<compile_context>
chip_gen: v5e
topology: v5e:2x2
jax: 0.10.0
libtpu: 0.0.40
codegen_flags: <defaults>
</compile_context>

<pallas_src>
import functools

import jax
import jax.numpy as jnp
from jax.experimental import pallas as pl
from jax.experimental.pallas import tpu as pltpu

NEG_SLOPE = 0.2
BN_EPS = 1e-5
LANE = 128
SUBLANE = 8
VMEM_BUDGET = 24 * 1024 * 1024     # planning budget for tiles (double-buffered)
VMEM_LIMIT = 32 * 1024 * 1024      # scoped VMEM limit passed to Mosaic


def _round_up(x, m):
    return ((x + m - 1) // m) * m


# ----------------------------- Pallas kernels -----------------------------

def _gemm_bias_act_kernel(p_ref, w_ref, b_ref, o_ref, *, use_act):
    """bf16 GEMM tile (MXU) + bias (+ LeakyReLU) in f32."""
    acc = jnp.dot(p_ref[...], w_ref[...], preferred_element_type=jnp.float32)
    acc = acc + b_ref[...]                       # (1, TILE_N) broadcast
    if use_act:
        acc = jnp.where(acc >= 0.0, acc, NEG_SLOPE * acc)
    o_ref[...] = acc.astype(o_ref.dtype)


def _gemm_stats_kernel(p_ref, w_ref, o_ref, sum_ref, ssq_ref):
    """bf16 GEMM tile + per-tile per-channel sum / sum-of-squares (one-pass
    BN statistics, accumulated across tiles outside the kernel)."""
    acc = jnp.dot(p_ref[...], w_ref[...], preferred_element_type=jnp.float32)
    o_ref[...] = acc
    s = jnp.sum(acc, axis=0, keepdims=True)          # (1, TILE_N)
    sq = jnp.sum(acc * acc, axis=0, keepdims=True)
    # Replicate across the 8-row (sublane-aligned) stats block; only row 0 is
    # consumed by the finalize step.
    sum_ref[...] = jnp.broadcast_to(s, sum_ref.shape)
    ssq_ref[...] = jnp.broadcast_to(sq, ssq_ref.shape)


def _bn_act_kernel(x_ref, scale_ref, shift_ref, o_ref, *, use_act):
    """Per-tile BN normalize+affine (pre-folded scale/shift) + LeakyReLU."""
    y = x_ref[...] * scale_ref[...] + shift_ref[...]
    if use_act:
        y = jnp.where(y >= 0.0, y, NEG_SLOPE * y)
    o_ref[...] = y.astype(o_ref.dtype)


# ------------------------------- host glue --------------------------------

def _im2col(x_nhwc, kh, kw, stride, pad):
    """Patches (M, K) with M = N*OH*OW (n, oh, ow major->minor) and
    K = KH*KW*Cin (kh, kw, cin major->minor)."""
    n, h, w, c = x_nhwc.shape
    xp = jnp.pad(x_nhwc, ((0, 0), (pad, pad), (pad, pad), (0, 0)))
    oh = (h + 2 * pad - kh) // stride + 1
    ow = (w + 2 * pad - kw) // stride + 1
    cols = []
    for i in range(kh):
        for j in range(kw):
            cols.append(xp[:, i:i + (oh - 1) * stride + 1:stride,
                              j:j + (ow - 1) * stride + 1:stride, :])
    p = jnp.stack(cols, axis=3)                  # (N, OH, OW, KH*KW, C)
    return p.reshape(n * oh * ow, kh * kw * c), oh, ow


def _pick_tile_m(m, k_p, tile_n, use_bn):
    """Largest M tile (multiple of 64, <=512) that keeps the double-buffered
    working set under VMEM_BUDGET; falls back to a single full-M tile."""
    m_full = _round_up(m, SUBLANE)
    out_bytes = 4 if use_bn else 2
    fixed = 2 * (k_p * tile_n * 2)                         # bf16 weight block x2
    per_row = 2 * (k_p * 2) + 2 * (tile_n * out_bytes)     # patch + out tiles x2
    tm = (VMEM_BUDGET - fixed) // max(per_row, 1)
    tm = int(max(64, min(512, (tm // 64) * 64)))
    return min(tm, m_full)


def _conv_layer(x_nhwc, w_oihw, bias, gamma, beta, *, stride, pad, use_act,
                out_dtype):
    """One Conv2d(+bias)(+BatchNorm2d training stats)(+LeakyReLU) layer as
    tiled Pallas GEMM kernels.  Activations keep lane-padded channels."""
    use_bn = gamma is not None
    n, _, _, cin = x_nhwc.shape                  # cin may already be 128-padded
    cout, cin_w, kh, kw = w_oihw.shape
    cout_p = _round_up(cout, LANE)

    # TODO(synk): replace the HBM-materialized im2col with an implicit-GEMM
    # conv kernel (NHWC tile resident in VMEM, 16 shifted jnp.dot taps) to
    # remove the 4-16x activation-read inflation of the 4x4 kernel.
    patches, oh, ow = _im2col(x_nhwc.astype(jnp.bfloat16), kh, kw, stride, pad)
    m, k = patches.shape
    k_p = _round_up(k, LANE)

    # Weights: (Cout,Cin,KH,KW) -> (KH,KW,Cin,Cout); zero-pad Cin up to the
    # (channel-padded) activation depth and Cout up to a lane multiple.
    w_mat = jnp.transpose(w_oihw, (2, 3, 1, 0))
    w_mat = jnp.pad(w_mat, ((0, 0), (0, 0), (0, cin - cin_w),
                            (0, cout_p - cout)))
    w_mat = w_mat.reshape(kh * kw * cin, cout_p)
    if k_p != k:
        w_mat = jnp.pad(w_mat, ((0, k_p - k), (0, 0)))
    w_mat = w_mat.astype(jnp.bfloat16)

    tile_n = min(cout_p, 256)
    tile_m = _pick_tile_m(m, k_p, tile_n, use_bn)
    m_p = _round_up(m, tile_m)
    if m_p != m or k_p != k:
        patches = jnp.pad(patches, ((0, m_p - m), (0, k_p - k)))
    grid_m, grid_n = m_p // tile_m, cout_p // tile_n

    cparams_mn = pltpu.CompilerParams(
        dimension_semantics=("parallel", "parallel"),
        vmem_limit_bytes=VMEM_LIMIT)

    if not use_bn:
        b_vec = jnp.pad(bias.astype(jnp.float32),
                        (0, cout_p - cout)).reshape(1, cout_p)
        out = pl.pallas_call(
            functools.partial(_gemm_bias_act_kernel, use_act=use_act),
            grid=(grid_m, grid_n),
            in_specs=[
                pl.BlockSpec((tile_m, k_p), lambda i, j: (i, 0)),
                pl.BlockSpec((k_p, tile_n), lambda i, j: (0, j)),
                pl.BlockSpec((1, tile_n), lambda i, j: (0, j)),
            ],
            out_specs=pl.BlockSpec((tile_m, tile_n), lambda i, j: (i, j)),
            out_shape=jax.ShapeDtypeStruct((m_p, cout_p), out_dtype),
            compiler_params=cparams_mn,
        )(patches, w_mat, b_vec)
    else:
        conv, psum, pssq = pl.pallas_call(
            _gemm_stats_kernel,
            grid=(grid_m, grid_n),
            in_specs=[
                pl.BlockSpec((tile_m, k_p), lambda i, j: (i, 0)),
                pl.BlockSpec((k_p, tile_n), lambda i, j: (0, j)),
            ],
            out_specs=[
                pl.BlockSpec((tile_m, tile_n), lambda i, j: (i, j)),
                pl.BlockSpec((SUBLANE, tile_n), lambda i, j: (i, j)),
                pl.BlockSpec((SUBLANE, tile_n), lambda i, j: (i, j)),
            ],
            out_shape=[
                jax.ShapeDtypeStruct((m_p, cout_p), jnp.float32),
                jax.ShapeDtypeStruct((grid_m * SUBLANE, cout_p), jnp.float32),
                jax.ShapeDtypeStruct((grid_m * SUBLANE, cout_p), jnp.float32),
            ],
            compiler_params=cparams_mn,
        )(patches, w_mat)

        # Tiny stats finalize (exact global batch stats: padded rows/channels
        # contribute exact zeros; divide by the *real* M).  Biased variance,
        # matching BatchNorm2d training-mode normalization; all f32.
        ch_sum = psum.reshape(grid_m, SUBLANE, cout_p)[:, 0, :].sum(axis=0)
        ch_ssq = pssq.reshape(grid_m, SUBLANE, cout_p)[:, 0, :].sum(axis=0)
        mean = ch_sum / m
        var = jnp.maximum(ch_ssq / m - mean * mean, 0.0)
        invstd = jax.lax.rsqrt(var + BN_EPS)
        g = jnp.pad(gamma.astype(jnp.float32), (0, cout_p - cout))
        bt = jnp.pad(beta.astype(jnp.float32), (0, cout_p - cout))
        scale = (g * invstd).reshape(1, cout_p)
        shift = (bt - mean * g * invstd).reshape(1, cout_p)

        # TODO(synk): fuse this normalize+act pass into the next layer's patch
        # formation to save one full activation HBM round trip.
        out = pl.pallas_call(
            functools.partial(_bn_act_kernel, use_act=use_act),
            grid=(grid_m,),
            in_specs=[
                pl.BlockSpec((tile_m, cout_p), lambda i: (i, 0)),
                pl.BlockSpec((1, cout_p), lambda i: (0, 0)),
                pl.BlockSpec((1, cout_p), lambda i: (0, 0)),
            ],
            out_specs=pl.BlockSpec((tile_m, cout_p), lambda i: (i, 0)),
            out_shape=jax.ShapeDtypeStruct((m_p, cout_p), out_dtype),
            compiler_params=pltpu.CompilerParams(
                dimension_semantics=("parallel",),
                vmem_limit_bytes=VMEM_LIMIT),
        )(conv, scale, shift)

    if m_p != m:
        out = out[:m]
    return out.reshape(n, oh, ow, cout_p), cout


# ------------------------------ model driver ------------------------------

def init_nlayer_discriminator_params(key, input_nc, ndf=64, n_layers=3):
    """Deterministic synthetic init matching NLayerDiscriminator's shapes.
    BatchNorm2d => conv bias disabled for middle layers; BN weight=1/bias=0."""
    kw = 4

    def conv_w(k, cout, cin):
        return 0.02 * jax.random.normal(k, (cout, cin, kw, kw), jnp.float32)

    keys = jax.random.split(key, 2 * (n_layers + 2) + 2)
    ki = 0
    layers = []

    layers.append(dict(                                   # Conv + LeakyReLU
        w=conv_w(keys[ki], ndf, input_nc),
        b=0.02 * jax.random.normal(keys[ki + 1], (ndf,), jnp.float32),
        gamma=None, beta=None, stride=2, act=True))
    ki += 2

    nf_mult = 1
    for n in range(1, n_layers):                          # Conv + BN + LeakyReLU
        nf_prev, nf_mult = nf_mult, min(2 ** n, 8)
        layers.append(dict(
            w=conv_w(keys[ki], ndf * nf_mult, ndf * nf_prev), b=None,
            gamma=jnp.ones((ndf * nf_mult,), jnp.float32),
            beta=jnp.zeros((ndf * nf_mult,), jnp.float32),
            stride=2, act=True))
        ki += 1

    nf_prev, nf_mult = nf_mult, min(2 ** n_layers, 8)     # Conv(s=1)+BN+LeakyReLU
    layers.append(dict(
        w=conv_w(keys[ki], ndf * nf_mult, ndf * nf_prev), b=None,
        gamma=jnp.ones((ndf * nf_mult,), jnp.float32),
        beta=jnp.zeros((ndf * nf_mult,), jnp.float32),
        stride=1, act=True))
    ki += 1

    layers.append(dict(                                   # final Conv -> 1 ch
        w=conv_w(keys[ki], 1, ndf * nf_mult),
        b=0.02 * jax.random.normal(keys[ki + 1], (1,), jnp.float32),
        gamma=None, beta=None, stride=1, act=False))
    return layers


def nlayer_discriminator_forward(params, x_nchw):
    """Forward pass; input NCHW float32, output NCHW float32."""
    x = jnp.transpose(x_nchw, (0, 2, 3, 1))               # -> NHWC
    cout = x.shape[-1]
    for idx, layer in enumerate(params):
        last = idx == len(params) - 1
        x, cout = _conv_layer(
            x, layer["w"], layer["b"], layer["gamma"], layer["beta"],
            stride=layer["stride"], pad=1, use_act=layer["act"],
            out_dtype=jnp.float32 if last else jnp.bfloat16)
    x = x[..., :cout]                                      # drop channel padding
    return jnp.transpose(x, (0, 3, 1, 2)).astype(jnp.float32)   # -> NCHW


def _reference_forward(params, x_nchw):
    """Pure-JAX f32 reference (conv + BN batch stats + LeakyReLU)."""
    x = x_nchw.astype(jnp.float32)
    for layer in params:
        s = layer["stride"]
        y = jax.lax.conv_general_dilated(
            x, layer["w"], window_strides=(s, s), padding=((1, 1), (1, 1)),
            dimension_numbers=("NCHW", "OIHW", "NCHW"))
        if layer["b"] is not None:
            y = y + layer["b"].reshape(1, -1, 1, 1)
        if layer["gamma"] is not None:
            mean = jnp.mean(y, axis=(0, 2, 3), keepdims=True)
            var = jnp.mean((y - mean) ** 2, axis=(0, 2, 3), keepdims=True)
            y = (y - mean) * jax.lax.rsqrt(var + BN_EPS)
            y = y * layer["gamma"].reshape(1, -1, 1, 1) \
                + layer["beta"].reshape(1, -1, 1, 1)
        if layer["act"]:
            y = jnp.where(y >= 0, y, NEG_SLOPE * y)
        x = y
    return x


if __name__ == "__main__":
    key = jax.random.PRNGKey(0)
    k_x, k_p = jax.random.split(key)

    # Small shapes: batch=2, input_nc=4, spatial=32, ndf=8, n_layers=3.
    # Spatial chain: 32 -> 16 -> 8 -> 4 -> 3 -> 2, final channels = 1.
    x = jax.random.normal(k_x, (2, 4, 32, 32), jnp.float32)        # NCHW
    params = init_nlayer_discriminator_params(k_p, input_nc=4, ndf=8, n_layers=3)

    fwd = jax.jit(lambda inp: nlayer_discriminator_forward(params, inp))
    y = jax.block_until_ready(fwd(x))
    assert y.shape == (2, 1, 2, 2), y.shape
    assert bool(jnp.all(jnp.isfinite(y)))

    # Loose-tolerance check vs. pure-JAX f32 reference (kernel GEMMs are bf16).
    y_ref = jax.block_until_ready(_reference_forward(params, x))
    rel = float(jnp.linalg.norm(y - y_ref) / (jnp.linalg.norm(y_ref) + 1e-6))
    assert rel < 0.25, rel

    print("KERNEL_OK")
</pallas_src>

<mosaic_0001>
module attributes {stable_mosaic.version = 11 : i64} {
  func.func @_gemm_bias_act_kernel(%arg0: i32, %arg1: i32, %arg2: memref<512x128xbf16, #tpu.memory_space<vmem>>, %arg3: memref<128x128xbf16, #tpu.memory_space<vmem>>, %arg4: memref<1x128xf32, #tpu.memory_space<vmem>>, %arg5: memref<512x128xbf16, #tpu.memory_space<vmem>>) attributes {dimension_semantics = [#tpu.dimension_semantics<parallel>, #tpu.dimension_semantics<parallel>], iteration_bounds = array<i64: 1, 1>, scalar_prefetch = 0 : i64, scratch_operands = 0 : i64, tpu.core_type = #tpu.core_type<tc>, window_params = [{transform_indices = @transform_0, window_bounds = array<i64: 512, 128>}, {transform_indices = @transform_1, window_bounds = array<i64: 128, 128>}, {transform_indices = @transform_2, window_bounds = array<i64: 1, 128>}, {transform_indices = @transform_3, window_bounds = array<i64: 512, 128>}]} {
    %c0 = arith.constant 0 : index
    %c0_0 = arith.constant 0 : index
    %0 = vector.load %arg2[%c0, %c0_0] : memref<512x128xbf16, #tpu.memory_space<vmem>>, vector<512x128xbf16>
    %c0_1 = arith.constant 0 : index
    %c0_2 = arith.constant 0 : index
    %1 = vector.load %arg3[%c0_1, %c0_2] : memref<128x128xbf16, #tpu.memory_space<vmem>>, vector<128x128xbf16>
    %cst = arith.constant dense<0.000000e+00> : vector<512x128xf32>
    %2 = tpu.matmul %0, %1, %cst {dimension_numbers = #tpu.dot_dimension_numbers<[1], [0], [0], [1], [0, 0, 1, 1], [], []>} : vector<512x128xbf16>, vector<128x128xbf16>, vector<512x128xf32> -> vector<512x128xf32>
    %c0_3 = arith.constant 0 : index
    %c0_4 = arith.constant 0 : index
    %3 = vector.load %arg4[%c0_3, %c0_4] : memref<1x128xf32, #tpu.memory_space<vmem>>, vector<1x128xf32>
    %4 = vector.broadcast %3 : vector<1x128xf32> to vector<512x128xf32>
    %5 = arith.addf %2, %4 : vector<512x128xf32>
    %cst_5 = arith.constant 0.000000e+00 : f32
    %6 = vector.broadcast %cst_5 : f32 to vector<512x128xf32>
    %7 = arith.cmpf oge, %5, %6 : vector<512x128xf32>
    %cst_6 = arith.constant 2.000000e-01 : f32
    %8 = vector.broadcast %cst_6 : f32 to vector<512x128xf32>
    %9 = arith.mulf %8, %5 : vector<512x128xf32>
    %10 = arith.select %7, %5, %9 : vector<512x128xi1>, vector<512x128xf32>
    %11 = arith.truncf %10 : vector<512x128xf32> to vector<512x128xbf16>
    %c0_7 = arith.constant 0 : index
    %c0_8 = arith.constant 0 : index
    %12 = vector.load %arg5[%c0_7, %c0_8] : memref<512x128xbf16, #tpu.memory_space<vmem>>, vector<512x128xbf16>
    tpu.vector_store %arg5[%c0_7, %c0_8], %11 {strides = array<i32>} : memref<512x128xbf16, #tpu.memory_space<vmem>>, vector<512x128xbf16>,
    return
  }
  func.func @transform_0(%arg0: i32, %arg1: i32) -> (i32, i32) {
    %c0_i32 = arith.constant 0 : i32
    %c0_i32_0 = arith.constant 0 : i32
    return %arg0, %c0_i32 : i32, i32
  }
  func.func @transform_1(%arg0: i32, %arg1: i32) -> (i32, i32) {
    %c0_i32 = arith.constant 0 : i32
    %c0_i32_0 = arith.constant 0 : i32
    return %c0_i32, %arg1 : i32, i32
  }
  func.func @transform_2(%arg0: i32, %arg1: i32) -> (i32, i32) {
    %c0_i32 = arith.constant 0 : i32
    %c0_i32_0 = arith.constant 0 : i32
    return %c0_i32, %arg1 : i32, i32
  }
  func.func @transform_3(%arg0: i32, %arg1: i32) -> (i32, i32) {
    %c0_i32 = arith.constant 0 : i32
    return %arg0, %arg1 : i32, i32
  }
}

module attributes {stable_mosaic.version = 11 : i64} {
  func.func @_gemm_stats_kernel(%arg0: i32, %arg1: i32, %arg2: memref<128x2048xbf16, #tpu.memory_space<vmem>>, %arg3: memref<2048x128xbf16, #tpu.memory_space<vmem>>, %arg4: memref<128x128xf32, #tpu.memory_space<vmem>>, %arg5: memref<8x128xf32, #tpu.memory_space<vmem>>, %arg6: memref<8x128xf32, #tpu.memory_space<vmem>>) attributes {dimension_semantics = [#tpu.dimension_semantics<parallel>, #tpu.dimension_semantics<parallel>], iteration_bounds = array<i64: 1, 1>, scalar_prefetch = 0 : i64, scratch_operands = 0 : i64, tpu.core_type = #tpu.core_type<tc>, window_params = [{transform_indices = @transform_0, window_bounds = array<i64: 128, 2048>}, {transform_indices = @transform_1, window_bounds = array<i64: 2048, 128>}, {transform_indices = @transform_2, window_bounds = array<i64: 128, 128>}, {transform_indices = @transform_3, window_bounds = array<i64: 8, 128>}, {transform_indices = @transform_4, window_bounds = array<i64: 8, 128>}]} {
    %c0 = arith.constant 0 : index
    %c0_0 = arith.constant 0 : index
    %0 = vector.load %arg2[%c0, %c0_0] : memref<128x2048xbf16, #tpu.memory_space<vmem>>, vector<128x2048xbf16>
    %c0_1 = arith.constant 0 : index
    %c0_2 = arith.constant 0 : index
    %1 = vector.load %arg3[%c0_1, %c0_2] : memref<2048x128xbf16, #tpu.memory_space<vmem>>, vector<2048x128xbf16>
    %cst = arith.constant dense<0.000000e+00> : vector<128x128xf32>
    %2 = tpu.matmul %0, %1, %cst {dimension_numbers = #tpu.dot_dimension_numbers<[1], [0], [0], [1], [0, 0, 1, 1], [], []>} : vector<128x2048xbf16>, vector<2048x128xbf16>, vector<128x128xf32> -> vector<128x128xf32>
    %c0_3 = arith.constant 0 : index
    %c0_4 = arith.constant 0 : index
    %3 = vector.load %arg4[%c0_3, %c0_4] : memref<128x128xf32, #tpu.memory_space<vmem>>, vector<128x128xf32>
    tpu.vector_store %arg4[%c0_3, %c0_4], %2 {strides = array<i32>} : memref<128x128xf32, #tpu.memory_space<vmem>>, vector<128x128xf32>,
    %cst_5 = arith.constant dense<0.000000e+00> : vector<128xf32>
    %4 = vector.multi_reduction <add>, %2, %cst_5 [0] : vector<128x128xf32> to vector<128xf32>
    %5 = vector.shape_cast %4 : vector<128xf32> to vector<1x128xf32>
    %6 = arith.mulf %2, %2 : vector<128x128xf32>
    %cst_6 = arith.constant dense<0.000000e+00> : vector<128xf32>
    %7 = vector.multi_reduction <add>, %6, %cst_6 [0] : vector<128x128xf32> to vector<128xf32>
    %8 = vector.shape_cast %7 : vector<128xf32> to vector<1x128xf32>
    %9 = vector.shape_cast %5 : vector<1x128xf32> to vector<1x128xf32>
    %10 = vector.broadcast %9 : vector<1x128xf32> to vector<8x128xf32>
    %c0_7 = arith.constant 0 : index
    %c0_8 = arith.constant 0 : index
    %11 = vector.load %arg5[%c0_7, %c0_8] : memref<8x128xf32, #tpu.memory_space<vmem>>, vector<8x128xf32>
    tpu.vector_store %arg5[%c0_7, %c0_8], %10 {strides = array<i32>} : memref<8x128xf32, #tpu.memory_space<vmem>>, vector<8x128xf32>,
    %12 = vector.shape_cast %8 : vector<1x128xf32> to vector<1x128xf32>
    %13 = vector.broadcast %12 : vector<1x128xf32> to vector<8x128xf32>
    %c0_9 = arith.constant 0 : index
    %c0_10 = arith.constant 0 : index
    %14 = vector.load %arg6[%c0_9, %c0_10] : memref<8x128xf32, #tpu.memory_space<vmem>>, vector<8x128xf32>
    tpu.vector_store %arg6[%c0_9, %c0_10], %13 {strides = array<i32>} : memref<8x128xf32, #tpu.memory_space<vmem>>, vector<8x128xf32>,
    return
  }
  func.func @transform_0(%arg0: i32, %arg1: i32) -> (i32, i32) {
    %c0_i32 = arith.constant 0 : i32
    %c0_i32_0 = arith.constant 0 : i32
    return %arg0, %c0_i32 : i32, i32
  }
  func.func @transform_1(%arg0: i32, %arg1: i32) -> (i32, i32) {
    %c0_i32 = arith.constant 0 : i32
    %c0_i32_0 = arith.constant 0 : i32
    return %c0_i32, %arg1 : i32, i32
  }
  func.func @transform_2(%arg0: i32, %arg1: i32) -> (i32, i32) {
    %c0_i32 = arith.constant 0 : i32
    return %arg0, %arg1 : i32, i32
  }
  func.func @transform_3(%arg0: i32, %arg1: i32) -> (i32, i32) {
    %c0_i32 = arith.constant 0 : i32
    return %arg0, %arg1 : i32, i32
  }
  func.func @transform_4(%arg0: i32, %arg1: i32) -> (i32, i32) {
    %c0_i32 = arith.constant 0 : i32
    return %arg0, %arg1 : i32, i32
  }
}

module attributes {stable_mosaic.version = 11 : i64} {
  func.func @_bn_act_kernel(%arg0: i32, %arg1: memref<128x128xf32, #tpu.memory_space<vmem>>, %arg2: memref<1x128xf32, #tpu.memory_space<vmem>>, %arg3: memref<1x128xf32, #tpu.memory_space<vmem>>, %arg4: memref<128x128xbf16, #tpu.memory_space<vmem>>) attributes {dimension_semantics = [#tpu.dimension_semantics<parallel>], iteration_bounds = array<i64: 1>, scalar_prefetch = 0 : i64, scratch_operands = 0 : i64, tpu.core_type = #tpu.core_type<tc>, window_params = [{transform_indices = @transform_0, window_bounds = array<i64: 128, 128>}, {pipeline_mode = #tpu.pipeline_mode<synchronous>, transform_indices = @transform_1, window_bounds = array<i64: 1, 128>}, {pipeline_mode = #tpu.pipeline_mode<synchronous>, transform_indices = @transform_2, window_bounds = array<i64: 1, 128>}, {transform_indices = @transform_3, window_bounds = array<i64: 128, 128>}]} {
    %c0 = arith.constant 0 : index
    %c0_0 = arith.constant 0 : index
    %0 = vector.load %arg1[%c0, %c0_0] : memref<128x128xf32, #tpu.memory_space<vmem>>, vector<128x128xf32>
    %c0_1 = arith.constant 0 : index
    %c0_2 = arith.constant 0 : index
    %1 = vector.load %arg2[%c0_1, %c0_2] : memref<1x128xf32, #tpu.memory_space<vmem>>, vector<1x128xf32>
    %2 = vector.broadcast %1 : vector<1x128xf32> to vector<128x128xf32>
    %3 = arith.mulf %0, %2 : vector<128x128xf32>
    %c0_3 = arith.constant 0 : index
    %c0_4 = arith.constant 0 : index
    %4 = vector.load %arg3[%c0_3, %c0_4] : memref<1x128xf32, #tpu.memory_space<vmem>>, vector<1x128xf32>
    %5 = vector.broadcast %4 : vector<1x128xf32> to vector<128x128xf32>
    %6 = arith.addf %3, %5 : vector<128x128xf32>
    %cst = arith.constant 0.000000e+00 : f32
    %7 = vector.broadcast %cst : f32 to vector<128x128xf32>
    %8 = arith.cmpf oge, %6, %7 : vector<128x128xf32>
    %cst_5 = arith.constant 2.000000e-01 : f32
    %9 = vector.broadcast %cst_5 : f32 to vector<128x128xf32>
    %10 = arith.mulf %9, %6 : vector<128x128xf32>
    %11 = arith.select %8, %6, %10 : vector<128x128xi1>, vector<128x128xf32>
    %12 = arith.truncf %11 : vector<128x128xf32> to vector<128x128xbf16>
    %c0_6 = arith.constant 0 : index
    %c0_7 = arith.constant 0 : index
    %13 = vector.load %arg4[%c0_6, %c0_7] : memref<128x128xbf16, #tpu.memory_space<vmem>>, vector<128x128xbf16>
    tpu.vector_store %arg4[%c0_6, %c0_7], %12 {strides = array<i32>} : memref<128x128xbf16, #tpu.memory_space<vmem>>, vector<128x128xbf16>,
    return
  }
  func.func @transform_0(%arg0: i32) -> (i32, i32) {
    %c0_i32 = arith.constant 0 : i32
    %c0_i32_0 = arith.constant 0 : i32
    return %arg0, %c0_i32 : i32, i32
  }
  func.func @transform_1(%arg0: i32) -> (i32, i32) {
    %c0_i32 = arith.constant 0 : i32
    %c0_i32_0 = arith.constant 0 : i32
    %c0_i32_1 = arith.constant 0 : i32
    return %c0_i32, %c0_i32_0 : i32, i32
  }
  func.func @transform_2(%arg0: i32) -> (i32, i32) {
    %c0_i32 = arith.constant 0 : i32
    %c0_i32_0 = arith.constant 0 : i32
    %c0_i32_1 = arith.constant 0 : i32
    return %c0_i32, %c0_i32_0 : i32, i32
  }
  func.func @transform_3(%arg0: i32) -> (i32, i32) {
    %c0_i32 = arith.constant 0 : i32
    %c0_i32_0 = arith.constant 0 : i32
    return %arg0, %c0_i32 : i32, i32
  }
}

module attributes {stable_mosaic.version = 11 : i64} {
  func.func @_gemm_stats_kernel(%arg0: i32, %arg1: i32, %arg2: memref<32x2048xbf16, #tpu.memory_space<vmem>>, %arg3: memref<2048x128xbf16, #tpu.memory_space<vmem>>, %arg4: memref<32x128xf32, #tpu.memory_space<vmem>>, %arg5: memref<8x128xf32, #tpu.memory_space<vmem>>, %arg6: memref<8x128xf32, #tpu.memory_space<vmem>>) attributes {dimension_semantics = [#tpu.dimension_semantics<parallel>, #tpu.dimension_semantics<parallel>], iteration_bounds = array<i64: 1, 1>, scalar_prefetch = 0 : i64, scratch_operands = 0 : i64, tpu.core_type = #tpu.core_type<tc>, window_params = [{transform_indices = @transform_0, window_bounds = array<i64: 32, 2048>}, {transform_indices = @transform_1, window_bounds = array<i64: 2048, 128>}, {transform_indices = @transform_2, window_bounds = array<i64: 32, 128>}, {transform_indices = @transform_3, window_bounds = array<i64: 8, 128>}, {transform_indices = @transform_4, window_bounds = array<i64: 8, 128>}]} {
    %c0 = arith.constant 0 : index
    %c0_0 = arith.constant 0 : index
    %0 = vector.load %arg2[%c0, %c0_0] : memref<32x2048xbf16, #tpu.memory_space<vmem>>, vector<32x2048xbf16>
    %c0_1 = arith.constant 0 : index
    %c0_2 = arith.constant 0 : index
    %1 = vector.load %arg3[%c0_1, %c0_2] : memref<2048x128xbf16, #tpu.memory_space<vmem>>, vector<2048x128xbf16>
    %cst = arith.constant dense<0.000000e+00> : vector<32x128xf32>
    %2 = tpu.matmul %0, %1, %cst {dimension_numbers = #tpu.dot_dimension_numbers<[1], [0], [0], [1], [0, 0, 1, 1], [], []>} : vector<32x2048xbf16>, vector<2048x128xbf16>, vector<32x128xf32> -> vector<32x128xf32>
    %c0_3 = arith.constant 0 : index
    %c0_4 = arith.constant 0 : index
    %3 = vector.load %arg4[%c0_3, %c0_4] : memref<32x128xf32, #tpu.memory_space<vmem>>, vector<32x128xf32>
    tpu.vector_store %arg4[%c0_3, %c0_4], %2 {strides = array<i32>} : memref<32x128xf32, #tpu.memory_space<vmem>>, vector<32x128xf32>,
    %cst_5 = arith.constant dense<0.000000e+00> : vector<128xf32>
    %4 = vector.multi_reduction <add>, %2, %cst_5 [0] : vector<32x128xf32> to vector<128xf32>
    %5 = vector.shape_cast %4 : vector<128xf32> to vector<1x128xf32>
    %6 = arith.mulf %2, %2 : vector<32x128xf32>
    %cst_6 = arith.constant dense<0.000000e+00> : vector<128xf32>
    %7 = vector.multi_reduction <add>, %6, %cst_6 [0] : vector<32x128xf32> to vector<128xf32>
    %8 = vector.shape_cast %7 : vector<128xf32> to vector<1x128xf32>
    %9 = vector.shape_cast %5 : vector<1x128xf32> to vector<1x128xf32>
    %10 = vector.broadcast %9 : vector<1x128xf32> to vector<8x128xf32>
    %c0_7 = arith.constant 0 : index
    %c0_8 = arith.constant 0 : index
    %11 = vector.load %arg5[%c0_7, %c0_8] : memref<8x128xf32, #tpu.memory_space<vmem>>, vector<8x128xf32>
    tpu.vector_store %arg5[%c0_7, %c0_8], %10 {strides = array<i32>} : memref<8x128xf32, #tpu.memory_space<vmem>>, vector<8x128xf32>,
    %12 = vector.shape_cast %8 : vector<1x128xf32> to vector<1x128xf32>
    %13 = vector.broadcast %12 : vector<1x128xf32> to vector<8x128xf32>
    %c0_9 = arith.constant 0 : index
    %c0_10 = arith.constant 0 : index
    %14 = vector.load %arg6[%c0_9, %c0_10] : memref<8x128xf32, #tpu.memory_space<vmem>>, vector<8x128xf32>
    tpu.vector_store %arg6[%c0_9, %c0_10], %13 {strides = array<i32>} : memref<8x128xf32, #tpu.memory_space<vmem>>, vector<8x128xf32>,
    return
  }
  func.func @transform_0(%arg0: i32, %arg1: i32) -> (i32, i32) {
    %c0_i32 = arith.constant 0 : i32
    %c0_i32_0 = arith.constant 0 : i32
    return %arg0, %c0_i32 : i32, i32
  }
  func.func @transform_1(%arg0: i32, %arg1: i32) -> (i32, i32) {
    %c0_i32 = arith.constant 0 : i32
    %c0_i32_0 = arith.constant 0 : i32
    return %c0_i32, %arg1 : i32, i32
  }
  func.func @transform_2(%arg0: i32, %arg1: i32) -> (i32, i32) {
    %c0_i32 = arith.constant 0 : i32
    return %arg0, %arg1 : i32, i32
  }
  func.func @transform_3(%arg0: i32, %arg1: i32) -> (i32, i32) {
    %c0_i32 = arith.constant 0 : i32
    return %arg0, %arg1 : i32, i32
  }
  func.func @transform_4(%arg0: i32, %arg1: i32) -> (i32, i32) {
    %c0_i32 = arith.constant 0 : i32
    return %arg0, %arg1 : i32, i32
  }
}

module attributes {stable_mosaic.version = 11 : i64} {
  func.func @_bn_act_kernel(%arg0: i32, %arg1: memref<32x128xf32, #tpu.memory_space<vmem>>, %arg2: memref<1x128xf32, #tpu.memory_space<vmem>>, %arg3: memref<1x128xf32, #tpu.memory_space<vmem>>, %arg4: memref<32x128xbf16, #tpu.memory_space<vmem>>) attributes {dimension_semantics = [#tpu.dimension_semantics<parallel>], iteration_bounds = array<i64: 1>, scalar_prefetch = 0 : i64, scratch_operands = 0 : i64, tpu.core_type = #tpu.core_type<tc>, window_params = [{transform_indices = @transform_0, window_bounds = array<i64: 32, 128>}, {pipeline_mode = #tpu.pipeline_mode<synchronous>, transform_indices = @transform_1, window_bounds = array<i64: 1, 128>}, {pipeline_mode = #tpu.pipeline_mode<synchronous>, transform_indices = @transform_2, window_bounds = array<i64: 1, 128>}, {transform_indices = @transform_3, window_bounds = array<i64: 32, 128>}]} {
    %c0 = arith.constant 0 : index
    %c0_0 = arith.constant 0 : index
    %0 = vector.load %arg1[%c0, %c0_0] : memref<32x128xf32, #tpu.memory_space<vmem>>, vector<32x128xf32>
    %c0_1 = arith.constant 0 : index
    %c0_2 = arith.constant 0 : index
    %1 = vector.load %arg2[%c0_1, %c0_2] : memref<1x128xf32, #tpu.memory_space<vmem>>, vector<1x128xf32>
    %2 = vector.broadcast %1 : vector<1x128xf32> to vector<32x128xf32>
    %3 = arith.mulf %0, %2 : vector<32x128xf32>
    %c0_3 = arith.constant 0 : index
    %c0_4 = arith.constant 0 : index
    %4 = vector.load %arg3[%c0_3, %c0_4] : memref<1x128xf32, #tpu.memory_space<vmem>>, vector<1x128xf32>
    %5 = vector.broadcast %4 : vector<1x128xf32> to vector<32x128xf32>
    %6 = arith.addf %3, %5 : vector<32x128xf32>
    %cst = arith.constant 0.000000e+00 : f32
    %7 = vector.broadcast %cst : f32 to vector<32x128xf32>
    %8 = arith.cmpf oge, %6, %7 : vector<32x128xf32>
    %cst_5 = arith.constant 2.000000e-01 : f32
    %9 = vector.broadcast %cst_5 : f32 to vector<32x128xf32>
    %10 = arith.mulf %9, %6 : vector<32x128xf32>
    %11 = arith.select %8, %6, %10 : vector<32x128xi1>, vector<32x128xf32>
    %12 = arith.truncf %11 : vector<32x128xf32> to vector<32x128xbf16>
    %c0_6 = arith.constant 0 : index
    %c0_7 = arith.constant 0 : index
    %13 = vector.load %arg4[%c0_6, %c0_7] : memref<32x128xbf16, #tpu.memory_space<vmem>>, vector<32x128xbf16>
    tpu.vector_store %arg4[%c0_6, %c0_7], %12 {strides = array<i32>} : memref<32x128xbf16, #tpu.memory_space<vmem>>, vector<32x128xbf16>,
    return
  }
  func.func @transform_0(%arg0: i32) -> (i32, i32) {
    %c0_i32 = arith.constant 0 : i32
    %c0_i32_0 = arith.constant 0 : i32
    return %arg0, %c0_i32 : i32, i32
  }
  func.func @transform_1(%arg0: i32) -> (i32, i32) {
    %c0_i32 = arith.constant 0 : i32
    %c0_i32_0 = arith.constant 0 : i32
    %c0_i32_1 = arith.constant 0 : i32
    return %c0_i32, %c0_i32_0 : i32, i32
  }
  func.func @transform_2(%arg0: i32) -> (i32, i32) {
    %c0_i32 = arith.constant 0 : i32
    %c0_i32_0 = arith.constant 0 : i32
    %c0_i32_1 = arith.constant 0 : i32
    return %c0_i32, %c0_i32_0 : i32, i32
  }
  func.func @transform_3(%arg0: i32) -> (i32, i32) {
    %c0_i32 = arith.constant 0 : i32
    %c0_i32_0 = arith.constant 0 : i32
    return %arg0, %c0_i32 : i32, i32
  }
}

module attributes {stable_mosaic.version = 11 : i64} {
  func.func @_gemm_stats_kernel(%arg0: i32, %arg1: i32, %arg2: memref<24x2048xbf16, #tpu.memory_space<vmem>>, %arg3: memref<2048x128xbf16, #tpu.memory_space<vmem>>, %arg4: memref<24x128xf32, #tpu.memory_space<vmem>>, %arg5: memref<8x128xf32, #tpu.memory_space<vmem>>, %arg6: memref<8x128xf32, #tpu.memory_space<vmem>>) attributes {dimension_semantics = [#tpu.dimension_semantics<parallel>, #tpu.dimension_semantics<parallel>], iteration_bounds = array<i64: 1, 1>, scalar_prefetch = 0 : i64, scratch_operands = 0 : i64, tpu.core_type = #tpu.core_type<tc>, window_params = [{transform_indices = @transform_0, window_bounds = array<i64: 24, 2048>}, {transform_indices = @transform_1, window_bounds = array<i64: 2048, 128>}, {transform_indices = @transform_2, window_bounds = array<i64: 24, 128>}, {transform_indices = @transform_3, window_bounds = array<i64: 8, 128>}, {transform_indices = @transform_4, window_bounds = array<i64: 8, 128>}]} {
    %c0 = arith.constant 0 : index
    %c0_0 = arith.constant 0 : index
    %0 = vector.load %arg2[%c0, %c0_0] : memref<24x2048xbf16, #tpu.memory_space<vmem>>, vector<24x2048xbf16>
    %c0_1 = arith.constant 0 : index
    %c0_2 = arith.constant 0 : index
    %1 = vector.load %arg3[%c0_1, %c0_2] : memref<2048x128xbf16, #tpu.memory_space<vmem>>, vector<2048x128xbf16>
    %cst = arith.constant dense<0.000000e+00> : vector<24x128xf32>
    %2 = tpu.matmul %0, %1, %cst {dimension_numbers = #tpu.dot_dimension_numbers<[1], [0], [0], [1], [0, 0, 1, 1], [], []>} : vector<24x2048xbf16>, vector<2048x128xbf16>, vector<24x128xf32> -> vector<24x128xf32>
    %c0_3 = arith.constant 0 : index
    %c0_4 = arith.constant 0 : index
    %3 = vector.load %arg4[%c0_3, %c0_4] : memref<24x128xf32, #tpu.memory_space<vmem>>, vector<24x128xf32>
    tpu.vector_store %arg4[%c0_3, %c0_4], %2 {strides = array<i32>} : memref<24x128xf32, #tpu.memory_space<vmem>>, vector<24x128xf32>,
    %cst_5 = arith.constant dense<0.000000e+00> : vector<128xf32>
    %4 = vector.multi_reduction <add>, %2, %cst_5 [0] : vector<24x128xf32> to vector<128xf32>
    %5 = vector.shape_cast %4 : vector<128xf32> to vector<1x128xf32>
    %6 = arith.mulf %2, %2 : vector<24x128xf32>
    %cst_6 = arith.constant dense<0.000000e+00> : vector<128xf32>
    %7 = vector.multi_reduction <add>, %6, %cst_6 [0] : vector<24x128xf32> to vector<128xf32>
    %8 = vector.shape_cast %7 : vector<128xf32> to vector<1x128xf32>
    %9 = vector.shape_cast %5 : vector<1x128xf32> to vector<1x128xf32>
    %10 = vector.broadcast %9 : vector<1x128xf32> to vector<8x128xf32>
    %c0_7 = arith.constant 0 : index
    %c0_8 = arith.constant 0 : index
    %11 = vector.load %arg5[%c0_7, %c0_8] : memref<8x128xf32, #tpu.memory_space<vmem>>, vector<8x128xf32>
    tpu.vector_store %arg5[%c0_7, %c0_8], %10 {strides = array<i32>} : memref<8x128xf32, #tpu.memory_space<vmem>>, vector<8x128xf32>,
    %12 = vector.shape_cast %8 : vector<1x128xf32> to vector<1x128xf32>
    %13 = vector.broadcast %12 : vector<1x128xf32> to vector<8x128xf32>
    %c0_9 = arith.constant 0 : index
    %c0_10 = arith.constant 0 : index
    %14 = vector.load %arg6[%c0_9, %c0_10] : memref<8x128xf32, #tpu.memory_space<vmem>>, vector<8x128xf32>
    tpu.vector_store %arg6[%c0_9, %c0_10], %13 {strides = array<i32>} : memref<8x128xf32, #tpu.memory_space<vmem>>, vector<8x128xf32>,
    return
  }
  func.func @transform_0(%arg0: i32, %arg1: i32) -> (i32, i32) {
    %c0_i32 = arith.constant 0 : i32
    %c0_i32_0 = arith.constant 0 : i32
    return %arg0, %c0_i32 : i32, i32
  }
  func.func @transform_1(%arg0: i32, %arg1: i32) -> (i32, i32) {
    %c0_i32 = arith.constant 0 : i32
    %c0_i32_0 = arith.constant 0 : i32
    return %c0_i32, %arg1 : i32, i32
  }
  func.func @transform_2(%arg0: i32, %arg1: i32) -> (i32, i32) {
    %c0_i32 = arith.constant 0 : i32
    return %arg0, %arg1 : i32, i32
  }
  func.func @transform_3(%arg0: i32, %arg1: i32) -> (i32, i32) {
    %c0_i32 = arith.constant 0 : i32
    return %arg0, %arg1 : i32, i32
  }
  func.func @transform_4(%arg0: i32, %arg1: i32) -> (i32, i32) {
    %c0_i32 = arith.constant 0 : i32
    return %arg0, %arg1 : i32, i32
  }
}

module attributes {stable_mosaic.version = 11 : i64} {
  func.func @_bn_act_kernel(%arg0: i32, %arg1: memref<24x128xf32, #tpu.memory_space<vmem>>, %arg2: memref<1x128xf32, #tpu.memory_space<vmem>>, %arg3: memref<1x128xf32, #tpu.memory_space<vmem>>, %arg4: memref<24x128xbf16, #tpu.memory_space<vmem>>) attributes {dimension_semantics = [#tpu.dimension_semantics<parallel>], iteration_bounds = array<i64: 1>, scalar_prefetch = 0 : i64, scratch_operands = 0 : i64, tpu.core_type = #tpu.core_type<tc>, window_params = [{transform_indices = @transform_0, window_bounds = array<i64: 24, 128>}, {pipeline_mode = #tpu.pipeline_mode<synchronous>, transform_indices = @transform_1, window_bounds = array<i64: 1, 128>}, {pipeline_mode = #tpu.pipeline_mode<synchronous>, transform_indices = @transform_2, window_bounds = array<i64: 1, 128>}, {transform_indices = @transform_3, window_bounds = array<i64: 24, 128>}]} {
    %c0 = arith.constant 0 : index
    %c0_0 = arith.constant 0 : index
    %0 = vector.load %arg1[%c0, %c0_0] : memref<24x128xf32, #tpu.memory_space<vmem>>, vector<24x128xf32>
    %c0_1 = arith.constant 0 : index
    %c0_2 = arith.constant 0 : index
    %1 = vector.load %arg2[%c0_1, %c0_2] : memref<1x128xf32, #tpu.memory_space<vmem>>, vector<1x128xf32>
    %2 = vector.broadcast %1 : vector<1x128xf32> to vector<24x128xf32>
    %3 = arith.mulf %0, %2 : vector<24x128xf32>
    %c0_3 = arith.constant 0 : index
    %c0_4 = arith.constant 0 : index
    %4 = vector.load %arg3[%c0_3, %c0_4] : memref<1x128xf32, #tpu.memory_space<vmem>>, vector<1x128xf32>
    %5 = vector.broadcast %4 : vector<1x128xf32> to vector<24x128xf32>
    %6 = arith.addf %3, %5 : vector<24x128xf32>
    %cst = arith.constant 0.000000e+00 : f32
    %7 = vector.broadcast %cst : f32 to vector<24x128xf32>
    %8 = arith.cmpf oge, %6, %7 : vector<24x128xf32>
    %cst_5 = arith.constant 2.000000e-01 : f32
    %9 = vector.broadcast %cst_5 : f32 to vector<24x128xf32>
    %10 = arith.mulf %9, %6 : vector<24x128xf32>
    %11 = arith.select %8, %6, %10 : vector<24x128xi1>, vector<24x128xf32>
    %12 = arith.truncf %11 : vector<24x128xf32> to vector<24x128xbf16>
    %c0_6 = arith.constant 0 : index
    %c0_7 = arith.constant 0 : index
    %13 = vector.load %arg4[%c0_6, %c0_7] : memref<24x128xbf16, #tpu.memory_space<vmem>>, vector<24x128xbf16>
    tpu.vector_store %arg4[%c0_6, %c0_7], %12 {strides = array<i32>} : memref<24x128xbf16, #tpu.memory_space<vmem>>, vector<24x128xbf16>,
    return
  }
  func.func @transform_0(%arg0: i32) -> (i32, i32) {
    %c0_i32 = arith.constant 0 : i32
    %c0_i32_0 = arith.constant 0 : i32
    return %arg0, %c0_i32 : i32, i32
  }
  func.func @transform_1(%arg0: i32) -> (i32, i32) {
    %c0_i32 = arith.constant 0 : i32
    %c0_i32_0 = arith.constant 0 : i32
    %c0_i32_1 = arith.constant 0 : i32
    return %c0_i32, %c0_i32_0 : i32, i32
  }
  func.func @transform_2(%arg0: i32) -> (i32, i32) {
    %c0_i32 = arith.constant 0 : i32
    %c0_i32_0 = arith.constant 0 : i32
    %c0_i32_1 = arith.constant 0 : i32
    return %c0_i32, %c0_i32_0 : i32, i32
  }
  func.func @transform_3(%arg0: i32) -> (i32, i32) {
    %c0_i32 = arith.constant 0 : i32
    %c0_i32_0 = arith.constant 0 : i32
    return %arg0, %c0_i32 : i32, i32
  }
}

module attributes {stable_mosaic.version = 11 : i64} {
  func.func @_gemm_bias_act_kernel(%arg0: i32, %arg1: i32, %arg2: memref<8x2048xbf16, #tpu.memory_space<vmem>>, %arg3: memref<2048x128xbf16, #tpu.memory_space<vmem>>, %arg4: memref<1x128xf32, #tpu.memory_space<vmem>>, %arg5: memref<8x128xf32, #tpu.memory_space<vmem>>) attributes {dimension_semantics = [#tpu.dimension_semantics<parallel>, #tpu.dimension_semantics<parallel>], iteration_bounds = array<i64: 1, 1>, scalar_prefetch = 0 : i64, scratch_operands = 0 : i64, tpu.core_type = #tpu.core_type<tc>, window_params = [{transform_indices = @transform_0, window_bounds = array<i64: 8, 2048>}, {transform_indices = @transform_1, window_bounds = array<i64: 2048, 128>}, {transform_indices = @transform_2, window_bounds = array<i64: 1, 128>}, {transform_indices = @transform_3, window_bounds = array<i64: 8, 128>}]} {
    %c0 = arith.constant 0 : index
    %c0_0 = arith.constant 0 : index
    %0 = vector.load %arg2[%c0, %c0_0] : memref<8x2048xbf16, #tpu.memory_space<vmem>>, vector<8x2048xbf16>
    %c0_1 = arith.constant 0 : index
    %c0_2 = arith.constant 0 : index
    %1 = vector.load %arg3[%c0_1, %c0_2] : memref<2048x128xbf16, #tpu.memory_space<vmem>>, vector<2048x128xbf16>
    %cst = arith.constant dense<0.000000e+00> : vector<8x128xf32>
    %2 = tpu.matmul %0, %1, %cst {dimension_numbers = #tpu.dot_dimension_numbers<[1], [0], [0], [1], [0, 0, 1, 1], [], []>} : vector<8x2048xbf16>, vector<2048x128xbf16>, vector<8x128xf32> -> vector<8x128xf32>
    %c0_3 = arith.constant 0 : index
    %c0_4 = arith.constant 0 : index
    %3 = vector.load %arg4[%c0_3, %c0_4] : memref<1x128xf32, #tpu.memory_space<vmem>>, vector<1x128xf32>
    %4 = vector.broadcast %3 : vector<1x128xf32> to vector<8x128xf32>
    %5 = arith.addf %2, %4 : vector<8x128xf32>
    %c0_5 = arith.constant 0 : index
    %c0_6 = arith.constant 0 : index
    %6 = vector.load %arg5[%c0_5, %c0_6] : memref<8x128xf32, #tpu.memory_space<vmem>>, vector<8x128xf32>
    tpu.vector_store %arg5[%c0_5, %c0_6], %5 {strides = array<i32>} : memref<8x128xf32, #tpu.memory_space<vmem>>, vector<8x128xf32>,
    return
  }
  func.func @transform_0(%arg0: i32, %arg1: i32) -> (i32, i32) {
    %c0_i32 = arith.constant 0 : i32
    %c0_i32_0 = arith.constant 0 : i32
    return %arg0, %c0_i32 : i32, i32
  }
  func.func @transform_1(%arg0: i32, %arg1: i32) -> (i32, i32) {
    %c0_i32 = arith.constant 0 : i32
    %c0_i32_0 = arith.constant 0 : i32
    return %c0_i32, %arg1 : i32, i32
  }
  func.func @transform_2(%arg0: i32, %arg1: i32) -> (i32, i32) {
    %c0_i32 = arith.constant 0 : i32
    %c0_i32_0 = arith.constant 0 : i32
    return %c0_i32, %arg1 : i32, i32
  }
  func.func @transform_3(%arg0: i32, %arg1: i32) -> (i32, i32) {
    %c0_i32 = arith.constant 0 : i32
    return %arg0, %arg1 : i32, i32
  }
}

</mosaic_0001>

<llo_original>
// kernel: _lambda_.8
$region0: #{_lambda_.8}
  #allocation0 [shape = 'u32[]', space=smem, size = 0x4, offset = 0x4, fixed_abs, tag = 'smem constant byte address 0x4 - core index']
  #allocation1 [shape = 'u32[72,128]{1,0:T(1,128)}', space=vmem, size = 0x9000, scoped, tag = 'internal scratch']
  %s0 = inlined_call_operand.vmem [shape: bf16[512,128], index: 0, kind: input, shape index: {}]
  %s1 = inlined_call_operand.vmem [shape: bf16[128,128], index: 1, kind: input, shape index: {}]
  %s2 = inlined_call_operand.vmem [shape: f32[1,128], index: 2, kind: input, shape index: {}]
  %s3 = inlined_call_operand.vmem [shape: bf16[512,128], index: 3, kind: output, shape index: {}]
  %s4 = sld [smem:[#allocation0]]
  $region22: #{_lambda_.8} parent=0
    _
  %s6 = ssub.s32 1, %s4
  %s7 = scalar_select 0, %s6, %s4
  // Predicated region
  $region2: #{_lambda_.8} parent=0 // pred_check
    _
  $region3: #{_lambda_.8} parent=0 // pred_check_branch
    %9 = sbr.rel (0) target = $region5
  $region4: #{_lambda_.8} parent=0 // pred_region
    _
  $region5: #{_lambda_.8} parent=0 // pred_fallthru
    _
  // Predicated region
  $region6: #{_lambda_.8} parent=0 // pred_check
    _
  $region7: #{_lambda_.8} parent=0 // pred_check_branch
    %11 = sbr.rel (0) target = $region9
  $region8: #{_lambda_.8} parent=0 // pred_region
    _
  $region9: #{_lambda_.8} parent=0 // pred_fallthru
    _
  // Predicated region
  $region10: #{_lambda_.8} parent=0 // pred_check
    _
  $region11: #{_lambda_.8} parent=0 // pred_check_branch
    %13 = sbr.rel (0) target = $region13
  $region12: #{_lambda_.8} parent=0 // pred_region
    _
  $region13: #{_lambda_.8} parent=0 // pred_fallthru
    _
  %v14 = vld [vmem:[%s0] sm:$0xf]
  %v15 = vld [vmem:[%s0 + $0x4] sm:$0xf]
  %v16 = vld [vmem:[%s0 + $0x8] sm:$0xf]
  %v17 = vld [vmem:[%s0 + $0xc] sm:$0xf]
  %v18 = vld [vmem:[%s0 + $0x10] sm:$0xf]
  %v19 = vld [vmem:[%s0 + $0x14] sm:$0xf]
  %v20 = vld [vmem:[%s0 + $0x18] sm:$0xf]
  %v21 = vld [vmem:[%s0 + $0x1c] sm:$0xf]
  %v22 = vld [vmem:[%s0 + $0x20] sm:$0xf]
  %v23 = vld [vmem:[%s0 + $0x24] sm:$0xf]
  %v24 = vld [vmem:[%s0 + $0x28] sm:$0xf]
  %v25 = vld [vmem:[%s0 + $0x2c] sm:$0xf]
  %v26 = vld [vmem:[%s0 + $0x30] sm:$0xf]
  %v27 = vld [vmem:[%s0 + $0x34] sm:$0xf]
  %v28 = vld [vmem:[%s0 + $0x38] sm:$0xf]
  %v29 = vld [vmem:[%s0 + $0x3c] sm:$0xf]
  %v30 = vld [vmem:[%s0 + $0x40] sm:$0xf]
  %v31 = vld [vmem:[%s0 + $0x44] sm:$0xf]
  %v32 = vld [vmem:[%s0 + $0x48] sm:$0xf]
  %v33 = vld [vmem:[%s0 + $0x4c] sm:$0xf]
  %v34 = vld [vmem:[%s0 + $0x50] sm:$0xf]
  %v35 = vld [vmem:[%s0 + $0x54] sm:$0xf]
  %v36 = vld [vmem:[%s0 + $0x58] sm:$0xf]
  %v37 = vld [vmem:[%s0 + $0x5c] sm:$0xf]
  %v38 = vld [vmem:[%s0 + $0x60] sm:$0xf]
  %v39 = vld [vmem:[%s0 + $0x64] sm:$0xf]
  %v40 = vld [vmem:[%s0 + $0x68] sm:$0xf]
  %v41 = vld [vmem:[%s0 + $0x6c] sm:$0xf]
  %v42 = vld [vmem:[%s0 + $0x70] sm:$0xf]
  %v43 = vld [vmem:[%s0 + $0x74] sm:$0xf]
  %v44 = vld [vmem:[%s0 + $0x78] sm:$0xf]
  %v45 = vld [vmem:[%s0 + $0x7c] sm:$0xf]
  %v46 = vld [vmem:[%s0 + $0x80] sm:$0xf]
  %v47 = vld [vmem:[%s0 + $0x84] sm:$0xf]
  %v48 = vld [vmem:[%s0 + $0x88] sm:$0xf]
  %v49 = vld [vmem:[%s0 + $0x8c] sm:$0xf]
  %v50 = vld [vmem:[%s0 + $0x90] sm:$0xf]
  %v51 = vld [vmem:[%s0 + $0x94] sm:$0xf]
  %v52 = vld [vmem:[%s0 + $0x98] sm:$0xf]
  %v53 = vld [vmem:[%s0 + $0x9c] sm:$0xf]
  %v54 = vld [vmem:[%s0 + $0xa0] sm:$0xf]
  %v55 = vld [vmem:[%s0 + $0xa4] sm:$0xf]
  %v56 = vld [vmem:[%s0 + $0xa8] sm:$0xf]
  %v57 = vld [vmem:[%s0 + $0xac] sm:$0xf]
  %v58 = vld [vmem:[%s0 + $0xb0] sm:$0xf]
  %v59 = vld [vmem:[%s0 + $0xb4] sm:$0xf]
  %v60 = vld [vmem:[%s0 + $0xb8] sm:$0xf]
  %v61 = vld [vmem:[%s0 + $0xbc] sm:$0xf]
  %v62 = vld [vmem:[%s0 + $0xc0] sm:$0xf]
  %v63 = vld [vmem:[%s0 + $0xc4] sm:$0xf]
  %v64 = vld [vmem:[%s0 + $0xc8] sm:$0xf]
  %v65 = vld [vmem:[%s0 + $0xcc] sm:$0xf]
  %v66 = vld [vmem:[%s0 + $0xd0] sm:$0xf]
  %v67 = vld [vmem:[%s0 + $0xd4] sm:$0xf]
  %v68 = vld [vmem:[%s0 + $0xd8] sm:$0xf]
  %v69 = vld [vmem:[%s0 + $0xdc] sm:$0xf]
  %v70 = vld [vmem:[%s0 + $0xe0] sm:$0xf]
  %v71 = vld [vmem:[%s0 + $0xe4] sm:$0xf]
  %v72 = vld [vmem:[%s0 + $0xe8] sm:$0xf]
  %v73 = vld [vmem:[%s0 + $0xec] sm:$0xf]
  %v74 = vld [vmem:[%s0 + $0xf0] sm:$0xf]
  %v75 = vld [vmem:[%s0 + $0xf4] sm:$0xf]
  %v76 = vld [vmem:[%s0 + $0xf8] sm:$0xf]
  %v77 = vld [vmem:[%s0 + $0xfc] sm:$0xf]
  %v78 = vld [vmem:[%s1] sm:$0xf]
  %v79 = vld [vmem:[%s1 + $0x4] sm:$0xf]
  %v80 = vld [vmem:[%s1 + $0x8] sm:$0xf]
  %v81 = vld [vmem:[%s1 + $0xc] sm:$0xf]
  %v82 = vld [vmem:[%s1 + $0x10] sm:$0xf]
  %v83 = vld [vmem:[%s1 + $0x14] sm:$0xf]
  %v84 = vld [vmem:[%s1 + $0x18] sm:$0xf]
  %v85 = vld [vmem:[%s1 + $0x1c] sm:$0xf]
  %v86 = vld [vmem:[%s1 + $0x20] sm:$0xf]
  %v87 = vld [vmem:[%s1 + $0x24] sm:$0xf]
  %v88 = vld [vmem:[%s1 + $0x28] sm:$0xf]
  %v89 = vld [vmem:[%s1 + $0x2c] sm:$0xf]
  %v90 = vld [vmem:[%s1 + $0x30] sm:$0xf]
  %v91 = vld [vmem:[%s1 + $0x34] sm:$0xf]
  %v92 = vld [vmem:[%s1 + $0x38] sm:$0xf]
  %v93 = vld [vmem:[%s1 + $0x3c] sm:$0xf]
  %v94 = vld [vmem:[%s2] sm:$0x1]
  %v96 = vperm.slane %v94, 0
  %v162 = vunpack.c.l.b16 %v14
  %v163 = vunpack.c.l.b16 %v15
  %v164 = vunpack.c.l.b16 %v16
  %v165 = vunpack.c.l.b16 %v17
  %v166 = vunpack.c.l.b16 %v18
  %v167 = vunpack.c.l.b16 %v19
  %v168 = vunpack.c.l.b16 %v20
  %v169 = vunpack.c.l.b16 %v21
  %v170 = vunpack.c.l.b16 %v22
  %v171 = vunpack.c.l.b16 %v23
  %v172 = vunpack.c.l.b16 %v24
  %v173 = vunpack.c.l.b16 %v25
  %v174 = vunpack.c.l.b16 %v26
  %v175 = vunpack.c.l.b16 %v27
  %v176 = vunpack.c.l.b16 %v28
  %v177 = vunpack.c.l.b16 %v29
  %v178 = vunpack.c.l.b16 %v30
  %v179 = vunpack.c.l.b16 %v31
  %v180 = vunpack.c.l.b16 %v32
  %v181 = vunpack.c.l.b16 %v33
  %v182 = vunpack.c.l.b16 %v34
  %v183 = vunpack.c.l.b16 %v35
  %v184 = vunpack.c.l.b16 %v36
  %v185 = vunpack.c.l.b16 %v37
  %v186 = vunpack.c.l.b16 %v38
  %v187 = vunpack.c.l.b16 %v39
  %v188 = vunpack.c.l.b16 %v40
  %v189 = vunpack.c.l.b16 %v41
  %v190 = vunpack.c.l.b16 %v42
  %v191 = vunpack.c.l.b16 %v43
  %v192 = vunpack.c.l.b16 %v44
  %v193 = vunpack.c.l.b16 %v45
  %v194 = vunpack.c.l.b16 %v46
  %v195 = vunpack.c.l.b16 %v47
  %v196 = vunpack.c.l.b16 %v48
  %v197 = vunpack.c.l.b16 %v49
  %v198 = vunpack.c.l.b16 %v50
  %v199 = vunpack.c.l.b16 %v51
  %v200 = vunpack.c.l.b16 %v52
  %v201 = vunpack.c.l.b16 %v53
  %v202 = vunpack.c.l.b16 %v54
  %v203 = vunpack.c.l.b16 %v55
  %v204 = vunpack.c.l.b16 %v56
  %v205 = vunpack.c.l.b16 %v57
  %v206 = vunpack.c.l.b16 %v58
  %v207 = vunpack.c.l.b16 %v59
  %v208 = vunpack.c.l.b16 %v60
  %v209 = vunpack.c.l.b16 %v61
  %v210 = vunpack.c.l.b16 %v62
  %v211 = vunpack.c.l.b16 %v63
  %v212 = vunpack.c.l.b16 %v64
  %v213 = vunpack.c.l.b16 %v65
  %v214 = vunpack.c.l.b16 %v66
  %v215 = vunpack.c.l.b16 %v67
  %v216 = vunpack.c.l.b16 %v68
  %v217 = vunpack.c.l.b16 %v69
  %v218 = vunpack.c.l.b16 %v70
  %v219 = vunpack.c.l.b16 %v71
  %v220 = vunpack.c.l.b16 %v72
  %v221 = vunpack.c.l.b16 %v73
  %v222 = vunpack.c.l.b16 %v74
  %v223 = vunpack.c.l.b16 %v75
  %v224 = vunpack.c.l.b16 %v76
  %v225 = vunpack.c.l.b16 %v77
  %v226 = vpack.c.b16 %v163, %v162
  %v227 = vpack.c.b16 %v165, %v164
  %v228 = vpack.c.b16 %v167, %v166
  %v229 = vpack.c.b16 %v169, %v168
  %v230 = vpack.c.b16 %v171, %v170
  %v231 = vpack.c.b16 %v173, %v172
  %v232 = vpack.c.b16 %v175, %v174
  %v233 = vpack.c.b16 %v177, %v176
  %v234 = vpack.c.b16 %v179, %v178
  %v235 = vpack.c.b16 %v181, %v180
  %v236 = vpack.c.b16 %v183, %v182
  %v237 = vpack.c.b16 %v185, %v184
  %v238 = vpack.c.b16 %v187, %v186
  %v239 = vpack.c.b16 %v189, %v188
  %v240 = vpack.c.b16 %v191, %v190
  %v241 = vpack.c.b16 %v193, %v192
  %v242 = vpack.c.b16 %v195, %v194
  %v243 = vpack.c.b16 %v197, %v196
  %v244 = vpack.c.b16 %v199, %v198
  %v245 = vpack.c.b16 %v201, %v200
  %v246 = vpack.c.b16 %v203, %v202
  %v247 = vpack.c.b16 %v205, %v204
  %v248 = vpack.c.b16 %v207, %v206
  %v249 = vpack.c.b16 %v209, %v208
  %v250 = vpack.c.b16 %v211, %v210
  %v251 = vpack.c.b16 %v213, %v212
  %v252 = vpack.c.b16 %v215, %v214
  %v253 = vpack.c.b16 %v217, %v216
  %v254 = vpack.c.b16 %v219, %v218
  %v255 = vpack.c.b16 %v221, %v220
  %v256 = vpack.c.b16 %v223, %v222
  %v257 = vpack.c.b16 %v225, %v224
  %v306 = vunpack.c.l.b16 %v78
  %v307 = vunpack.c.l.b16 %v79
  %v308 = vunpack.c.l.b16 %v80
  %v309 = vunpack.c.l.b16 %v81
  %v310 = vunpack.c.l.b16 %v82
  %v311 = vunpack.c.l.b16 %v83
  %v312 = vunpack.c.l.b16 %v84
  %v313 = vunpack.c.l.b16 %v85
  %v314 = vunpack.c.l.b16 %v86
  %v315 = vunpack.c.l.b16 %v87
  %v316 = vunpack.c.l.b16 %v88
  %v317 = vunpack.c.l.b16 %v89
  %v318 = vunpack.c.l.b16 %v90
  %v319 = vunpack.c.l.b16 %v91
  %v320 = vunpack.c.l.b16 %v92
  %v321 = vunpack.c.l.b16 %v93
  %v322 = vpack.c.b16 %v307, %v306
  %v323 = vpack.c.b16 %v309, %v308
  %v324 = vpack.c.b16 %v311, %v310
  %v325 = vpack.c.b16 %v313, %v312
  %v326 = vpack.c.b16 %v315, %v314
  %v327 = vpack.c.b16 %v317, %v316
  %v328 = vpack.c.b16 %v319, %v318
  %v329 = vpack.c.b16 %v321, %v320
  %338 = vmatpush.bf16.msra.mxu0 %v329
  %339 = vmatpush.bf16.msra.mxu0 %v328
  %340 = vmatpush.bf16.msra.mxu0 %v327
  %341 = vmatpush.bf16.msra.mxu0 %v326
  %342 = vmatpush.bf16.msra.mxu0 %v325
  %343 = vmatpush.bf16.msra.mxu0 %v324
  %344 = vmatpush.bf16.msra.mxu0 %v323
  %345 = vmatpush.bf16.msra.mxu0 %v322
  %346 = vmatmul.bf16.gmra.mxu0 %v226
  %v347 = vpop.f32.mrf.mxu0
  %v348 = vadd.f32 %v96, %v347
  %v349 = vpop.f32.mrf.mxu0
  %v350 = vadd.f32 %v96, %v349
  %351 = vmatmul.bf16.gmra.mxu0 %v227
  %v352 = vpop.f32.mrf.mxu0
  %v353 = vadd.f32 %v96, %v352
  %v354 = vpop.f32.mrf.mxu0
  %v355 = vadd.f32 %v96, %v354
  %356 = vmatmul.bf16.gmra.mxu0 %v228
  %v357 = vpop.f32.mrf.mxu0
  %v358 = vadd.f32 %v96, %v357
  %v359 = vpop.f32.mrf.mxu0
  %v360 = vadd.f32 %v96, %v359
  %361 = vmatmul.bf16.gmra.mxu0 %v229
  %v362 = vpop.f32.mrf.mxu0
  %v363 = vadd.f32 %v96, %v362
  %v364 = vpop.f32.mrf.mxu0
  %v365 = vadd.f32 %v96, %v364
  %366 = vmatmul.bf16.gmra.mxu0 %v230
  %v367 = vpop.f32.mrf.mxu0
  %v368 = vadd.f32 %v96, %v367
  %v369 = vpop.f32.mrf.mxu0
  %v370 = vadd.f32 %v96, %v369
  %371 = vmatmul.bf16.gmra.mxu0 %v231
  %v372 = vpop.f32.mrf.mxu0
  %v373 = vadd.f32 %v96, %v372
  %v374 = vpop.f32.mrf.mxu0
  %v375 = vadd.f32 %v96, %v374
  %376 = vmatmul.bf16.gmra.mxu0 %v232
  %v377 = vpop.f32.mrf.mxu0
  %v378 = vadd.f32 %v96, %v377
  %v379 = vpop.f32.mrf.mxu0
  %v380 = vadd.f32 %v96, %v379
  %381 = vmatmul.bf16.gmra.mxu0 %v233
  %v382 = vpop.f32.mrf.mxu0
  %v383 = vadd.f32 %v96, %v382
  %v384 = vpop.f32.mrf.mxu0
  %v385 = vadd.f32 %v96, %v384
  %386 = vmatmul.bf16.gmra.mxu0 %v234
  %v387 = vpop.f32.mrf.mxu0
  %v388 = vadd.f32 %v96, %v387
  %v389 = vpop.f32.mrf.mxu0
  %v390 = vadd.f32 %v96, %v389
  %391 = vmatmul.bf16.gmra.mxu0 %v235
  %v392 = vpop.f32.mrf.mxu0
  %v393 = vadd.f32 %v96, %v392
  %v394 = vpop.f32.mrf.mxu0
  %v395 = vadd.f32 %v96, %v394
  %396 = vmatmul.bf16.gmra.mxu0 %v236
  %v397 = vpop.f32.mrf.mxu0
  %v398 = vadd.f32 %v96, %v397
  %v399 = vpop.f32.mrf.mxu0
  %v400 = vadd.f32 %v96, %v399
  %401 = vmatmul.bf16.gmra.mxu0 %v237
  %v402 = vpop.f32.mrf.mxu0
  %v403 = vadd.f32 %v96, %v402
  %v404 = vpop.f32.mrf.mxu0
  %v405 = vadd.f32 %v96, %v404
  %406 = vmatmul.bf16.gmra.mxu0 %v238
  %v407 = vpop.f32.mrf.mxu0
  %v408 = vadd.f32 %v96, %v407
  %v409 = vpop.f32.mrf.mxu0
  %v410 = vadd.f32 %v96, %v409
  %411 = vmatmul.bf16.gmra.mxu0 %v239
  %v412 = vpop.f32.mrf.mxu0
  %v413 = vadd.f32 %v96, %v412
  %v414 = vpop.f32.mrf.mxu0
  %v415 = vadd.f32 %v96, %v414
  %416 = vmatmul.bf16.gmra.mxu0 %v240
  %v417 = vpop.f32.mrf.mxu0
  %v418 = vadd.f32 %v96, %v417
  %v419 = vpop.f32.mrf.mxu0
  %v420 = vadd.f32 %v96, %v419
  %421 = vmatmul.bf16.gmra.mxu0 %v241
  %v422 = vpop.f32.mrf.mxu0
  %v423 = vadd.f32 %v96, %v422
  %v424 = vpop.f32.mrf.mxu0
  %v425 = vadd.f32 %v96, %v424
  %426 = vmatmul.bf16.gmra.mxu0 %v242
  %v427 = vpop.f32.mrf.mxu0
  %v428 = vadd.f32 %v96, %v427
  %v429 = vpop.f32.mrf.mxu0
  %v430 = vadd.f32 %v96, %v429
  %431 = vmatmul.bf16.gmra.mxu0 %v243
  %v432 = vpop.f32.mrf.mxu0
  %v433 = vadd.f32 %v96, %v432
  %v434 = vpop.f32.mrf.mxu0
  %v435 = vadd.f32 %v96, %v434
  %436 = vmatmul.bf16.gmra.mxu0 %v244
  %v437 = vpop.f32.mrf.mxu0
  %v438 = vadd.f32 %v96, %v437
  %v439 = vpop.f32.mrf.mxu0
  %v440 = vadd.f32 %v96, %v439
  %441 = vmatmul.bf16.gmra.mxu0 %v245
  %v442 = vpop.f32.mrf.mxu0
  %v443 = vadd.f32 %v96, %v442
  %v444 = vpop.f32.mrf.mxu0
  %v445 = vadd.f32 %v96, %v444
  %446 = vmatmul.bf16.gmra.mxu0 %v246
  %v447 = vpop.f32.mrf.mxu0
  %v448 = vadd.f32 %v96, %v447
  %v449 = vpop.f32.mrf.mxu0
  %v450 = vadd.f32 %v96, %v449
  %451 = vmatmul.bf16.gmra.mxu0 %v247
  %v452 = vpop.f32.mrf.mxu0
  %v453 = vadd.f32 %v96, %v452
  %v454 = vpop.f32.mrf.mxu0
  %v455 = vadd.f32 %v96, %v454
  %456 = vmatmul.bf16.gmra.mxu0 %v248
  %v457 = vpop.f32.mrf.mxu0
  %v458 = vadd.f32 %v96, %v457
  %v459 = vpop.f32.mrf.mxu0
  %v460 = vadd.f32 %v96, %v459
  %461 = vmatmul.bf16.gmra.mxu0 %v249
  %v462 = vpop.f32.mrf.mxu0
  %v463 = vadd.f32 %v96, %v462
  %v464 = vpop.f32.mrf.mxu0
  %v465 = vadd.f32 %v96, %v464
  %466 = vmatmul.bf16.gmra.mxu0 %v250
  %v467 = vpop.f32.mrf.mxu0
  %v468 = vadd.f32 %v96, %v467
  %v469 = vpop.f32.mrf.mxu0
  %v470 = vadd.f32 %v96, %v469
  %471 = vmatmul.bf16.gmra.mxu0 %v251
  %v472 = vpop.f32.mrf.mxu0
  %v473 = vadd.f32 %v96, %v472
  %v474 = vpop.f32.mrf.mxu0
  %v475 = vadd.f32 %v96, %v474
  %476 = vmatmul.bf16.gmra.mxu0 %v252
  %v477 = vpop.f32.mrf.mxu0
  %v478 = vadd.f32 %v96, %v477
  %v479 = vpop.f32.mrf.mxu0
  %v480 = vadd.f32 %v96, %v479
  %481 = vmatmul.bf16.gmra.mxu0 %v253
  %v482 = vpop.f32.mrf.mxu0
  %v483 = vadd.f32 %v96, %v482
  %v484 = vpop.f32.mrf.mxu0
  %v485 = vadd.f32 %v96, %v484
  %486 = vmatmul.bf16.gmra.mxu0 %v254
  %v487 = vpop.f32.mrf.mxu0
  %v488 = vadd.f32 %v96, %v487
  %v489 = vpop.f32.mrf.mxu0
  %v490 = vadd.f32 %v96, %v489
  %491 = vmatmul.bf16.gmra.mxu0 %v255
  %v492 = vpop.f32.mrf.mxu0
  %v493 = vadd.f32 %v96, %v492
  %v494 = vpop.f32.mrf.mxu0
  %v495 = vadd.f32 %v96, %v494
  %496 = vmatmul.bf16.gmra.mxu0 %v256
  %v497 = vpop.f32.mrf.mxu0
  %v498 = vadd.f32 %v96, %v497
  %v499 = vpop.f32.mrf.mxu0
  %v500 = vadd.f32 %v96, %v499
  %501 = vmatmul.bf16.gmra.mxu0 %v257
  %v502 = vpop.f32.mrf.mxu0
  %v503 = vadd.f32 %v96, %v502
  %v504 = vpop.f32.mrf.mxu0
  %v505 = vadd.f32 %v96, %v504
  %506 = vdwg.mxu0
  %vm507 = vcmp.ge.f32.partialorder %v348, 0.0
  %vm508 = vcmp.ge.f32.partialorder %v350, 0.0
  %vm509 = vcmp.ge.f32.partialorder %v353, 0.0
  %vm510 = vcmp.ge.f32.partialorder %v355, 0.0
  %vm511 = vcmp.ge.f32.partialorder %v358, 0.0
  %vm512 = vcmp.ge.f32.partialorder %v360, 0.0
  %vm513 = vcmp.ge.f32.partialorder %v363, 0.0
  %vm514 = vcmp.ge.f32.partialorder %v365, 0.0
  %vm515 = vcmp.ge.f32.partialorder %v368, 0.0
  %vm516 = vcmp.ge.f32.partialorder %v370, 0.0
  %vm517 = vcmp.ge.f32.partialorder %v373, 0.0
  %vm518 = vcmp.ge.f32.partialorder %v375, 0.0
  %vm519 = vcmp.ge.f32.partialorder %v378, 0.0
  %vm520 = vcmp.ge.f32.partialorder %v380, 0.0
  %vm521 = vcmp.ge.f32.partialorder %v383, 0.0
  %vm522 = vcmp.ge.f32.partialorder %v385, 0.0
  %vm523 = vcmp.ge.f32.partialorder %v388, 0.0
  %vm524 = vcmp.ge.f32.partialorder %v390, 0.0
  %vm525 = vcmp.ge.f32.partialorder %v393, 0.0
  %vm526 = vcmp.ge.f32.partialorder %v395, 0.0
  %vm527 = vcmp.ge.f32.partialorder %v398, 0.0
  %vm528 = vcmp.ge.f32.partialorder %v400, 0.0
  %vm529 = vcmp.ge.f32.partialorder %v403, 0.0
  %vm530 = vcmp.ge.f32.partialorder %v405, 0.0
  %vm531 = vcmp.ge.f32.partialorder %v408, 0.0
  %vm532 = vcmp.ge.f32.partialorder %v410, 0.0
  %vm533 = vcmp.ge.f32.partialorder %v413, 0.0
  %vm534 = vcmp.ge.f32.partialorder %v415, 0.0
  %vm535 = vcmp.ge.f32.partialorder %v418, 0.0
  %vm536 = vcmp.ge.f32.partialorder %v420, 0.0
  %vm537 = vcmp.ge.f32.partialorder %v423, 0.0
  %vm538 = vcmp.ge.f32.partialorder %v425, 0.0
  %vm539 = vcmp.ge.f32.partialorder %v428, 0.0
  %vm540 = vcmp.ge.f32.partialorder %v430, 0.0
  %vm541 = vcmp.ge.f32.partialorder %v433, 0.0
  %vm542 = vcmp.ge.f32.partialorder %v435, 0.0
  %vm543 = vcmp.ge.f32.partialorder %v438, 0.0
  %vm544 = vcmp.ge.f32.partialorder %v440, 0.0
  %vm545 = vcmp.ge.f32.partialorder %v443, 0.0
  %vm546 = vcmp.ge.f32.partialorder %v445, 0.0
  %vm547 = vcmp.ge.f32.partialorder %v448, 0.0
  %vm548 = vcmp.ge.f32.partialorder %v450, 0.0
  %vm549 = vcmp.ge.f32.partialorder %v453, 0.0
  %vm550 = vcmp.ge.f32.partialorder %v455, 0.0
  %vm551 = vcmp.ge.f32.partialorder %v458, 0.0
  %vm552 = vcmp.ge.f32.partialorder %v460, 0.0
  %vm553 = vcmp.ge.f32.partialorder %v463, 0.0
  %vm554 = vcmp.ge.f32.partialorder %v465, 0.0
  %vm555 = vcmp.ge.f32.partialorder %v468, 0.0
  %vm556 = vcmp.ge.f32.partialorder %v470, 0.0
  %vm557 = vcmp.ge.f32.partialorder %v473, 0.0
  %vm558 = vcmp.ge.f32.partialorder %v475, 0.0
  %vm559 = vcmp.ge.f32.partialorder %v478, 0.0
  %vm560 = vcmp.ge.f32.partialorder %v480, 0.0
  %vm561 = vcmp.ge.f32.partialorder %v483, 0.0
  %vm562 = vcmp.ge.f32.partialorder %v485, 0.0
  %vm563 = vcmp.ge.f32.partialorder %v488, 0.0
  %vm564 = vcmp.ge.f32.partialorder %v490, 0.0
  %vm565 = vcmp.ge.f32.partialorder %v493, 0.0
  %vm566 = vcmp.ge.f32.partialorder %v495, 0.0
  %vm567 = vcmp.ge.f32.partialorder %v498, 0.0
  %vm568 = vcmp.ge.f32.partialorder %v500, 0.0
  %vm569 = vcmp.ge.f32.partialorder %v503, 0.0
  %vm570 = vcmp.ge.f32.partialorder %v505, 0.0
  %v571 = vmul.f32 %v348, 0.2
  %v572 = vmul.f32 %v350, 0.2
  %v573 = vmul.f32 %v353, 0.2
  %v574 = vmul.f32 %v355, 0.2
  %v575 = vmul.f32 %v358, 0.2
  %v576 = vmul.f32 %v360, 0.2
  %v577 = vmul.f32 %v363, 0.2
  %v578 = vmul.f32 %v365, 0.2
  %v579 = vmul.f32 %v368, 0.2
  %v580 = vmul.f32 %v370, 0.2
  %v581 = vmul.f32 %v373, 0.2
  %v582 = vmul.f32 %v375, 0.2
  %v583 = vmul.f32 %v378, 0.2
  %v584 = vmul.f32 %v380, 0.2
  %v585 = vmul.f32 %v383, 0.2
  %v586 = vmul.f32 %v385, 0.2
  %v587 = vmul.f32 %v388, 0.2
  %v588 = vmul.f32 %v390, 0.2
  %v589 = vmul.f32 %v393, 0.2
  %v590 = vmul.f32 %v395, 0.2
  %v591 = vmul.f32 %v398, 0.2
  %v592 = vmul.f32 %v400, 0.2
  %v593 = vmul.f32 %v403, 0.2
  %v594 = vmul.f32 %v405, 0.2
  %v595 = vmul.f32 %v408, 0.2
  %v596 = vmul.f32 %v410, 0.2
  %v597 = vmul.f32 %v413, 0.2
  %v598 = vmul.f32 %v415, 0.2
  %v599 = vmul.f32 %v418, 0.2
  %v600 = vmul.f32 %v420, 0.2
  %v601 = vmul.f32 %v423, 0.2
  %v602 = vmul.f32 %v425, 0.2
  %v603 = vmul.f32 %v428, 0.2
  %v604 = vmul.f32 %v430, 0.2
  %v605 = vmul.f32 %v433, 0.2
  %v606 = vmul.f32 %v435, 0.2
  %v607 = vmul.f32 %v438, 0.2
  %v608 = vmul.f32 %v440, 0.2
  %v609 = vmul.f32 %v443, 0.2
  %v610 = vmul.f32 %v445, 0.2
  %v611 = vmul.f32 %v448, 0.2
  %v612 = vmul.f32 %v450, 0.2
  %v613 = vmul.f32 %v453, 0.2
  %v614 = vmul.f32 %v455, 0.2
  %v615 = vmul.f32 %v458, 0.2
  %v616 = vmul.f32 %v460, 0.2
  %v617 = vmul.f32 %v463, 0.2
  %v618 = vmul.f32 %v465, 0.2
  %v619 = vmul.f32 %v468, 0.2
  %v620 = vmul.f32 %v470, 0.2
  %v621 = vmul.f32 %v473, 0.2
  %v622 = vmul.f32 %v475, 0.2
  %v623 = vmul.f32 %v478, 0.2
  %v624 = vmul.f32 %v480, 0.2
  %v625 = vmul.f32 %v483, 0.2
  %v626 = vmul.f32 %v485, 0.2
  %v627 = vmul.f32 %v488, 0.2
  %v628 = vmul.f32 %v490, 0.2
  %v629 = vmul.f32 %v493, 0.2
  %v630 = vmul.f32 %v495, 0.2
  %v631 = vmul.f32 %v498, 0.2
  %v632 = vmul.f32 %v500, 0.2
  %v633 = vmul.f32 %v503, 0.2
  %v634 = vmul.f32 %v505, 0.2
  %v635 = vsel %vm507, %v348, %v571
  %v636 = vsel %vm508, %v350, %v572
  %v637 = vsel %vm509, %v353, %v573
  %v638 = vsel %vm510, %v355, %v574
  %v639 = vsel %vm511, %v358, %v575
  %v640 = vsel %vm512, %v360, %v576
  %v641 = vsel %vm513, %v363, %v577
  %v642 = vsel %vm514, %v365, %v578
  %v643 = vsel %vm515, %v368, %v579
  %v644 = vsel %vm516, %v370, %v580
  %v645 = vsel %vm517, %v373, %v581
  %v646 = vsel %vm518, %v375, %v582
  %v647 = vsel %vm519, %v378, %v583
  %v648 = vsel %vm520, %v380, %v584
  %v649 = vsel %vm521, %v383, %v585
  %v650 = vsel %vm522, %v385, %v586
  %v651 = vsel %vm523, %v388, %v587
  %v652 = vsel %vm524, %v390, %v588
  %v653 = vsel %vm525, %v393, %v589
  %v654 = vsel %vm526, %v395, %v590
  %v655 = vsel %vm527, %v398, %v591
  %v656 = vsel %vm528, %v400, %v592
  %v657 = vsel %vm529, %v403, %v593
  %v658 = vsel %vm530, %v405, %v594
  %v659 = vsel %vm531, %v408, %v595
  %v660 = vsel %vm532, %v410, %v596
  %v661 = vsel %vm533, %v413, %v597
  %v662 = vsel %vm534, %v415, %v598
  %v663 = vsel %vm535, %v418, %v599
  %v664 = vsel %vm536, %v420, %v600
  %v665 = vsel %vm537, %v423, %v601
  %v666 = vsel %vm538, %v425, %v602
  %v667 = vsel %vm539, %v428, %v603
  %v668 = vsel %vm540, %v430, %v604
  %v669 = vsel %vm541, %v433, %v605
  %v670 = vsel %vm542, %v435, %v606
  %v671 = vsel %vm543, %v438, %v607
  %v672 = vsel %vm544, %v440, %v608
  %v673 = vsel %vm545, %v443, %v609
  %v674 = vsel %vm546, %v445, %v610
  %v675 = vsel %vm547, %v448, %v611
  %v676 = vsel %vm548, %v450, %v612
  %v677 = vsel %vm549, %v453, %v613
  %v678 = vsel %vm550, %v455, %v614
  %v679 = vsel %vm551, %v458, %v615
  %v680 = vsel %vm552, %v460, %v616
  %v681 = vsel %vm553, %v463, %v617
  %v682 = vsel %vm554, %v465, %v618
  %v683 = vsel %vm555, %v468, %v619
  %v684 = vsel %vm556, %v470, %v620
  %v685 = vsel %vm557, %v473, %v621
  %v686 = vsel %vm558, %v475, %v622
  %v687 = vsel %vm559, %v478, %v623
  %v688 = vsel %vm560, %v480, %v624
  %v689 = vsel %vm561, %v483, %v625
  %v690 = vsel %vm562, %v485, %v626
  %v691 = vsel %vm563, %v488, %v627
  %v692 = vsel %vm564, %v490, %v628
  %v693 = vsel %vm565, %v493, %v629
  %v694 = vsel %vm566, %v495, %v630
  %v695 = vsel %vm567, %v498, %v631
  %v696 = vsel %vm568, %v500, %v632
  %v697 = vsel %vm569, %v503, %v633
  %v698 = vsel %vm570, %v505, %v634
  %v699 = vpack.c.bf16 %v635, %v635
  %v700 = vpack.c.bf16 %v636, %v636
  %v701 = vpack.c.bf16 %v637, %v637
  %v702 = vpack.c.bf16 %v638, %v638
  %v703 = vpack.c.bf16 %v639, %v639
  %v704 = vpack.c.bf16 %v640, %v640
  %v705 = vpack.c.bf16 %v641, %v641
  %v706 = vpack.c.bf16 %v642, %v642
  %v707 = vpack.c.bf16 %v643, %v643
  %v708 = vpack.c.bf16 %v644, %v644
  %v709 = vpack.c.bf16 %v645, %v645
  %v710 = vpack.c.bf16 %v646, %v646
  %v711 = vpack.c.bf16 %v647, %v647
  %v712 = vpack.c.bf16 %v648, %v648
  %v713 = vpack.c.bf16 %v649, %v649
  %v714 = vpack.c.bf16 %v650, %v650
  %v715 = vpack.c.bf16 %v651, %v651
  %v716 = vpack.c.bf16 %v652, %v652
  %v717 = vpack.c.bf16 %v653, %v653
  %v718 = vpack.c.bf16 %v654, %v654
  %v719 = vpack.c.bf16 %v655, %v655
  %v720 = vpack.c.bf16 %v656, %v656
  %v721 = vpack.c.bf16 %v657, %v657
  %v722 = vpack.c.bf16 %v658, %v658
  %v723 = vpack.c.bf16 %v659, %v659
  %v724 = vpack.c.bf16 %v660, %v660
  %v725 = vpack.c.bf16 %v661, %v661
  %v726 = vpack.c.bf16 %v662, %v662
  %v727 = vpack.c.bf16 %v663, %v663
  %v728 = vpack.c.bf16 %v664, %v664
  %v729 = vpack.c.bf16 %v665, %v665
  %v730 = vpack.c.bf16 %v666, %v666
  %v731 = vpack.c.bf16 %v667, %v667
  %v732 = vpack.c.bf16 %v668, %v668
  %v733 = vpack.c.bf16 %v669, %v669
  %v734 = vpack.c.bf16 %v670, %v670
  %v735 = vpack.c.bf16 %v671, %v671
  %v736 = vpack.c.bf16 %v672, %v672
  %v737 = vpack.c.bf16 %v673, %v673
  %v738 = vpack.c.bf16 %v674, %v674
  %v739 = vpack.c.bf16 %v675, %v675
  %v740 = vpack.c.bf16 %v676, %v676
  %v741 = vpack.c.bf16 %v677, %v677
  %v742 = vpack.c.bf16 %v678, %v678
  %v743 = vpack.c.bf16 %v679, %v679
  %v744 = vpack.c.bf16 %v680, %v680
  %v745 = vpack.c.bf16 %v681, %v681
  %v746 = vpack.c.bf16 %v682, %v682
  %v747 = vpack.c.bf16 %v683, %v683
  %v748 = vpack.c.bf16 %v684, %v684
  %v749 = vpack.c.bf16 %v685, %v685
  %v750 = vpack.c.bf16 %v686, %v686
  %v751 = vpack.c.bf16 %v687, %v687
  %v752 = vpack.c.bf16 %v688, %v688
  %v753 = vpack.c.bf16 %v689, %v689
  %v754 = vpack.c.bf16 %v690, %v690
  %v755 = vpack.c.bf16 %v691, %v691
  %v756 = vpack.c.bf16 %v692, %v692
  %v757 = vpack.c.bf16 %v693, %v693
  %v758 = vpack.c.bf16 %v694, %v694
  %v759 = vpack.c.bf16 %v695, %v695
  %v760 = vpack.c.bf16 %v696, %v696
  %v761 = vpack.c.bf16 %v697, %v697
  %v762 = vpack.c.bf16 %v698, %v698
  %763 = vst [vmem:[%s3] sm:$0xf] %v699
  %764 = vst [vmem:[%s3 + $0x4] sm:$0xf] %v700
  %765 = vst [vmem:[%s3 + $0x8] sm:$0xf] %v701
  %766 = vst [vmem:[%s3 + $0xc] sm:$0xf] %v702
  %767 = vst [vmem:[%s3 + $0x10] sm:$0xf] %v703
  %768 = vst [vmem:[%s3 + $0x14] sm:$0xf] %v704
  %769 = vst [vmem:[%s3 + $0x18] sm:$0xf] %v705
  %770 = vst [vmem:[%s3 + $0x1c] sm:$0xf] %v706
  %771 = vst [vmem:[%s3 + $0x20] sm:$0xf] %v707
  %772 = vst [vmem:[%s3 + $0x24] sm:$0xf] %v708
  %773 = vst [vmem:[%s3 + $0x28] sm:$0xf] %v709
  %774 = vst [vmem:[%s3 + $0x2c] sm:$0xf] %v710
  %775 = vst [vmem:[%s3 + $0x30] sm:$0xf] %v711
  %776 = vst [vmem:[%s3 + $0x34] sm:$0xf] %v712
  %777 = vst [vmem:[%s3 + $0x38] sm:$0xf] %v713
  %778 = vst [vmem:[%s3 + $0x3c] sm:$0xf] %v714
  %779 = vst [vmem:[%s3 + $0x40] sm:$0xf] %v715
  %780 = vst [vmem:[%s3 + $0x44] sm:$0xf] %v716
  %781 = vst [vmem:[%s3 + $0x48] sm:$0xf] %v717
  %782 = vst [vmem:[%s3 + $0x4c] sm:$0xf] %v718
  %783 = vst [vmem:[%s3 + $0x50] sm:$0xf] %v719
  %784 = vst [vmem:[%s3 + $0x54] sm:$0xf] %v720
  %785 = vst [vmem:[%s3 + $0x58] sm:$0xf] %v721
  %786 = vst [vmem:[%s3 + $0x5c] sm:$0xf] %v722
  %787 = vst [vmem:[%s3 + $0x60] sm:$0xf] %v723
  %788 = vst [vmem:[%s3 + $0x64] sm:$0xf] %v724
  %789 = vst [vmem:[%s3 + $0x68] sm:$0xf] %v725
  %790 = vst [vmem:[%s3 + $0x6c] sm:$0xf] %v726
  %791 = vst [vmem:[%s3 + $0x70] sm:$0xf] %v727
  %792 = vst [vmem:[%s3 + $0x74] sm:$0xf] %v728
  %793 = vst [vmem:[%s3 + $0x78] sm:$0xf] %v729
  %794 = vst [vmem:[%s3 + $0x7c] sm:$0xf] %v730
  %795 = vst [vmem:[%s3 + $0x80] sm:$0xf] %v731
  %796 = vst [vmem:[%s3 + $0x84] sm:$0xf] %v732
  %797 = vst [vmem:[%s3 + $0x88] sm:$0xf] %v733
  %798 = vst [vmem:[%s3 + $0x8c] sm:$0xf] %v734
  %799 = vst [vmem:[%s3 + $0x90] sm:$0xf] %v735
  %800 = vst [vmem:[%s3 + $0x94] sm:$0xf] %v736
  %801 = vst [vmem:[%s3 + $0x98] sm:$0xf] %v737
  %802 = vst [vmem:[%s3 + $0x9c] sm:$0xf] %v738
  %803 = vst [vmem:[%s3 + $0xa0] sm:$0xf] %v739
  %804 = vst [vmem:[%s3 + $0xa4] sm:$0xf] %v740
  %805 = vst [vmem:[%s3 + $0xa8] sm:$0xf] %v741
  %806 = vst [vmem:[%s3 + $0xac] sm:$0xf] %v742
  %807 = vst [vmem:[%s3 + $0xb0] sm:$0xf] %v743
  %808 = vst [vmem:[%s3 + $0xb4] sm:$0xf] %v744
  %809 = vst [vmem:[%s3 + $0xb8] sm:$0xf] %v745
  %810 = vst [vmem:[%s3 + $0xbc] sm:$0xf] %v746
  %811 = vst [vmem:[%s3 + $0xc0] sm:$0xf] %v747
  %812 = vst [vmem:[%s3 + $0xc4] sm:$0xf] %v748
  %813 = vst [vmem:[%s3 + $0xc8] sm:$0xf] %v749
  %814 = vst [vmem:[%s3 + $0xcc] sm:$0xf] %v750
  %815 = vst [vmem:[%s3 + $0xd0] sm:$0xf] %v751
  %816 = vst [vmem:[%s3 + $0xd4] sm:$0xf] %v752
  %817 = vst [vmem:[%s3 + $0xd8] sm:$0xf] %v753
  %818 = vst [vmem:[%s3 + $0xdc] sm:$0xf] %v754
  %819 = vst [vmem:[%s3 + $0xe0] sm:$0xf] %v755
  %820 = vst [vmem:[%s3 + $0xe4] sm:$0xf] %v756
  %821 = vst [vmem:[%s3 + $0xe8] sm:$0xf] %v757
  %822 = vst [vmem:[%s3 + $0xec] sm:$0xf] %v758
  %823 = vst [vmem:[%s3 + $0xf0] sm:$0xf] %v759
  %824 = vst [vmem:[%s3 + $0xf4] sm:$0xf] %v760
  %825 = vst [vmem:[%s3 + $0xf8] sm:$0xf] %v761
  %826 = vst [vmem:[%s3 + $0xfc] sm:$0xf] %v762
  // Predicated region
  $region14: #{_lambda_.8} parent=0 // pred_check
    _
  $region15: #{_lambda_.8} parent=0 // pred_check_branch
    %828 = sbr.rel (0) target = $region17
  $region16: #{_lambda_.8} parent=0 // pred_region
    _
  $region17: #{_lambda_.8} parent=0 // pred_fallthru
    _
  // Predicated region
  $region18: #{_lambda_.8} parent=0 // pred_check
    _
  $region19: #{_lambda_.8} parent=0 // pred_check_branch
    %830 = sbr.rel (0) target = $region21
  $region20: #{_lambda_.8} parent=0 // pred_region
    _
  $region21: #{_lambda_.8} parent=0 // pred_fallthru
    _

// kernel: _lambda_.10
$region0: #{_lambda_.10}
  #allocation0 [shape = 'u32[]', space=smem, size = 0x4, offset = 0x4, fixed_abs, tag = 'smem constant byte address 0x4 - core index']
  #allocation1 [shape = 'u32[72,128]{1,0:T(1,128)}', space=vmem, size = 0x9000, scoped, tag = 'internal scratch']
  %s0 = inlined_call_operand.vmem [shape: f32[128,128], index: 0, kind: input, shape index: {}]
  %s1 = inlined_call_operand.vmem [shape: f32[1,128], index: 1, kind: input, shape index: {}]
  %s2 = inlined_call_operand.vmem [shape: f32[1,128], index: 2, kind: input, shape index: {}]
  %s3 = inlined_call_operand.vmem [shape: bf16[128,128], index: 3, kind: output, shape index: {}]
  %s4 = sld [smem:[#allocation0]]
  $region22: #{_lambda_.10} parent=0
    _
  %s6 = ssub.s32 1, %s4
  %s7 = scalar_select 0, %s6, %s4
  // Predicated region
  $region2: #{_lambda_.10} parent=0 // pred_check
    _
  $region3: #{_lambda_.10} parent=0 // pred_check_branch
    %9 = sbr.rel (0) target = $region5
  $region4: #{_lambda_.10} parent=0 // pred_region
    _
  $region5: #{_lambda_.10} parent=0 // pred_fallthru
    _
  // Predicated region
  $region6: #{_lambda_.10} parent=0 // pred_check
    _
  $region7: #{_lambda_.10} parent=0 // pred_check_branch
    %11 = sbr.rel (0) target = $region9
  $region8: #{_lambda_.10} parent=0 // pred_region
    _
  $region9: #{_lambda_.10} parent=0 // pred_fallthru
    _
  // Predicated region
  $region10: #{_lambda_.10} parent=0 // pred_check
    _
  $region11: #{_lambda_.10} parent=0 // pred_check_branch
    %13 = sbr.rel (0) target = $region13
  $region12: #{_lambda_.10} parent=0 // pred_region
    _
  $region13: #{_lambda_.10} parent=0 // pred_fallthru
    _
  %v14 = vld [vmem:[%s0] sm:$0xff]
  %v15 = vld [vmem:[%s0 + $0x8] sm:$0xff]
  %v16 = vld [vmem:[%s0 + $0x10] sm:$0xff]
  %v17 = vld [vmem:[%s0 + $0x18] sm:$0xff]
  %v18 = vld [vmem:[%s0 + $0x20] sm:$0xff]
  %v19 = vld [vmem:[%s0 + $0x28] sm:$0xff]
  %v20 = vld [vmem:[%s0 + $0x30] sm:$0xff]
  %v21 = vld [vmem:[%s0 + $0x38] sm:$0xff]
  %v22 = vld [vmem:[%s0 + $0x40] sm:$0xff]
  %v23 = vld [vmem:[%s0 + $0x48] sm:$0xff]
  %v24 = vld [vmem:[%s0 + $0x50] sm:$0xff]
  %v25 = vld [vmem:[%s0 + $0x58] sm:$0xff]
  %v26 = vld [vmem:[%s0 + $0x60] sm:$0xff]
  %v27 = vld [vmem:[%s0 + $0x68] sm:$0xff]
  %v28 = vld [vmem:[%s0 + $0x70] sm:$0xff]
  %v29 = vld [vmem:[%s0 + $0x78] sm:$0xff]
  %v30 = vld [vmem:[%s1] sm:$0x1]
  %v32 = vperm.slane %v30, 0
  %v34 = vmul.f32 %v14, %v32
  %v35 = vmul.f32 %v15, %v32
  %v36 = vmul.f32 %v16, %v32
  %v37 = vmul.f32 %v17, %v32
  %v38 = vmul.f32 %v18, %v32
  %v39 = vmul.f32 %v19, %v32
  %v40 = vmul.f32 %v20, %v32
  %v41 = vmul.f32 %v21, %v32
  %v42 = vmul.f32 %v22, %v32
  %v43 = vmul.f32 %v23, %v32
  %v44 = vmul.f32 %v24, %v32
  %v45 = vmul.f32 %v25, %v32
  %v46 = vmul.f32 %v26, %v32
  %v47 = vmul.f32 %v27, %v32
  %v48 = vmul.f32 %v28, %v32
  %v49 = vmul.f32 %v29, %v32
  %v50 = vld [vmem:[%s2] sm:$0x1]
  %v52 = vperm.slane %v50, 0
  %v54 = vadd.f32 %v34, %v52
  %v55 = vadd.f32 %v35, %v52
  %v56 = vadd.f32 %v36, %v52
  %v57 = vadd.f32 %v37, %v52
  %v58 = vadd.f32 %v38, %v52
  %v59 = vadd.f32 %v39, %v52
  %v60 = vadd.f32 %v40, %v52
  %v61 = vadd.f32 %v41, %v52
  %v62 = vadd.f32 %v42, %v52
  %v63 = vadd.f32 %v43, %v52
  %v64 = vadd.f32 %v44, %v52
  %v65 = vadd.f32 %v45, %v52
  %v66 = vadd.f32 %v46, %v52
  %v67 = vadd.f32 %v47, %v52
  %v68 = vadd.f32 %v48, %v52
  %v69 = vadd.f32 %v49, %v52
  %vm70 = vcmp.ge.f32.partialorder %v54, 0.0
  %vm71 = vcmp.ge.f32.partialorder %v55, 0.0
  %vm72 = vcmp.ge.f32.partialorder %v56, 0.0
  %vm73 = vcmp.ge.f32.partialorder %v57, 0.0
  %vm74 = vcmp.ge.f32.partialorder %v58, 0.0
  %vm75 = vcmp.ge.f32.partialorder %v59, 0.0
  %vm76 = vcmp.ge.f32.partialorder %v60, 0.0
  %vm77 = vcmp.ge.f32.partialorder %v61, 0.0
  %vm78 = vcmp.ge.f32.partialorder %v62, 0.0
  %vm79 = vcmp.ge.f32.partialorder %v63, 0.0
  %vm80 = vcmp.ge.f32.partialorder %v64, 0.0
  %vm81 = vcmp.ge.f32.partialorder %v65, 0.0
  %vm82 = vcmp.ge.f32.partialorder %v66, 0.0
  %vm83 = vcmp.ge.f32.partialorder %v67, 0.0
  %vm84 = vcmp.ge.f32.partialorder %v68, 0.0
  %vm85 = vcmp.ge.f32.partialorder %v69, 0.0
  %v86 = vmul.f32 %v54, 0.2
  %v87 = vmul.f32 %v55, 0.2
  %v88 = vmul.f32 %v56, 0.2
  %v89 = vmul.f32 %v57, 0.2
  %v90 = vmul.f32 %v58, 0.2
  %v91 = vmul.f32 %v59, 0.2
  %v92 = vmul.f32 %v60, 0.2
  %v93 = vmul.f32 %v61, 0.2
  %v94 = vmul.f32 %v62, 0.2
  %v95 = vmul.f32 %v63, 0.2
  %v96 = vmul.f32 %v64, 0.2
  %v97 = vmul.f32 %v65, 0.2
  %v98 = vmul.f32 %v66, 0.2
  %v99 = vmul.f32 %v67, 0.2
  %v100 = vmul.f32 %v68, 0.2
  %v101 = vmul.f32 %v69, 0.2
  %v102 = vsel %vm70, %v54, %v86
  %v103 = vsel %vm71, %v55, %v87
  %v104 = vsel %vm72, %v56, %v88
  %v105 = vsel %vm73, %v57, %v89
  %v106 = vsel %vm74, %v58, %v90
  %v107 = vsel %vm75, %v59, %v91
  %v108 = vsel %vm76, %v60, %v92
  %v109 = vsel %vm77, %v61, %v93
  %v110 = vsel %vm78, %v62, %v94
  %v111 = vsel %vm79, %v63, %v95
  %v112 = vsel %vm80, %v64, %v96
  %v113 = vsel %vm81, %v65, %v97
  %v114 = vsel %vm82, %v66, %v98
  %v115 = vsel %vm83, %v67, %v99
  %v116 = vsel %vm84, %v68, %v100
  %v117 = vsel %vm85, %v69, %v101
  %v118 = vpack.c.bf16 %v102, %v102
  %v119 = vpack.c.bf16 %v103, %v103
  %v120 = vpack.c.bf16 %v104, %v104
  %v121 = vpack.c.bf16 %v105, %v105
  %v122 = vpack.c.bf16 %v106, %v106
  %v123 = vpack.c.bf16 %v107, %v107
  %v124 = vpack.c.bf16 %v108, %v108
  %v125 = vpack.c.bf16 %v109, %v109
  %v126 = vpack.c.bf16 %v110, %v110
  %v127 = vpack.c.bf16 %v111, %v111
  %v128 = vpack.c.bf16 %v112, %v112
  %v129 = vpack.c.bf16 %v113, %v113
  %v130 = vpack.c.bf16 %v114, %v114
  %v131 = vpack.c.bf16 %v115, %v115
  %v132 = vpack.c.bf16 %v116, %v116
  %v133 = vpack.c.bf16 %v117, %v117
  %134 = vst [vmem:[%s3] sm:$0xf] %v118
  %135 = vst [vmem:[%s3 + $0x4] sm:$0xf] %v119
  %136 = vst [vmem:[%s3 + $0x8] sm:$0xf] %v120
  %137 = vst [vmem:[%s3 + $0xc] sm:$0xf] %v121
  %138 = vst [vmem:[%s3 + $0x10] sm:$0xf] %v122
  %139 = vst [vmem:[%s3 + $0x14] sm:$0xf] %v123
  %140 = vst [vmem:[%s3 + $0x18] sm:$0xf] %v124
  %141 = vst [vmem:[%s3 + $0x1c] sm:$0xf] %v125
  %142 = vst [vmem:[%s3 + $0x20] sm:$0xf] %v126
  %143 = vst [vmem:[%s3 + $0x24] sm:$0xf] %v127
  %144 = vst [vmem:[%s3 + $0x28] sm:$0xf] %v128
  %145 = vst [vmem:[%s3 + $0x2c] sm:$0xf] %v129
  %146 = vst [vmem:[%s3 + $0x30] sm:$0xf] %v130
  %147 = vst [vmem:[%s3 + $0x34] sm:$0xf] %v131
  %148 = vst [vmem:[%s3 + $0x38] sm:$0xf] %v132
  %149 = vst [vmem:[%s3 + $0x3c] sm:$0xf] %v133
  // Predicated region
  $region14: #{_lambda_.10} parent=0 // pred_check
    _
  $region15: #{_lambda_.10} parent=0 // pred_check_branch
    %151 = sbr.rel (0) target = $region17
  $region16: #{_lambda_.10} parent=0 // pred_region
    _
  $region17: #{_lambda_.10} parent=0 // pred_fallthru
    _
  // Predicated region
  $region18: #{_lambda_.10} parent=0 // pred_check
    _
  $region19: #{_lambda_.10} parent=0 // pred_check_branch
    %153 = sbr.rel (0) target = $region21
  $region20: #{_lambda_.10} parent=0 // pred_region
    _
  $region21: #{_lambda_.10} parent=0 // pred_fallthru
    _

// kernel: _lambda_.9
$region0: #{_lambda_.9}
  #allocation0 [shape = 'u32[]', space=smem, size = 0x4, offset = 0x4, fixed_abs, tag = 'smem constant byte address 0x4 - core index']
  #allocation1 [shape = 'u32[72,128]{1,0:T(1,128)}', space=vmem, size = 0x9000, scoped, tag = 'internal scratch']
  %s0 = inlined_call_operand.vmem [shape: bf16[128,2048], index: 0, kind: input, shape index: {}]
  %s1 = inlined_call_operand.vmem [shape: bf16[2048,128], index: 1, kind: input, shape index: {}]
  %s2 = inlined_call_operand.vmem [shape: f32[128,128], index: 2, kind: output, shape index: {0}]
  %s3 = inlined_call_operand.vmem [shape: f32[8,128], index: 3, kind: output, shape index: {1}]
  %s4 = inlined_call_operand.vmem [shape: f32[8,128], index: 4, kind: output, shape index: {2}]
  %5 = xla_tuple %s2, %s3, %s4
  %s6 = sld [smem:[#allocation0]]
  $region34: #{_lambda_.9} parent=0
    _
  %s8 = ssub.s32 1, %s6
  %s9 = scalar_select 0, %s8, %s6
  // Predicated region
  $region2: #{_lambda_.9} parent=0 // pred_check
    _
  $region3: #{_lambda_.9} parent=0 // pred_check_branch
    %11 = sbr.rel (0) target = $region5
  $region4: #{_lambda_.9} parent=0 // pred_region
    _
  $region5: #{_lambda_.9} parent=0 // pred_fallthru
    _
  // Predicated region
  $region6: #{_lambda_.9} parent=0 // pred_check
    _
  $region7: #{_lambda_.9} parent=0 // pred_check_branch
    %13 = sbr.rel (0) target = $region9
  $region8: #{_lambda_.9} parent=0 // pred_region
    _
  $region9: #{_lambda_.9} parent=0 // pred_fallthru
    _
  %v14 = vld [vmem:[%s0] sm:$0xff]
  %v15 = vld [vmem:[%s0 + $0x8] sm:$0xff]
  %v16 = vld [vmem:[%s0 + $0x10] sm:$0xff]
  %v17 = vld [vmem:[%s0 + $0x18] sm:$0xff]
  %v18 = vld [vmem:[%s0 + $0x20] sm:$0xff]
  %v19 = vld [vmem:[%s0 + $0x28] sm:$0xff]
  %v20 = vld [vmem:[%s0 + $0x30] sm:$0xff]
  %v21 = vld [vmem:[%s0 + $0x38] sm:$0xff]
  %v22 = vld [vmem:[%s0 + $0x40] sm:$0xff]
  %v23 = vld [vmem:[%s0 + $0x48] sm:$0xff]
  %v24 = vld [vmem:[%s0 + $0x50] sm:$0xff]
  %v25 = vld [vmem:[%s0 + $0x58] sm:$0xff]
  %v26 = vld [vmem:[%s0 + $0x60] sm:$0xff]
  %v27 = vld [vmem:[%s0 + $0x68] sm:$0xff]
  %v28 = vld [vmem:[%s0 + $0x70] sm:$0xff]
  %v29 = vld [vmem:[%s0 + $0x78] sm:$0xff]
  %v30 = vld [vmem:[%s0 + $0x80] sm:$0xff]
  %v31 = vld [vmem:[%s0 + $0x88] sm:$0xff]
  %v32 = vld [vmem:[%s0 + $0x90] sm:$0xff]
  %v33 = vld [vmem:[%s0 + $0x98] sm:$0xff]
  %v34 = vld [vmem:[%s0 + $0xa0] sm:$0xff]
  %v35 = vld [vmem:[%s0 + $0xa8] sm:$0xff]
  %v36 = vld [vmem:[%s0 + $0xb0] sm:$0xff]
  %v37 = vld [vmem:[%s0 + $0xb8] sm:$0xff]
  %v38 = vld [vmem:[%s0 + $0xc0] sm:$0xff]
  %v39 = vld [vmem:[%s0 + $0xc8] sm:$0xff]
  %v40 = vld [vmem:[%s0 + $0xd0] sm:$0xff]
  %v41 = vld [vmem:[%s0 + $0xd8] sm:$0xff]
  %v42 = vld [vmem:[%s0 + $0xe0] sm:$0xff]
  %v43 = vld [vmem:[%s0 + $0xe8] sm:$0xff]
  %v44 = vld [vmem:[%s0 + $0xf0] sm:$0xff]
  %v45 = vld [vmem:[%s0 + $0xf8] sm:$0xff]
  %v46 = vld [vmem:[%s0 + $0x100] sm:$0xff]
  %v47 = vld [vmem:[%s0 + $0x108] sm:$0xff]
  %v48 = vld [vmem:[%s0 + $0x110] sm:$0xff]
  %v49 = vld [vmem:[%s0 + $0x118] sm:$0xff]
  %v50 = vld [vmem:[%s0 + $0x120] sm:$0xff]
  %v51 = vld [vmem:[%s0 + $0x128] sm:$0xff]
  %v52 = vld [vmem:[%s0 + $0x130] sm:$0xff]
  %v53 = vld [vmem:[%s0 + $0x138] sm:$0xff]
  %v54 = vld [vmem:[%s0 + $0x140] sm:$0xff]
  %v55 = vld [vmem:[%s0 + $0x148] sm:$0xff]
  %v56 = vld [vmem:[%s0 + $0x150] sm:$0xff]
  %v57 = vld [vmem:[%s0 + $0x158] sm:$0xff]
  %v58 = vld [vmem:[%s0 + $0x160] sm:$0xff]
  %v59 = vld [vmem:[%s0 + $0x168] sm:$0xff]
  %v60 = vld [vmem:[%s0 + $0x170] sm:$0xff]
  %v61 = vld [vmem:[%s0 + $0x178] sm:$0xff]
  %v62 = vld [vmem:[%s0 + $0x180] sm:$0xff]
  %v63 = vld [vmem:[%s0 + $0x188] sm:$0xff]
  %v64 = vld [vmem:[%s0 + $0x190] sm:$0xff]
  %v65 = vld [vmem:[%s0 + $0x198] sm:$0xff]
  %v66 = vld [vmem:[%s0 + $0x1a0] sm:$0xff]
  %v67 = vld [vmem:[%s0 + $0x1a8] sm:$0xff]
  %v68 = vld [vmem:[%s0 + $0x1b0] sm:$0xff]
  %v69 = vld [vmem:[%s0 + $0x1b8] sm:$0xff]
  %v70 = vld [vmem:[%s0 + $0x1c0] sm:$0xff]
  %v71 = vld [vmem:[%s0 + $0x1c8] sm:$0xff]
  %v72 = vld [vmem:[%s0 + $0x1d0] sm:$0xff]
  %v73 = vld [vmem:[%s0 + $0x1d8] sm:$0xff]
  %v74 = vld [vmem:[%s0 + $0x1e0] sm:$0xff]
  %v75 = vld [vmem:[%s0 + $0x1e8] sm:$0xff]
  %v76 = vld [vmem:[%s0 + $0x1f0] sm:$0xff]
  %v77 = vld [vmem:[%s0 + $0x1f8] sm:$0xff]
  %v78 = vld [vmem:[%s0 + $0x200] sm:$0xff]
  %v79 = vld [vmem:[%s0 + $0x208] sm:$0xff]
  %v80 = vld [vmem:[%s0 + $0x210] sm:$0xff]
  %v81 = vld [vmem:[%s0 + $0x218] sm:$0xff]
  %v82 = vld [vmem:[%s0 + $0x220] sm:$0xff]
  %v83 = vld [vmem:[%s0 + $0x228] sm:$0xff]
  %v84 = vld [vmem:[%s0 + $0x230] sm:$0xff]
  %v85 = vld [vmem:[%s0 + $0x238] sm:$0xff]
  %v86 = vld [vmem:[%s0 + $0x240] sm:$0xff]
  %v87 = vld [vmem:[%s0 + $0x248] sm:$0xff]
  %v88 = vld [vmem:[%s0 + $0x250] sm:$0xff]
  %v89 = vld [vmem:[%s0 + $0x258] sm:$0xff]
  %v90 = vld [vmem:[%s0 + $0x260] sm:$0xff]
  %v91 = vld [vmem:[%s0 + $0x268] sm:$0xff]
  %v92 = vld [vmem:[%s0 + $0x270] sm:$0xff]
  %v93 = vld [vmem:[%s0 + $0x278] sm:$0xff]
  %v94 = vld [vmem:[%s0 + $0x280] sm:$0xff]
  %v95 = vld [vmem:[%s0 + $0x288] sm:$0xff]
  %v96 = vld [vmem:[%s0 + $0x290] sm:$0xff]
  %v97 = vld [vmem:[%s0 + $0x298] sm:$0xff]
  %v98 = vld [vmem:[%s0 + $0x2a0] sm:$0xff]
  %v99 = vld [vmem:[%s0 + $0x2a8] sm:$0xff]
  %v100 = vld [vmem:[%s0 + $0x2b0] sm:$0xff]
  %v101 = vld [vmem:[%s0 + $0x2b8] sm:$0xff]
  %v102 = vld [vmem:[%s0 + $0x2c0] sm:$0xff]
  %v103 = vld [vmem:[%s0 + $0x2c8] sm:$0xff]
  %v104 = vld [vmem:[%s0 + $0x2d0] sm:$0xff]
  %v105 = vld [vmem:[%s0 + $0x2d8] sm:$0xff]
  %v106 = vld [vmem:[%s0 + $0x2e0] sm:$0xff]
  %v107 = vld [vmem:[%s0 + $0x2e8] sm:$0xff]
  %v108 = vld [vmem:[%s0 + $0x2f0] sm:$0xff]
  %v109 = vld [vmem:[%s0 + $0x2f8] sm:$0xff]
  %v110 = vld [vmem:[%s0 + $0x300] sm:$0xff]
  %v111 = vld [vmem:[%s0 + $0x308] sm:$0xff]
  %v112 = vld [vmem:[%s0 + $0x310] sm:$0xff]
  %v113 = vld [vmem:[%s0 + $0x318] sm:$0xff]
  %v114 = vld [vmem:[%s0 + $0x320] sm:$0xff]
  %v115 = vld [vmem:[%s0 + $0x328] sm:$0xff]
  %v116 = vld [vmem:[%s0 + $0x330] sm:$0xff]
  %v117 = vld [vmem:[%s0 + $0x338] sm:$0xff]
  %v118 = vld [vmem:[%s0 + $0x340] sm:$0xff]
  %v119 = vld [vmem:[%s0 + $0x348] sm:$0xff]
  %v120 = vld [vmem:[%s0 + $0x350] sm:$0xff]
  %v121 = vld [vmem:[%s0 + $0x358] sm:$0xff]
  %v122 = vld [vmem:[%s0 + $0x360] sm:$0xff]
  %v123 = vld [vmem:[%s0 + $0x368] sm:$0xff]
  %v124 = vld [vmem:[%s0 + $0x370] sm:$0xff]
  %v125 = vld [vmem:[%s0 + $0x378] sm:$0xff]
  %v126 = vld [vmem:[%s0 + $0x380] sm:$0xff]
  %v127 = vld [vmem:[%s0 + $0x388] sm:$0xff]
  %v128 = vld [vmem:[%s0 + $0x390] sm:$0xff]
  %v129 = vld [vmem:[%s0 + $0x398] sm:$0xff]
  %v130 = vld [vmem:[%s0 + $0x3a0] sm:$0xff]
  %v131 = vld [vmem:[%s0 + $0x3a8] sm:$0xff]
  %v132 = vld [vmem:[%s0 + $0x3b0] sm:$0xff]
  %v133 = vld [vmem:[%s0 + $0x3b8] sm:$0xff]
  %v134 = vld [vmem:[%s0 + $0x3c0] sm:$0xff]
  %v135 = vld [vmem:[%s0 + $0x3c8] sm:$0xff]
  %v136 = vld [vmem:[%s0 + $0x3d0] sm:$0xff]
  %v137 = vld [vmem:[%s0 + $0x3d8] sm:$0xff]
  %v138 = vld [vmem:[%s0 + $0x3e0] sm:$0xff]
  %v139 = vld [vmem:[%s0 + $0x3e8] sm:$0xff]
  %v140 = vld [vmem:[%s0 + $0x3f0] sm:$0xff]
  %v141 = vld [vmem:[%s0 + $0x3f8] sm:$0xff]
  %v142 = vld [vmem:[%s1] sm:$0xf]
  %v143 = vld [vmem:[%s1 + $0x4] sm:$0xf]
  %v144 = vld [vmem:[%s1 + $0x8] sm:$0xf]
  %v145 = vld [vmem:[%s1 + $0xc] sm:$0xf]
  %v146 = vld [vmem:[%s1 + $0x10] sm:$0xf]
  %v147 = vld [vmem:[%s1 + $0x14] sm:$0xf]
  %v148 = vld [vmem:[%s1 + $0x18] sm:$0xf]
  %v149 = vld [vmem:[%s1 + $0x1c] sm:$0xf]
  %v150 = vld [vmem:[%s1 + $0x20] sm:$0xf]
  %v151 = vld [vmem:[%s1 + $0x24] sm:$0xf]
  %v152 = vld [vmem:[%s1 + $0x28] sm:$0xf]
  %v153 = vld [vmem:[%s1 + $0x2c] sm:$0xf]
  %v154 = vld [vmem:[%s1 + $0x30] sm:$0xf]
  %v155 = vld [vmem:[%s1 + $0x34] sm:$0xf]
  %v156 = vld [vmem:[%s1 + $0x38] sm:$0xf]
  %v157 = vld [vmem:[%s1 + $0x3c] sm:$0xf]
  %v158 = vld [vmem:[%s1 + $0x40] sm:$0xf]
  %v159 = vld [vmem:[%s1 + $0x44] sm:$0xf]
  %v160 = vld [vmem:[%s1 + $0x48] sm:$0xf]
  %v161 = vld [vmem:[%s1 + $0x4c] sm:$0xf]
  %v162 = vld [vmem:[%s1 + $0x50] sm:$0xf]
  %v163 = vld [vmem:[%s1 + $0x54] sm:$0xf]
  %v164 = vld [vmem:[%s1 + $0x58] sm:$0xf]
  %v165 = vld [vmem:[%s1 + $0x5c] sm:$0xf]
  %v166 = vld [vmem:[%s1 + $0x60] sm:$0xf]
  %v167 = vld [vmem:[%s1 + $0x64] sm:$0xf]
  %v168 = vld [vmem:[%s1 + $0x68] sm:$0xf]
  %v169 = vld [vmem:[%s1 + $0x6c] sm:$0xf]
  %v170 = vld [vmem:[%s1 + $0x70] sm:$0xf]
  %v171 = vld [vmem:[%s1 + $0x74] sm:$0xf]
  %v172 = vld [vmem:[%s1 + $0x78] sm:$0xf]
  %v173 = vld [vmem:[%s1 + $0x7c] sm:$0xf]
  %v174 = vld [vmem:[%s1 + $0x80] sm:$0xf]
  %v175 = vld [vmem:[%s1 + $0x84] sm:$0xf]
  %v176 = vld [vmem:[%s1 + $0x88] sm:$0xf]
  %v177 = vld [vmem:[%s1 + $0x8c] sm:$0xf]
  %v178 = vld [vmem:[%s1 + $0x90] sm:$0xf]
  %v179 = vld [vmem:[%s1 + $0x94] sm:$0xf]
  %v180 = vld [vmem:[%s1 + $0x98] sm:$0xf]
  %v181 = vld [vmem:[%s1 + $0x9c] sm:$0xf]
  %v182 = vld [vmem:[%s1 + $0xa0] sm:$0xf]
  %v183 = vld [vmem:[%s1 + $0xa4] sm:$0xf]
  %v184 = vld [vmem:[%s1 + $0xa8] sm:$0xf]
  %v185 = vld [vmem:[%s1 + $0xac] sm:$0xf]
  %v186 = vld [vmem:[%s1 + $0xb0] sm:$0xf]
  %v187 = vld [vmem:[%s1 + $0xb4] sm:$0xf]
  %v188 = vld [vmem:[%s1 + $0xb8] sm:$0xf]
  %v189 = vld [vmem:[%s1 + $0xbc] sm:$0xf]
  %v190 = vld [vmem:[%s1 + $0xc0] sm:$0xf]
  %v191 = vld [vmem:[%s1 + $0xc4] sm:$0xf]
  %v192 = vld [vmem:[%s1 + $0xc8] sm:$0xf]
  %v193 = vld [vmem:[%s1 + $0xcc] sm:$0xf]
  %v194 = vld [vmem:[%s1 + $0xd0] sm:$0xf]
  %v195 = vld [vmem:[%s1 + $0xd4] sm:$0xf]
  %v196 = vld [vmem:[%s1 + $0xd8] sm:$0xf]
  %v197 = vld [vmem:[%s1 + $0xdc] sm:$0xf]
  %v198 = vld [vmem:[%s1 + $0xe0] sm:$0xf]
  %v199 = vld [vmem:[%s1 + $0xe4] sm:$0xf]
  %v200 = vld [vmem:[%s1 + $0xe8] sm:$0xf]
  %v201 = vld [vmem:[%s1 + $0xec] sm:$0xf]
  %v202 = vld [vmem:[%s1 + $0xf0] sm:$0xf]
  %v203 = vld [vmem:[%s1 + $0xf4] sm:$0xf]
  %v204 = vld [vmem:[%s1 + $0xf8] sm:$0xf]
  %v205 = vld [vmem:[%s1 + $0xfc] sm:$0xf]
  %v206 = vld [vmem:[%s1 + $0x100] sm:$0xf]
  %v207 = vld [vmem:[%s1 + $0x104] sm:$0xf]
  %v208 = vld [vmem:[%s1 + $0x108] sm:$0xf]
  %v209 = vld [vmem:[%s1 + $0x10c] sm:$0xf]
  %v210 = vld [vmem:[%s1 + $0x110] sm:$0xf]
  %v211 = vld [vmem:[%s1 + $0x114] sm:$0xf]
  %v212 = vld [vmem:[%s1 + $0x118] sm:$0xf]
  %v213 = vld [vmem:[%s1 + $0x11c] sm:$0xf]
  %v214 = vld [vmem:[%s1 + $0x120] sm:$0xf]
  %v215 = vld [vmem:[%s1 + $0x124] sm:$0xf]
  %v216 = vld [vmem:[%s1 + $0x128] sm:$0xf]
  %v217 = vld [vmem:[%s1 + $0x12c] sm:$0xf]
  %v218 = vld [vmem:[%s1 + $0x130] sm:$0xf]
  %v219 = vld [vmem:[%s1 + $0x134] sm:$0xf]
  %v220 = vld [vmem:[%s1 + $0x138] sm:$0xf]
  %v221 = vld [vmem:[%s1 + $0x13c] sm:$0xf]
  %v222 = vld [vmem:[%s1 + $0x140] sm:$0xf]
  %v223 = vld [vmem:[%s1 + $0x144] sm:$0xf]
  %v224 = vld [vmem:[%s1 + $0x148] sm:$0xf]
  %v225 = vld [vmem:[%s1 + $0x14c] sm:$0xf]
  %v226 = vld [vmem:[%s1 + $0x150] sm:$0xf]
  %v227 = vld [vmem:[%s1 + $0x154] sm:$0xf]
  %v228 = vld [vmem:[%s1 + $0x158] sm:$0xf]
  %v229 = vld [vmem:[%s1 + $0x15c] sm:$0xf]
  %v230 = vld [vmem:[%s1 + $0x160] sm:$0xf]
  %v231 = vld [vmem:[%s1 + $0x164] sm:$0xf]
  %v232 = vld [vmem:[%s1 + $0x168] sm:$0xf]
  %v233 = vld [vmem:[%s1 + $0x16c] sm:$0xf]
  %v234 = vld [vmem:[%s1 + $0x170] sm:$0xf]
  %v235 = vld [vmem:[%s1 + $0x174] sm:$0xf]
  %v236 = vld [vmem:[%s1 + $0x178] sm:$0xf]
  %v237 = vld [vmem:[%s1 + $0x17c] sm:$0xf]
  %v238 = vld [vmem:[%s1 + $0x180] sm:$0xf]
  %v239 = vld [vmem:[%s1 + $0x184] sm:$0xf]
  %v240 = vld [vmem:[%s1 + $0x188] sm:$0xf]
  %v241 = vld [vmem:[%s1 + $0x18c] sm:$0xf]
  %v242 = vld [vmem:[%s1 + $0x190] sm:$0xf]
  %v243 = vld [vmem:[%s1 + $0x194] sm:$0xf]
  %v244 = vld [vmem:[%s1 + $0x198] sm:$0xf]
  %v245 = vld [vmem:[%s1 + $0x19c] sm:$0xf]
  %v246 = vld [vmem:[%s1 + $0x1a0] sm:$0xf]
  %v247 = vld [vmem:[%s1 + $0x1a4] sm:$0xf]
  %v248 = vld [vmem:[%s1 + $0x1a8] sm:$0xf]
  %v249 = vld [vmem:[%s1 + $0x1ac] sm:$0xf]
  %v250 = vld [vmem:[%s1 + $0x1b0] sm:$0xf]
  %v251 = vld [vmem:[%s1 + $0x1b4] sm:$0xf]
  %v252 = vld [vmem:[%s1 + $0x1b8] sm:$0xf]
  %v253 = vld [vmem:[%s1 + $0x1bc] sm:$0xf]
  %v254 = vld [vmem:[%s1 + $0x1c0] sm:$0xf]
  %v255 = vld [vmem:[%s1 + $0x1c4] sm:$0xf]
  %v256 = vld [vmem:[%s1 + $0x1c8] sm:$0xf]
  %v257 = vld [vmem:[%s1 + $0x1cc] sm:$0xf]
  %v258 = vld [vmem:[%s1 + $0x1d0] sm:$0xf]
  %v259 = vld [vmem:[%s1 + $0x1d4] sm:$0xf]
  %v260 = vld [vmem:[%s1 + $0x1d8] sm:$0xf]
  %v261 = vld [vmem:[%s1 + $0x1dc] sm:$0xf]
  %v262 = vld [vmem:[%s1 + $0x1e0] sm:$0xf]
  %v263 = vld [vmem:[%s1 + $0x1e4] sm:$0xf]
  %v264 = vld [vmem:[%s1 + $0x1e8] sm:$0xf]
  %v265 = vld [vmem:[%s1 + $0x1ec] sm:$0xf]
  %v266 = vld [vmem:[%s1 + $0x1f0] sm:$0xf]
  %v267 = vld [vmem:[%s1 + $0x1f4] sm:$0xf]
  %v268 = vld [vmem:[%s1 + $0x1f8] sm:$0xf]
  %v269 = vld [vmem:[%s1 + $0x1fc] sm:$0xf]
  %v270 = vld [vmem:[%s1 + $0x200] sm:$0xf]
  %v271 = vld [vmem:[%s1 + $0x204] sm:$0xf]
  %v272 = vld [vmem:[%s1 + $0x208] sm:$0xf]
  %v273 = vld [vmem:[%s1 + $0x20c] sm:$0xf]
  %v274 = vld [vmem:[%s1 + $0x210] sm:$0xf]
  %v275 = vld [vmem:[%s1 + $0x214] sm:$0xf]
  %v276 = vld [vmem:[%s1 + $0x218] sm:$0xf]
  %v277 = vld [vmem:[%s1 + $0x21c] sm:$0xf]
  %v278 = vld [vmem:[%s1 + $0x220] sm:$0xf]
  %v279 = vld [vmem:[%s1 + $0x224] sm:$0xf]
  %v280 = vld [vmem:[%s1 + $0x228] sm:$0xf]
  %v281 = vld [vmem:[%s1 + $0x22c] sm:$0xf]
  %v282 = vld [vmem:[%s1 + $0x230] sm:$0xf]
  %v283 = vld [vmem:[%s1 + $0x234] sm:$0xf]
  %v284 = vld [vmem:[%s1 + $0x238] sm:$0xf]
  %v285 = vld [vmem:[%s1 + $0x23c] sm:$0xf]
  %v286 = vld [vmem:[%s1 + $0x240] sm:$0xf]
  %v287 = vld [vmem:[%s1 + $0x244] sm:$0xf]
  %v288 = vld [vmem:[%s1 + $0x248] sm:$0xf]
  %v289 = vld [vmem:[%s1 + $0x24c] sm:$0xf]
  %v290 = vld [vmem:[%s1 + $0x250] sm:$0xf]
  %v291 = vld [vmem:[%s1 + $0x254] sm:$0xf]
  %v292 = vld [vmem:[%s1 + $0x258] sm:$0xf]
  %v293 = vld [vmem:[%s1 + $0x25c] sm:$0xf]
  %v294 = vld [vmem:[%s1 + $0x260] sm:$0xf]
  %v295 = vld [vmem:[%s1 + $0x264] sm:$0xf]
  %v296 = vld [vmem:[%s1 + $0x268] sm:$0xf]
  %v297 = vld [vmem:[%s1 + $0x26c] sm:$0xf]
  %v298 = vld [vmem:[%s1 + $0x270] sm:$0xf]
  %v299 = vld [vmem:[%s1 + $0x274] sm:$0xf]
  %v300 = vld [vmem:[%s1 + $0x278] sm:$0xf]
  %v301 = vld [vmem:[%s1 + $0x27c] sm:$0xf]
  %v302 = vld [vmem:[%s1 + $0x280] sm:$0xf]
  %v303 = vld [vmem:[%s1 + $0x284] sm:$0xf]
  %v304 = vld [vmem:[%s1 + $0x288] sm:$0xf]
  %v305 = vld [vmem:[%s1 + $0x28c] sm:$0xf]
  %v306 = vld [vmem:[%s1 + $0x290] sm:$0xf]
  %v307 = vld [vmem:[%s1 + $0x294] sm:$0xf]
  %v308 = vld [vmem:[%s1 + $0x298] sm:$0xf]
  %v309 = vld [vmem:[%s1 + $0x29c] sm:$0xf]
  %v310 = vld [vmem:[%s1 + $0x2a0] sm:$0xf]
  %v311 = vld [vmem:[%s1 + $0x2a4] sm:$0xf]
  %v312 = vld [vmem:[%s1 + $0x2a8] sm:$0xf]
  %v313 = vld [vmem:[%s1 + $0x2ac] sm:$0xf]
  %v314 = vld [vmem:[%s1 + $0x2b0] sm:$0xf]
  %v315 = vld [vmem:[%s1 + $0x2b4] sm:$0xf]
  %v316 = vld [vmem:[%s1 + $0x2b8] sm:$0xf]
  %v317 = vld [vmem:[%s1 + $0x2bc] sm:$0xf]
  %v318 = vld [vmem:[%s1 + $0x2c0] sm:$0xf]
  %v319 = vld [vmem:[%s1 + $0x2c4] sm:$0xf]
  %v320 = vld [vmem:[%s1 + $0x2c8] sm:$0xf]
  %v321 = vld [vmem:[%s1 + $0x2cc] sm:$0xf]
  %v322 = vld [vmem:[%s1 + $0x2d0] sm:$0xf]
  %v323 = vld [vmem:[%s1 + $0x2d4] sm:$0xf]
  %v324 = vld [vmem:[%s1 + $0x2d8] sm:$0xf]
  %v325 = vld [vmem:[%s1 + $0x2dc] sm:$0xf]
  %v326 = vld [vmem:[%s1 + $0x2e0] sm:$0xf]
  %v327 = vld [vmem:[%s1 + $0x2e4] sm:$0xf]
  %v328 = vld [vmem:[%s1 + $0x2e8] sm:$0xf]
  %v329 = vld [vmem:[%s1 + $0x2ec] sm:$0xf]
  %v330 = vld [vmem:[%s1 + $0x2f0] sm:$0xf]
  %v331 = vld [vmem:[%s1 + $0x2f4] sm:$0xf]
  %v332 = vld [vmem:[%s1 + $0x2f8] sm:$0xf]
  %v333 = vld [vmem:[%s1 + $0x2fc] sm:$0xf]
  %v334 = vld [vmem:[%s1 + $0x300] sm:$0xf]
  %v335 = vld [vmem:[%s1 + $0x304] sm:$0xf]
  %v336 = vld [vmem:[%s1 + $0x308] sm:$0xf]
  %v337 = vld [vmem:[%s1 + $0x30c] sm:$0xf]
  %v338 = vld [vmem:[%s1 + $0x310] sm:$0xf]
  %v339 = vld [vmem:[%s1 + $0x314] sm:$0xf]
  %v340 = vld [vmem:[%s1 + $0x318] sm:$0xf]
  %v341 = vld [vmem:[%s1 + $0x31c] sm:$0xf]
  %v342 = vld [vmem:[%s1 + $0x320] sm:$0xf]
  %v343 = vld [vmem:[%s1 + $0x324] sm:$0xf]
  %v344 = vld [vmem:[%s1 + $0x328] sm:$0xf]
  %v345 = vld [vmem:[%s1 + $0x32c] sm:$0xf]
  %v346 = vld [vmem:[%s1 + $0x330] sm:$0xf]
  %v347 = vld [vmem:[%s1 + $0x334] sm:$0xf]
  %v348 = vld [vmem:[%s1 + $0x338] sm:$0xf]
  %v349 = vld [vmem:[%s1 + $0x33c] sm:$0xf]
  %v350 = vld [vmem:[%s1 + $0x340] sm:$0xf]
  %v351 = vld [vmem:[%s1 + $0x344] sm:$0xf]
  %v352 = vld [vmem:[%s1 + $0x348] sm:$0xf]
  %v353 = vld [vmem:[%s1 + $0x34c] sm:$0xf]
  %v354 = vld [vmem:[%s1 + $0x350] sm:$0xf]
  %v355 = vld [vmem:[%s1 + $0x354] sm:$0xf]
  %v356 = vld [vmem:[%s1 + $0x358] sm:$0xf]
  %v357 = vld [vmem:[%s1 + $0x35c] sm:$0xf]
  %v358 = vld [vmem:[%s1 + $0x360] sm:$0xf]
  %v359 = vld [vmem:[%s1 + $0x364] sm:$0xf]
  %v360 = vld [vmem:[%s1 + $0x368] sm:$0xf]
  %v361 = vld [vmem:[%s1 + $0x36c] sm:$0xf]
  %v362 = vld [vmem:[%s1 + $0x370] sm:$0xf]
  %v363 = vld [vmem:[%s1 + $0x374] sm:$0xf]
  %v364 = vld [vmem:[%s1 + $0x378] sm:$0xf]
  %v365 = vld [vmem:[%s1 + $0x37c] sm:$0xf]
  %v366 = vld [vmem:[%s1 + $0x380] sm:$0xf]
  %v367 = vld [vmem:[%s1 + $0x384] sm:$0xf]
  %v368 = vld [vmem:[%s1 + $0x388] sm:$0xf]
  %v369 = vld [vmem:[%s1 + $0x38c] sm:$0xf]
  %v370 = vld [vmem:[%s1 + $0x390] sm:$0xf]
  %v371 = vld [vmem:[%s1 + $0x394] sm:$0xf]
  %v372 = vld [vmem:[%s1 + $0x398] sm:$0xf]
  %v373 = vld [vmem:[%s1 + $0x39c] sm:$0xf]
  %v374 = vld [vmem:[%s1 + $0x3a0] sm:$0xf]
  %v375 = vld [vmem:[%s1 + $0x3a4] sm:$0xf]
  %v376 = vld [vmem:[%s1 + $0x3a8] sm:$0xf]
  %v377 = vld [vmem:[%s1 + $0x3ac] sm:$0xf]
  %v378 = vld [vmem:[%s1 + $0x3b0] sm:$0xf]
  %v379 = vld [vmem:[%s1 + $0x3b4] sm:$0xf]
  %v380 = vld [vmem:[%s1 + $0x3b8] sm:$0xf]
  %v381 = vld [vmem:[%s1 + $0x3bc] sm:$0xf]
  %v382 = vld [vmem:[%s1 + $0x3c0] sm:$0xf]
  %v383 = vld [vmem:[%s1 + $0x3c4] sm:$0xf]
  %v384 = vld [vmem:[%s1 + $0x3c8] sm:$0xf]
  %v385 = vld [vmem:[%s1 + $0x3cc] sm:$0xf]
  %v386 = vld [vmem:[%s1 + $0x3d0] sm:$0xf]
  %v387 = vld [vmem:[%s1 + $0x3d4] sm:$0xf]
  %v388 = vld [vmem:[%s1 + $0x3d8] sm:$0xf]
  %v389 = vld [vmem:[%s1 + $0x3dc] sm:$0xf]
  %v390 = vld [vmem:[%s1 + $0x3e0] sm:$0xf]
  %v391 = vld [vmem:[%s1 + $0x3e4] sm:$0xf]
  %v392 = vld [vmem:[%s1 + $0x3e8] sm:$0xf]
  %v393 = vld [vmem:[%s1 + $0x3ec] sm:$0xf]
  %v394 = vld [vmem:[%s1 + $0x3f0] sm:$0xf]
  %v395 = vld [vmem:[%s1 + $0x3f4] sm:$0xf]
  %v396 = vld [vmem:[%s1 + $0x3f8] sm:$0xf]
  %v397 = vld [vmem:[%s1 + $0x3fc] sm:$0xf]
  %v526 = vunpack.c.l.b16 %v14
  %v527 = vunpack.c.h.b16 %v14
  %v528 = vunpack.c.l.b16 %v15
  %v529 = vunpack.c.h.b16 %v15
  %v530 = vunpack.c.l.b16 %v16
  %v531 = vunpack.c.h.b16 %v16
  %v532 = vunpack.c.l.b16 %v17
  %v533 = vunpack.c.h.b16 %v17
  %v534 = vunpack.c.l.b16 %v18
  %v535 = vunpack.c.h.b16 %v18
  %v536 = vunpack.c.l.b16 %v19
  %v537 = vunpack.c.h.b16 %v19
  %v538 = vunpack.c.l.b16 %v20
  %v539 = vunpack.c.h.b16 %v20
  %v540 = vunpack.c.l.b16 %v21
  %v541 = vunpack.c.h.b16 %v21
  %v542 = vunpack.c.l.b16 %v22
  %v543 = vunpack.c.h.b16 %v22
  %v544 = vunpack.c.l.b16 %v23
  %v545 = vunpack.c.h.b16 %v23
  %v546 = vunpack.c.l.b16 %v24
  %v547 = vunpack.c.h.b16 %v24
  %v548 = vunpack.c.l.b16 %v25
  %v549 = vunpack.c.h.b16 %v25
  %v550 = vunpack.c.l.b16 %v26
  %v551 = vunpack.c.h.b16 %v26
  %v552 = vunpack.c.l.b16 %v27
  %v553 = vunpack.c.h.b16 %v27
  %v554 = vunpack.c.l.b16 %v28
  %v555 = vunpack.c.h.b16 %v28
  %v556 = vunpack.c.l.b16 %v29
  %v557 = vunpack.c.h.b16 %v29
  %v558 = vunpack.c.l.b16 %v30
  %v559 = vunpack.c.h.b16 %v30
  %v560 = vunpack.c.l.b16 %v31
  %v561 = vunpack.c.h.b16 %v31
  %v562 = vunpack.c.l.b16 %v32
  %v563 = vunpack.c.h.b16 %v32
  %v564 = vunpack.c.l.b16 %v33
  %v565 = vunpack.c.h.b16 %v33
  %v566 = vunpack.c.l.b16 %v34
  %v567 = vunpack.c.h.b16 %v34
  %v568 = vunpack.c.l.b16 %v35
  %v569 = vunpack.c.h.b16 %v35
  %v570 = vunpack.c.l.b16 %v36
  %v571 = vunpack.c.h.b16 %v36
  %v572 = vunpack.c.l.b16 %v37
  %v573 = vunpack.c.h.b16 %v37
  %v574 = vunpack.c.l.b16 %v38
  %v575 = vunpack.c.h.b16 %v38
  %v576 = vunpack.c.l.b16 %v39
  %v577 = vunpack.c.h.b16 %v39
  %v578 = vunpack.c.l.b16 %v40
  %v579 = vunpack.c.h.b16 %v40
  %v580 = vunpack.c.l.b16 %v41
  %v581 = vunpack.c.h.b16 %v41
  %v582 = vunpack.c.l.b16 %v42
  %v583 = vunpack.c.h.b16 %v42
  %v584 = vunpack.c.l.b16 %v43
  %v585 = vunpack.c.h.b16 %v43
  %v586 = vunpack.c.l.b16 %v44
  %v587 = vunpack.c.h.b16 %v44
  %v588 = vunpack.c.l.b16 %v45
  %v589 = vunpack.c.h.b16 %v45
  %v590 = vunpack.c.l.b16 %v46
  %v591 = vunpack.c.h.b16 %v46
  %v592 = vunpack.c.l.b16 %v47
  %v593 = vunpack.c.h.b16 %v47
  %v594 = vunpack.c.l.b16 %v48
  %v595 = vunpack.c.h.b16 %v48
  %v596 = vunpack.c.l.b16 %v49
  %v597 = vunpack.c.h.b16 %v49
  %v598 = vunpack.c.l.b16 %v50
  %v599 = vunpack.c.h.b16 %v50
  %v600 = vunpack.c.l.b16 %v51
  %v601 = vunpack.c.h.b16 %v51
  %v602 = vunpack.c.l.b16 %v52
  %v603 = vunpack.c.h.b16 %v52
  %v604 = vunpack.c.l.b16 %v53
  %v605 = vunpack.c.h.b16 %v53
  %v606 = vunpack.c.l.b16 %v54
  %v607 = vunpack.c.h.b16 %v54
  %v608 = vunpack.c.l.b16 %v55
  %v609 = vunpack.c.h.b16 %v55
  %v610 = vunpack.c.l.b16 %v56
  %v611 = vunpack.c.h.b16 %v56
  %v612 = vunpack.c.l.b16 %v57
  %v613 = vunpack.c.h.b16 %v57
  %v614 = vunpack.c.l.b16 %v58
  %v615 = vunpack.c.h.b16 %v58
  %v616 = vunpack.c.l.b16 %v59
  %v617 = vunpack.c.h.b16 %v59
  %v618 = vunpack.c.l.b16 %v60
  %v619 = vunpack.c.h.b16 %v60
  %v620 = vunpack.c.l.b16 %v61
  %v621 = vunpack.c.h.b16 %v61
  %v622 = vunpack.c.l.b16 %v62
  %v623 = vunpack.c.h.b16 %v62
  %v624 = vunpack.c.l.b16 %v63
  %v625 = vunpack.c.h.b16 %v63
  %v626 = vunpack.c.l.b16 %v64
  %v627 = vunpack.c.h.b16 %v64
  %v628 = vunpack.c.l.b16 %v65
  %v629 = vunpack.c.h.b16 %v65
  %v630 = vunpack.c.l.b16 %v66
  %v631 = vunpack.c.h.b16 %v66
  %v632 = vunpack.c.l.b16 %v67
  %v633 = vunpack.c.h.b16 %v67
  %v634 = vunpack.c.l.b16 %v68
  %v635 = vunpack.c.h.b16 %v68
  %v636 = vunpack.c.l.b16 %v69
  %v637 = vunpack.c.h.b16 %v69
  %v638 = vunpack.c.l.b16 %v70
  %v639 = vunpack.c.h.b16 %v70
  %v640 = vunpack.c.l.b16 %v71
  %v641 = vunpack.c.h.b16 %v71
  %v642 = vunpack.c.l.b16 %v72
  %v643 = vunpack.c.h.b16 %v72
  %v644 = vunpack.c.l.b16 %v73
  %v645 = vunpack.c.h.b16 %v73
  %v646 = vunpack.c.l.b16 %v74
  %v647 = vunpack.c.h.b16 %v74
  %v648 = vunpack.c.l.b16 %v75
  %v649 = vunpack.c.h.b16 %v75
  %v650 = vunpack.c.l.b16 %v76
  %v651 = vunpack.c.h.b16 %v76
  %v652 = vunpack.c.l.b16 %v77
  %v653 = vunpack.c.h.b16 %v77
  %v654 = vunpack.c.l.b16 %v78
  %v655 = vunpack.c.h.b16 %v78
  %v656 = vunpack.c.l.b16 %v79
  %v657 = vunpack.c.h.b16 %v79
  %v658 = vunpack.c.l.b16 %v80
  %v659 = vunpack.c.h.b16 %v80
  %v660 = vunpack.c.l.b16 %v81
  %v661 = vunpack.c.h.b16 %v81
  %v662 = vunpack.c.l.b16 %v82
  %v663 = vunpack.c.h.b16 %v82
  %v664 = vunpack.c.l.b16 %v83
  %v665 = vunpack.c.h.b16 %v83
  %v666 = vunpack.c.l.b16 %v84
  %v667 = vunpack.c.h.b16 %v84
  %v668 = vunpack.c.l.b16 %v85
  %v669 = vunpack.c.h.b16 %v85
  %v670 = vunpack.c.l.b16 %v86
  %v671 = vunpack.c.h.b16 %v86
  %v672 = vunpack.c.l.b16 %v87
  %v673 = vunpack.c.h.b16 %v87
  %v674 = vunpack.c.l.b16 %v88
  %v675 = vunpack.c.h.b16 %v88
  %v676 = vunpack.c.l.b16 %v89
  %v677 = vunpack.c.h.b16 %v89
  %v678 = vunpack.c.l.b16 %v90
  %v679 = vunpack.c.h.b16 %v90
  %v680 = vunpack.c.l.b16 %v91
  %v681 = vunpack.c.h.b16 %v91
  %v682 = vunpack.c.l.b16 %v92
  %v683 = vunpack.c.h.b16 %v92
  %v684 = vunpack.c.l.b16 %v93
  %v685 = vunpack.c.h.b16 %v93
  %v686 = vunpack.c.l.b16 %v94
  %v687 = vunpack.c.h.b16 %v94
  %v688 = vunpack.c.l.b16 %v95
  %v689 = vunpack.c.h.b16 %v95
  %v690 = vunpack.c.l.b16 %v96
  %v691 = vunpack.c.h.b16 %v96
  %v692 = vunpack.c.l.b16 %v97
  %v693 = vunpack.c.h.b16 %v97
  %v694 = vunpack.c.l.b16 %v98
  %v695 = vunpack.c.h.b16 %v98
  %v696 = vunpack.c.l.b16 %v99
  %v697 = vunpack.c.h.b16 %v99
  %v698 = vunpack.c.l.b16 %v100
  %v699 = vunpack.c.h.b16 %v100
  %v700 = vunpack.c.l.b16 %v101
  %v701 = vunpack.c.h.b16 %v101
  %v702 = vunpack.c.l.b16 %v102
  %v703 = vunpack.c.h.b16 %v102
  %v704 = vunpack.c.l.b16 %v103
  %v705 = vunpack.c.h.b16 %v103
  %v706 = vunpack.c.l.b16 %v104
  %v707 = vunpack.c.h.b16 %v104
  %v708 = vunpack.c.l.b16 %v105
  %v709 = vunpack.c.h.b16 %v105
  %v710 = vunpack.c.l.b16 %v106
  %v711 = vunpack.c.h.b16 %v106
  %v712 = vunpack.c.l.b16 %v107
  %v713 = vunpack.c.h.b16 %v107
  %v714 = vunpack.c.l.b16 %v108
  %v715 = vunpack.c.h.b16 %v108
  %v716 = vunpack.c.l.b16 %v109
  %v717 = vunpack.c.h.b16 %v109
  %v718 = vunpack.c.l.b16 %v110
  %v719 = vunpack.c.h.b16 %v110
  %v720 = vunpack.c.l.b16 %v111
  %v721 = vunpack.c.h.b16 %v111
  %v722 = vunpack.c.l.b16 %v112
  %v723 = vunpack.c.h.b16 %v112
  %v724 = vunpack.c.l.b16 %v113
  %v725 = vunpack.c.h.b16 %v113
  %v726 = vunpack.c.l.b16 %v114
  %v727 = vunpack.c.h.b16 %v114
  %v728 = vunpack.c.l.b16 %v115
  %v729 = vunpack.c.h.b16 %v115
  %v730 = vunpack.c.l.b16 %v116
  %v731 = vunpack.c.h.b16 %v116
  %v732 = vunpack.c.l.b16 %v117
  %v733 = vunpack.c.h.b16 %v117
  %v734 = vunpack.c.l.b16 %v118
  %v735 = vunpack.c.h.b16 %v118
  %v736 = vunpack.c.l.b16 %v119
  %v737 = vunpack.c.h.b16 %v119
  %v738 = vunpack.c.l.b16 %v120
  %v739 = vunpack.c.h.b16 %v120
  %v740 = vunpack.c.l.b16 %v121
  %v741 = vunpack.c.h.b16 %v121
  %v742 = vunpack.c.l.b16 %v122
  %v743 = vunpack.c.h.b16 %v122
  %v744 = vunpack.c.l.b16 %v123
  %v745 = vunpack.c.h.b16 %v123
  %v746 = vunpack.c.l.b16 %v124
  %v747 = vunpack.c.h.b16 %v124
  %v748 = vunpack.c.l.b16 %v125
  %v749 = vunpack.c.h.b16 %v125
  %v750 = vunpack.c.l.b16 %v126
  %v751 = vunpack.c.h.b16 %v126
  %v752 = vunpack.c.l.b16 %v127
  %v753 = vunpack.c.h.b16 %v127
  %v754 = vunpack.c.l.b16 %v128
  %v755 = vunpack.c.h.b16 %v128
  %v756 = vunpack.c.l.b16 %v129
  %v757 = vunpack.c.h.b16 %v129
  %v758 = vunpack.c.l.b16 %v130
  %v759 = vunpack.c.h.b16 %v130
  %v760 = vunpack.c.l.b16 %v131
  %v761 = vunpack.c.h.b16 %v131
  %v762 = vunpack.c.l.b16 %v132
  %v763 = vunpack.c.h.b16 %v132
  %v764 = vunpack.c.l.b16 %v133
  %v765 = vunpack.c.h.b16 %v133
  %v766 = vunpack.c.l.b16 %v134
  %v767 = vunpack.c.h.b16 %v134
  %v768 = vunpack.c.l.b16 %v135
  %v769 = vunpack.c.h.b16 %v135
  %v770 = vunpack.c.l.b16 %v136
  %v771 = vunpack.c.h.b16 %v136
  %v772 = vunpack.c.l.b16 %v137
  %v773 = vunpack.c.h.b16 %v137
  %v774 = vunpack.c.l.b16 %v138
  %v775 = vunpack.c.h.b16 %v138
  %v776 = vunpack.c.l.b16 %v139
  %v777 = vunpack.c.h.b16 %v139
  %v778 = vunpack.c.l.b16 %v140
  %v779 = vunpack.c.h.b16 %v140
  %v780 = vunpack.c.l.b16 %v141
  %v781 = vunpack.c.h.b16 %v141
  %v782 = vpack.c.b16 %v542, %v526
  %v783 = vpack.c.b16 %v543, %v527
  %v784 = vpack.c.b16 %v544, %v528
  %v785 = vpack.c.b16 %v545, %v529
  %v786 = vpack.c.b16 %v546, %v530
  %v787 = vpack.c.b16 %v547, %v531
  %v788 = vpack.c.b16 %v548, %v532
  %v789 = vpack.c.b16 %v549, %v533
  %v790 = vpack.c.b16 %v550, %v534
  %v791 = vpack.c.b16 %v551, %v535
  %v792 = vpack.c.b16 %v552, %v536
  %v793 = vpack.c.b16 %v553, %v537
  %v794 = vpack.c.b16 %v554, %v538
  %v795 = vpack.c.b16 %v555, %v539
  %v796 = vpack.c.b16 %v556, %v540
  %v797 = vpack.c.b16 %v557, %v541
  %v798 = vpack.c.b16 %v574, %v558
  %v799 = vpack.c.b16 %v575, %v559
  %v800 = vpack.c.b16 %v576, %v560
  %v801 = vpack.c.b16 %v577, %v561
  %v802 = vpack.c.b16 %v578, %v562
  %v803 = vpack.c.b16 %v579, %v563
  %v804 = vpack.c.b16 %v580, %v564
  %v805 = vpack.c.b16 %v581, %v565
  %v806 = vpack.c.b16 %v582, %v566
  %v807 = vpack.c.b16 %v583, %v567
  %v808 = vpack.c.b16 %v584, %v568
  %v809 = vpack.c.b16 %v585, %v569
  %v810 = vpack.c.b16 %v586, %v570
  %v811 = vpack.c.b16 %v587, %v571
  %v812 = vpack.c.b16 %v588, %v572
  %v813 = vpack.c.b16 %v589, %v573
  %v814 = vpack.c.b16 %v606, %v590
  %v815 = vpack.c.b16 %v607, %v591
  %v816 = vpack.c.b16 %v608, %v592
  %v817 = vpack.c.b16 %v609, %v593
  %v818 = vpack.c.b16 %v610, %v594
  %v819 = vpack.c.b16 %v611, %v595
  %v820 = vpack.c.b16 %v612, %v596
  %v821 = vpack.c.b16 %v613, %v597
  %v822 = vpack.c.b16 %v614, %v598
  %v823 = vpack.c.b16 %v615, %v599
  %v824 = vpack.c.b16 %v616, %v600
  %v825 = vpack.c.b16 %v617, %v601
  %v826 = vpack.c.b16 %v618, %v602
  %v827 = vpack.c.b16 %v619, %v603
  %v828 = vpack.c.b16 %v620, %v604
  %v829 = vpack.c.b16 %v621, %v605
  %v830 = vpack.c.b16 %v638, %v622
  %v831 = vpack.c.b16 %v639, %v623
  %v832 = vpack.c.b16 %v640, %v624
  %v833 = vpack.c.b16 %v641, %v625
  %v834 = vpack.c.b16 %v642, %v626
  %v835 = vpack.c.b16 %v643, %v627
  %v836 = vpack.c.b16 %v644, %v628
  %v837 = vpack.c.b16 %v645, %v629
  %v838 = vpack.c.b16 %v646, %v630
  %v839 = vpack.c.b16 %v647, %v631
  %v840 = vpack.c.b16 %v648, %v632
  %v841 = vpack.c.b16 %v649, %v633
  %v842 = vpack.c.b16 %v650, %v634
  %v843 = vpack.c.b16 %v651, %v635
  %v844 = vpack.c.b16 %v652, %v636
  %v845 = vpack.c.b16 %v653, %v637
  %v846 = vpack.c.b16 %v670, %v654
  %v847 = vpack.c.b16 %v671, %v655
  %v848 = vpack.c.b16 %v672, %v656
  %v849 = vpack.c.b16 %v673, %v657
  %v850 = vpack.c.b16 %v674, %v658
  %v851 = vpack.c.b16 %v675, %v659
  %v852 = vpack.c.b16 %v676, %v660
  %v853 = vpack.c.b16 %v677, %v661
  %v854 = vpack.c.b16 %v678, %v662
  %v855 = vpack.c.b16 %v679, %v663
  %v856 = vpack.c.b16 %v680, %v664
  %v857 = vpack.c.b16 %v681, %v665
  %v858 = vpack.c.b16 %v682, %v666
  %v859 = vpack.c.b16 %v683, %v667
  %v860 = vpack.c.b16 %v684, %v668
  %v861 = vpack.c.b16 %v685, %v669
  %v862 = vpack.c.b16 %v702, %v686
  %v863 = vpack.c.b16 %v703, %v687
  %v864 = vpack.c.b16 %v704, %v688
  %v865 = vpack.c.b16 %v705, %v689
  %v866 = vpack.c.b16 %v706, %v690
  %v867 = vpack.c.b16 %v707, %v691
  %v868 = vpack.c.b16 %v708, %v692
  %v869 = vpack.c.b16 %v709, %v693
  %v870 = vpack.c.b16 %v710, %v694
  %v871 = vpack.c.b16 %v711, %v695
  %v872 = vpack.c.b16 %v712, %v696
  %v873 = vpack.c.b16 %v713, %v697
  %v874 = vpack.c.b16 %v714, %v698
  %v875 = vpack.c.b16 %v715, %v699
  %v876 = vpack.c.b16 %v716, %v700
  %v877 = vpack.c.b16 %v717, %v701
  %v878 = vpack.c.b16 %v734, %v718
  %v879 = vpack.c.b16 %v735, %v719
  %v880 = vpack.c.b16 %v736, %v720
  %v881 = vpack.c.b16 %v737, %v721
  %v882 = vpack.c.b16 %v738, %v722
  %v883 = vpack.c.b16 %v739, %v723
  %v884 = vpack.c.b16 %v740, %v724
  %v885 = vpack.c.b16 %v741, %v725
  %v886 = vpack.c.b16 %v742, %v726
  %v887 = vpack.c.b16 %v743, %v727
  %v888 = vpack.c.b16 %v744, %v728
  %v889 = vpack.c.b16 %v745, %v729
  %v890 = vpack.c.b16 %v746, %v730
  %v891 = vpack.c.b16 %v747, %v731
  %v892 = vpack.c.b16 %v748, %v732
  %v893 = vpack.c.b16 %v749, %v733
  %v894 = vpack.c.b16 %v766, %v750
  %v895 = vpack.c.b16 %v767, %v751
  %v896 = vpack.c.b16 %v768, %v752
  %v897 = vpack.c.b16 %v769, %v753
  %v898 = vpack.c.b16 %v770, %v754
  %v899 = vpack.c.b16 %v771, %v755
  %v900 = vpack.c.b16 %v772, %v756
  %v901 = vpack.c.b16 %v773, %v757
  %v902 = vpack.c.b16 %v774, %v758
  %v903 = vpack.c.b16 %v775, %v759
  %v904 = vpack.c.b16 %v776, %v760
  %v905 = vpack.c.b16 %v777, %v761
  %v906 = vpack.c.b16 %v778, %v762
  %v907 = vpack.c.b16 %v779, %v763
  %v908 = vpack.c.b16 %v780, %v764
  %v909 = vpack.c.b16 %v781, %v765
  %v1294 = vunpack.c.l.b16 %v142
  %v1295 = vunpack.c.l.b16 %v143
  %v1296 = vunpack.c.l.b16 %v144
  %v1297 = vunpack.c.l.b16 %v145
  %v1298 = vunpack.c.l.b16 %v146
  %v1299 = vunpack.c.l.b16 %v147
  %v1300 = vunpack.c.l.b16 %v148
  %v1301 = vunpack.c.l.b16 %v149
  %v1302 = vunpack.c.l.b16 %v150
  %v1303 = vunpack.c.l.b16 %v151
  %v1304 = vunpack.c.l.b16 %v152
  %v1305 = vunpack.c.l.b16 %v153
  %v1306 = vunpack.c.l.b16 %v154
  %v1307 = vunpack.c.l.b16 %v155
  %v1308 = vunpack.c.l.b16 %v156
  %v1309 = vunpack.c.l.b16 %v157
  %v1310 = vunpack.c.l.b16 %v158
  %v1311 = vunpack.c.l.b16 %v159
  %v1312 = vunpack.c.l.b16 %v160
  %v1313 = vunpack.c.l.b16 %v161
  %v1314 = vunpack.c.l.b16 %v162
  %v1315 = vunpack.c.l.b16 %v163
  %v1316 = vunpack.c.l.b16 %v164
  %v1317 = vunpack.c.l.b16 %v165
  %v1318 = vunpack.c.l.b16 %v166
  %v1319 = vunpack.c.l.b16 %v167
  %v1320 = vunpack.c.l.b16 %v168
  %v1321 = vunpack.c.l.b16 %v169
  %v1322 = vunpack.c.l.b16 %v170
  %v1323 = vunpack.c.l.b16 %v171
  %v1324 = vunpack.c.l.b16 %v172
  %v1325 = vunpack.c.l.b16 %v173
  %v1326 = vunpack.c.l.b16 %v174
  %v1327 = vunpack.c.l.b16 %v175
  %v1328 = vunpack.c.l.b16 %v176
  %v1329 = vunpack.c.l.b16 %v177
  %v1330 = vunpack.c.l.b16 %v178
  %v1331 = vunpack.c.l.b16 %v179
  %v1332 = vunpack.c.l.b16 %v180
  %v1333 = vunpack.c.l.b16 %v181
  %v1334 = vunpack.c.l.b16 %v182
  %v1335 = vunpack.c.l.b16 %v183
  %v1336 = vunpack.c.l.b16 %v184
  %v1337 = vunpack.c.l.b16 %v185
  %v1338 = vunpack.c.l.b16 %v186
  %v1339 = vunpack.c.l.b16 %v187
  %v1340 = vunpack.c.l.b16 %v188
  %v1341 = vunpack.c.l.b16 %v189
  %v1342 = vunpack.c.l.b16 %v190
  %v1343 = vunpack.c.l.b16 %v191
  %v1344 = vunpack.c.l.b16 %v192
  %v1345 = vunpack.c.l.b16 %v193
  %v1346 = vunpack.c.l.b16 %v194
  %v1347 = vunpack.c.l.b16 %v195
  %v1348 = vunpack.c.l.b16 %v196
  %v1349 = vunpack.c.l.b16 %v197
  %v1350 = vunpack.c.l.b16 %v198
  %v1351 = vunpack.c.l.b16 %v199
  %v1352 = vunpack.c.l.b16 %v200
  %v1353 = vunpack.c.l.b16 %v201
  %v1354 = vunpack.c.l.b16 %v202
  %v1355 = vunpack.c.l.b16 %v203
  %v1356 = vunpack.c.l.b16 %v204
  %v1357 = vunpack.c.l.b16 %v205
  %v1358 = vunpack.c.l.b16 %v206
  %v1359 = vunpack.c.l.b16 %v207
  %v1360 = vunpack.c.l.b16 %v208
  %v1361 = vunpack.c.l.b16 %v209
  %v1362 = vunpack.c.l.b16 %v210
  %v1363 = vunpack.c.l.b16 %v211
  %v1364 = vunpack.c.l.b16 %v212
  %v1365 = vunpack.c.l.b16 %v213
  %v1366 = vunpack.c.l.b16 %v214
  %v1367 = vunpack.c.l.b16 %v215
  %v1368 = vunpack.c.l.b16 %v216
  %v1369 = vunpack.c.l.b16 %v217
  %v1370 = vunpack.c.l.b16 %v218
  %v1371 = vunpack.c.l.b16 %v219
  %v1372 = vunpack.c.l.b16 %v220
  %v1373 = vunpack.c.l.b16 %v221
  %v1374 = vunpack.c.l.b16 %v222
  %v1375 = vunpack.c.l.b16 %v223
  %v1376 = vunpack.c.l.b16 %v224
  %v1377 = vunpack.c.l.b16 %v225
  %v1378 = vunpack.c.l.b16 %v226
  %v1379 = vunpack.c.l.b16 %v227
  %v1380 = vunpack.c.l.b16 %v228
  %v1381 = vunpack.c.l.b16 %v229
  %v1382 = vunpack.c.l.b16 %v230
  %v1383 = vunpack.c.l.b16 %v231
  %v1384 = vunpack.c.l.b16 %v232
  %v1385 = vunpack.c.l.b16 %v233
  %v1386 = vunpack.c.l.b16 %v234
  %v1387 = vunpack.c.l.b16 %v235
  %v1388 = vunpack.c.l.b16 %v236
  %v1389 = vunpack.c.l.b16 %v237
  %v1390 = vunpack.c.l.b16 %v238
  %v1391 = vunpack.c.l.b16 %v239
  %v1392 = vunpack.c.l.b16 %v240
  %v1393 = vunpack.c.l.b16 %v241
  %v1394 = vunpack.c.l.b16 %v242
  %v1395 = vunpack.c.l.b16 %v243
  %v1396 = vunpack.c.l.b16 %v244
  %v1397 = vunpack.c.l.b16 %v245
  %v1398 = vunpack.c.l.b16 %v246
  %v1399 = vunpack.c.l.b16 %v247
  %v1400 = vunpack.c.l.b16 %v248
  %v1401 = vunpack.c.l.b16 %v249
  %v1402 = vunpack.c.l.b16 %v250
  %v1403 = vunpack.c.l.b16 %v251
  %v1404 = vunpack.c.l.b16 %v252
  %v1405 = vunpack.c.l.b16 %v253
  %v1406 = vunpack.c.l.b16 %v254
  %v1407 = vunpack.c.l.b16 %v255
  %v1408 = vunpack.c.l.b16 %v256
  %v1409 = vunpack.c.l.b16 %v257
  %v1410 = vunpack.c.l.b16 %v258
  %v1411 = vunpack.c.l.b16 %v259
  %v1412 = vunpack.c.l.b16 %v260
  %v1413 = vunpack.c.l.b16 %v261
  %v1414 = vunpack.c.l.b16 %v262
  %v1415 = vunpack.c.l.b16 %v263
  %v1416 = vunpack.c.l.b16 %v264
  %v1417 = vunpack.c.l.b16 %v265
  %v1418 = vunpack.c.l.b16 %v266
  %v1419 = vunpack.c.l.b16 %v267
  %v1420 = vunpack.c.l.b16 %v268
  %v1421 = vunpack.c.l.b16 %v269
  %v1422 = vunpack.c.l.b16 %v270
  %v1423 = vunpack.c.l.b16 %v271
  %v1424 = vunpack.c.l.b16 %v272
  %v1425 = vunpack.c.l.b16 %v273
  %v1426 = vunpack.c.l.b16 %v274
  %v1427 = vunpack.c.l.b16 %v275
  %v1428 = vunpack.c.l.b16 %v276
  %v1429 = vunpack.c.l.b16 %v277
  %v1430 = vunpack.c.l.b16 %v278
  %v1431 = vunpack.c.l.b16 %v279
  %v1432 = vunpack.c.l.b16 %v280
  %v1433 = vunpack.c.l.b16 %v281
  %v1434 = vunpack.c.l.b16 %v282
  %v1435 = vunpack.c.l.b16 %v283
  %v1436 = vunpack.c.l.b16 %v284
  %v1437 = vunpack.c.l.b16 %v285
  %v1438 = vunpack.c.l.b16 %v286
  %v1439 = vunpack.c.l.b16 %v287
  %v1440 = vunpack.c.l.b16 %v288
  %v1441 = vunpack.c.l.b16 %v289
  %v1442 = vunpack.c.l.b16 %v290
  %v1443 = vunpack.c.l.b16 %v291
  %v1444 = vunpack.c.l.b16 %v292
  %v1445 = vunpack.c.l.b16 %v293
  %v1446 = vunpack.c.l.b16 %v294
  %v1447 = vunpack.c.l.b16 %v295
  %v1448 = vunpack.c.l.b16 %v296
  %v1449 = vunpack.c.l.b16 %v297
  %v1450 = vunpack.c.l.b16 %v298
  %v1451 = vunpack.c.l.b16 %v299
  %v1452 = vunpack.c.l.b16 %v300
  %v1453 = vunpack.c.l.b16 %v301
  %v1454 = vunpack.c.l.b16 %v302
  %v1455 = vunpack.c.l.b16 %v303
  %v1456 = vunpack.c.l.b16 %v304
  %v1457 = vunpack.c.l.b16 %v305
  %v1458 = vunpack.c.l.b16 %v306
  %v1459 = vunpack.c.l.b16 %v307
  %v1460 = vunpack.c.l.b16 %v308
  %v1461 = vunpack.c.l.b16 %v309
  %v1462 = vunpack.c.l.b16 %v310
  %v1463 = vunpack.c.l.b16 %v311
  %v1464 = vunpack.c.l.b16 %v312
  %v1465 = vunpack.c.l.b16 %v313
  %v1466 = vunpack.c.l.b16 %v314
  %v1467 = vunpack.c.l.b16 %v315
  %v1468 = vunpack.c.l.b16 %v316
  %v1469 = vunpack.c.l.b16 %v317
  %v1470 = vunpack.c.l.b16 %v318
  %v1471 = vunpack.c.l.b16 %v319
  %v1472 = vunpack.c.l.b16 %v320
  %v1473 = vunpack.c.l.b16 %v321
  %v1474 = vunpack.c.l.b16 %v322
  %v1475 = vunpack.c.l.b16 %v323
  %v1476 = vunpack.c.l.b16 %v324
  %v1477 = vunpack.c.l.b16 %v325
  %v1478 = vunpack.c.l.b16 %v326
  %v1479 = vunpack.c.l.b16 %v327
  %v1480 = vunpack.c.l.b16 %v328
  %v1481 = vunpack.c.l.b16 %v329
  %v1482 = vunpack.c.l.b16 %v330
  %v1483 = vunpack.c.l.b16 %v331
  %v1484 = vunpack.c.l.b16 %v332
  %v1485 = vunpack.c.l.b16 %v333
  %v1486 = vunpack.c.l.b16 %v334
  %v1487 = vunpack.c.l.b16 %v335
  %v1488 = vunpack.c.l.b16 %v336
  %v1489 = vunpack.c.l.b16 %v337
  %v1490 = vunpack.c.l.b16 %v338
  %v1491 = vunpack.c.l.b16 %v339
  %v1492 = vunpack.c.l.b16 %v340
  %v1493 = vunpack.c.l.b16 %v341
  %v1494 = vunpack.c.l.b16 %v342
  %v1495 = vunpack.c.l.b16 %v343
  %v1496 = vunpack.c.l.b16 %v344
  %v1497 = vunpack.c.l.b16 %v345
  %v1498 = vunpack.c.l.b16 %v346
  %v1499 = vunpack.c.l.b16 %v347
  %v1500 = vunpack.c.l.b16 %v348
  %v1501 = vunpack.c.l.b16 %v349
  %v1502 = vunpack.c.l.b16 %v350
  %v1503 = vunpack.c.l.b16 %v351
  %v1504 = vunpack.c.l.b16 %v352
  %v1505 = vunpack.c.l.b16 %v353
  %v1506 = vunpack.c.l.b16 %v354
  %v1507 = vunpack.c.l.b16 %v355
  %v1508 = vunpack.c.l.b16 %v356
  %v1509 = vunpack.c.l.b16 %v357
  %v1510 = vunpack.c.l.b16 %v358
  %v1511 = vunpack.c.l.b16 %v359
  %v1512 = vunpack.c.l.b16 %v360
  %v1513 = vunpack.c.l.b16 %v361
  %v1514 = vunpack.c.l.b16 %v362
  %v1515 = vunpack.c.l.b16 %v363
  %v1516 = vunpack.c.l.b16 %v364
  %v1517 = vunpack.c.l.b16 %v365
  %v1518 = vunpack.c.l.b16 %v366
  %v1519 = vunpack.c.l.b16 %v367
  %v1520 = vunpack.c.l.b16 %v368
  %v1521 = vunpack.c.l.b16 %v369
  %v1522 = vunpack.c.l.b16 %v370
  %v1523 = vunpack.c.l.b16 %v371
  %v1524 = vunpack.c.l.b16 %v372
  %v1525 = vunpack.c.l.b16 %v373
  %v1526 = vunpack.c.l.b16 %v374
  %v1527 = vunpack.c.l.b16 %v375
  %v1528 = vunpack.c.l.b16 %v376
  %v1529 = vunpack.c.l.b16 %v377
  %v1530 = vunpack.c.l.b16 %v378
  %v1531 = vunpack.c.l.b16 %v379
  %v1532 = vunpack.c.l.b16 %v380
  %v1533 = vunpack.c.l.b16 %v381
  %v1534 = vunpack.c.l.b16 %v382
  %v1535 = vunpack.c.l.b16 %v383
  %v1536 = vunpack.c.l.b16 %v384
  %v1537 = vunpack.c.l.b16 %v385
  %v1538 = vunpack.c.l.b16 %v386
  %v1539 = vunpack.c.l.b16 %v387
  %v1540 = vunpack.c.l.b16 %v388
  %v1541 = vunpack.c.l.b16 %v389
  %v1542 = vunpack.c.l.b16 %v390
  %v1543 = vunpack.c.l.b16 %v391
  %v1544 = vunpack.c.l.b16 %v392
  %v1545 = vunpack.c.l.b16 %v393
  %v1546 = vunpack.c.l.b16 %v394
  %v1547 = vunpack.c.l.b16 %v395
  %v1548 = vunpack.c.l.b16 %v396
  %v1549 = vunpack.c.l.b16 %v397
  %v1550 = vpack.c.b16 %v1295, %v1294
  %v1551 = vpack.c.b16 %v1297, %v1296
  %v1552 = vpack.c.b16 %v1299, %v1298
  %v1553 = vpack.c.b16 %v1301, %v1300
  %v1554 = vpack.c.b16 %v1303, %v1302
  %v1555 = vpack.c.b16 %v1305, %v1304
  %v1556 = vpack.c.b16 %v1307, %v1306
  %v1557 = vpack.c.b16 %v1309, %v1308
  %v1558 = vpack.c.b16 %v1311, %v1310
  %v1559 = vpack.c.b16 %v1313, %v1312
  %v1560 = vpack.c.b16 %v1315, %v1314
  %v1561 = vpack.c.b16 %v1317, %v1316
  %v1562 = vpack.c.b16 %v1319, %v1318
  %v1563 = vpack.c.b16 %v1321, %v1320
  %v1564 = vpack.c.b16 %v1323, %v1322
  %v1565 = vpack.c.b16 %v1325, %v1324
  %v1566 = vpack.c.b16 %v1327, %v1326
  %v1567 = vpack.c.b16 %v1329, %v1328
  %v1568 = vpack.c.b16 %v1331, %v1330
  %v1569 = vpack.c.b16 %v1333, %v1332
  %v1570 = vpack.c.b16 %v1335, %v1334
  %v1571 = vpack.c.b16 %v1337, %v1336
  %v1572 = vpack.c.b16 %v1339, %v1338
  %v1573 = vpack.c.b16 %v1341, %v1340
  %v1574 = vpack.c.b16 %v1343, %v1342
  %v1575 = vpack.c.b16 %v1345, %v1344
  %v1576 = vpack.c.b16 %v1347, %v1346
  %v1577 = vpack.c.b16 %v1349, %v1348
  %v1578 = vpack.c.b16 %v1351, %v1350
  %v1579 = vpack.c.b16 %v1353, %v1352
  %v1580 = vpack.c.b16 %v1355, %v1354
  %v1581 = vpack.c.b16 %v1357, %v1356
  %v1582 = vpack.c.b16 %v1359, %v1358
  %v1583 = vpack.c.b16 %v1361, %v1360
  %v1584 = vpack.c.b16 %v1363, %v1362
  %v1585 = vpack.c.b16 %v1365, %v1364
  %v1586 = vpack.c.b16 %v1367, %v1366
  %v1587 = vpack.c.b16 %v1369, %v1368
  %v1588 = vpack.c.b16 %v1371, %v1370
  %v1589 = vpack.c.b16 %v1373, %v1372
  %v1590 = vpack.c.b16 %v1375, %v1374
  %v1591 = vpack.c.b16 %v1377, %v1376
  %v1592 = vpack.c.b16 %v1379, %v1378
  %v1593 = vpack.c.b16 %v1381, %v1380
  %v1594 = vpack.c.b16 %v1383, %v1382
  %v1595 = vpack.c.b16 %v1385, %v1384
  %v1596 = vpack.c.b16 %v1387, %v1386
  %v1597 = vpack.c.b16 %v1389, %v1388
  %v1598 = vpack.c.b16 %v1391, %v1390
  %v1599 = vpack.c.b16 %v1393, %v1392
  %v1600 = vpack.c.b16 %v1395, %v1394
  %v1601 = vpack.c.b16 %v1397, %v1396
  %v1602 = vpack.c.b16 %v1399, %v1398
  %v1603 = vpack.c.b16 %v1401, %v1400
  %v1604 = vpack.c.b16 %v1403, %v1402
  %v1605 = vpack.c.b16 %v1405, %v1404
  %v1606 = vpack.c.b16 %v1407, %v1406
  %v1607 = vpack.c.b16 %v1409, %v1408
  %v1608 = vpack.c.b16 %v1411, %v1410
  %v1609 = vpack.c.b16 %v1413, %v1412
  %v1610 = vpack.c.b16 %v1415, %v1414
  %v1611 = vpack.c.b16 %v1417, %v1416
  %v1612 = vpack.c.b16 %v1419, %v1418
  %v1613 = vpack.c.b16 %v1421, %v1420
  %v1614 = vpack.c.b16 %v1423, %v1422
  %v1615 = vpack.c.b16 %v1425, %v1424
  %v1616 = vpack.c.b16 %v1427, %v1426
  %v1617 = vpack.c.b16 %v1429, %v1428
  %v1618 = vpack.c.b16 %v1431, %v1430
  %v1619 = vpack.c.b16 %v1433, %v1432
  %v1620 = vpack.c.b16 %v1435, %v1434
  %v1621 = vpack.c.b16 %v1437, %v1436
  %v1622 = vpack.c.b16 %v1439, %v1438
  %v1623 = vpack.c.b16 %v1441, %v1440
  %v1624 = vpack.c.b16 %v1443, %v1442
  %v1625 = vpack.c.b16 %v1445, %v1444
  %v1626 = vpack.c.b16 %v1447, %v1446
  %v1627 = vpack.c.b16 %v1449, %v1448
  %v1628 = vpack.c.b16 %v1451, %v1450
  %v1629 = vpack.c.b16 %v1453, %v1452
  %v1630 = vpack.c.b16 %v1455, %v1454
  %v1631 = vpack.c.b16 %v1457, %v1456
  %v1632 = vpack.c.b16 %v1459, %v1458
  %v1633 = vpack.c.b16 %v1461, %v1460
  %v1634 = vpack.c.b16 %v1463, %v1462
  %v1635 = vpack.c.b16 %v1465, %v1464
  %v1636 = vpack.c.b16 %v1467, %v1466
  %v1637 = vpack.c.b16 %v1469, %v1468
  %v1638 = vpack.c.b16 %v1471, %v1470
  %v1639 = vpack.c.b16 %v1473, %v1472
  %v1640 = vpack.c.b16 %v1475, %v1474
  %v1641 = vpack.c.b16 %v1477, %v1476
  %v1642 = vpack.c.b16 %v1479, %v1478
  %v1643 = vpack.c.b16 %v1481, %v1480
  %v1644 = vpack.c.b16 %v1483, %v1482
  %v1645 = vpack.c.b16 %v1485, %v1484
  %v1646 = vpack.c.b16 %v1487, %v1486
  %v1647 = vpack.c.b16 %v1489, %v1488
  %v1648 = vpack.c.b16 %v1491, %v1490
  %v1649 = vpack.c.b16 %v1493, %v1492
  %v1650 = vpack.c.b16 %v1495, %v1494
  %v1651 = vpack.c.b16 %v1497, %v1496
  %v1652 = vpack.c.b16 %v1499, %v1498
  %v1653 = vpack.c.b16 %v1501, %v1500
  %v1654 = vpack.c.b16 %v1503, %v1502
  %v1655 = vpack.c.b16 %v1505, %v1504
  %v1656 = vpack.c.b16 %v1507, %v1506
  %v1657 = vpack.c.b16 %v1509, %v1508
  %v1658 = vpack.c.b16 %v1511, %v1510
  %v1659 = vpack.c.b16 %v1513, %v1512
  %v1660 = vpack.c.b16 %v1515, %v1514
  %v1661 = vpack.c.b16 %v1517, %v1516
  %v1662 = vpack.c.b16 %v1519, %v1518
  %v1663 = vpack.c.b16 %v1521, %v1520
  %v1664 = vpack.c.b16 %v1523, %v1522
  %v1665 = vpack.c.b16 %v1525, %v1524
  %v1666 = vpack.c.b16 %v1527, %v1526
  %v1667 = vpack.c.b16 %v1529, %v1528
  %v1668 = vpack.c.b16 %v1531, %v1530
  %v1669 = vpack.c.b16 %v1533, %v1532
  %v1670 = vpack.c.b16 %v1535, %v1534
  %v1671 = vpack.c.b16 %v1537, %v1536
  %v1672 = vpack.c.b16 %v1539, %v1538
  %v1673 = vpack.c.b16 %v1541, %v1540
  %v1674 = vpack.c.b16 %v1543, %v1542
  %v1675 = vpack.c.b16 %v1545, %v1544
  %v1676 = vpack.c.b16 %v1547, %v1546
  %v1677 = vpack.c.b16 %v1549, %v1548
  %1806 = vmatpush.bf16.msra.mxu0 %v1557
  %1807 = vmatpush.bf16.msra.mxu0 %v1556
  %1808 = vmatpush.bf16.msra.mxu0 %v1555
  %1809 = vmatpush.bf16.msra.mxu0 %v1554
  %1810 = vmatpush.bf16.msra.mxu0 %v1553
  %1811 = vmatpush.bf16.msra.mxu0 %v1552
  %1812 = vmatpush.bf16.msra.mxu0 %v1551
  %1813 = vmatpush.bf16.msra.mxu0 %v1550
  %1814 = vmatmul.bf16.gmra.mxu0 %v782
  %v1815 = vpop.f32.mrf.mxu0
  %v1816 = vadd.f32 0.0, %v1815
  %v1817 = vpop.f32.mrf.mxu0
  %v1818 = vadd.f32 0.0, %v1817
  %1819 = vmatmul.bf16.gmra.mxu0 %v798
  %v1820 = vpop.f32.mrf.mxu0
  %v1821 = vadd.f32 0.0, %v1820
  %v1822 = vpop.f32.mrf.mxu0
  %v1823 = vadd.f32 0.0, %v1822
  %1824 = vmatmul.bf16.gmra.mxu0 %v814
  %v1825 = vpop.f32.mrf.mxu0
  %v1826 = vadd.f32 0.0, %v1825
  %v1827 = vpop.f32.mrf.mxu0
  %v1828 = vadd.f32 0.0, %v1827
  %1829 = vmatmul.bf16.gmra.mxu0 %v830
  %v1830 = vpop.f32.mrf.mxu0
  %v1831 = vadd.f32 0.0, %v1830
  %v1832 = vpop.f32.mrf.mxu0
  %v1833 = vadd.f32 0.0, %v1832
  %1834 = vmatmul.bf16.gmra.mxu0 %v846
  %v1835 = vpop.f32.mrf.mxu0
  %v1836 = vadd.f32 0.0, %v1835
  %v1837 = vpop.f32.mrf.mxu0
  %v1838 = vadd.f32 0.0, %v1837
  %1839 = vmatmul.bf16.gmra.mxu0 %v862
  %v1840 = vpop.f32.mrf.mxu0
  %v1841 = vadd.f32 0.0, %v1840
  %v1842 = vpop.f32.mrf.mxu0
  %v1843 = vadd.f32 0.0, %v1842
  %1844 = vmatmul.bf16.gmra.mxu0 %v878
  %v1845 = vpop.f32.mrf.mxu0
  %v1846 = vadd.f32 0.0, %v1845
  %v1847 = vpop.f32.mrf.mxu0
  %v1848 = vadd.f32 0.0, %v1847
  %1849 = vmatmul.bf16.gmra.mxu0 %v894
  %v1850 = vpop.f32.mrf.mxu0
  %v1851 = vadd.f32 0.0, %v1850
  %v1852 = vpop.f32.mrf.mxu0
  %v1853 = vadd.f32 0.0, %v1852
  %1854 = vdwg.mxu0
  %1855 = vmatpush.bf16.msra.mxu0 %v1565
  %1856 = vmatpush.bf16.msra.mxu0 %v1564
  %1857 = vmatpush.bf16.msra.mxu0 %v1563
  %1858 = vmatpush.bf16.msra.mxu0 %v1562
  %1859 = vmatpush.bf16.msra.mxu0 %v1561
  %1860 = vmatpush.bf16.msra.mxu0 %v1560
  %1861 = vmatpush.bf16.msra.mxu0 %v1559
  %1862 = vmatpush.bf16.msra.mxu0 %v1558
  %1863 = vmatmul.bf16.gmra.mxu0 %v783
  %v1864 = vpop.f32.mrf.mxu0
  %v1865 = vadd.f32 %v1816, %v1864
  %v1866 = vpop.f32.mrf.mxu0
  %v1867 = vadd.f32 %v1818, %v1866
  %1868 = vmatmul.bf16.gmra.mxu0 %v799
  %v1869 = vpop.f32.mrf.mxu0
  %v1870 = vadd.f32 %v1821, %v1869
  %v1871 = vpop.f32.mrf.mxu0
  %v1872 = vadd.f32 %v1823, %v1871
  %1873 = vmatmul.bf16.gmra.mxu0 %v815
  %v1874 = vpop.f32.mrf.mxu0
  %v1875 = vadd.f32 %v1826, %v1874
  %v1876 = vpop.f32.mrf.mxu0
  %v1877 = vadd.f32 %v1828, %v1876
  %1878 = vmatmul.bf16.gmra.mxu0 %v831
  %v1879 = vpop.f32.mrf.mxu0
  %v1880 = vadd.f32 %v1831, %v1879
  %v1881 = vpop.f32.mrf.mxu0
  %v1882 = vadd.f32 %v1833, %v1881
  %1883 = vmatmul.bf16.gmra.mxu0 %v847
  %v1884 = vpop.f32.mrf.mxu0
  %v1885 = vadd.f32 %v1836, %v1884
  %v1886 = vpop.f32.mrf.mxu0
  %v1887 = vadd.f32 %v1838, %v1886
  %1888 = vmatmul.bf16.gmra.mxu0 %v863
  %v1889 = vpop.f32.mrf.mxu0
  %v1890 = vadd.f32 %v1841, %v1889
  %v1891 = vpop.f32.mrf.mxu0
  %v1892 = vadd.f32 %v1843, %v1891
  %1893 = vmatmul.bf16.gmra.mxu0 %v879
  %v1894 = vpop.f32.mrf.mxu0
  %v1895 = vadd.f32 %v1846, %v1894
  %v1896 = vpop.f32.mrf.mxu0
  %v1897 = vadd.f32 %v1848, %v1896
  %1898 = vmatmul.bf16.gmra.mxu0 %v895
  %v1899 = vpop.f32.mrf.mxu0
  %v1900 = vadd.f32 %v1851, %v1899
  %v1901 = vpop.f32.mrf.mxu0
  %v1902 = vadd.f32 %v1853, %v1901
  %1903 = vdwg.mxu0
  %1904 = vmatpush.bf16.msra.mxu0 %v1573
  %1905 = vmatpush.bf16.msra.mxu0 %v1572
  %1906 = vmatpush.bf16.msra.mxu0 %v1571
  %1907 = vmatpush.bf16.msra.mxu0 %v1570
  %1908 = vmatpush.bf16.msra.mxu0 %v1569
  %1909 = vmatpush.bf16.msra.mxu0 %v1568
  %1910 = vmatpush.bf16.msra.mxu0 %v1567
  %1911 = vmatpush.bf16.msra.mxu0 %v1566
  %1912 = vmatmul.bf16.gmra.mxu0 %v784
  %v1913 = vpop.f32.mrf.mxu0
  %v1914 = vadd.f32 %v1865, %v1913
  %v1915 = vpop.f32.mrf.mxu0
  %v1916 = vadd.f32 %v1867, %v1915
  %1917 = vmatmul.bf16.gmra.mxu0 %v800
  %v1918 = vpop.f32.mrf.mxu0
  %v1919 = vadd.f32 %v1870, %v1918
  %v1920 = vpop.f32.mrf.mxu0
  %v1921 = vadd.f32 %v1872, %v1920
  %1922 = vmatmul.bf16.gmra.mxu0 %v816
  %v1923 = vpop.f32.mrf.mxu0
  %v1924 = vadd.f32 %v1875, %v1923
  %v1925 = vpop.f32.mrf.mxu0
  %v1926 = vadd.f32 %v1877, %v1925
  %1927 = vmatmul.bf16.gmra.mxu0 %v832
  %v1928 = vpop.f32.mrf.mxu0
  %v1929 = vadd.f32 %v1880, %v1928
  %v1930 = vpop.f32.mrf.mxu0
  %v1931 = vadd.f32 %v1882, %v1930
  %1932 = vmatmul.bf16.gmra.mxu0 %v848
  %v1933 = vpop.f32.mrf.mxu0
  %v1934 = vadd.f32 %v1885, %v1933
  %v1935 = vpop.f32.mrf.mxu0
  %v1936 = vadd.f32 %v1887, %v1935
  %1937 = vmatmul.bf16.gmra.mxu0 %v864
  %v1938 = vpop.f32.mrf.mxu0
  %v1939 = vadd.f32 %v1890, %v1938
  %v1940 = vpop.f32.mrf.mxu0
  %v1941 = vadd.f32 %v1892, %v1940
  %1942 = vmatmul.bf16.gmra.mxu0 %v880
  %v1943 = vpop.f32.mrf.mxu0
  %v1944 = vadd.f32 %v1895, %v1943
  %v1945 = vpop.f32.mrf.mxu0
  %v1946 = vadd.f32 %v1897, %v1945
  %1947 = vmatmul.bf16.gmra.mxu0 %v896
  %v1948 = vpop.f32.mrf.mxu0
  %v1949 = vadd.f32 %v1900, %v1948
  %v1950 = vpop.f32.mrf.mxu0
  %v1951 = vadd.f32 %v1902, %v1950
  %1952 = vdwg.mxu0
  %1953 = vmatpush.bf16.msra.mxu0 %v1581
  %1954 = vmatpush.bf16.msra.mxu0 %v1580
  %1955 = vmatpush.bf16.msra.mxu0 %v1579
  %1956 = vmatpush.bf16.msra.mxu0 %v1578
  %1957 = vmatpush.bf16.msra.mxu0 %v1577
  %1958 = vmatpush.bf16.msra.mxu0 %v1576
  %1959 = vmatpush.bf16.msra.mxu0 %v1575
  %1960 = vmatpush.bf16.msra.mxu0 %v1574
  %1961 = vmatmul.bf16.gmra.mxu0 %v785
  %v1962 = vpop.f32.mrf.mxu0
  %v1963 = vadd.f32 %v1914, %v1962
  %v1964 = vpop.f32.mrf.mxu0
  %v1965 = vadd.f32 %v1916, %v1964
  %1966 = vmatmul.bf16.gmra.mxu0 %v801
  %v1967 = vpop.f32.mrf.mxu0
  %v1968 = vadd.f32 %v1919, %v1967
  %v1969 = vpop.f32.mrf.mxu0
  %v1970 = vadd.f32 %v1921, %v1969
  %1971 = vmatmul.bf16.gmra.mxu0 %v817
  %v1972 = vpop.f32.mrf.mxu0
  %v1973 = vadd.f32 %v1924, %v1972
  %v1974 = vpop.f32.mrf.mxu0
  %v1975 = vadd.f32 %v1926, %v1974
  %1976 = vmatmul.bf16.gmra.mxu0 %v833
  %v1977 = vpop.f32.mrf.mxu0
  %v1978 = vadd.f32 %v1929, %v1977
  %v1979 = vpop.f32.mrf.mxu0
  %v1980 = vadd.f32 %v1931, %v1979
  %1981 = vmatmul.bf16.gmra.mxu0 %v849
  %v1982 = vpop.f32.mrf.mxu0
  %v1983 = vadd.f32 %v1934, %v1982
  %v1984 = vpop.f32.mrf.mxu0
  %v1985 = vadd.f32 %v1936, %v1984
  %1986 = vmatmul.bf16.gmra.mxu0 %v865
  %v1987 = vpop.f32.mrf.mxu0
  %v1988 = vadd.f32 %v1939, %v1987
  %v1989 = vpop.f32.mrf.mxu0
  %v1990 = vadd.f32 %v1941, %v1989
  %1991 = vmatmul.bf16.gmra.mxu0 %v881
  %v1992 = vpop.f32.mrf.mxu0
  %v1993 = vadd.f32 %v1944, %v1992
  %v1994 = vpop.f32.mrf.mxu0
  %v1995 = vadd.f32 %v1946, %v1994
  %1996 = vmatmul.bf16.gmra.mxu0 %v897
  %v1997 = vpop.f32.mrf.mxu0
  %v1998 = vadd.f32 %v1949, %v1997
  %v1999 = vpop.f32.mrf.mxu0
  %v2000 = vadd.f32 %v1951, %v1999
  %2001 = vdwg.mxu0
  %2002 = vmatpush.bf16.msra.mxu0 %v1589
  %2003 = vmatpush.bf16.msra.mxu0 %v1588
  %2004 = vmatpush.bf16.msra.mxu0 %v1587
  %2005 = vmatpush.bf16.msra.mxu0 %v1586
  %2006 = vmatpush.bf16.msra.mxu0 %v1585
  %2007 = vmatpush.bf16.msra.mxu0 %v1584
  %2008 = vmatpush.bf16.msra.mxu0 %v1583
  %2009 = vmatpush.bf16.msra.mxu0 %v1582
  %2010 = vmatmul.bf16.gmra.mxu0 %v786
  %v2011 = vpop.f32.mrf.mxu0
  %v2012 = vadd.f32 %v1963, %v2011
  %v2013 = vpop.f32.mrf.mxu0
  %v2014 = vadd.f32 %v1965, %v2013
  %2015 = vmatmul.bf16.gmra.mxu0 %v802
  %v2016 = vpop.f32.mrf.mxu0
  %v2017 = vadd.f32 %v1968, %v2016
  %v2018 = vpop.f32.mrf.mxu0
  %v2019 = vadd.f32 %v1970, %v2018
  %2020 = vmatmul.bf16.gmra.mxu0 %v818
  %v2021 = vpop.f32.mrf.mxu0
  %v2022 = vadd.f32 %v1973, %v2021
  %v2023 = vpop.f32.mrf.mxu0
  %v2024 = vadd.f32 %v1975, %v2023
  %2025 = vmatmul.bf16.gmra.mxu0 %v834
  %v2026 = vpop.f32.mrf.mxu0
  %v2027 = vadd.f32 %v1978, %v2026
  %v2028 = vpop.f32.mrf.mxu0
  %v2029 = vadd.f32 %v1980, %v2028
  %2030 = vmatmul.bf16.gmra.mxu0 %v850
  %v2031 = vpop.f32.mrf.mxu0
  %v2032 = vadd.f32 %v1983, %v2031
  %v2033 = vpop.f32.mrf.mxu0
  %v2034 = vadd.f32 %v1985, %v2033
  %2035 = vmatmul.bf16.gmra.mxu0 %v866
  %v2036 = vpop.f32.mrf.mxu0
  %v2037 = vadd.f32 %v1988, %v2036
  %v2038 = vpop.f32.mrf.mxu0
  %v2039 = vadd.f32 %v1990, %v2038
  %2040 = vmatmul.bf16.gmra.mxu0 %v882
  %v2041 = vpop.f32.mrf.mxu0
  %v2042 = vadd.f32 %v1993, %v2041
  %v2043 = vpop.f32.mrf.mxu0
  %v2044 = vadd.f32 %v1995, %v2043
  %2045 = vmatmul.bf16.gmra.mxu0 %v898
  %v2046 = vpop.f32.mrf.mxu0
  %v2047 = vadd.f32 %v1998, %v2046
  %v2048 = vpop.f32.mrf.mxu0
  %v2049 = vadd.f32 %v2000, %v2048
  %2050 = vdwg.mxu0
  %2051 = vmatpush.bf16.msra.mxu0 %v1597
  %2052 = vmatpush.bf16.msra.mxu0 %v1596
  %2053 = vmatpush.bf16.msra.mxu0 %v1595
  %2054 = vmatpush.bf16.msra.mxu0 %v1594
  %2055 = vmatpush.bf16.msra.mxu0 %v1593
  %2056 = vmatpush.bf16.msra.mxu0 %v1592
  %2057 = vmatpush.bf16.msra.mxu0 %v1591
  %2058 = vmatpush.bf16.msra.mxu0 %v1590
  %2059 = vmatmul.bf16.gmra.mxu0 %v787
  %v2060 = vpop.f32.mrf.mxu0
  %v2061 = vadd.f32 %v2012, %v2060
  %v2062 = vpop.f32.mrf.mxu0
  %v2063 = vadd.f32 %v2014, %v2062
  %2064 = vmatmul.bf16.gmra.mxu0 %v803
  %v2065 = vpop.f32.mrf.mxu0
  %v2066 = vadd.f32 %v2017, %v2065
  %v2067 = vpop.f32.mrf.mxu0
  %v2068 = vadd.f32 %v2019, %v2067
  %2069 = vmatmul.bf16.gmra.mxu0 %v819
  %v2070 = vpop.f32.mrf.mxu0
  %v2071 = vadd.f32 %v2022, %v2070
  %v2072 = vpop.f32.mrf.mxu0
  %v2073 = vadd.f32 %v2024, %v2072
  %2074 = vmatmul.bf16.gmra.mxu0 %v835
  %v2075 = vpop.f32.mrf.mxu0
  %v2076 = vadd.f32 %v2027, %v2075
  %v2077 = vpop.f32.mrf.mxu0
  %v2078 = vadd.f32 %v2029, %v2077
  %2079 = vmatmul.bf16.gmra.mxu0 %v851
  %v2080 = vpop.f32.mrf.mxu0
  %v2081 = vadd.f32 %v2032, %v2080
  %v2082 = vpop.f32.mrf.mxu0
  %v2083 = vadd.f32 %v2034, %v2082
  %2084 = vmatmul.bf16.gmra.mxu0 %v867
  %v2085 = vpop.f32.mrf.mxu0
  %v2086 = vadd.f32 %v2037, %v2085
  %v2087 = vpop.f32.mrf.mxu0
  %v2088 = vadd.f32 %v2039, %v2087
  %2089 = vmatmul.bf16.gmra.mxu0 %v883
  %v2090 = vpop.f32.mrf.mxu0
  %v2091 = vadd.f32 %v2042, %v2090
  %v2092 = vpop.f32.mrf.mxu0
  %v2093 = vadd.f32 %v2044, %v2092
  %2094 = vmatmul.bf16.gmra.mxu0 %v899
  %v2095 = vpop.f32.mrf.mxu0
  %v2096 = vadd.f32 %v2047, %v2095
  %v2097 = vpop.f32.mrf.mxu0
  %v2098 = vadd.f32 %v2049, %v2097
  %2099 = vdwg.mxu0
  %2100 = vmatpush.bf16.msra.mxu0 %v1605
  %2101 = vmatpush.bf16.msra.mxu0 %v1604
  %2102 = vmatpush.bf16.msra.mxu0 %v1603
  %2103 = vmatpush.bf16.msra.mxu0 %v1602
  %2104 = vmatpush.bf16.msra.mxu0 %v1601
  %2105 = vmatpush.bf16.msra.mxu0 %v1600
  %2106 = vmatpush.bf16.msra.mxu0 %v1599
  %2107 = vmatpush.bf16.msra.mxu0 %v1598
  %2108 = vmatmul.bf16.gmra.mxu0 %v788
  %v2109 = vpop.f32.mrf.mxu0
  %v2110 = vadd.f32 %v2061, %v2109
  %v2111 = vpop.f32.mrf.mxu0
  %v2112 = vadd.f32 %v2063, %v2111
  %2113 = vmatmul.bf16.gmra.mxu0 %v804
  %v2114 = vpop.f32.mrf.mxu0
  %v2115 = vadd.f32 %v2066, %v2114
  %v2116 = vpop.f32.mrf.mxu0
  %v2117 = vadd.f32 %v2068, %v2116
  %2118 = vmatmul.bf16.gmra.mxu0 %v820
  %v2119 = vpop.f32.mrf.mxu0
  %v2120 = vadd.f32 %v2071, %v2119
  %v2121 = vpop.f32.mrf.mxu0
  %v2122 = vadd.f32 %v2073, %v2121
  %2123 = vmatmul.bf16.gmra.mxu0 %v836
  %v2124 = vpop.f32.mrf.mxu0
  %v2125 = vadd.f32 %v2076, %v2124
  %v2126 = vpop.f32.mrf.mxu0
  %v2127 = vadd.f32 %v2078, %v2126
  %2128 = vmatmul.bf16.gmra.mxu0 %v852
  %v2129 = vpop.f32.mrf.mxu0
  %v2130 = vadd.f32 %v2081, %v2129
  %v2131 = vpop.f32.mrf.mxu0
  %v2132 = vadd.f32 %v2083, %v2131
  %2133 = vmatmul.bf16.gmra.mxu0 %v868
  %v2134 = vpop.f32.mrf.mxu0
  %v2135 = vadd.f32 %v2086, %v2134
  %v2136 = vpop.f32.mrf.mxu0
  %v2137 = vadd.f32 %v2088, %v2136
  %2138 = vmatmul.bf16.gmra.mxu0 %v884
  %v2139 = vpop.f32.mrf.mxu0
  %v2140 = vadd.f32 %v2091, %v2139
  %v2141 = vpop.f32.mrf.mxu0
  %v2142 = vadd.f32 %v2093, %v2141
  %2143 = vmatmul.bf16.gmra.mxu0 %v900
  %v2144 = vpop.f32.mrf.mxu0
  %v2145 = vadd.f32 %v2096, %v2144
  %v2146 = vpop.f32.mrf.mxu0
  %v2147 = vadd.f32 %v2098, %v2146
  %2148 = vdwg.mxu0
  %2149 = vmatpush.bf16.msra.mxu0 %v1613
  %2150 = vmatpush.bf16.msra.mxu0 %v1612
  %2151 = vmatpush.bf16.msra.mxu0 %v1611
  %2152 = vmatpush.bf16.msra.mxu0 %v1610
  %2153 = vmatpush.bf16.msra.mxu0 %v1609
  %2154 = vmatpush.bf16.msra.mxu0 %v1608
  %2155 = vmatpush.bf16.msra.mxu0 %v1607
  %2156 = vmatpush.bf16.msra.mxu0 %v1606
  %2157 = vmatmul.bf16.gmra.mxu0 %v789
  %v2158 = vpop.f32.mrf.mxu0
  %v2159 = vadd.f32 %v2110, %v2158
  %v2160 = vpop.f32.mrf.mxu0
  %v2161 = vadd.f32 %v2112, %v2160
  %2162 = vmatmul.bf16.gmra.mxu0 %v805
  %v2163 = vpop.f32.mrf.mxu0
  %v2164 = vadd.f32 %v2115, %v2163
  %v2165 = vpop.f32.mrf.mxu0
  %v2166 = vadd.f32 %v2117, %v2165
  %2167 = vmatmul.bf16.gmra.mxu0 %v821
  %v2168 = vpop.f32.mrf.mxu0
  %v2169 = vadd.f32 %v2120, %v2168
  %v2170 = vpop.f32.mrf.mxu0
  %v2171 = vadd.f32 %v2122, %v2170
  %2172 = vmatmul.bf16.gmra.mxu0 %v837
  %v2173 = vpop.f32.mrf.mxu0
  %v2174 = vadd.f32 %v2125, %v2173
  %v2175 = vpop.f32.mrf.mxu0
  %v2176 = vadd.f32 %v2127, %v2175
  %2177 = vmatmul.bf16.gmra.mxu0 %v853
  %v2178 = vpop.f32.mrf.mxu0
  %v2179 = vadd.f32 %v2130, %v2178
  %v2180 = vpop.f32.mrf.mxu0
  %v2181 = vadd.f32 %v2132, %v2180
  %2182 = vmatmul.bf16.gmra.mxu0 %v869
  %v2183 = vpop.f32.mrf.mxu0
  %v2184 = vadd.f32 %v2135, %v2183
  %v2185 = vpop.f32.mrf.mxu0
  %v2186 = vadd.f32 %v2137, %v2185
  %2187 = vmatmul.bf16.gmra.mxu0 %v885
  %v2188 = vpop.f32.mrf.mxu0
  %v2189 = vadd.f32 %v2140, %v2188
  %v2190 = vpop.f32.mrf.mxu0
  %v2191 = vadd.f32 %v2142, %v2190
  %2192 = vmatmul.bf16.gmra.mxu0 %v901
  %v2193 = vpop.f32.mrf.mxu0
  %v2194 = vadd.f32 %v2145, %v2193
  %v2195 = vpop.f32.mrf.mxu0
  %v2196 = vadd.f32 %v2147, %v2195
  %2197 = vdwg.mxu0
  %2198 = vmatpush.bf16.msra.mxu0 %v1621
  %2199 = vmatpush.bf16.msra.mxu0 %v1620
  %2200 = vmatpush.bf16.msra.mxu0 %v1619
  %2201 = vmatpush.bf16.msra.mxu0 %v1618
  %2202 = vmatpush.bf16.msra.mxu0 %v1617
  %2203 = vmatpush.bf16.msra.mxu0 %v1616
  %2204 = vmatpush.bf16.msra.mxu0 %v1615
  %2205 = vmatpush.bf16.msra.mxu0 %v1614
  %2206 = vmatmul.bf16.gmra.mxu0 %v790
  %v2207 = vpop.f32.mrf.mxu0
  %v2208 = vadd.f32 %v2159, %v2207
  %v2209 = vpop.f32.mrf.mxu0
  %v2210 = vadd.f32 %v2161, %v2209
  %2211 = vmatmul.bf16.gmra.mxu0 %v806
  %v2212 = vpop.f32.mrf.mxu0
  %v2213 = vadd.f32 %v2164, %v2212
  %v2214 = vpop.f32.mrf.mxu0
  %v2215 = vadd.f32 %v2166, %v2214
  %2216 = vmatmul.bf16.gmra.mxu0 %v822
  %v2217 = vpop.f32.mrf.mxu0
  %v2218 = vadd.f32 %v2169, %v2217
  %v2219 = vpop.f32.mrf.mxu0
  %v2220 = vadd.f32 %v2171, %v2219
  %2221 = vmatmul.bf16.gmra.mxu0 %v838
  %v2222 = vpop.f32.mrf.mxu0
  %v2223 = vadd.f32 %v2174, %v2222
  %v2224 = vpop.f32.mrf.mxu0
  %v2225 = vadd.f32 %v2176, %v2224
  %2226 = vmatmul.bf16.gmra.mxu0 %v854
  %v2227 = vpop.f32.mrf.mxu0
  %v2228 = vadd.f32 %v2179, %v2227
  %v2229 = vpop.f32.mrf.mxu0
  %v2230 = vadd.f32 %v2181, %v2229
  %2231 = vmatmul.bf16.gmra.mxu0 %v870
  %v2232 = vpop.f32.mrf.mxu0
  %v2233 = vadd.f32 %v2184, %v2232
  %v2234 = vpop.f32.mrf.mxu0
  %v2235 = vadd.f32 %v2186, %v2234
  %2236 = vmatmul.bf16.gmra.mxu0 %v886
  %v2237 = vpop.f32.mrf.mxu0
  %v2238 = vadd.f32 %v2189, %v2237
  %v2239 = vpop.f32.mrf.mxu0
  %v2240 = vadd.f32 %v2191, %v2239
  %2241 = vmatmul.bf16.gmra.mxu0 %v902
  %v2242 = vpop.f32.mrf.mxu0
  %v2243 = vadd.f32 %v2194, %v2242
  %v2244 = vpop.f32.mrf.mxu0
  %v2245 = vadd.f32 %v2196, %v2244
  %2246 = vdwg.mxu0
  %2247 = vmatpush.bf16.msra.mxu0 %v1629
  %2248 = vmatpush.bf16.msra.mxu0 %v1628
  %2249 = vmatpush.bf16.msra.mxu0 %v1627
  %2250 = vmatpush.bf16.msra.mxu0 %v1626
  %2251 = vmatpush.bf16.msra.mxu0 %v1625
  %2252 = vmatpush.bf16.msra.mxu0 %v1624
  %2253 = vmatpush.bf16.msra.mxu0 %v1623
  %2254 = vmatpush.bf16.msra.mxu0 %v1622
  %2255 = vmatmul.bf16.gmra.mxu0 %v791
  %v2256 = vpop.f32.mrf.mxu0
  %v2257 = vadd.f32 %v2208, %v2256
  %v2258 = vpop.f32.mrf.mxu0
  %v2259 = vadd.f32 %v2210, %v2258
  %2260 = vmatmul.bf16.gmra.mxu0 %v807
  %v2261 = vpop.f32.mrf.mxu0
  %v2262 = vadd.f32 %v2213, %v2261
  %v2263 = vpop.f32.mrf.mxu0
  %v2264 = vadd.f32 %v2215, %v2263
  %2265 = vmatmul.bf16.gmra.mxu0 %v823
  %v2266 = vpop.f32.mrf.mxu0
  %v2267 = vadd.f32 %v2218, %v2266
  %v2268 = vpop.f32.mrf.mxu0
  %v2269 = vadd.f32 %v2220, %v2268
  %2270 = vmatmul.bf16.gmra.mxu0 %v839
  %v2271 = vpop.f32.mrf.mxu0
  %v2272 = vadd.f32 %v2223, %v2271
  %v2273 = vpop.f32.mrf.mxu0
  %v2274 = vadd.f32 %v2225, %v2273
  %2275 = vmatmul.bf16.gmra.mxu0 %v855
  %v2276 = vpop.f32.mrf.mxu0
  %v2277 = vadd.f32 %v2228, %v2276
  %v2278 = vpop.f32.mrf.mxu0
  %v2279 = vadd.f32 %v2230, %v2278
  %2280 = vmatmul.bf16.gmra.mxu0 %v871
  %v2281 = vpop.f32.mrf.mxu0
  %v2282 = vadd.f32 %v2233, %v2281
  %v2283 = vpop.f32.mrf.mxu0
  %v2284 = vadd.f32 %v2235, %v2283
  %2285 = vmatmul.bf16.gmra.mxu0 %v887
  %v2286 = vpop.f32.mrf.mxu0
  %v2287 = vadd.f32 %v2238, %v2286
  %v2288 = vpop.f32.mrf.mxu0
  %v2289 = vadd.f32 %v2240, %v2288
  %2290 = vmatmul.bf16.gmra.mxu0 %v903
  %v2291 = vpop.f32.mrf.mxu0
  %v2292 = vadd.f32 %v2243, %v2291
  %v2293 = vpop.f32.mrf.mxu0
  %v2294 = vadd.f32 %v2245, %v2293
  %2295 = vdwg.mxu0
  %2296 = vmatpush.bf16.msra.mxu0 %v1637
  %2297 = vmatpush.bf16.msra.mxu0 %v1636
  %2298 = vmatpush.bf16.msra.mxu0 %v1635
  %2299 = vmatpush.bf16.msra.mxu0 %v1634
  %2300 = vmatpush.bf16.msra.mxu0 %v1633
  %2301 = vmatpush.bf16.msra.mxu0 %v1632
  %2302 = vmatpush.bf16.msra.mxu0 %v1631
  %2303 = vmatpush.bf16.msra.mxu0 %v1630
  %2304 = vmatmul.bf16.gmra.mxu0 %v792
  %v2305 = vpop.f32.mrf.mxu0
  %v2306 = vadd.f32 %v2257, %v2305
  %v2307 = vpop.f32.mrf.mxu0
  %v2308 = vadd.f32 %v2259, %v2307
  %2309 = vmatmul.bf16.gmra.mxu0 %v808
  %v2310 = vpop.f32.mrf.mxu0
  %v2311 = vadd.f32 %v2262, %v2310
  %v2312 = vpop.f32.mrf.mxu0
  %v2313 = vadd.f32 %v2264, %v2312
  %2314 = vmatmul.bf16.gmra.mxu0 %v824
  %v2315 = vpop.f32.mrf.mxu0
  %v2316 = vadd.f32 %v2267, %v2315
  %v2317 = vpop.f32.mrf.mxu0
  %v2318 = vadd.f32 %v2269, %v2317
  %2319 = vmatmul.bf16.gmra.mxu0 %v840
  %v2320 = vpop.f32.mrf.mxu0
  %v2321 = vadd.f32 %v2272, %v2320
  %v2322 = vpop.f32.mrf.mxu0
  %v2323 = vadd.f32 %v2274, %v2322
  %2324 = vmatmul.bf16.gmra.mxu0 %v856
  %v2325 = vpop.f32.mrf.mxu0
  %v2326 = vadd.f32 %v2277, %v2325
  %v2327 = vpop.f32.mrf.mxu0
  %v2328 = vadd.f32 %v2279, %v2327
  %2329 = vmatmul.bf16.gmra.mxu0 %v872
  %v2330 = vpop.f32.mrf.mxu0
  %v2331 = vadd.f32 %v2282, %v2330
  %v2332 = vpop.f32.mrf.mxu0
  %v2333 = vadd.f32 %v2284, %v2332
  %2334 = vmatmul.bf16.gmra.mxu0 %v888
  %v2335 = vpop.f32.mrf.mxu0
  %v2336 = vadd.f32 %v2287, %v2335
  %v2337 = vpop.f32.mrf.mxu0
  %v2338 = vadd.f32 %v2289, %v2337
  %2339 = vmatmul.bf16.gmra.mxu0 %v904
  %v2340 = vpop.f32.mrf.mxu0
  %v2341 = vadd.f32 %v2292, %v2340
  %v2342 = vpop.f32.mrf.mxu0
  %v2343 = vadd.f32 %v2294, %v2342
  %2344 = vdwg.mxu0
  %2345 = vmatpush.bf16.msra.mxu0 %v1645
  %2346 = vmatpush.bf16.msra.mxu0 %v1644
  %2347 = vmatpush.bf16.msra.mxu0 %v1643
  %2348 = vmatpush.bf16.msra.mxu0 %v1642
  %2349 = vmatpush.bf16.msra.mxu0 %v1641
  %2350 = vmatpush.bf16.msra.mxu0 %v1640
  %2351 = vmatpush.bf16.msra.mxu0 %v1639
  %2352 = vmatpush.bf16.msra.mxu0 %v1638
  %2353 = vmatmul.bf16.gmra.mxu0 %v793
  %v2354 = vpop.f32.mrf.mxu0
  %v2355 = vadd.f32 %v2306, %v2354
  %v2356 = vpop.f32.mrf.mxu0
  %v2357 = vadd.f32 %v2308, %v2356
  %2358 = vmatmul.bf16.gmra.mxu0 %v809
  %v2359 = vpop.f32.mrf.mxu0
  %v2360 = vadd.f32 %v2311, %v2359
  %v2361 = vpop.f32.mrf.mxu0
  %v2362 = vadd.f32 %v2313, %v2361
  %2363 = vmatmul.bf16.gmra.mxu0 %v825
  %v2364 = vpop.f32.mrf.mxu0
  %v2365 = vadd.f32 %v2316, %v2364
  %v2366 = vpop.f32.mrf.mxu0
  %v2367 = vadd.f32 %v2318, %v2366
  %2368 = vmatmul.bf16.gmra.mxu0 %v841
  %v2369 = vpop.f32.mrf.mxu0
  %v2370 = vadd.f32 %v2321, %v2369
  %v2371 = vpop.f32.mrf.mxu0
  %v2372 = vadd.f32 %v2323, %v2371
  %2373 = vmatmul.bf16.gmra.mxu0 %v857
  %v2374 = vpop.f32.mrf.mxu0
  %v2375 = vadd.f32 %v2326, %v2374
  %v2376 = vpop.f32.mrf.mxu0
  %v2377 = vadd.f32 %v2328, %v2376
  %2378 = vmatmul.bf16.gmra.mxu0 %v873
  %v2379 = vpop.f32.mrf.mxu0
  %v2380 = vadd.f32 %v2331, %v2379
  %v2381 = vpop.f32.mrf.mxu0
  %v2382 = vadd.f32 %v2333, %v2381
  %2383 = vmatmul.bf16.gmra.mxu0 %v889
  %v2384 = vpop.f32.mrf.mxu0
  %v2385 = vadd.f32 %v2336, %v2384
  %v2386 = vpop.f32.mrf.mxu0
  %v2387 = vadd.f32 %v2338, %v2386
  %2388 = vmatmul.bf16.gmra.mxu0 %v905
  %v2389 = vpop.f32.mrf.mxu0
  %v2390 = vadd.f32 %v2341, %v2389
  %v2391 = vpop.f32.mrf.mxu0
  %v2392 = vadd.f32 %v2343, %v2391
  %2393 = vdwg.mxu0
  %2394 = vmatpush.bf16.msra.mxu0 %v1653
  %2395 = vmatpush.bf16.msra.mxu0 %v1652
  %2396 = vmatpush.bf16.msra.mxu0 %v1651
  %2397 = vmatpush.bf16.msra.mxu0 %v1650
  %2398 = vmatpush.bf16.msra.mxu0 %v1649
  %2399 = vmatpush.bf16.msra.mxu0 %v1648
  %2400 = vmatpush.bf16.msra.mxu0 %v1647
  %2401 = vmatpush.bf16.msra.mxu0 %v1646
  %2402 = vmatmul.bf16.gmra.mxu0 %v794
  %v2403 = vpop.f32.mrf.mxu0
  %v2404 = vadd.f32 %v2355, %v2403
  %v2405 = vpop.f32.mrf.mxu0
  %v2406 = vadd.f32 %v2357, %v2405
  %2407 = vmatmul.bf16.gmra.mxu0 %v810
  %v2408 = vpop.f32.mrf.mxu0
  %v2409 = vadd.f32 %v2360, %v2408
  %v2410 = vpop.f32.mrf.mxu0
  %v2411 = vadd.f32 %v2362, %v2410
  %2412 = vmatmul.bf16.gmra.mxu0 %v826
  %v2413 = vpop.f32.mrf.mxu0
  %v2414 = vadd.f32 %v2365, %v2413
  %v2415 = vpop.f32.mrf.mxu0
  %v2416 = vadd.f32 %v2367, %v2415
  %2417 = vmatmul.bf16.gmra.mxu0 %v842
  %v2418 = vpop.f32.mrf.mxu0
  %v2419 = vadd.f32 %v2370, %v2418
  %v2420 = vpop.f32.mrf.mxu0
  %v2421 = vadd.f32 %v2372, %v2420
  %2422 = vmatmul.bf16.gmra.mxu0 %v858
  %v2423 = vpop.f32.mrf.mxu0
  %v2424 = vadd.f32 %v2375, %v2423
  %v2425 = vpop.f32.mrf.mxu0
  %v2426 = vadd.f32 %v2377, %v2425
  %2427 = vmatmul.bf16.gmra.mxu0 %v874
  %v2428 = vpop.f32.mrf.mxu0
  %v2429 = vadd.f32 %v2380, %v2428
  %v2430 = vpop.f32.mrf.mxu0
  %v2431 = vadd.f32 %v2382, %v2430
  %2432 = vmatmul.bf16.gmra.mxu0 %v890
  %v2433 = vpop.f32.mrf.mxu0
  %v2434 = vadd.f32 %v2385, %v2433
  %v2435 = vpop.f32.mrf.mxu0
  %v2436 = vadd.f32 %v2387, %v2435
  %2437 = vmatmul.bf16.gmra.mxu0 %v906
  %v2438 = vpop.f32.mrf.mxu0
  %v2439 = vadd.f32 %v2390, %v2438
  %v2440 = vpop.f32.mrf.mxu0
  %v2441 = vadd.f32 %v2392, %v2440
  %2442 = vdwg.mxu0
  %2443 = vmatpush.bf16.msra.mxu0 %v1661
  %2444 = vmatpush.bf16.msra.mxu0 %v1660
  %2445 = vmatpush.bf16.msra.mxu0 %v1659
  %2446 = vmatpush.bf16.msra.mxu0 %v1658
  %2447 = vmatpush.bf16.msra.mxu0 %v1657
  %2448 = vmatpush.bf16.msra.mxu0 %v1656
  %2449 = vmatpush.bf16.msra.mxu0 %v1655
  %2450 = vmatpush.bf16.msra.mxu0 %v1654
  %2451 = vmatmul.bf16.gmra.mxu0 %v795
  %v2452 = vpop.f32.mrf.mxu0
  %v2453 = vadd.f32 %v2404, %v2452
  %v2454 = vpop.f32.mrf.mxu0
  %v2455 = vadd.f32 %v2406, %v2454
  %2456 = vmatmul.bf16.gmra.mxu0 %v811
  %v2457 = vpop.f32.mrf.mxu0
  %v2458 = vadd.f32 %v2409, %v2457
  %v2459 = vpop.f32.mrf.mxu0
  %v2460 = vadd.f32 %v2411, %v2459
  %2461 = vmatmul.bf16.gmra.mxu0 %v827
  %v2462 = vpop.f32.mrf.mxu0
  %v2463 = vadd.f32 %v2414, %v2462
  %v2464 = vpop.f32.mrf.mxu0
  %v2465 = vadd.f32 %v2416, %v2464
  %2466 = vmatmul.bf16.gmra.mxu0 %v843
  %v2467 = vpop.f32.mrf.mxu0
  %v2468 = vadd.f32 %v2419, %v2467
  %v2469 = vpop.f32.mrf.mxu0
  %v2470 = vadd.f32 %v2421, %v2469
  %2471 = vmatmul.bf16.gmra.mxu0 %v859
  %v2472 = vpop.f32.mrf.mxu0
  %v2473 = vadd.f32 %v2424, %v2472
  %v2474 = vpop.f32.mrf.mxu0
  %v2475 = vadd.f32 %v2426, %v2474
  %2476 = vmatmul.bf16.gmra.mxu0 %v875
  %v2477 = vpop.f32.mrf.mxu0
  %v2478 = vadd.f32 %v2429, %v2477
  %v2479 = vpop.f32.mrf.mxu0
  %v2480 = vadd.f32 %v2431, %v2479
  %2481 = vmatmul.bf16.gmra.mxu0 %v891
  %v2482 = vpop.f32.mrf.mxu0
  %v2483 = vadd.f32 %v2434, %v2482
  %v2484 = vpop.f32.mrf.mxu0
  %v2485 = vadd.f32 %v2436, %v2484
  %2486 = vmatmul.bf16.gmra.mxu0 %v907
  %v2487 = vpop.f32.mrf.mxu0
  %v2488 = vadd.f32 %v2439, %v2487
  %v2489 = vpop.f32.mrf.mxu0
  %v2490 = vadd.f32 %v2441, %v2489
  %2491 = vdwg.mxu0
  %2492 = vmatpush.bf16.msra.mxu0 %v1669
  %2493 = vmatpush.bf16.msra.mxu0 %v1668
  %2494 = vmatpush.bf16.msra.mxu0 %v1667
  %2495 = vmatpush.bf16.msra.mxu0 %v1666
  %2496 = vmatpush.bf16.msra.mxu0 %v1665
  %2497 = vmatpush.bf16.msra.mxu0 %v1664
  %2498 = vmatpush.bf16.msra.mxu0 %v1663
  %2499 = vmatpush.bf16.msra.mxu0 %v1662
  %2500 = vmatmul.bf16.gmra.mxu0 %v796
  %v2501 = vpop.f32.mrf.mxu0
  %v2502 = vadd.f32 %v2453, %v2501
  %v2503 = vpop.f32.mrf.mxu0
  %v2504 = vadd.f32 %v2455, %v2503
  %2505 = vmatmul.bf16.gmra.mxu0 %v812
  %v2506 = vpop.f32.mrf.mxu0
  %v2507 = vadd.f32 %v2458, %v2506
  %v2508 = vpop.f32.mrf.mxu0
  %v2509 = vadd.f32 %v2460, %v2508
  %2510 = vmatmul.bf16.gmra.mxu0 %v828
  %v2511 = vpop.f32.mrf.mxu0
  %v2512 = vadd.f32 %v2463, %v2511
  %v2513 = vpop.f32.mrf.mxu0
  %v2514 = vadd.f32 %v2465, %v2513
  %2515 = vmatmul.bf16.gmra.mxu0 %v844
  %v2516 = vpop.f32.mrf.mxu0
  %v2517 = vadd.f32 %v2468, %v2516
  %v2518 = vpop.f32.mrf.mxu0
  %v2519 = vadd.f32 %v2470, %v2518
  %2520 = vmatmul.bf16.gmra.mxu0 %v860
  %v2521 = vpop.f32.mrf.mxu0
  %v2522 = vadd.f32 %v2473, %v2521
  %v2523 = vpop.f32.mrf.mxu0
  %v2524 = vadd.f32 %v2475, %v2523
  %2525 = vmatmul.bf16.gmra.mxu0 %v876
  %v2526 = vpop.f32.mrf.mxu0
  %v2527 = vadd.f32 %v2478, %v2526
  %v2528 = vpop.f32.mrf.mxu0
  %v2529 = vadd.f32 %v2480, %v2528
  %2530 = vmatmul.bf16.gmra.mxu0 %v892
  %v2531 = vpop.f32.mrf.mxu0
  %v2532 = vadd.f32 %v2483, %v2531
  %v2533 = vpop.f32.mrf.mxu0
  %v2534 = vadd.f32 %v2485, %v2533
  %2535 = vmatmul.bf16.gmra.mxu0 %v908
  %v2536 = vpop.f32.mrf.mxu0
  %v2537 = vadd.f32 %v2488, %v2536
  %v2538 = vpop.f32.mrf.mxu0
  %v2539 = vadd.f32 %v2490, %v2538
  %2540 = vdwg.mxu0
  %2541 = vmatpush.bf16.msra.mxu0 %v1677
  %2542 = vmatpush.bf16.msra.mxu0 %v1676
  %2543 = vmatpush.bf16.msra.mxu0 %v1675
  %2544 = vmatpush.bf16.msra.mxu0 %v1674
  %2545 = vmatpush.bf16.msra.mxu0 %v1673
  %2546 = vmatpush.bf16.msra.mxu0 %v1672
  %2547 = vmatpush.bf16.msra.mxu0 %v1671
  %2548 = vmatpush.bf16.msra.mxu0 %v1670
  %2549 = vmatmul.bf16.gmra.mxu0 %v797
  %v2550 = vpop.f32.mrf.mxu0
  %v2551 = vadd.f32 %v2502, %v2550
  %v2552 = vpop.f32.mrf.mxu0
  %v2553 = vadd.f32 %v2504, %v2552
  %2554 = vmatmul.bf16.gmra.mxu0 %v813
  %v2555 = vpop.f32.mrf.mxu0
  %v2556 = vadd.f32 %v2507, %v2555
  %v2557 = vpop.f32.mrf.mxu0
  %v2558 = vadd.f32 %v2509, %v2557
  %2559 = vmatmul.bf16.gmra.mxu0 %v829
  %v2560 = vpop.f32.mrf.mxu0
  %v2561 = vadd.f32 %v2512, %v2560
  %v2562 = vpop.f32.mrf.mxu0
  %v2563 = vadd.f32 %v2514, %v2562
  %2564 = vmatmul.bf16.gmra.mxu0 %v845
  %v2565 = vpop.f32.mrf.mxu0
  %v2566 = vadd.f32 %v2517, %v2565
  %v2567 = vpop.f32.mrf.mxu0
  %v2568 = vadd.f32 %v2519, %v2567
  %2569 = vmatmul.bf16.gmra.mxu0 %v861
  %v2570 = vpop.f32.mrf.mxu0
  %v2571 = vadd.f32 %v2522, %v2570
  %v2572 = vpop.f32.mrf.mxu0
  %v2573 = vadd.f32 %v2524, %v2572
  %2574 = vmatmul.bf16.gmra.mxu0 %v877
  %v2575 = vpop.f32.mrf.mxu0
  %v2576 = vadd.f32 %v2527, %v2575
  %v2577 = vpop.f32.mrf.mxu0
  %v2578 = vadd.f32 %v2529, %v2577
  %2579 = vmatmul.bf16.gmra.mxu0 %v893
  %v2580 = vpop.f32.mrf.mxu0
  %v2581 = vadd.f32 %v2532, %v2580
  %v2582 = vpop.f32.mrf.mxu0
  %v2583 = vadd.f32 %v2534, %v2582
  %2584 = vmatmul.bf16.gmra.mxu0 %v909
  %v2585 = vpop.f32.mrf.mxu0
  %v2586 = vadd.f32 %v2537, %v2585
  %v2587 = vpop.f32.mrf.mxu0
  %v2588 = vadd.f32 %v2539, %v2587
  %2589 = vdwg.mxu0
  %2590 = vst [vmem:[%s2] sm:$0xff] %v2551
  %2591 = vst [vmem:[%s2 + $0x8] sm:$0xff] %v2553
  %2592 = vst [vmem:[%s2 + $0x10] sm:$0xff] %v2556
  %2593 = vst [vmem:[%s2 + $0x18] sm:$0xff] %v2558
  %2594 = vst [vmem:[%s2 + $0x20] sm:$0xff] %v2561
  %2595 = vst [vmem:[%s2 + $0x28] sm:$0xff] %v2563
  %2596 = vst [vmem:[%s2 + $0x30] sm:$0xff] %v2566
  %2597 = vst [vmem:[%s2 + $0x38] sm:$0xff] %v2568
  %2598 = vst [vmem:[%s2 + $0x40] sm:$0xff] %v2571
  %2599 = vst [vmem:[%s2 + $0x48] sm:$0xff] %v2573
  %2600 = vst [vmem:[%s2 + $0x50] sm:$0xff] %v2576
  %2601 = vst [vmem:[%s2 + $0x58] sm:$0xff] %v2578
  %2602 = vst [vmem:[%s2 + $0x60] sm:$0xff] %v2581
  %2603 = vst [vmem:[%s2 + $0x68] sm:$0xff] %v2583
  %2604 = vst [vmem:[%s2 + $0x70] sm:$0xff] %v2586
  %2605 = vst [vmem:[%s2 + $0x78] sm:$0xff] %v2588
  %v2606 = vadd.f32 %v2551, %v2553
  %v2607 = vadd.f32 %v2606, %v2556
  %v2608 = vadd.f32 %v2607, %v2558
  %v2609 = vadd.f32 %v2608, %v2561
  %v2610 = vadd.f32 %v2609, %v2563
  %v2611 = vadd.f32 %v2610, %v2566
  %v2612 = vadd.f32 %v2611, %v2568
  %v2613 = vadd.f32 %v2612, %v2571
  %v2614 = vadd.f32 %v2613, %v2573
  %v2615 = vadd.f32 %v2614, %v2576
  %v2616 = vadd.f32 %v2615, %v2578
  %v2617 = vadd.f32 %v2616, %v2581
  %v2618 = vadd.f32 %v2617, %v2583
  %v2619 = vadd.f32 %v2618, %v2586
  %v2620 = vadd.f32 %v2619, %v2588
  %v2621 = vrot.slane %v2620, 4
  %v2622 = vadd.f32 %v2620, %v2621
  %v2623 = vrot.slane %v2622, 2
  %v2624 = vadd.f32 %v2622, %v2623
  %v2625 = vrot.slane %v2624, 1
  %v2626 = vadd.f32 %v2624, %v2625
  %v2627 = vmul.f32 %v2551, %v2551
  %v2628 = vmul.f32 %v2553, %v2553
  %v2629 = vmul.f32 %v2556, %v2556
  %v2630 = vmul.f32 %v2558, %v2558
  %v2631 = vmul.f32 %v2561, %v2561
  %v2632 = vmul.f32 %v2563, %v2563
  %v2633 = vmul.f32 %v2566, %v2566
  %v2634 = vmul.f32 %v2568, %v2568
  %v2635 = vmul.f32 %v2571, %v2571
  %v2636 = vmul.f32 %v2573, %v2573
  %v2637 = vmul.f32 %v2576, %v2576
  %v2638 = vmul.f32 %v2578, %v2578
  %v2639 = vmul.f32 %v2581, %v2581
  %v2640 = vmul.f32 %v2583, %v2583
  %v2641 = vmul.f32 %v2586, %v2586
  %v2642 = vmul.f32 %v2588, %v2588
  %v2643 = vadd.f32 %v2627, %v2628
  %v2644 = vadd.f32 %v2643, %v2629
  %v2645 = vadd.f32 %v2644, %v2630
  %v2646 = vadd.f32 %v2645, %v2631
  %v2647 = vadd.f32 %v2646, %v2632
  %v2648 = vadd.f32 %v2647, %v2633
  %v2649 = vadd.f32 %v2648, %v2634
  %v2650 = vadd.f32 %v2649, %v2635
  %v2651 = vadd.f32 %v2650, %v2636
  %v2652 = vadd.f32 %v2651, %v2637
  %v2653 = vadd.f32 %v2652, %v2638
  %v2654 = vadd.f32 %v2653, %v2639
  %v2655 = vadd.f32 %v2654, %v2640
  %v2656 = vadd.f32 %v2655, %v2641
  %v2657 = vadd.f32 %v2656, %v2642
  %v2658 = vrot.slane %v2657, 4
  %v2659 = vadd.f32 %v2657, %v2658
  %v2660 = vrot.slane %v2659, 2
  %v2661 = vadd.f32 %v2659, %v2660
  %v2662 = vrot.slane %v2661, 1
  %v2663 = vadd.f32 %v2661, %v2662
  %2664 = vst [vmem:[%s3] sm:$0xff] %v2626
  %2665 = vst [vmem:[%s4] sm:$0xff] %v2663
  // Predicated region
  $region10: #{_lambda_.9} parent=0 // pred_check
    _
  $region11: #{_lambda_.9} parent=0 // pred_check_branch
    %2667 = sbr.rel (0) target = $region13
  $region12: #{_lambda_.9} parent=0 // pred_region
    _
  $region13: #{_lambda_.9} parent=0 // pred_fallthru
    _
  // Predicated region
  $region14: #{_lambda_.9} parent=0 // pred_check
    _
  $region15: #{_lambda_.9} parent=0 // pred_check_branch
    %2669 = sbr.rel (0) target = $region17
  $region16: #{_lambda_.9} parent=0 // pred_region
    _
  $region17: #{_lambda_.9} parent=0 // pred_fallthru
    _
  // Predicated region
  $region18: #{_lambda_.9} parent=0 // pred_check
    _
  $region19: #{_lambda_.9} parent=0 // pred_check_branch
    %2671 = sbr.rel (0) target = $region21
  $region20: #{_lambda_.9} parent=0 // pred_region
    _
  $region21: #{_lambda_.9} parent=0 // pred_fallthru
    _
  // Predicated region
  $region22: #{_lambda_.9} parent=0 // pred_check
    _
  $region23: #{_lambda_.9} parent=0 // pred_check_branch
    %2673 = sbr.rel (0) target = $region25
  $region24: #{_lambda_.9} parent=0 // pred_region
    _
  $region25: #{_lambda_.9} parent=0 // pred_fallthru
    _
  // Predicated region
  $region26: #{_lambda_.9} parent=0 // pred_check
    _
  $region27: #{_lambda_.9} parent=0 // pred_check_branch
    %2675 = sbr.rel (0) target = $region29
  $region28: #{_lambda_.9} parent=0 // pred_region
    _
  $region29: #{_lambda_.9} parent=0 // pred_fallthru
    _
  // Predicated region
  $region30: #{_lambda_.9} parent=0 // pred_check
    _
  $region31: #{_lambda_.9} parent=0 // pred_check_branch
    %2677 = sbr.rel (0) target = $region33
  $region32: #{_lambda_.9} parent=0 // pred_region
    _
  $region33: #{_lambda_.9} parent=0 // pred_fallthru
    _

// kernel: _lambda_.12
$region0: #{_lambda_.12}
  #allocation0 [shape = 'u32[]', space=smem, size = 0x4, offset = 0x4, fixed_abs, tag = 'smem constant byte address 0x4 - core index']
  #allocation1 [shape = 'u32[72,128]{1,0:T(1,128)}', space=vmem, size = 0x9000, scoped, tag = 'internal scratch']
  %s0 = inlined_call_operand.vmem [shape: f32[32,128], index: 0, kind: input, shape index: {}]
  %s1 = inlined_call_operand.vmem [shape: f32[1,128], index: 1, kind: input, shape index: {}]
  %s2 = inlined_call_operand.vmem [shape: f32[1,128], index: 2, kind: input, shape index: {}]
  %s3 = inlined_call_operand.vmem [shape: bf16[32,128], index: 3, kind: output, shape index: {}]
  %s4 = sld [smem:[#allocation0]]
  $region22: #{_lambda_.12} parent=0
    _
  %s6 = ssub.s32 1, %s4
  %s7 = scalar_select 0, %s6, %s4
  // Predicated region
  $region2: #{_lambda_.12} parent=0 // pred_check
    _
  $region3: #{_lambda_.12} parent=0 // pred_check_branch
    %9 = sbr.rel (0) target = $region5
  $region4: #{_lambda_.12} parent=0 // pred_region
    _
  $region5: #{_lambda_.12} parent=0 // pred_fallthru
    _
  // Predicated region
  $region6: #{_lambda_.12} parent=0 // pred_check
    _
  $region7: #{_lambda_.12} parent=0 // pred_check_branch
    %11 = sbr.rel (0) target = $region9
  $region8: #{_lambda_.12} parent=0 // pred_region
    _
  $region9: #{_lambda_.12} parent=0 // pred_fallthru
    _
  // Predicated region
  $region10: #{_lambda_.12} parent=0 // pred_check
    _
  $region11: #{_lambda_.12} parent=0 // pred_check_branch
    %13 = sbr.rel (0) target = $region13
  $region12: #{_lambda_.12} parent=0 // pred_region
    _
  $region13: #{_lambda_.12} parent=0 // pred_fallthru
    _
  %v14 = vld [vmem:[%s0] sm:$0xff]
  %v15 = vld [vmem:[%s0 + $0x8] sm:$0xff]
  %v16 = vld [vmem:[%s0 + $0x10] sm:$0xff]
  %v17 = vld [vmem:[%s0 + $0x18] sm:$0xff]
  %v18 = vld [vmem:[%s1] sm:$0x1]
  %v20 = vperm.slane %v18, 0
  %v22 = vmul.f32 %v14, %v20
  %v23 = vmul.f32 %v15, %v20
  %v24 = vmul.f32 %v16, %v20
  %v25 = vmul.f32 %v17, %v20
  %v26 = vld [vmem:[%s2] sm:$0x1]
  %v28 = vperm.slane %v26, 0
  %v30 = vadd.f32 %v22, %v28
  %v31 = vadd.f32 %v23, %v28
  %v32 = vadd.f32 %v24, %v28
  %v33 = vadd.f32 %v25, %v28
  %vm34 = vcmp.ge.f32.partialorder %v30, 0.0
  %vm35 = vcmp.ge.f32.partialorder %v31, 0.0
  %vm36 = vcmp.ge.f32.partialorder %v32, 0.0
  %vm37 = vcmp.ge.f32.partialorder %v33, 0.0
  %v38 = vmul.f32 %v30, 0.2
  %v39 = vmul.f32 %v31, 0.2
  %v40 = vmul.f32 %v32, 0.2
  %v41 = vmul.f32 %v33, 0.2
  %v42 = vsel %vm34, %v30, %v38
  %v43 = vsel %vm35, %v31, %v39
  %v44 = vsel %vm36, %v32, %v40
  %v45 = vsel %vm37, %v33, %v41
  %v46 = vpack.c.bf16 %v42, %v42
  %v47 = vpack.c.bf16 %v43, %v43
  %v48 = vpack.c.bf16 %v44, %v44
  %v49 = vpack.c.bf16 %v45, %v45
  %50 = vst [vmem:[%s3] sm:$0xf] %v46
  %51 = vst [vmem:[%s3 + $0x4] sm:$0xf] %v47
  %52 = vst [vmem:[%s3 + $0x8] sm:$0xf] %v48
  %53 = vst [vmem:[%s3 + $0xc] sm:$0xf] %v49
  // Predicated region
  $region14: #{_lambda_.12} parent=0 // pred_check
    _
  $region15: #{_lambda_.12} parent=0 // pred_check_branch
    %55 = sbr.rel (0) target = $region17
  $region16: #{_lambda_.12} parent=0 // pred_region
    _
  $region17: #{_lambda_.12} parent=0 // pred_fallthru
    _
  // Predicated region
  $region18: #{_lambda_.12} parent=0 // pred_check
    _
  $region19: #{_lambda_.12} parent=0 // pred_check_branch
    %57 = sbr.rel (0) target = $region21
  $region20: #{_lambda_.12} parent=0 // pred_region
    _
  $region21: #{_lambda_.12} parent=0 // pred_fallthru
    _

// kernel: _lambda_.11
$region0: #{_lambda_.11}
  #allocation0 [shape = 'u32[]', space=smem, size = 0x4, offset = 0x4, fixed_abs, tag = 'smem constant byte address 0x4 - core index']
  #allocation1 [shape = 'u32[72,128]{1,0:T(1,128)}', space=vmem, size = 0x9000, scoped, tag = 'internal scratch']
  %s0 = inlined_call_operand.vmem [shape: bf16[32,2048], index: 0, kind: input, shape index: {}]
  %s1 = inlined_call_operand.vmem [shape: bf16[2048,128], index: 1, kind: input, shape index: {}]
  %s2 = inlined_call_operand.vmem [shape: f32[32,128], index: 2, kind: output, shape index: {0}]
  %s3 = inlined_call_operand.vmem [shape: f32[8,128], index: 3, kind: output, shape index: {1}]
  %s4 = inlined_call_operand.vmem [shape: f32[8,128], index: 4, kind: output, shape index: {2}]
  %5 = xla_tuple %s2, %s3, %s4
  %s6 = sld [smem:[#allocation0]]
  $region34: #{_lambda_.11} parent=0
    _
  %s8 = ssub.s32 1, %s6
  %s9 = scalar_select 0, %s8, %s6
  // Predicated region
  $region2: #{_lambda_.11} parent=0 // pred_check
    _
  $region3: #{_lambda_.11} parent=0 // pred_check_branch
    %11 = sbr.rel (0) target = $region5
  $region4: #{_lambda_.11} parent=0 // pred_region
    _
  $region5: #{_lambda_.11} parent=0 // pred_fallthru
    _
  // Predicated region
  $region6: #{_lambda_.11} parent=0 // pred_check
    _
  $region7: #{_lambda_.11} parent=0 // pred_check_branch
    %13 = sbr.rel (0) target = $region9
  $region8: #{_lambda_.11} parent=0 // pred_region
    _
  $region9: #{_lambda_.11} parent=0 // pred_fallthru
    _
  %v14 = vld [vmem:[%s0] sm:$0xff]
  %v15 = vld [vmem:[%s0 + $0x8] sm:$0xff]
  %v16 = vld [vmem:[%s0 + $0x10] sm:$0xff]
  %v17 = vld [vmem:[%s0 + $0x18] sm:$0xff]
  %v18 = vld [vmem:[%s0 + $0x20] sm:$0xff]
  %v19 = vld [vmem:[%s0 + $0x28] sm:$0xff]
  %v20 = vld [vmem:[%s0 + $0x30] sm:$0xff]
  %v21 = vld [vmem:[%s0 + $0x38] sm:$0xff]
  %v22 = vld [vmem:[%s0 + $0x40] sm:$0xff]
  %v23 = vld [vmem:[%s0 + $0x48] sm:$0xff]
  %v24 = vld [vmem:[%s0 + $0x50] sm:$0xff]
  %v25 = vld [vmem:[%s0 + $0x58] sm:$0xff]
  %v26 = vld [vmem:[%s0 + $0x60] sm:$0xff]
  %v27 = vld [vmem:[%s0 + $0x68] sm:$0xff]
  %v28 = vld [vmem:[%s0 + $0x70] sm:$0xff]
  %v29 = vld [vmem:[%s0 + $0x78] sm:$0xff]
  %v30 = vld [vmem:[%s0 + $0x80] sm:$0xff]
  %v31 = vld [vmem:[%s0 + $0x88] sm:$0xff]
  %v32 = vld [vmem:[%s0 + $0x90] sm:$0xff]
  %v33 = vld [vmem:[%s0 + $0x98] sm:$0xff]
  %v34 = vld [vmem:[%s0 + $0xa0] sm:$0xff]
  %v35 = vld [vmem:[%s0 + $0xa8] sm:$0xff]
  %v36 = vld [vmem:[%s0 + $0xb0] sm:$0xff]
  %v37 = vld [vmem:[%s0 + $0xb8] sm:$0xff]
  %v38 = vld [vmem:[%s0 + $0xc0] sm:$0xff]
  %v39 = vld [vmem:[%s0 + $0xc8] sm:$0xff]
  %v40 = vld [vmem:[%s0 + $0xd0] sm:$0xff]
  %v41 = vld [vmem:[%s0 + $0xd8] sm:$0xff]
  %v42 = vld [vmem:[%s0 + $0xe0] sm:$0xff]
  %v43 = vld [vmem:[%s0 + $0xe8] sm:$0xff]
  %v44 = vld [vmem:[%s0 + $0xf0] sm:$0xff]
  %v45 = vld [vmem:[%s0 + $0xf8] sm:$0xff]
  %v46 = vld [vmem:[%s1] sm:$0xf]
  %v47 = vld [vmem:[%s1 + $0x4] sm:$0xf]
  %v48 = vld [vmem:[%s1 + $0x8] sm:$0xf]
  %v49 = vld [vmem:[%s1 + $0xc] sm:$0xf]
  %v50 = vld [vmem:[%s1 + $0x10] sm:$0xf]
  %v51 = vld [vmem:[%s1 + $0x14] sm:$0xf]
  %v52 = vld [vmem:[%s1 + $0x18] sm:$0xf]
  %v53 = vld [vmem:[%s1 + $0x1c] sm:$0xf]
  %v54 = vld [vmem:[%s1 + $0x20] sm:$0xf]
  %v55 = vld [vmem:[%s1 + $0x24] sm:$0xf]
  %v56 = vld [vmem:[%s1 + $0x28] sm:$0xf]
  %v57 = vld [vmem:[%s1 + $0x2c] sm:$0xf]
  %v58 = vld [vmem:[%s1 + $0x30] sm:$0xf]
  %v59 = vld [vmem:[%s1 + $0x34] sm:$0xf]
  %v60 = vld [vmem:[%s1 + $0x38] sm:$0xf]
  %v61 = vld [vmem:[%s1 + $0x3c] sm:$0xf]
  %v62 = vld [vmem:[%s1 + $0x40] sm:$0xf]
  %v63 = vld [vmem:[%s1 + $0x44] sm:$0xf]
  %v64 = vld [vmem:[%s1 + $0x48] sm:$0xf]
  %v65 = vld [vmem:[%s1 + $0x4c] sm:$0xf]
  %v66 = vld [vmem:[%s1 + $0x50] sm:$0xf]
  %v67 = vld [vmem:[%s1 + $0x54] sm:$0xf]
  %v68 = vld [vmem:[%s1 + $0x58] sm:$0xf]
  %v69 = vld [vmem:[%s1 + $0x5c] sm:$0xf]
  %v70 = vld [vmem:[%s1 + $0x60] sm:$0xf]
  %v71 = vld [vmem:[%s1 + $0x64] sm:$0xf]
  %v72 = vld [vmem:[%s1 + $0x68] sm:$0xf]
  %v73 = vld [vmem:[%s1 + $0x6c] sm:$0xf]
  %v74 = vld [vmem:[%s1 + $0x70] sm:$0xf]
  %v75 = vld [vmem:[%s1 + $0x74] sm:$0xf]
  %v76 = vld [vmem:[%s1 + $0x78] sm:$0xf]
  %v77 = vld [vmem:[%s1 + $0x7c] sm:$0xf]
  %v78 = vld [vmem:[%s1 + $0x80] sm:$0xf]
  %v79 = vld [vmem:[%s1 + $0x84] sm:$0xf]
  %v80 = vld [vmem:[%s1 + $0x88] sm:$0xf]
  %v81 = vld [vmem:[%s1 + $0x8c] sm:$0xf]
  %v82 = vld [vmem:[%s1 + $0x90] sm:$0xf]
  %v83 = vld [vmem:[%s1 + $0x94] sm:$0xf]
  %v84 = vld [vmem:[%s1 + $0x98] sm:$0xf]
  %v85 = vld [vmem:[%s1 + $0x9c] sm:$0xf]
  %v86 = vld [vmem:[%s1 + $0xa0] sm:$0xf]
  %v87 = vld [vmem:[%s1 + $0xa4] sm:$0xf]
  %v88 = vld [vmem:[%s1 + $0xa8] sm:$0xf]
  %v89 = vld [vmem:[%s1 + $0xac] sm:$0xf]
  %v90 = vld [vmem:[%s1 + $0xb0] sm:$0xf]
  %v91 = vld [vmem:[%s1 + $0xb4] sm:$0xf]
  %v92 = vld [vmem:[%s1 + $0xb8] sm:$0xf]
  %v93 = vld [vmem:[%s1 + $0xbc] sm:$0xf]
  %v94 = vld [vmem:[%s1 + $0xc0] sm:$0xf]
  %v95 = vld [vmem:[%s1 + $0xc4] sm:$0xf]
  %v96 = vld [vmem:[%s1 + $0xc8] sm:$0xf]
  %v97 = vld [vmem:[%s1 + $0xcc] sm:$0xf]
  %v98 = vld [vmem:[%s1 + $0xd0] sm:$0xf]
  %v99 = vld [vmem:[%s1 + $0xd4] sm:$0xf]
  %v100 = vld [vmem:[%s1 + $0xd8] sm:$0xf]
  %v101 = vld [vmem:[%s1 + $0xdc] sm:$0xf]
  %v102 = vld [vmem:[%s1 + $0xe0] sm:$0xf]
  %v103 = vld [vmem:[%s1 + $0xe4] sm:$0xf]
  %v104 = vld [vmem:[%s1 + $0xe8] sm:$0xf]
  %v105 = vld [vmem:[%s1 + $0xec] sm:$0xf]
  %v106 = vld [vmem:[%s1 + $0xf0] sm:$0xf]
  %v107 = vld [vmem:[%s1 + $0xf4] sm:$0xf]
  %v108 = vld [vmem:[%s1 + $0xf8] sm:$0xf]
  %v109 = vld [vmem:[%s1 + $0xfc] sm:$0xf]
  %v110 = vld [vmem:[%s1 + $0x100] sm:$0xf]
  %v111 = vld [vmem:[%s1 + $0x104] sm:$0xf]
  %v112 = vld [vmem:[%s1 + $0x108] sm:$0xf]
  %v113 = vld [vmem:[%s1 + $0x10c] sm:$0xf]
  %v114 = vld [vmem:[%s1 + $0x110] sm:$0xf]
  %v115 = vld [vmem:[%s1 + $0x114] sm:$0xf]
  %v116 = vld [vmem:[%s1 + $0x118] sm:$0xf]
  %v117 = vld [vmem:[%s1 + $0x11c] sm:$0xf]
  %v118 = vld [vmem:[%s1 + $0x120] sm:$0xf]
  %v119 = vld [vmem:[%s1 + $0x124] sm:$0xf]
  %v120 = vld [vmem:[%s1 + $0x128] sm:$0xf]
  %v121 = vld [vmem:[%s1 + $0x12c] sm:$0xf]
  %v122 = vld [vmem:[%s1 + $0x130] sm:$0xf]
  %v123 = vld [vmem:[%s1 + $0x134] sm:$0xf]
  %v124 = vld [vmem:[%s1 + $0x138] sm:$0xf]
  %v125 = vld [vmem:[%s1 + $0x13c] sm:$0xf]
  %v126 = vld [vmem:[%s1 + $0x140] sm:$0xf]
  %v127 = vld [vmem:[%s1 + $0x144] sm:$0xf]
  %v128 = vld [vmem:[%s1 + $0x148] sm:$0xf]
  %v129 = vld [vmem:[%s1 + $0x14c] sm:$0xf]
  %v130 = vld [vmem:[%s1 + $0x150] sm:$0xf]
  %v131 = vld [vmem:[%s1 + $0x154] sm:$0xf]
  %v132 = vld [vmem:[%s1 + $0x158] sm:$0xf]
  %v133 = vld [vmem:[%s1 + $0x15c] sm:$0xf]
  %v134 = vld [vmem:[%s1 + $0x160] sm:$0xf]
  %v135 = vld [vmem:[%s1 + $0x164] sm:$0xf]
  %v136 = vld [vmem:[%s1 + $0x168] sm:$0xf]
  %v137 = vld [vmem:[%s1 + $0x16c] sm:$0xf]
  %v138 = vld [vmem:[%s1 + $0x170] sm:$0xf]
  %v139 = vld [vmem:[%s1 + $0x174] sm:$0xf]
  %v140 = vld [vmem:[%s1 + $0x178] sm:$0xf]
  %v141 = vld [vmem:[%s1 + $0x17c] sm:$0xf]
  %v142 = vld [vmem:[%s1 + $0x180] sm:$0xf]
  %v143 = vld [vmem:[%s1 + $0x184] sm:$0xf]
  %v144 = vld [vmem:[%s1 + $0x188] sm:$0xf]
  %v145 = vld [vmem:[%s1 + $0x18c] sm:$0xf]
  %v146 = vld [vmem:[%s1 + $0x190] sm:$0xf]
  %v147 = vld [vmem:[%s1 + $0x194] sm:$0xf]
  %v148 = vld [vmem:[%s1 + $0x198] sm:$0xf]
  %v149 = vld [vmem:[%s1 + $0x19c] sm:$0xf]
  %v150 = vld [vmem:[%s1 + $0x1a0] sm:$0xf]
  %v151 = vld [vmem:[%s1 + $0x1a4] sm:$0xf]
  %v152 = vld [vmem:[%s1 + $0x1a8] sm:$0xf]
  %v153 = vld [vmem:[%s1 + $0x1ac] sm:$0xf]
  %v154 = vld [vmem:[%s1 + $0x1b0] sm:$0xf]
  %v155 = vld [vmem:[%s1 + $0x1b4] sm:$0xf]
  %v156 = vld [vmem:[%s1 + $0x1b8] sm:$0xf]
  %v157 = vld [vmem:[%s1 + $0x1bc] sm:$0xf]
  %v158 = vld [vmem:[%s1 + $0x1c0] sm:$0xf]
  %v159 = vld [vmem:[%s1 + $0x1c4] sm:$0xf]
  %v160 = vld [vmem:[%s1 + $0x1c8] sm:$0xf]
  %v161 = vld [vmem:[%s1 + $0x1cc] sm:$0xf]
  %v162 = vld [vmem:[%s1 + $0x1d0] sm:$0xf]
  %v163 = vld [vmem:[%s1 + $0x1d4] sm:$0xf]
  %v164 = vld [vmem:[%s1 + $0x1d8] sm:$0xf]
  %v165 = vld [vmem:[%s1 + $0x1dc] sm:$0xf]
  %v166 = vld [vmem:[%s1 + $0x1e0] sm:$0xf]
  %v167 = vld [vmem:[%s1 + $0x1e4] sm:$0xf]
  %v168 = vld [vmem:[%s1 + $0x1e8] sm:$0xf]
  %v169 = vld [vmem:[%s1 + $0x1ec] sm:$0xf]
  %v170 = vld [vmem:[%s1 + $0x1f0] sm:$0xf]
  %v171 = vld [vmem:[%s1 + $0x1f4] sm:$0xf]
  %v172 = vld [vmem:[%s1 + $0x1f8] sm:$0xf]
  %v173 = vld [vmem:[%s1 + $0x1fc] sm:$0xf]
  %v174 = vld [vmem:[%s1 + $0x200] sm:$0xf]
  %v175 = vld [vmem:[%s1 + $0x204] sm:$0xf]
  %v176 = vld [vmem:[%s1 + $0x208] sm:$0xf]
  %v177 = vld [vmem:[%s1 + $0x20c] sm:$0xf]
  %v178 = vld [vmem:[%s1 + $0x210] sm:$0xf]
  %v179 = vld [vmem:[%s1 + $0x214] sm:$0xf]
  %v180 = vld [vmem:[%s1 + $0x218] sm:$0xf]
  %v181 = vld [vmem:[%s1 + $0x21c] sm:$0xf]
  %v182 = vld [vmem:[%s1 + $0x220] sm:$0xf]
  %v183 = vld [vmem:[%s1 + $0x224] sm:$0xf]
  %v184 = vld [vmem:[%s1 + $0x228] sm:$0xf]
  %v185 = vld [vmem:[%s1 + $0x22c] sm:$0xf]
  %v186 = vld [vmem:[%s1 + $0x230] sm:$0xf]
  %v187 = vld [vmem:[%s1 + $0x234] sm:$0xf]
  %v188 = vld [vmem:[%s1 + $0x238] sm:$0xf]
  %v189 = vld [vmem:[%s1 + $0x23c] sm:$0xf]
  %v190 = vld [vmem:[%s1 + $0x240] sm:$0xf]
  %v191 = vld [vmem:[%s1 + $0x244] sm:$0xf]
  %v192 = vld [vmem:[%s1 + $0x248] sm:$0xf]
  %v193 = vld [vmem:[%s1 + $0x24c] sm:$0xf]
  %v194 = vld [vmem:[%s1 + $0x250] sm:$0xf]
  %v195 = vld [vmem:[%s1 + $0x254] sm:$0xf]
  %v196 = vld [vmem:[%s1 + $0x258] sm:$0xf]
  %v197 = vld [vmem:[%s1 + $0x25c] sm:$0xf]
  %v198 = vld [vmem:[%s1 + $0x260] sm:$0xf]
  %v199 = vld [vmem:[%s1 + $0x264] sm:$0xf]
  %v200 = vld [vmem:[%s1 + $0x268] sm:$0xf]
  %v201 = vld [vmem:[%s1 + $0x26c] sm:$0xf]
  %v202 = vld [vmem:[%s1 + $0x270] sm:$0xf]
  %v203 = vld [vmem:[%s1 + $0x274] sm:$0xf]
  %v204 = vld [vmem:[%s1 + $0x278] sm:$0xf]
  %v205 = vld [vmem:[%s1 + $0x27c] sm:$0xf]
  %v206 = vld [vmem:[%s1 + $0x280] sm:$0xf]
  %v207 = vld [vmem:[%s1 + $0x284] sm:$0xf]
  %v208 = vld [vmem:[%s1 + $0x288] sm:$0xf]
  %v209 = vld [vmem:[%s1 + $0x28c] sm:$0xf]
  %v210 = vld [vmem:[%s1 + $0x290] sm:$0xf]
  %v211 = vld [vmem:[%s1 + $0x294] sm:$0xf]
  %v212 = vld [vmem:[%s1 + $0x298] sm:$0xf]
  %v213 = vld [vmem:[%s1 + $0x29c] sm:$0xf]
  %v214 = vld [vmem:[%s1 + $0x2a0] sm:$0xf]
  %v215 = vld [vmem:[%s1 + $0x2a4] sm:$0xf]
  %v216 = vld [vmem:[%s1 + $0x2a8] sm:$0xf]
  %v217 = vld [vmem:[%s1 + $0x2ac] sm:$0xf]
  %v218 = vld [vmem:[%s1 + $0x2b0] sm:$0xf]
  %v219 = vld [vmem:[%s1 + $0x2b4] sm:$0xf]
  %v220 = vld [vmem:[%s1 + $0x2b8] sm:$0xf]
  %v221 = vld [vmem:[%s1 + $0x2bc] sm:$0xf]
  %v222 = vld [vmem:[%s1 + $0x2c0] sm:$0xf]
  %v223 = vld [vmem:[%s1 + $0x2c4] sm:$0xf]
  %v224 = vld [vmem:[%s1 + $0x2c8] sm:$0xf]
  %v225 = vld [vmem:[%s1 + $0x2cc] sm:$0xf]
  %v226 = vld [vmem:[%s1 + $0x2d0] sm:$0xf]
  %v227 = vld [vmem:[%s1 + $0x2d4] sm:$0xf]
  %v228 = vld [vmem:[%s1 + $0x2d8] sm:$0xf]
  %v229 = vld [vmem:[%s1 + $0x2dc] sm:$0xf]
  %v230 = vld [vmem:[%s1 + $0x2e0] sm:$0xf]
  %v231 = vld [vmem:[%s1 + $0x2e4] sm:$0xf]
  %v232 = vld [vmem:[%s1 + $0x2e8] sm:$0xf]
  %v233 = vld [vmem:[%s1 + $0x2ec] sm:$0xf]
  %v234 = vld [vmem:[%s1 + $0x2f0] sm:$0xf]
  %v235 = vld [vmem:[%s1 + $0x2f4] sm:$0xf]
  %v236 = vld [vmem:[%s1 + $0x2f8] sm:$0xf]
  %v237 = vld [vmem:[%s1 + $0x2fc] sm:$0xf]
  %v238 = vld [vmem:[%s1 + $0x300] sm:$0xf]
  %v239 = vld [vmem:[%s1 + $0x304] sm:$0xf]
  %v240 = vld [vmem:[%s1 + $0x308] sm:$0xf]
  %v241 = vld [vmem:[%s1 + $0x30c] sm:$0xf]
  %v242 = vld [vmem:[%s1 + $0x310] sm:$0xf]
  %v243 = vld [vmem:[%s1 + $0x314] sm:$0xf]
  %v244 = vld [vmem:[%s1 + $0x318] sm:$0xf]
  %v245 = vld [vmem:[%s1 + $0x31c] sm:$0xf]
  %v246 = vld [vmem:[%s1 + $0x320] sm:$0xf]
  %v247 = vld [vmem:[%s1 + $0x324] sm:$0xf]
  %v248 = vld [vmem:[%s1 + $0x328] sm:$0xf]
  %v249 = vld [vmem:[%s1 + $0x32c] sm:$0xf]
  %v250 = vld [vmem:[%s1 + $0x330] sm:$0xf]
  %v251 = vld [vmem:[%s1 + $0x334] sm:$0xf]
  %v252 = vld [vmem:[%s1 + $0x338] sm:$0xf]
  %v253 = vld [vmem:[%s1 + $0x33c] sm:$0xf]
  %v254 = vld [vmem:[%s1 + $0x340] sm:$0xf]
  %v255 = vld [vmem:[%s1 + $0x344] sm:$0xf]
  %v256 = vld [vmem:[%s1 + $0x348] sm:$0xf]
  %v257 = vld [vmem:[%s1 + $0x34c] sm:$0xf]
  %v258 = vld [vmem:[%s1 + $0x350] sm:$0xf]
  %v259 = vld [vmem:[%s1 + $0x354] sm:$0xf]
  %v260 = vld [vmem:[%s1 + $0x358] sm:$0xf]
  %v261 = vld [vmem:[%s1 + $0x35c] sm:$0xf]
  %v262 = vld [vmem:[%s1 + $0x360] sm:$0xf]
  %v263 = vld [vmem:[%s1 + $0x364] sm:$0xf]
  %v264 = vld [vmem:[%s1 + $0x368] sm:$0xf]
  %v265 = vld [vmem:[%s1 + $0x36c] sm:$0xf]
  %v266 = vld [vmem:[%s1 + $0x370] sm:$0xf]
  %v267 = vld [vmem:[%s1 + $0x374] sm:$0xf]
  %v268 = vld [vmem:[%s1 + $0x378] sm:$0xf]
  %v269 = vld [vmem:[%s1 + $0x37c] sm:$0xf]
  %v270 = vld [vmem:[%s1 + $0x380] sm:$0xf]
  %v271 = vld [vmem:[%s1 + $0x384] sm:$0xf]
  %v272 = vld [vmem:[%s1 + $0x388] sm:$0xf]
  %v273 = vld [vmem:[%s1 + $0x38c] sm:$0xf]
  %v274 = vld [vmem:[%s1 + $0x390] sm:$0xf]
  %v275 = vld [vmem:[%s1 + $0x394] sm:$0xf]
  %v276 = vld [vmem:[%s1 + $0x398] sm:$0xf]
  %v277 = vld [vmem:[%s1 + $0x39c] sm:$0xf]
  %v278 = vld [vmem:[%s1 + $0x3a0] sm:$0xf]
  %v279 = vld [vmem:[%s1 + $0x3a4] sm:$0xf]
  %v280 = vld [vmem:[%s1 + $0x3a8] sm:$0xf]
  %v281 = vld [vmem:[%s1 + $0x3ac] sm:$0xf]
  %v282 = vld [vmem:[%s1 + $0x3b0] sm:$0xf]
  %v283 = vld [vmem:[%s1 + $0x3b4] sm:$0xf]
  %v284 = vld [vmem:[%s1 + $0x3b8] sm:$0xf]
  %v285 = vld [vmem:[%s1 + $0x3bc] sm:$0xf]
  %v286 = vld [vmem:[%s1 + $0x3c0] sm:$0xf]
  %v287 = vld [vmem:[%s1 + $0x3c4] sm:$0xf]
  %v288 = vld [vmem:[%s1 + $0x3c8] sm:$0xf]
  %v289 = vld [vmem:[%s1 + $0x3cc] sm:$0xf]
  %v290 = vld [vmem:[%s1 + $0x3d0] sm:$0xf]
  %v291 = vld [vmem:[%s1 + $0x3d4] sm:$0xf]
  %v292 = vld [vmem:[%s1 + $0x3d8] sm:$0xf]
  %v293 = vld [vmem:[%s1 + $0x3dc] sm:$0xf]
  %v294 = vld [vmem:[%s1 + $0x3e0] sm:$0xf]
  %v295 = vld [vmem:[%s1 + $0x3e4] sm:$0xf]
  %v296 = vld [vmem:[%s1 + $0x3e8] sm:$0xf]
  %v297 = vld [vmem:[%s1 + $0x3ec] sm:$0xf]
  %v298 = vld [vmem:[%s1 + $0x3f0] sm:$0xf]
  %v299 = vld [vmem:[%s1 + $0x3f4] sm:$0xf]
  %v300 = vld [vmem:[%s1 + $0x3f8] sm:$0xf]
  %v301 = vld [vmem:[%s1 + $0x3fc] sm:$0xf]
  %v334 = vunpack.c.l.b16 %v14
  %v335 = vunpack.c.h.b16 %v14
  %v336 = vunpack.c.l.b16 %v15
  %v337 = vunpack.c.h.b16 %v15
  %v338 = vunpack.c.l.b16 %v16
  %v339 = vunpack.c.h.b16 %v16
  %v340 = vunpack.c.l.b16 %v17
  %v341 = vunpack.c.h.b16 %v17
  %v342 = vunpack.c.l.b16 %v18
  %v343 = vunpack.c.h.b16 %v18
  %v344 = vunpack.c.l.b16 %v19
  %v345 = vunpack.c.h.b16 %v19
  %v346 = vunpack.c.l.b16 %v20
  %v347 = vunpack.c.h.b16 %v20
  %v348 = vunpack.c.l.b16 %v21
  %v349 = vunpack.c.h.b16 %v21
  %v350 = vunpack.c.l.b16 %v22
  %v351 = vunpack.c.h.b16 %v22
  %v352 = vunpack.c.l.b16 %v23
  %v353 = vunpack.c.h.b16 %v23
  %v354 = vunpack.c.l.b16 %v24
  %v355 = vunpack.c.h.b16 %v24
  %v356 = vunpack.c.l.b16 %v25
  %v357 = vunpack.c.h.b16 %v25
  %v358 = vunpack.c.l.b16 %v26
  %v359 = vunpack.c.h.b16 %v26
  %v360 = vunpack.c.l.b16 %v27
  %v361 = vunpack.c.h.b16 %v27
  %v362 = vunpack.c.l.b16 %v28
  %v363 = vunpack.c.h.b16 %v28
  %v364 = vunpack.c.l.b16 %v29
  %v365 = vunpack.c.h.b16 %v29
  %v366 = vunpack.c.l.b16 %v30
  %v367 = vunpack.c.h.b16 %v30
  %v368 = vunpack.c.l.b16 %v31
  %v369 = vunpack.c.h.b16 %v31
  %v370 = vunpack.c.l.b16 %v32
  %v371 = vunpack.c.h.b16 %v32
  %v372 = vunpack.c.l.b16 %v33
  %v373 = vunpack.c.h.b16 %v33
  %v374 = vunpack.c.l.b16 %v34
  %v375 = vunpack.c.h.b16 %v34
  %v376 = vunpack.c.l.b16 %v35
  %v377 = vunpack.c.h.b16 %v35
  %v378 = vunpack.c.l.b16 %v36
  %v379 = vunpack.c.h.b16 %v36
  %v380 = vunpack.c.l.b16 %v37
  %v381 = vunpack.c.h.b16 %v37
  %v382 = vunpack.c.l.b16 %v38
  %v383 = vunpack.c.h.b16 %v38
  %v384 = vunpack.c.l.b16 %v39
  %v385 = vunpack.c.h.b16 %v39
  %v386 = vunpack.c.l.b16 %v40
  %v387 = vunpack.c.h.b16 %v40
  %v388 = vunpack.c.l.b16 %v41
  %v389 = vunpack.c.h.b16 %v41
  %v390 = vunpack.c.l.b16 %v42
  %v391 = vunpack.c.h.b16 %v42
  %v392 = vunpack.c.l.b16 %v43
  %v393 = vunpack.c.h.b16 %v43
  %v394 = vunpack.c.l.b16 %v44
  %v395 = vunpack.c.h.b16 %v44
  %v396 = vunpack.c.l.b16 %v45
  %v397 = vunpack.c.h.b16 %v45
  %v398 = vpack.c.b16 %v350, %v334
  %v399 = vpack.c.b16 %v351, %v335
  %v400 = vpack.c.b16 %v352, %v336
  %v401 = vpack.c.b16 %v353, %v337
  %v402 = vpack.c.b16 %v354, %v338
  %v403 = vpack.c.b16 %v355, %v339
  %v404 = vpack.c.b16 %v356, %v340
  %v405 = vpack.c.b16 %v357, %v341
  %v406 = vpack.c.b16 %v358, %v342
  %v407 = vpack.c.b16 %v359, %v343
  %v408 = vpack.c.b16 %v360, %v344
  %v409 = vpack.c.b16 %v361, %v345
  %v410 = vpack.c.b16 %v362, %v346
  %v411 = vpack.c.b16 %v363, %v347
  %v412 = vpack.c.b16 %v364, %v348
  %v413 = vpack.c.b16 %v365, %v349
  %v414 = vpack.c.b16 %v382, %v366
  %v415 = vpack.c.b16 %v383, %v367
  %v416 = vpack.c.b16 %v384, %v368
  %v417 = vpack.c.b16 %v385, %v369
  %v418 = vpack.c.b16 %v386, %v370
  %v419 = vpack.c.b16 %v387, %v371
  %v420 = vpack.c.b16 %v388, %v372
  %v421 = vpack.c.b16 %v389, %v373
  %v422 = vpack.c.b16 %v390, %v374
  %v423 = vpack.c.b16 %v391, %v375
  %v424 = vpack.c.b16 %v392, %v376
  %v425 = vpack.c.b16 %v393, %v377
  %v426 = vpack.c.b16 %v394, %v378
  %v427 = vpack.c.b16 %v395, %v379
  %v428 = vpack.c.b16 %v396, %v380
  %v429 = vpack.c.b16 %v397, %v381
  %v718 = vunpack.c.l.b16 %v46
  %v719 = vunpack.c.l.b16 %v47
  %v720 = vunpack.c.l.b16 %v48
  %v721 = vunpack.c.l.b16 %v49
  %v722 = vunpack.c.l.b16 %v50
  %v723 = vunpack.c.l.b16 %v51
  %v724 = vunpack.c.l.b16 %v52
  %v725 = vunpack.c.l.b16 %v53
  %v726 = vunpack.c.l.b16 %v54
  %v727 = vunpack.c.l.b16 %v55
  %v728 = vunpack.c.l.b16 %v56
  %v729 = vunpack.c.l.b16 %v57
  %v730 = vunpack.c.l.b16 %v58
  %v731 = vunpack.c.l.b16 %v59
  %v732 = vunpack.c.l.b16 %v60
  %v733 = vunpack.c.l.b16 %v61
  %v734 = vunpack.c.l.b16 %v62
  %v735 = vunpack.c.l.b16 %v63
  %v736 = vunpack.c.l.b16 %v64
  %v737 = vunpack.c.l.b16 %v65
  %v738 = vunpack.c.l.b16 %v66
  %v739 = vunpack.c.l.b16 %v67
  %v740 = vunpack.c.l.b16 %v68
  %v741 = vunpack.c.l.b16 %v69
  %v742 = vunpack.c.l.b16 %v70
  %v743 = vunpack.c.l.b16 %v71
  %v744 = vunpack.c.l.b16 %v72
  %v745 = vunpack.c.l.b16 %v73
  %v746 = vunpack.c.l.b16 %v74
  %v747 = vunpack.c.l.b16 %v75
  %v748 = vunpack.c.l.b16 %v76
  %v749 = vunpack.c.l.b16 %v77
  %v750 = vunpack.c.l.b16 %v78
  %v751 = vunpack.c.l.b16 %v79
  %v752 = vunpack.c.l.b16 %v80
  %v753 = vunpack.c.l.b16 %v81
  %v754 = vunpack.c.l.b16 %v82
  %v755 = vunpack.c.l.b16 %v83
  %v756 = vunpack.c.l.b16 %v84
  %v757 = vunpack.c.l.b16 %v85
  %v758 = vunpack.c.l.b16 %v86
  %v759 = vunpack.c.l.b16 %v87
  %v760 = vunpack.c.l.b16 %v88
  %v761 = vunpack.c.l.b16 %v89
  %v762 = vunpack.c.l.b16 %v90
  %v763 = vunpack.c.l.b16 %v91
  %v764 = vunpack.c.l.b16 %v92
  %v765 = vunpack.c.l.b16 %v93
  %v766 = vunpack.c.l.b16 %v94
  %v767 = vunpack.c.l.b16 %v95
  %v768 = vunpack.c.l.b16 %v96
  %v769 = vunpack.c.l.b16 %v97
  %v770 = vunpack.c.l.b16 %v98
  %v771 = vunpack.c.l.b16 %v99
  %v772 = vunpack.c.l.b16 %v100
  %v773 = vunpack.c.l.b16 %v101
  %v774 = vunpack.c.l.b16 %v102
  %v775 = vunpack.c.l.b16 %v103
  %v776 = vunpack.c.l.b16 %v104
  %v777 = vunpack.c.l.b16 %v105
  %v778 = vunpack.c.l.b16 %v106
  %v779 = vunpack.c.l.b16 %v107
  %v780 = vunpack.c.l.b16 %v108
  %v781 = vunpack.c.l.b16 %v109
  %v782 = vunpack.c.l.b16 %v110
  %v783 = vunpack.c.l.b16 %v111
  %v784 = vunpack.c.l.b16 %v112
  %v785 = vunpack.c.l.b16 %v113
  %v786 = vunpack.c.l.b16 %v114
  %v787 = vunpack.c.l.b16 %v115
  %v788 = vunpack.c.l.b16 %v116
  %v789 = vunpack.c.l.b16 %v117
  %v790 = vunpack.c.l.b16 %v118
  %v791 = vunpack.c.l.b16 %v119
  %v792 = vunpack.c.l.b16 %v120
  %v793 = vunpack.c.l.b16 %v121
  %v794 = vunpack.c.l.b16 %v122
  %v795 = vunpack.c.l.b16 %v123
  %v796 = vunpack.c.l.b16 %v124
  %v797 = vunpack.c.l.b16 %v125
  %v798 = vunpack.c.l.b16 %v126
  %v799 = vunpack.c.l.b16 %v127
  %v800 = vunpack.c.l.b16 %v128
  %v801 = vunpack.c.l.b16 %v129
  %v802 = vunpack.c.l.b16 %v130
  %v803 = vunpack.c.l.b16 %v131
  %v804 = vunpack.c.l.b16 %v132
  %v805 = vunpack.c.l.b16 %v133
  %v806 = vunpack.c.l.b16 %v134
  %v807 = vunpack.c.l.b16 %v135
  %v808 = vunpack.c.l.b16 %v136
  %v809 = vunpack.c.l.b16 %v137
  %v810 = vunpack.c.l.b16 %v138
  %v811 = vunpack.c.l.b16 %v139
  %v812 = vunpack.c.l.b16 %v140
  %v813 = vunpack.c.l.b16 %v141
  %v814 = vunpack.c.l.b16 %v142
  %v815 = vunpack.c.l.b16 %v143
  %v816 = vunpack.c.l.b16 %v144
  %v817 = vunpack.c.l.b16 %v145
  %v818 = vunpack.c.l.b16 %v146
  %v819 = vunpack.c.l.b16 %v147
  %v820 = vunpack.c.l.b16 %v148
  %v821 = vunpack.c.l.b16 %v149
  %v822 = vunpack.c.l.b16 %v150
  %v823 = vunpack.c.l.b16 %v151
  %v824 = vunpack.c.l.b16 %v152
  %v825 = vunpack.c.l.b16 %v153
  %v826 = vunpack.c.l.b16 %v154
  %v827 = vunpack.c.l.b16 %v155
  %v828 = vunpack.c.l.b16 %v156
  %v829 = vunpack.c.l.b16 %v157
  %v830 = vunpack.c.l.b16 %v158
  %v831 = vunpack.c.l.b16 %v159
  %v832 = vunpack.c.l.b16 %v160
  %v833 = vunpack.c.l.b16 %v161
  %v834 = vunpack.c.l.b16 %v162
  %v835 = vunpack.c.l.b16 %v163
  %v836 = vunpack.c.l.b16 %v164
  %v837 = vunpack.c.l.b16 %v165
  %v838 = vunpack.c.l.b16 %v166
  %v839 = vunpack.c.l.b16 %v167
  %v840 = vunpack.c.l.b16 %v168
  %v841 = vunpack.c.l.b16 %v169
  %v842 = vunpack.c.l.b16 %v170
  %v843 = vunpack.c.l.b16 %v171
  %v844 = vunpack.c.l.b16 %v172
  %v845 = vunpack.c.l.b16 %v173
  %v846 = vunpack.c.l.b16 %v174
  %v847 = vunpack.c.l.b16 %v175
  %v848 = vunpack.c.l.b16 %v176
  %v849 = vunpack.c.l.b16 %v177
  %v850 = vunpack.c.l.b16 %v178
  %v851 = vunpack.c.l.b16 %v179
  %v852 = vunpack.c.l.b16 %v180
  %v853 = vunpack.c.l.b16 %v181
  %v854 = vunpack.c.l.b16 %v182
  %v855 = vunpack.c.l.b16 %v183
  %v856 = vunpack.c.l.b16 %v184
  %v857 = vunpack.c.l.b16 %v185
  %v858 = vunpack.c.l.b16 %v186
  %v859 = vunpack.c.l.b16 %v187
  %v860 = vunpack.c.l.b16 %v188
  %v861 = vunpack.c.l.b16 %v189
  %v862 = vunpack.c.l.b16 %v190
  %v863 = vunpack.c.l.b16 %v191
  %v864 = vunpack.c.l.b16 %v192
  %v865 = vunpack.c.l.b16 %v193
  %v866 = vunpack.c.l.b16 %v194
  %v867 = vunpack.c.l.b16 %v195
  %v868 = vunpack.c.l.b16 %v196
  %v869 = vunpack.c.l.b16 %v197
  %v870 = vunpack.c.l.b16 %v198
  %v871 = vunpack.c.l.b16 %v199
  %v872 = vunpack.c.l.b16 %v200
  %v873 = vunpack.c.l.b16 %v201
  %v874 = vunpack.c.l.b16 %v202
  %v875 = vunpack.c.l.b16 %v203
  %v876 = vunpack.c.l.b16 %v204
  %v877 = vunpack.c.l.b16 %v205
  %v878 = vunpack.c.l.b16 %v206
  %v879 = vunpack.c.l.b16 %v207
  %v880 = vunpack.c.l.b16 %v208
  %v881 = vunpack.c.l.b16 %v209
  %v882 = vunpack.c.l.b16 %v210
  %v883 = vunpack.c.l.b16 %v211
  %v884 = vunpack.c.l.b16 %v212
  %v885 = vunpack.c.l.b16 %v213
  %v886 = vunpack.c.l.b16 %v214
  %v887 = vunpack.c.l.b16 %v215
  %v888 = vunpack.c.l.b16 %v216
  %v889 = vunpack.c.l.b16 %v217
  %v890 = vunpack.c.l.b16 %v218
  %v891 = vunpack.c.l.b16 %v219
  %v892 = vunpack.c.l.b16 %v220
  %v893 = vunpack.c.l.b16 %v221
  %v894 = vunpack.c.l.b16 %v222
  %v895 = vunpack.c.l.b16 %v223
  %v896 = vunpack.c.l.b16 %v224
  %v897 = vunpack.c.l.b16 %v225
  %v898 = vunpack.c.l.b16 %v226
  %v899 = vunpack.c.l.b16 %v227
  %v900 = vunpack.c.l.b16 %v228
  %v901 = vunpack.c.l.b16 %v229
  %v902 = vunpack.c.l.b16 %v230
  %v903 = vunpack.c.l.b16 %v231
  %v904 = vunpack.c.l.b16 %v232
  %v905 = vunpack.c.l.b16 %v233
  %v906 = vunpack.c.l.b16 %v234
  %v907 = vunpack.c.l.b16 %v235
  %v908 = vunpack.c.l.b16 %v236
  %v909 = vunpack.c.l.b16 %v237
  %v910 = vunpack.c.l.b16 %v238
  %v911 = vunpack.c.l.b16 %v239
  %v912 = vunpack.c.l.b16 %v240
  %v913 = vunpack.c.l.b16 %v241
  %v914 = vunpack.c.l.b16 %v242
  %v915 = vunpack.c.l.b16 %v243
  %v916 = vunpack.c.l.b16 %v244
  %v917 = vunpack.c.l.b16 %v245
  %v918 = vunpack.c.l.b16 %v246
  %v919 = vunpack.c.l.b16 %v247
  %v920 = vunpack.c.l.b16 %v248
  %v921 = vunpack.c.l.b16 %v249
  %v922 = vunpack.c.l.b16 %v250
  %v923 = vunpack.c.l.b16 %v251
  %v924 = vunpack.c.l.b16 %v252
  %v925 = vunpack.c.l.b16 %v253
  %v926 = vunpack.c.l.b16 %v254
  %v927 = vunpack.c.l.b16 %v255
  %v928 = vunpack.c.l.b16 %v256
  %v929 = vunpack.c.l.b16 %v257
  %v930 = vunpack.c.l.b16 %v258
  %v931 = vunpack.c.l.b16 %v259
  %v932 = vunpack.c.l.b16 %v260
  %v933 = vunpack.c.l.b16 %v261
  %v934 = vunpack.c.l.b16 %v262
  %v935 = vunpack.c.l.b16 %v263
  %v936 = vunpack.c.l.b16 %v264
  %v937 = vunpack.c.l.b16 %v265
  %v938 = vunpack.c.l.b16 %v266
  %v939 = vunpack.c.l.b16 %v267
  %v940 = vunpack.c.l.b16 %v268
  %v941 = vunpack.c.l.b16 %v269
  %v942 = vunpack.c.l.b16 %v270
  %v943 = vunpack.c.l.b16 %v271
  %v944 = vunpack.c.l.b16 %v272
  %v945 = vunpack.c.l.b16 %v273
  %v946 = vunpack.c.l.b16 %v274
  %v947 = vunpack.c.l.b16 %v275
  %v948 = vunpack.c.l.b16 %v276
  %v949 = vunpack.c.l.b16 %v277
  %v950 = vunpack.c.l.b16 %v278
  %v951 = vunpack.c.l.b16 %v279
  %v952 = vunpack.c.l.b16 %v280
  %v953 = vunpack.c.l.b16 %v281
  %v954 = vunpack.c.l.b16 %v282
  %v955 = vunpack.c.l.b16 %v283
  %v956 = vunpack.c.l.b16 %v284
  %v957 = vunpack.c.l.b16 %v285
  %v958 = vunpack.c.l.b16 %v286
  %v959 = vunpack.c.l.b16 %v287
  %v960 = vunpack.c.l.b16 %v288
  %v961 = vunpack.c.l.b16 %v289
  %v962 = vunpack.c.l.b16 %v290
  %v963 = vunpack.c.l.b16 %v291
  %v964 = vunpack.c.l.b16 %v292
  %v965 = vunpack.c.l.b16 %v293
  %v966 = vunpack.c.l.b16 %v294
  %v967 = vunpack.c.l.b16 %v295
  %v968 = vunpack.c.l.b16 %v296
  %v969 = vunpack.c.l.b16 %v297
  %v970 = vunpack.c.l.b16 %v298
  %v971 = vunpack.c.l.b16 %v299
  %v972 = vunpack.c.l.b16 %v300
  %v973 = vunpack.c.l.b16 %v301
  %v974 = vpack.c.b16 %v719, %v718
  %v975 = vpack.c.b16 %v721, %v720
  %v976 = vpack.c.b16 %v723, %v722
  %v977 = vpack.c.b16 %v725, %v724
  %v978 = vpack.c.b16 %v727, %v726
  %v979 = vpack.c.b16 %v729, %v728
  %v980 = vpack.c.b16 %v731, %v730
  %v981 = vpack.c.b16 %v733, %v732
  %v982 = vpack.c.b16 %v735, %v734
  %v983 = vpack.c.b16 %v737, %v736
  %v984 = vpack.c.b16 %v739, %v738
  %v985 = vpack.c.b16 %v741, %v740
  %v986 = vpack.c.b16 %v743, %v742
  %v987 = vpack.c.b16 %v745, %v744
  %v988 = vpack.c.b16 %v747, %v746
  %v989 = vpack.c.b16 %v749, %v748
  %v990 = vpack.c.b16 %v751, %v750
  %v991 = vpack.c.b16 %v753, %v752
  %v992 = vpack.c.b16 %v755, %v754
  %v993 = vpack.c.b16 %v757, %v756
  %v994 = vpack.c.b16 %v759, %v758
  %v995 = vpack.c.b16 %v761, %v760
  %v996 = vpack.c.b16 %v763, %v762
  %v997 = vpack.c.b16 %v765, %v764
  %v998 = vpack.c.b16 %v767, %v766
  %v999 = vpack.c.b16 %v769, %v768
  %v1000 = vpack.c.b16 %v771, %v770
  %v1001 = vpack.c.b16 %v773, %v772
  %v1002 = vpack.c.b16 %v775, %v774
  %v1003 = vpack.c.b16 %v777, %v776
  %v1004 = vpack.c.b16 %v779, %v778
  %v1005 = vpack.c.b16 %v781, %v780
  %v1006 = vpack.c.b16 %v783, %v782
  %v1007 = vpack.c.b16 %v785, %v784
  %v1008 = vpack.c.b16 %v787, %v786
  %v1009 = vpack.c.b16 %v789, %v788
  %v1010 = vpack.c.b16 %v791, %v790
  %v1011 = vpack.c.b16 %v793, %v792
  %v1012 = vpack.c.b16 %v795, %v794
  %v1013 = vpack.c.b16 %v797, %v796
  %v1014 = vpack.c.b16 %v799, %v798
  %v1015 = vpack.c.b16 %v801, %v800
  %v1016 = vpack.c.b16 %v803, %v802
  %v1017 = vpack.c.b16 %v805, %v804
  %v1018 = vpack.c.b16 %v807, %v806
  %v1019 = vpack.c.b16 %v809, %v808
  %v1020 = vpack.c.b16 %v811, %v810
  %v1021 = vpack.c.b16 %v813, %v812
  %v1022 = vpack.c.b16 %v815, %v814
  %v1023 = vpack.c.b16 %v817, %v816
  %v1024 = vpack.c.b16 %v819, %v818
  %v1025 = vpack.c.b16 %v821, %v820
  %v1026 = vpack.c.b16 %v823, %v822
  %v1027 = vpack.c.b16 %v825, %v824
  %v1028 = vpack.c.b16 %v827, %v826
  %v1029 = vpack.c.b16 %v829, %v828
  %v1030 = vpack.c.b16 %v831, %v830
  %v1031 = vpack.c.b16 %v833, %v832
  %v1032 = vpack.c.b16 %v835, %v834
  %v1033 = vpack.c.b16 %v837, %v836
  %v1034 = vpack.c.b16 %v839, %v838
  %v1035 = vpack.c.b16 %v841, %v840
  %v1036 = vpack.c.b16 %v843, %v842
  %v1037 = vpack.c.b16 %v845, %v844
  %v1038 = vpack.c.b16 %v847, %v846
  %v1039 = vpack.c.b16 %v849, %v848
  %v1040 = vpack.c.b16 %v851, %v850
  %v1041 = vpack.c.b16 %v853, %v852
  %v1042 = vpack.c.b16 %v855, %v854
  %v1043 = vpack.c.b16 %v857, %v856
  %v1044 = vpack.c.b16 %v859, %v858
  %v1045 = vpack.c.b16 %v861, %v860
  %v1046 = vpack.c.b16 %v863, %v862
  %v1047 = vpack.c.b16 %v865, %v864
  %v1048 = vpack.c.b16 %v867, %v866
  %v1049 = vpack.c.b16 %v869, %v868
  %v1050 = vpack.c.b16 %v871, %v870
  %v1051 = vpack.c.b16 %v873, %v872
  %v1052 = vpack.c.b16 %v875, %v874
  %v1053 = vpack.c.b16 %v877, %v876
  %v1054 = vpack.c.b16 %v879, %v878
  %v1055 = vpack.c.b16 %v881, %v880
  %v1056 = vpack.c.b16 %v883, %v882
  %v1057 = vpack.c.b16 %v885, %v884
  %v1058 = vpack.c.b16 %v887, %v886
  %v1059 = vpack.c.b16 %v889, %v888
  %v1060 = vpack.c.b16 %v891, %v890
  %v1061 = vpack.c.b16 %v893, %v892
  %v1062 = vpack.c.b16 %v895, %v894
  %v1063 = vpack.c.b16 %v897, %v896
  %v1064 = vpack.c.b16 %v899, %v898
  %v1065 = vpack.c.b16 %v901, %v900
  %v1066 = vpack.c.b16 %v903, %v902
  %v1067 = vpack.c.b16 %v905, %v904
  %v1068 = vpack.c.b16 %v907, %v906
  %v1069 = vpack.c.b16 %v909, %v908
  %v1070 = vpack.c.b16 %v911, %v910
  %v1071 = vpack.c.b16 %v913, %v912
  %v1072 = vpack.c.b16 %v915, %v914
  %v1073 = vpack.c.b16 %v917, %v916
  %v1074 = vpack.c.b16 %v919, %v918
  %v1075 = vpack.c.b16 %v921, %v920
  %v1076 = vpack.c.b16 %v923, %v922
  %v1077 = vpack.c.b16 %v925, %v924
  %v1078 = vpack.c.b16 %v927, %v926
  %v1079 = vpack.c.b16 %v929, %v928
  %v1080 = vpack.c.b16 %v931, %v930
  %v1081 = vpack.c.b16 %v933, %v932
  %v1082 = vpack.c.b16 %v935, %v934
  %v1083 = vpack.c.b16 %v937, %v936
  %v1084 = vpack.c.b16 %v939, %v938
  %v1085 = vpack.c.b16 %v941, %v940
  %v1086 = vpack.c.b16 %v943, %v942
  %v1087 = vpack.c.b16 %v945, %v944
  %v1088 = vpack.c.b16 %v947, %v946
  %v1089 = vpack.c.b16 %v949, %v948
  %v1090 = vpack.c.b16 %v951, %v950
  %v1091 = vpack.c.b16 %v953, %v952
  %v1092 = vpack.c.b16 %v955, %v954
  %v1093 = vpack.c.b16 %v957, %v956
  %v1094 = vpack.c.b16 %v959, %v958
  %v1095 = vpack.c.b16 %v961, %v960
  %v1096 = vpack.c.b16 %v963, %v962
  %v1097 = vpack.c.b16 %v965, %v964
  %v1098 = vpack.c.b16 %v967, %v966
  %v1099 = vpack.c.b16 %v969, %v968
  %v1100 = vpack.c.b16 %v971, %v970
  %v1101 = vpack.c.b16 %v973, %v972
  %1230 = vmatpush.bf16.msra.mxu0 %v981
  %1231 = vmatpush.bf16.msra.mxu0 %v980
  %1232 = vmatpush.bf16.msra.mxu0 %v979
  %1233 = vmatpush.bf16.msra.mxu0 %v978
  %1234 = vmatpush.bf16.msra.mxu0 %v977
  %1235 = vmatpush.bf16.msra.mxu0 %v976
  %1236 = vmatpush.bf16.msra.mxu0 %v975
  %1237 = vmatpush.bf16.msra.mxu0 %v974
  %1238 = vmatmul.bf16.gmra.mxu0 %v398
  %v1239 = vpop.f32.mrf.mxu0
  %v1240 = vadd.f32 0.0, %v1239
  %v1241 = vpop.f32.mrf.mxu0
  %v1242 = vadd.f32 0.0, %v1241
  %1243 = vmatmul.bf16.gmra.mxu0 %v414
  %v1244 = vpop.f32.mrf.mxu0
  %v1245 = vadd.f32 0.0, %v1244
  %v1246 = vpop.f32.mrf.mxu0
  %v1247 = vadd.f32 0.0, %v1246
  %1248 = vdwg.mxu0
  %1249 = vmatpush.bf16.msra.mxu0 %v989
  %1250 = vmatpush.bf16.msra.mxu0 %v988
  %1251 = vmatpush.bf16.msra.mxu0 %v987
  %1252 = vmatpush.bf16.msra.mxu0 %v986
  %1253 = vmatpush.bf16.msra.mxu0 %v985
  %1254 = vmatpush.bf16.msra.mxu0 %v984
  %1255 = vmatpush.bf16.msra.mxu0 %v983
  %1256 = vmatpush.bf16.msra.mxu0 %v982
  %1257 = vmatmul.bf16.gmra.mxu0 %v399
  %v1258 = vpop.f32.mrf.mxu0
  %v1259 = vadd.f32 %v1240, %v1258
  %v1260 = vpop.f32.mrf.mxu0
  %v1261 = vadd.f32 %v1242, %v1260
  %1262 = vmatmul.bf16.gmra.mxu0 %v415
  %v1263 = vpop.f32.mrf.mxu0
  %v1264 = vadd.f32 %v1245, %v1263
  %v1265 = vpop.f32.mrf.mxu0
  %v1266 = vadd.f32 %v1247, %v1265
  %1267 = vdwg.mxu0
  %1268 = vmatpush.bf16.msra.mxu0 %v997
  %1269 = vmatpush.bf16.msra.mxu0 %v996
  %1270 = vmatpush.bf16.msra.mxu0 %v995
  %1271 = vmatpush.bf16.msra.mxu0 %v994
  %1272 = vmatpush.bf16.msra.mxu0 %v993
  %1273 = vmatpush.bf16.msra.mxu0 %v992
  %1274 = vmatpush.bf16.msra.mxu0 %v991
  %1275 = vmatpush.bf16.msra.mxu0 %v990
  %1276 = vmatmul.bf16.gmra.mxu0 %v400
  %v1277 = vpop.f32.mrf.mxu0
  %v1278 = vadd.f32 %v1259, %v1277
  %v1279 = vpop.f32.mrf.mxu0
  %v1280 = vadd.f32 %v1261, %v1279
  %1281 = vmatmul.bf16.gmra.mxu0 %v416
  %v1282 = vpop.f32.mrf.mxu0
  %v1283 = vadd.f32 %v1264, %v1282
  %v1284 = vpop.f32.mrf.mxu0
  %v1285 = vadd.f32 %v1266, %v1284
  %1286 = vdwg.mxu0
  %1287 = vmatpush.bf16.msra.mxu0 %v1005
  %1288 = vmatpush.bf16.msra.mxu0 %v1004
  %1289 = vmatpush.bf16.msra.mxu0 %v1003
  %1290 = vmatpush.bf16.msra.mxu0 %v1002
  %1291 = vmatpush.bf16.msra.mxu0 %v1001
  %1292 = vmatpush.bf16.msra.mxu0 %v1000
  %1293 = vmatpush.bf16.msra.mxu0 %v999
  %1294 = vmatpush.bf16.msra.mxu0 %v998
  %1295 = vmatmul.bf16.gmra.mxu0 %v401
  %v1296 = vpop.f32.mrf.mxu0
  %v1297 = vadd.f32 %v1278, %v1296
  %v1298 = vpop.f32.mrf.mxu0
  %v1299 = vadd.f32 %v1280, %v1298
  %1300 = vmatmul.bf16.gmra.mxu0 %v417
  %v1301 = vpop.f32.mrf.mxu0
  %v1302 = vadd.f32 %v1283, %v1301
  %v1303 = vpop.f32.mrf.mxu0
  %v1304 = vadd.f32 %v1285, %v1303
  %1305 = vdwg.mxu0
  %1306 = vmatpush.bf16.msra.mxu0 %v1013
  %1307 = vmatpush.bf16.msra.mxu0 %v1012
  %1308 = vmatpush.bf16.msra.mxu0 %v1011
  %1309 = vmatpush.bf16.msra.mxu0 %v1010
  %1310 = vmatpush.bf16.msra.mxu0 %v1009
  %1311 = vmatpush.bf16.msra.mxu0 %v1008
  %1312 = vmatpush.bf16.msra.mxu0 %v1007
  %1313 = vmatpush.bf16.msra.mxu0 %v1006
  %1314 = vmatmul.bf16.gmra.mxu0 %v402
  %v1315 = vpop.f32.mrf.mxu0
  %v1316 = vadd.f32 %v1297, %v1315
  %v1317 = vpop.f32.mrf.mxu0
  %v1318 = vadd.f32 %v1299, %v1317
  %1319 = vmatmul.bf16.gmra.mxu0 %v418
  %v1320 = vpop.f32.mrf.mxu0
  %v1321 = vadd.f32 %v1302, %v1320
  %v1322 = vpop.f32.mrf.mxu0
  %v1323 = vadd.f32 %v1304, %v1322
  %1324 = vdwg.mxu0
  %1325 = vmatpush.bf16.msra.mxu0 %v1021
  %1326 = vmatpush.bf16.msra.mxu0 %v1020
  %1327 = vmatpush.bf16.msra.mxu0 %v1019
  %1328 = vmatpush.bf16.msra.mxu0 %v1018
  %1329 = vmatpush.bf16.msra.mxu0 %v1017
  %1330 = vmatpush.bf16.msra.mxu0 %v1016
  %1331 = vmatpush.bf16.msra.mxu0 %v1015
  %1332 = vmatpush.bf16.msra.mxu0 %v1014
  %1333 = vmatmul.bf16.gmra.mxu0 %v403
  %v1334 = vpop.f32.mrf.mxu0
  %v1335 = vadd.f32 %v1316, %v1334
  %v1336 = vpop.f32.mrf.mxu0
  %v1337 = vadd.f32 %v1318, %v1336
  %1338 = vmatmul.bf16.gmra.mxu0 %v419
  %v1339 = vpop.f32.mrf.mxu0
  %v1340 = vadd.f32 %v1321, %v1339
  %v1341 = vpop.f32.mrf.mxu0
  %v1342 = vadd.f32 %v1323, %v1341
  %1343 = vdwg.mxu0
  %1344 = vmatpush.bf16.msra.mxu0 %v1029
  %1345 = vmatpush.bf16.msra.mxu0 %v1028
  %1346 = vmatpush.bf16.msra.mxu0 %v1027
  %1347 = vmatpush.bf16.msra.mxu0 %v1026
  %1348 = vmatpush.bf16.msra.mxu0 %v1025
  %1349 = vmatpush.bf16.msra.mxu0 %v1024
  %1350 = vmatpush.bf16.msra.mxu0 %v1023
  %1351 = vmatpush.bf16.msra.mxu0 %v1022
  %1352 = vmatmul.bf16.gmra.mxu0 %v404
  %v1353 = vpop.f32.mrf.mxu0
  %v1354 = vadd.f32 %v1335, %v1353
  %v1355 = vpop.f32.mrf.mxu0
  %v1356 = vadd.f32 %v1337, %v1355
  %1357 = vmatmul.bf16.gmra.mxu0 %v420
  %v1358 = vpop.f32.mrf.mxu0
  %v1359 = vadd.f32 %v1340, %v1358
  %v1360 = vpop.f32.mrf.mxu0
  %v1361 = vadd.f32 %v1342, %v1360
  %1362 = vdwg.mxu0
  %1363 = vmatpush.bf16.msra.mxu0 %v1037
  %1364 = vmatpush.bf16.msra.mxu0 %v1036
  %1365 = vmatpush.bf16.msra.mxu0 %v1035
  %1366 = vmatpush.bf16.msra.mxu0 %v1034
  %1367 = vmatpush.bf16.msra.mxu0 %v1033
  %1368 = vmatpush.bf16.msra.mxu0 %v1032
  %1369 = vmatpush.bf16.msra.mxu0 %v1031
  %1370 = vmatpush.bf16.msra.mxu0 %v1030
  %1371 = vmatmul.bf16.gmra.mxu0 %v405
  %v1372 = vpop.f32.mrf.mxu0
  %v1373 = vadd.f32 %v1354, %v1372
  %v1374 = vpop.f32.mrf.mxu0
  %v1375 = vadd.f32 %v1356, %v1374
  %1376 = vmatmul.bf16.gmra.mxu0 %v421
  %v1377 = vpop.f32.mrf.mxu0
  %v1378 = vadd.f32 %v1359, %v1377
  %v1379 = vpop.f32.mrf.mxu0
  %v1380 = vadd.f32 %v1361, %v1379
  %1381 = vdwg.mxu0
  %1382 = vmatpush.bf16.msra.mxu0 %v1045
  %1383 = vmatpush.bf16.msra.mxu0 %v1044
  %1384 = vmatpush.bf16.msra.mxu0 %v1043
  %1385 = vmatpush.bf16.msra.mxu0 %v1042
  %1386 = vmatpush.bf16.msra.mxu0 %v1041
  %1387 = vmatpush.bf16.msra.mxu0 %v1040
  %1388 = vmatpush.bf16.msra.mxu0 %v1039
  %1389 = vmatpush.bf16.msra.mxu0 %v1038
  %1390 = vmatmul.bf16.gmra.mxu0 %v406
  %v1391 = vpop.f32.mrf.mxu0
  %v1392 = vadd.f32 %v1373, %v1391
  %v1393 = vpop.f32.mrf.mxu0
  %v1394 = vadd.f32 %v1375, %v1393
  %1395 = vmatmul.bf16.gmra.mxu0 %v422
  %v1396 = vpop.f32.mrf.mxu0
  %v1397 = vadd.f32 %v1378, %v1396
  %v1398 = vpop.f32.mrf.mxu0
  %v1399 = vadd.f32 %v1380, %v1398
  %1400 = vdwg.mxu0
  %1401 = vmatpush.bf16.msra.mxu0 %v1053
  %1402 = vmatpush.bf16.msra.mxu0 %v1052
  %1403 = vmatpush.bf16.msra.mxu0 %v1051
  %1404 = vmatpush.bf16.msra.mxu0 %v1050
  %1405 = vmatpush.bf16.msra.mxu0 %v1049
  %1406 = vmatpush.bf16.msra.mxu0 %v1048
  %1407 = vmatpush.bf16.msra.mxu0 %v1047
  %1408 = vmatpush.bf16.msra.mxu0 %v1046
  %1409 = vmatmul.bf16.gmra.mxu0 %v407
  %v1410 = vpop.f32.mrf.mxu0
  %v1411 = vadd.f32 %v1392, %v1410
  %v1412 = vpop.f32.mrf.mxu0
  %v1413 = vadd.f32 %v1394, %v1412
  %1414 = vmatmul.bf16.gmra.mxu0 %v423
  %v1415 = vpop.f32.mrf.mxu0
  %v1416 = vadd.f32 %v1397, %v1415
  %v1417 = vpop.f32.mrf.mxu0
  %v1418 = vadd.f32 %v1399, %v1417
  %1419 = vdwg.mxu0
  %1420 = vmatpush.bf16.msra.mxu0 %v1061
  %1421 = vmatpush.bf16.msra.mxu0 %v1060
  %1422 = vmatpush.bf16.msra.mxu0 %v1059
  %1423 = vmatpush.bf16.msra.mxu0 %v1058
  %1424 = vmatpush.bf16.msra.mxu0 %v1057
  %1425 = vmatpush.bf16.msra.mxu0 %v1056
  %1426 = vmatpush.bf16.msra.mxu0 %v1055
  %1427 = vmatpush.bf16.msra.mxu0 %v1054
  %1428 = vmatmul.bf16.gmra.mxu0 %v408
  %v1429 = vpop.f32.mrf.mxu0
  %v1430 = vadd.f32 %v1411, %v1429
  %v1431 = vpop.f32.mrf.mxu0
  %v1432 = vadd.f32 %v1413, %v1431
  %1433 = vmatmul.bf16.gmra.mxu0 %v424
  %v1434 = vpop.f32.mrf.mxu0
  %v1435 = vadd.f32 %v1416, %v1434
  %v1436 = vpop.f32.mrf.mxu0
  %v1437 = vadd.f32 %v1418, %v1436
  %1438 = vdwg.mxu0
  %1439 = vmatpush.bf16.msra.mxu0 %v1069
  %1440 = vmatpush.bf16.msra.mxu0 %v1068
  %1441 = vmatpush.bf16.msra.mxu0 %v1067
  %1442 = vmatpush.bf16.msra.mxu0 %v1066
  %1443 = vmatpush.bf16.msra.mxu0 %v1065
  %1444 = vmatpush.bf16.msra.mxu0 %v1064
  %1445 = vmatpush.bf16.msra.mxu0 %v1063
  %1446 = vmatpush.bf16.msra.mxu0 %v1062
  %1447 = vmatmul.bf16.gmra.mxu0 %v409
  %v1448 = vpop.f32.mrf.mxu0
  %v1449 = vadd.f32 %v1430, %v1448
  %v1450 = vpop.f32.mrf.mxu0
  %v1451 = vadd.f32 %v1432, %v1450
  %1452 = vmatmul.bf16.gmra.mxu0 %v425
  %v1453 = vpop.f32.mrf.mxu0
  %v1454 = vadd.f32 %v1435, %v1453
  %v1455 = vpop.f32.mrf.mxu0
  %v1456 = vadd.f32 %v1437, %v1455
  %1457 = vdwg.mxu0
  %1458 = vmatpush.bf16.msra.mxu0 %v1077
  %1459 = vmatpush.bf16.msra.mxu0 %v1076
  %1460 = vmatpush.bf16.msra.mxu0 %v1075
  %1461 = vmatpush.bf16.msra.mxu0 %v1074
  %1462 = vmatpush.bf16.msra.mxu0 %v1073
  %1463 = vmatpush.bf16.msra.mxu0 %v1072
  %1464 = vmatpush.bf16.msra.mxu0 %v1071
  %1465 = vmatpush.bf16.msra.mxu0 %v1070
  %1466 = vmatmul.bf16.gmra.mxu0 %v410
  %v1467 = vpop.f32.mrf.mxu0
  %v1468 = vadd.f32 %v1449, %v1467
  %v1469 = vpop.f32.mrf.mxu0
  %v1470 = vadd.f32 %v1451, %v1469
  %1471 = vmatmul.bf16.gmra.mxu0 %v426
  %v1472 = vpop.f32.mrf.mxu0
  %v1473 = vadd.f32 %v1454, %v1472
  %v1474 = vpop.f32.mrf.mxu0
  %v1475 = vadd.f32 %v1456, %v1474
  %1476 = vdwg.mxu0
  %1477 = vmatpush.bf16.msra.mxu0 %v1085
  %1478 = vmatpush.bf16.msra.mxu0 %v1084
  %1479 = vmatpush.bf16.msra.mxu0 %v1083
  %1480 = vmatpush.bf16.msra.mxu0 %v1082
  %1481 = vmatpush.bf16.msra.mxu0 %v1081
  %1482 = vmatpush.bf16.msra.mxu0 %v1080
  %1483 = vmatpush.bf16.msra.mxu0 %v1079
  %1484 = vmatpush.bf16.msra.mxu0 %v1078
  %1485 = vmatmul.bf16.gmra.mxu0 %v411
  %v1486 = vpop.f32.mrf.mxu0
  %v1487 = vadd.f32 %v1468, %v1486
  %v1488 = vpop.f32.mrf.mxu0
  %v1489 = vadd.f32 %v1470, %v1488
  %1490 = vmatmul.bf16.gmra.mxu0 %v427
  %v1491 = vpop.f32.mrf.mxu0
  %v1492 = vadd.f32 %v1473, %v1491
  %v1493 = vpop.f32.mrf.mxu0
  %v1494 = vadd.f32 %v1475, %v1493
  %1495 = vdwg.mxu0
  %1496 = vmatpush.bf16.msra.mxu0 %v1093
  %1497 = vmatpush.bf16.msra.mxu0 %v1092
  %1498 = vmatpush.bf16.msra.mxu0 %v1091
  %1499 = vmatpush.bf16.msra.mxu0 %v1090
  %1500 = vmatpush.bf16.msra.mxu0 %v1089
  %1501 = vmatpush.bf16.msra.mxu0 %v1088
  %1502 = vmatpush.bf16.msra.mxu0 %v1087
  %1503 = vmatpush.bf16.msra.mxu0 %v1086
  %1504 = vmatmul.bf16.gmra.mxu0 %v412
  %v1505 = vpop.f32.mrf.mxu0
  %v1506 = vadd.f32 %v1487, %v1505
  %v1507 = vpop.f32.mrf.mxu0
  %v1508 = vadd.f32 %v1489, %v1507
  %1509 = vmatmul.bf16.gmra.mxu0 %v428
  %v1510 = vpop.f32.mrf.mxu0
  %v1511 = vadd.f32 %v1492, %v1510
  %v1512 = vpop.f32.mrf.mxu0
  %v1513 = vadd.f32 %v1494, %v1512
  %1514 = vdwg.mxu0
  %1515 = vmatpush.bf16.msra.mxu0 %v1101
  %1516 = vmatpush.bf16.msra.mxu0 %v1100
  %1517 = vmatpush.bf16.msra.mxu0 %v1099
  %1518 = vmatpush.bf16.msra.mxu0 %v1098
  %1519 = vmatpush.bf16.msra.mxu0 %v1097
  %1520 = vmatpush.bf16.msra.mxu0 %v1096
  %1521 = vmatpush.bf16.msra.mxu0 %v1095
  %1522 = vmatpush.bf16.msra.mxu0 %v1094
  %1523 = vmatmul.bf16.gmra.mxu0 %v413
  %v1524 = vpop.f32.mrf.mxu0
  %v1525 = vadd.f32 %v1506, %v1524
  %v1526 = vpop.f32.mrf.mxu0
  %v1527 = vadd.f32 %v1508, %v1526
  %1528 = vmatmul.bf16.gmra.mxu0 %v429
  %v1529 = vpop.f32.mrf.mxu0
  %v1530 = vadd.f32 %v1511, %v1529
  %v1531 = vpop.f32.mrf.mxu0
  %v1532 = vadd.f32 %v1513, %v1531
  %1533 = vdwg.mxu0
  %1534 = vst [vmem:[%s2] sm:$0xff] %v1525
  %1535 = vst [vmem:[%s2 + $0x8] sm:$0xff] %v1527
  %1536 = vst [vmem:[%s2 + $0x10] sm:$0xff] %v1530
  %1537 = vst [vmem:[%s2 + $0x18] sm:$0xff] %v1532
  %v1538 = vadd.f32 %v1525, %v1527
  %v1539 = vadd.f32 %v1538, %v1530
  %v1540 = vadd.f32 %v1539, %v1532
  %v1541 = vrot.slane %v1540, 4
  %v1542 = vadd.f32 %v1540, %v1541
  %v1543 = vrot.slane %v1542, 2
  %v1544 = vadd.f32 %v1542, %v1543
  %v1545 = vrot.slane %v1544, 1
  %v1546 = vadd.f32 %v1544, %v1545
  %v1547 = vmul.f32 %v1525, %v1525
  %v1548 = vmul.f32 %v1527, %v1527
  %v1549 = vmul.f32 %v1530, %v1530
  %v1550 = vmul.f32 %v1532, %v1532
  %v1551 = vadd.f32 %v1547, %v1548
  %v1552 = vadd.f32 %v1551, %v1549
  %v1553 = vadd.f32 %v1552, %v1550
  %v1554 = vrot.slane %v1553, 4
  %v1555 = vadd.f32 %v1553, %v1554
  %v1556 = vrot.slane %v1555, 2
  %v1557 = vadd.f32 %v1555, %v1556
  %v1558 = vrot.slane %v1557, 1
  %v1559 = vadd.f32 %v1557, %v1558
  %1560 = vst [vmem:[%s3] sm:$0xff] %v1546
  %1561 = vst [vmem:[%s4] sm:$0xff] %v1559
  // Predicated region
  $region10: #{_lambda_.11} parent=0 // pred_check
    _
  $region11: #{_lambda_.11} parent=0 // pred_check_branch
    %1563 = sbr.rel (0) target = $region13
  $region12: #{_lambda_.11} parent=0 // pred_region
    _
  $region13: #{_lambda_.11} parent=0 // pred_fallthru
    _
  // Predicated region
  $region14: #{_lambda_.11} parent=0 // pred_check
    _
  $region15: #{_lambda_.11} parent=0 // pred_check_branch
    %1565 = sbr.rel (0) target = $region17
  $region16: #{_lambda_.11} parent=0 // pred_region
    _
  $region17: #{_lambda_.11} parent=0 // pred_fallthru
    _
  // Predicated region
  $region18: #{_lambda_.11} parent=0 // pred_check
    _
  $region19: #{_lambda_.11} parent=0 // pred_check_branch
    %1567 = sbr.rel (0) target = $region21
  $region20: #{_lambda_.11} parent=0 // pred_region
    _
  $region21: #{_lambda_.11} parent=0 // pred_fallthru
    _
  // Predicated region
  $region22: #{_lambda_.11} parent=0 // pred_check
    _
  $region23: #{_lambda_.11} parent=0 // pred_check_branch
    %1569 = sbr.rel (0) target = $region25
  $region24: #{_lambda_.11} parent=0 // pred_region
    _
  $region25: #{_lambda_.11} parent=0 // pred_fallthru
    _
  // Predicated region
  $region26: #{_lambda_.11} parent=0 // pred_check
    _
  $region27: #{_lambda_.11} parent=0 // pred_check_branch
    %1571 = sbr.rel (0) target = $region29
  $region28: #{_lambda_.11} parent=0 // pred_region
    _
  $region29: #{_lambda_.11} parent=0 // pred_fallthru
    _
  // Predicated region
  $region30: #{_lambda_.11} parent=0 // pred_check
    _
  $region31: #{_lambda_.11} parent=0 // pred_check_branch
    %1573 = sbr.rel (0) target = $region33
  $region32: #{_lambda_.11} parent=0 // pred_region
    _
  $region33: #{_lambda_.11} parent=0 // pred_fallthru
    _

// kernel: _lambda_.14
$region0: #{_lambda_.14}
  #allocation0 [shape = 'u32[]', space=smem, size = 0x4, offset = 0x4, fixed_abs, tag = 'smem constant byte address 0x4 - core index']
  #allocation1 [shape = 'u32[72,128]{1,0:T(1,128)}', space=vmem, size = 0x9000, scoped, tag = 'internal scratch']
  %s0 = inlined_call_operand.vmem [shape: f32[24,128], index: 0, kind: input, shape index: {}]
  %s1 = inlined_call_operand.vmem [shape: f32[1,128], index: 1, kind: input, shape index: {}]
  %s2 = inlined_call_operand.vmem [shape: f32[1,128], index: 2, kind: input, shape index: {}]
  %s3 = inlined_call_operand.vmem [shape: bf16[24,128], index: 3, kind: output, shape index: {}]
  %s4 = sld [smem:[#allocation0]]
  $region22: #{_lambda_.14} parent=0
    _
  %s6 = ssub.s32 1, %s4
  %s7 = scalar_select 0, %s6, %s4
  // Predicated region
  $region2: #{_lambda_.14} parent=0 // pred_check
    _
  $region3: #{_lambda_.14} parent=0 // pred_check_branch
    %9 = sbr.rel (0) target = $region5
  $region4: #{_lambda_.14} parent=0 // pred_region
    _
  $region5: #{_lambda_.14} parent=0 // pred_fallthru
    _
  // Predicated region
  $region6: #{_lambda_.14} parent=0 // pred_check
    _
  $region7: #{_lambda_.14} parent=0 // pred_check_branch
    %11 = sbr.rel (0) target = $region9
  $region8: #{_lambda_.14} parent=0 // pred_region
    _
  $region9: #{_lambda_.14} parent=0 // pred_fallthru
    _
  // Predicated region
  $region10: #{_lambda_.14} parent=0 // pred_check
    _
  $region11: #{_lambda_.14} parent=0 // pred_check_branch
    %13 = sbr.rel (0) target = $region13
  $region12: #{_lambda_.14} parent=0 // pred_region
    _
  $region13: #{_lambda_.14} parent=0 // pred_fallthru
    _
  %v14 = vld [vmem:[%s0] sm:$0xff]
  %v15 = vld [vmem:[%s0 + $0x8] sm:$0xff]
  %v16 = vld [vmem:[%s0 + $0x10] sm:$0xff]
  %v17 = vld [vmem:[%s1] sm:$0x1]
  %v19 = vperm.slane %v17, 0
  %v21 = vmul.f32 %v14, %v19
  %v22 = vmul.f32 %v15, %v19
  %v23 = vmul.f32 %v16, %v19
  %v24 = vld [vmem:[%s2] sm:$0x1]
  %v26 = vperm.slane %v24, 0
  %v28 = vadd.f32 %v21, %v26
  %v29 = vadd.f32 %v22, %v26
  %v30 = vadd.f32 %v23, %v26
  %vm31 = vcmp.ge.f32.partialorder %v28, 0.0
  %vm32 = vcmp.ge.f32.partialorder %v29, 0.0
  %vm33 = vcmp.ge.f32.partialorder %v30, 0.0
  %v34 = vmul.f32 %v28, 0.2
  %v35 = vmul.f32 %v29, 0.2
  %v36 = vmul.f32 %v30, 0.2
  %v37 = vsel %vm31, %v28, %v34
  %v38 = vsel %vm32, %v29, %v35
  %v39 = vsel %vm33, %v30, %v36
  %v40 = vpack.c.bf16 %v37, %v37
  %v41 = vpack.c.bf16 %v38, %v38
  %v42 = vpack.c.bf16 %v39, %v39
  %43 = vst [vmem:[%s3] sm:$0xf] %v40
  %44 = vst [vmem:[%s3 + $0x4] sm:$0xf] %v41
  %45 = vst [vmem:[%s3 + $0x8] sm:$0xf] %v42
  // Predicated region
  $region14: #{_lambda_.14} parent=0 // pred_check
    _
  $region15: #{_lambda_.14} parent=0 // pred_check_branch
    %47 = sbr.rel (0) target = $region17
  $region16: #{_lambda_.14} parent=0 // pred_region
    _
  $region17: #{_lambda_.14} parent=0 // pred_fallthru
    _
  // Predicated region
  $region18: #{_lambda_.14} parent=0 // pred_check
    _
  $region19: #{_lambda_.14} parent=0 // pred_check_branch
    %49 = sbr.rel (0) target = $region21
  $region20: #{_lambda_.14} parent=0 // pred_region
    _
  $region21: #{_lambda_.14} parent=0 // pred_fallthru
    _

// kernel: _lambda_.13
$region0: #{_lambda_.13}
  #allocation0 [shape = 'u32[]', space=smem, size = 0x4, offset = 0x4, fixed_abs, tag = 'smem constant byte address 0x4 - core index']
  #allocation1 [shape = 'u32[72,128]{1,0:T(1,128)}', space=vmem, size = 0x9000, scoped, tag = 'internal scratch']
  %s0 = inlined_call_operand.vmem [shape: bf16[24,2048], index: 0, kind: input, shape index: {}]
  %s1 = inlined_call_operand.vmem [shape: bf16[2048,128], index: 1, kind: input, shape index: {}]
  %s2 = inlined_call_operand.vmem [shape: f32[24,128], index: 2, kind: output, shape index: {0}]
  %s3 = inlined_call_operand.vmem [shape: f32[8,128], index: 3, kind: output, shape index: {1}]
  %s4 = inlined_call_operand.vmem [shape: f32[8,128], index: 4, kind: output, shape index: {2}]
  %5 = xla_tuple %s2, %s3, %s4
  %s6 = sld [smem:[#allocation0]]
  $region34: #{_lambda_.13} parent=0
    _
  %s8 = ssub.s32 1, %s6
  %s9 = scalar_select 0, %s8, %s6
  // Predicated region
  $region2: #{_lambda_.13} parent=0 // pred_check
    _
  $region3: #{_lambda_.13} parent=0 // pred_check_branch
    %11 = sbr.rel (0) target = $region5
  $region4: #{_lambda_.13} parent=0 // pred_region
    _
  $region5: #{_lambda_.13} parent=0 // pred_fallthru
    _
  // Predicated region
  $region6: #{_lambda_.13} parent=0 // pred_check
    _
  $region7: #{_lambda_.13} parent=0 // pred_check_branch
    %13 = sbr.rel (0) target = $region9
  $region8: #{_lambda_.13} parent=0 // pred_region
    _
  $region9: #{_lambda_.13} parent=0 // pred_fallthru
    _
  %v14 = vld [vmem:[%s0] sm:$0xff]
  %v15 = vld [vmem:[%s0 + $0x8] sm:$0xff]
  %v16 = vld [vmem:[%s0 + $0x10] sm:$0xff]
  %v17 = vld [vmem:[%s0 + $0x18] sm:$0xff]
  %v18 = vld [vmem:[%s0 + $0x20] sm:$0xff]
  %v19 = vld [vmem:[%s0 + $0x28] sm:$0xff]
  %v20 = vld [vmem:[%s0 + $0x30] sm:$0xff]
  %v21 = vld [vmem:[%s0 + $0x38] sm:$0xff]
  %v22 = vld [vmem:[%s0 + $0x40] sm:$0xff]
  %v23 = vld [vmem:[%s0 + $0x48] sm:$0xff]
  %v24 = vld [vmem:[%s0 + $0x50] sm:$0xff]
  %v25 = vld [vmem:[%s0 + $0x58] sm:$0xff]
  %v26 = vld [vmem:[%s0 + $0x60] sm:$0xff]
  %v27 = vld [vmem:[%s0 + $0x68] sm:$0xff]
  %v28 = vld [vmem:[%s0 + $0x70] sm:$0xff]
  %v29 = vld [vmem:[%s0 + $0x78] sm:$0xff]
  %v30 = vld [vmem:[%s0 + $0x80] sm:$0xff]
  %v31 = vld [vmem:[%s0 + $0x88] sm:$0xff]
  %v32 = vld [vmem:[%s0 + $0x90] sm:$0xff]
  %v33 = vld [vmem:[%s0 + $0x98] sm:$0xff]
  %v34 = vld [vmem:[%s0 + $0xa0] sm:$0xff]
  %v35 = vld [vmem:[%s0 + $0xa8] sm:$0xff]
  %v36 = vld [vmem:[%s0 + $0xb0] sm:$0xff]
  %v37 = vld [vmem:[%s0 + $0xb8] sm:$0xff]
  %v38 = vld [vmem:[%s1] sm:$0xf]
  %v39 = vld [vmem:[%s1 + $0x4] sm:$0xf]
  %v40 = vld [vmem:[%s1 + $0x8] sm:$0xf]
  %v41 = vld [vmem:[%s1 + $0xc] sm:$0xf]
  %v42 = vld [vmem:[%s1 + $0x10] sm:$0xf]
  %v43 = vld [vmem:[%s1 + $0x14] sm:$0xf]
  %v44 = vld [vmem:[%s1 + $0x18] sm:$0xf]
  %v45 = vld [vmem:[%s1 + $0x1c] sm:$0xf]
  %v46 = vld [vmem:[%s1 + $0x20] sm:$0xf]
  %v47 = vld [vmem:[%s1 + $0x24] sm:$0xf]
  %v48 = vld [vmem:[%s1 + $0x28] sm:$0xf]
  %v49 = vld [vmem:[%s1 + $0x2c] sm:$0xf]
  %v50 = vld [vmem:[%s1 + $0x30] sm:$0xf]
  %v51 = vld [vmem:[%s1 + $0x34] sm:$0xf]
  %v52 = vld [vmem:[%s1 + $0x38] sm:$0xf]
  %v53 = vld [vmem:[%s1 + $0x3c] sm:$0xf]
  %v54 = vld [vmem:[%s1 + $0x40] sm:$0xf]
  %v55 = vld [vmem:[%s1 + $0x44] sm:$0xf]
  %v56 = vld [vmem:[%s1 + $0x48] sm:$0xf]
  %v57 = vld [vmem:[%s1 + $0x4c] sm:$0xf]
  %v58 = vld [vmem:[%s1 + $0x50] sm:$0xf]
  %v59 = vld [vmem:[%s1 + $0x54] sm:$0xf]
  %v60 = vld [vmem:[%s1 + $0x58] sm:$0xf]
  %v61 = vld [vmem:[%s1 + $0x5c] sm:$0xf]
  %v62 = vld [vmem:[%s1 + $0x60] sm:$0xf]
  %v63 = vld [vmem:[%s1 + $0x64] sm:$0xf]
  %v64 = vld [vmem:[%s1 + $0x68] sm:$0xf]
  %v65 = vld [vmem:[%s1 + $0x6c] sm:$0xf]
  %v66 = vld [vmem:[%s1 + $0x70] sm:$0xf]
  %v67 = vld [vmem:[%s1 + $0x74] sm:$0xf]
  %v68 = vld [vmem:[%s1 + $0x78] sm:$0xf]
  %v69 = vld [vmem:[%s1 + $0x7c] sm:$0xf]
  %v70 = vld [vmem:[%s1 + $0x80] sm:$0xf]
  %v71 = vld [vmem:[%s1 + $0x84] sm:$0xf]
  %v72 = vld [vmem:[%s1 + $0x88] sm:$0xf]
  %v73 = vld [vmem:[%s1 + $0x8c] sm:$0xf]
  %v74 = vld [vmem:[%s1 + $0x90] sm:$0xf]
  %v75 = vld [vmem:[%s1 + $0x94] sm:$0xf]
  %v76 = vld [vmem:[%s1 + $0x98] sm:$0xf]
  %v77 = vld [vmem:[%s1 + $0x9c] sm:$0xf]
  %v78 = vld [vmem:[%s1 + $0xa0] sm:$0xf]
  %v79 = vld [vmem:[%s1 + $0xa4] sm:$0xf]
  %v80 = vld [vmem:[%s1 + $0xa8] sm:$0xf]
  %v81 = vld [vmem:[%s1 + $0xac] sm:$0xf]
  %v82 = vld [vmem:[%s1 + $0xb0] sm:$0xf]
  %v83 = vld [vmem:[%s1 + $0xb4] sm:$0xf]
  %v84 = vld [vmem:[%s1 + $0xb8] sm:$0xf]
  %v85 = vld [vmem:[%s1 + $0xbc] sm:$0xf]
  %v86 = vld [vmem:[%s1 + $0xc0] sm:$0xf]
  %v87 = vld [vmem:[%s1 + $0xc4] sm:$0xf]
  %v88 = vld [vmem:[%s1 + $0xc8] sm:$0xf]
  %v89 = vld [vmem:[%s1 + $0xcc] sm:$0xf]
  %v90 = vld [vmem:[%s1 + $0xd0] sm:$0xf]
  %v91 = vld [vmem:[%s1 + $0xd4] sm:$0xf]
  %v92 = vld [vmem:[%s1 + $0xd8] sm:$0xf]
  %v93 = vld [vmem:[%s1 + $0xdc] sm:$0xf]
  %v94 = vld [vmem:[%s1 + $0xe0] sm:$0xf]
  %v95 = vld [vmem:[%s1 + $0xe4] sm:$0xf]
  %v96 = vld [vmem:[%s1 + $0xe8] sm:$0xf]
  %v97 = vld [vmem:[%s1 + $0xec] sm:$0xf]
  %v98 = vld [vmem:[%s1 + $0xf0] sm:$0xf]
  %v99 = vld [vmem:[%s1 + $0xf4] sm:$0xf]
  %v100 = vld [vmem:[%s1 + $0xf8] sm:$0xf]
  %v101 = vld [vmem:[%s1 + $0xfc] sm:$0xf]
  %v102 = vld [vmem:[%s1 + $0x100] sm:$0xf]
  %v103 = vld [vmem:[%s1 + $0x104] sm:$0xf]
  %v104 = vld [vmem:[%s1 + $0x108] sm:$0xf]
  %v105 = vld [vmem:[%s1 + $0x10c] sm:$0xf]
  %v106 = vld [vmem:[%s1 + $0x110] sm:$0xf]
  %v107 = vld [vmem:[%s1 + $0x114] sm:$0xf]
  %v108 = vld [vmem:[%s1 + $0x118] sm:$0xf]
  %v109 = vld [vmem:[%s1 + $0x11c] sm:$0xf]
  %v110 = vld [vmem:[%s1 + $0x120] sm:$0xf]
  %v111 = vld [vmem:[%s1 + $0x124] sm:$0xf]
  %v112 = vld [vmem:[%s1 + $0x128] sm:$0xf]
  %v113 = vld [vmem:[%s1 + $0x12c] sm:$0xf]
  %v114 = vld [vmem:[%s1 + $0x130] sm:$0xf]
  %v115 = vld [vmem:[%s1 + $0x134] sm:$0xf]
  %v116 = vld [vmem:[%s1 + $0x138] sm:$0xf]
  %v117 = vld [vmem:[%s1 + $0x13c] sm:$0xf]
  %v118 = vld [vmem:[%s1 + $0x140] sm:$0xf]
  %v119 = vld [vmem:[%s1 + $0x144] sm:$0xf]
  %v120 = vld [vmem:[%s1 + $0x148] sm:$0xf]
  %v121 = vld [vmem:[%s1 + $0x14c] sm:$0xf]
  %v122 = vld [vmem:[%s1 + $0x150] sm:$0xf]
  %v123 = vld [vmem:[%s1 + $0x154] sm:$0xf]
  %v124 = vld [vmem:[%s1 + $0x158] sm:$0xf]
  %v125 = vld [vmem:[%s1 + $0x15c] sm:$0xf]
  %v126 = vld [vmem:[%s1 + $0x160] sm:$0xf]
  %v127 = vld [vmem:[%s1 + $0x164] sm:$0xf]
  %v128 = vld [vmem:[%s1 + $0x168] sm:$0xf]
  %v129 = vld [vmem:[%s1 + $0x16c] sm:$0xf]
  %v130 = vld [vmem:[%s1 + $0x170] sm:$0xf]
  %v131 = vld [vmem:[%s1 + $0x174] sm:$0xf]
  %v132 = vld [vmem:[%s1 + $0x178] sm:$0xf]
  %v133 = vld [vmem:[%s1 + $0x17c] sm:$0xf]
  %v134 = vld [vmem:[%s1 + $0x180] sm:$0xf]
  %v135 = vld [vmem:[%s1 + $0x184] sm:$0xf]
  %v136 = vld [vmem:[%s1 + $0x188] sm:$0xf]
  %v137 = vld [vmem:[%s1 + $0x18c] sm:$0xf]
  %v138 = vld [vmem:[%s1 + $0x190] sm:$0xf]
  %v139 = vld [vmem:[%s1 + $0x194] sm:$0xf]
  %v140 = vld [vmem:[%s1 + $0x198] sm:$0xf]
  %v141 = vld [vmem:[%s1 + $0x19c] sm:$0xf]
  %v142 = vld [vmem:[%s1 + $0x1a0] sm:$0xf]
  %v143 = vld [vmem:[%s1 + $0x1a4] sm:$0xf]
  %v144 = vld [vmem:[%s1 + $0x1a8] sm:$0xf]
  %v145 = vld [vmem:[%s1 + $0x1ac] sm:$0xf]
  %v146 = vld [vmem:[%s1 + $0x1b0] sm:$0xf]
  %v147 = vld [vmem:[%s1 + $0x1b4] sm:$0xf]
  %v148 = vld [vmem:[%s1 + $0x1b8] sm:$0xf]
  %v149 = vld [vmem:[%s1 + $0x1bc] sm:$0xf]
  %v150 = vld [vmem:[%s1 + $0x1c0] sm:$0xf]
  %v151 = vld [vmem:[%s1 + $0x1c4] sm:$0xf]
  %v152 = vld [vmem:[%s1 + $0x1c8] sm:$0xf]
  %v153 = vld [vmem:[%s1 + $0x1cc] sm:$0xf]
  %v154 = vld [vmem:[%s1 + $0x1d0] sm:$0xf]
  %v155 = vld [vmem:[%s1 + $0x1d4] sm:$0xf]
  %v156 = vld [vmem:[%s1 + $0x1d8] sm:$0xf]
  %v157 = vld [vmem:[%s1 + $0x1dc] sm:$0xf]
  %v158 = vld [vmem:[%s1 + $0x1e0] sm:$0xf]
  %v159 = vld [vmem:[%s1 + $0x1e4] sm:$0xf]
  %v160 = vld [vmem:[%s1 + $0x1e8] sm:$0xf]
  %v161 = vld [vmem:[%s1 + $0x1ec] sm:$0xf]
  %v162 = vld [vmem:[%s1 + $0x1f0] sm:$0xf]
  %v163 = vld [vmem:[%s1 + $0x1f4] sm:$0xf]
  %v164 = vld [vmem:[%s1 + $0x1f8] sm:$0xf]
  %v165 = vld [vmem:[%s1 + $0x1fc] sm:$0xf]
  %v166 = vld [vmem:[%s1 + $0x200] sm:$0xf]
  %v167 = vld [vmem:[%s1 + $0x204] sm:$0xf]
  %v168 = vld [vmem:[%s1 + $0x208] sm:$0xf]
  %v169 = vld [vmem:[%s1 + $0x20c] sm:$0xf]
  %v170 = vld [vmem:[%s1 + $0x210] sm:$0xf]
  %v171 = vld [vmem:[%s1 + $0x214] sm:$0xf]
  %v172 = vld [vmem:[%s1 + $0x218] sm:$0xf]
  %v173 = vld [vmem:[%s1 + $0x21c] sm:$0xf]
  %v174 = vld [vmem:[%s1 + $0x220] sm:$0xf]
  %v175 = vld [vmem:[%s1 + $0x224] sm:$0xf]
  %v176 = vld [vmem:[%s1 + $0x228] sm:$0xf]
  %v177 = vld [vmem:[%s1 + $0x22c] sm:$0xf]
  %v178 = vld [vmem:[%s1 + $0x230] sm:$0xf]
  %v179 = vld [vmem:[%s1 + $0x234] sm:$0xf]
  %v180 = vld [vmem:[%s1 + $0x238] sm:$0xf]
  %v181 = vld [vmem:[%s1 + $0x23c] sm:$0xf]
  %v182 = vld [vmem:[%s1 + $0x240] sm:$0xf]
  %v183 = vld [vmem:[%s1 + $0x244] sm:$0xf]
  %v184 = vld [vmem:[%s1 + $0x248] sm:$0xf]
  %v185 = vld [vmem:[%s1 + $0x24c] sm:$0xf]
  %v186 = vld [vmem:[%s1 + $0x250] sm:$0xf]
  %v187 = vld [vmem:[%s1 + $0x254] sm:$0xf]
  %v188 = vld [vmem:[%s1 + $0x258] sm:$0xf]
  %v189 = vld [vmem:[%s1 + $0x25c] sm:$0xf]
  %v190 = vld [vmem:[%s1 + $0x260] sm:$0xf]
  %v191 = vld [vmem:[%s1 + $0x264] sm:$0xf]
  %v192 = vld [vmem:[%s1 + $0x268] sm:$0xf]
  %v193 = vld [vmem:[%s1 + $0x26c] sm:$0xf]
  %v194 = vld [vmem:[%s1 + $0x270] sm:$0xf]
  %v195 = vld [vmem:[%s1 + $0x274] sm:$0xf]
  %v196 = vld [vmem:[%s1 + $0x278] sm:$0xf]
  %v197 = vld [vmem:[%s1 + $0x27c] sm:$0xf]
  %v198 = vld [vmem:[%s1 + $0x280] sm:$0xf]
  %v199 = vld [vmem:[%s1 + $0x284] sm:$0xf]
  %v200 = vld [vmem:[%s1 + $0x288] sm:$0xf]
  %v201 = vld [vmem:[%s1 + $0x28c] sm:$0xf]
  %v202 = vld [vmem:[%s1 + $0x290] sm:$0xf]
  %v203 = vld [vmem:[%s1 + $0x294] sm:$0xf]
  %v204 = vld [vmem:[%s1 + $0x298] sm:$0xf]
  %v205 = vld [vmem:[%s1 + $0x29c] sm:$0xf]
  %v206 = vld [vmem:[%s1 + $0x2a0] sm:$0xf]
  %v207 = vld [vmem:[%s1 + $0x2a4] sm:$0xf]
  %v208 = vld [vmem:[%s1 + $0x2a8] sm:$0xf]
  %v209 = vld [vmem:[%s1 + $0x2ac] sm:$0xf]
  %v210 = vld [vmem:[%s1 + $0x2b0] sm:$0xf]
  %v211 = vld [vmem:[%s1 + $0x2b4] sm:$0xf]
  %v212 = vld [vmem:[%s1 + $0x2b8] sm:$0xf]
  %v213 = vld [vmem:[%s1 + $0x2bc] sm:$0xf]
  %v214 = vld [vmem:[%s1 + $0x2c0] sm:$0xf]
  %v215 = vld [vmem:[%s1 + $0x2c4] sm:$0xf]
  %v216 = vld [vmem:[%s1 + $0x2c8] sm:$0xf]
  %v217 = vld [vmem:[%s1 + $0x2cc] sm:$0xf]
  %v218 = vld [vmem:[%s1 + $0x2d0] sm:$0xf]
  %v219 = vld [vmem:[%s1 + $0x2d4] sm:$0xf]
  %v220 = vld [vmem:[%s1 + $0x2d8] sm:$0xf]
  %v221 = vld [vmem:[%s1 + $0x2dc] sm:$0xf]
  %v222 = vld [vmem:[%s1 + $0x2e0] sm:$0xf]
  %v223 = vld [vmem:[%s1 + $0x2e4] sm:$0xf]
  %v224 = vld [vmem:[%s1 + $0x2e8] sm:$0xf]
  %v225 = vld [vmem:[%s1 + $0x2ec] sm:$0xf]
  %v226 = vld [vmem:[%s1 + $0x2f0] sm:$0xf]
  %v227 = vld [vmem:[%s1 + $0x2f4] sm:$0xf]
  %v228 = vld [vmem:[%s1 + $0x2f8] sm:$0xf]
  %v229 = vld [vmem:[%s1 + $0x2fc] sm:$0xf]
  %v230 = vld [vmem:[%s1 + $0x300] sm:$0xf]
  %v231 = vld [vmem:[%s1 + $0x304] sm:$0xf]
  %v232 = vld [vmem:[%s1 + $0x308] sm:$0xf]
  %v233 = vld [vmem:[%s1 + $0x30c] sm:$0xf]
  %v234 = vld [vmem:[%s1 + $0x310] sm:$0xf]
  %v235 = vld [vmem:[%s1 + $0x314] sm:$0xf]
  %v236 = vld [vmem:[%s1 + $0x318] sm:$0xf]
  %v237 = vld [vmem:[%s1 + $0x31c] sm:$0xf]
  %v238 = vld [vmem:[%s1 + $0x320] sm:$0xf]
  %v239 = vld [vmem:[%s1 + $0x324] sm:$0xf]
  %v240 = vld [vmem:[%s1 + $0x328] sm:$0xf]
  %v241 = vld [vmem:[%s1 + $0x32c] sm:$0xf]
  %v242 = vld [vmem:[%s1 + $0x330] sm:$0xf]
  %v243 = vld [vmem:[%s1 + $0x334] sm:$0xf]
  %v244 = vld [vmem:[%s1 + $0x338] sm:$0xf]
  %v245 = vld [vmem:[%s1 + $0x33c] sm:$0xf]
  %v246 = vld [vmem:[%s1 + $0x340] sm:$0xf]
  %v247 = vld [vmem:[%s1 + $0x344] sm:$0xf]
  %v248 = vld [vmem:[%s1 + $0x348] sm:$0xf]
  %v249 = vld [vmem:[%s1 + $0x34c] sm:$0xf]
  %v250 = vld [vmem:[%s1 + $0x350] sm:$0xf]
  %v251 = vld [vmem:[%s1 + $0x354] sm:$0xf]
  %v252 = vld [vmem:[%s1 + $0x358] sm:$0xf]
  %v253 = vld [vmem:[%s1 + $0x35c] sm:$0xf]
  %v254 = vld [vmem:[%s1 + $0x360] sm:$0xf]
  %v255 = vld [vmem:[%s1 + $0x364] sm:$0xf]
  %v256 = vld [vmem:[%s1 + $0x368] sm:$0xf]
  %v257 = vld [vmem:[%s1 + $0x36c] sm:$0xf]
  %v258 = vld [vmem:[%s1 + $0x370] sm:$0xf]
  %v259 = vld [vmem:[%s1 + $0x374] sm:$0xf]
  %v260 = vld [vmem:[%s1 + $0x378] sm:$0xf]
  %v261 = vld [vmem:[%s1 + $0x37c] sm:$0xf]
  %v262 = vld [vmem:[%s1 + $0x380] sm:$0xf]
  %v263 = vld [vmem:[%s1 + $0x384] sm:$0xf]
  %v264 = vld [vmem:[%s1 + $0x388] sm:$0xf]
  %v265 = vld [vmem:[%s1 + $0x38c] sm:$0xf]
  %v266 = vld [vmem:[%s1 + $0x390] sm:$0xf]
  %v267 = vld [vmem:[%s1 + $0x394] sm:$0xf]
  %v268 = vld [vmem:[%s1 + $0x398] sm:$0xf]
  %v269 = vld [vmem:[%s1 + $0x39c] sm:$0xf]
  %v270 = vld [vmem:[%s1 + $0x3a0] sm:$0xf]
  %v271 = vld [vmem:[%s1 + $0x3a4] sm:$0xf]
  %v272 = vld [vmem:[%s1 + $0x3a8] sm:$0xf]
  %v273 = vld [vmem:[%s1 + $0x3ac] sm:$0xf]
  %v274 = vld [vmem:[%s1 + $0x3b0] sm:$0xf]
  %v275 = vld [vmem:[%s1 + $0x3b4] sm:$0xf]
  %v276 = vld [vmem:[%s1 + $0x3b8] sm:$0xf]
  %v277 = vld [vmem:[%s1 + $0x3bc] sm:$0xf]
  %v278 = vld [vmem:[%s1 + $0x3c0] sm:$0xf]
  %v279 = vld [vmem:[%s1 + $0x3c4] sm:$0xf]
  %v280 = vld [vmem:[%s1 + $0x3c8] sm:$0xf]
  %v281 = vld [vmem:[%s1 + $0x3cc] sm:$0xf]
  %v282 = vld [vmem:[%s1 + $0x3d0] sm:$0xf]
  %v283 = vld [vmem:[%s1 + $0x3d4] sm:$0xf]
  %v284 = vld [vmem:[%s1 + $0x3d8] sm:$0xf]
  %v285 = vld [vmem:[%s1 + $0x3dc] sm:$0xf]
  %v286 = vld [vmem:[%s1 + $0x3e0] sm:$0xf]
  %v287 = vld [vmem:[%s1 + $0x3e4] sm:$0xf]
  %v288 = vld [vmem:[%s1 + $0x3e8] sm:$0xf]
  %v289 = vld [vmem:[%s1 + $0x3ec] sm:$0xf]
  %v290 = vld [vmem:[%s1 + $0x3f0] sm:$0xf]
  %v291 = vld [vmem:[%s1 + $0x3f4] sm:$0xf]
  %v292 = vld [vmem:[%s1 + $0x3f8] sm:$0xf]
  %v293 = vld [vmem:[%s1 + $0x3fc] sm:$0xf]
  %v318 = vunpack.c.l.b16 %v14
  %v319 = vunpack.c.h.b16 %v14
  %v320 = vunpack.c.l.b16 %v15
  %v321 = vunpack.c.h.b16 %v15
  %v322 = vunpack.c.l.b16 %v16
  %v323 = vunpack.c.h.b16 %v16
  %v324 = vunpack.c.l.b16 %v17
  %v325 = vunpack.c.h.b16 %v17
  %v326 = vunpack.c.l.b16 %v18
  %v327 = vunpack.c.h.b16 %v18
  %v328 = vunpack.c.l.b16 %v19
  %v329 = vunpack.c.h.b16 %v19
  %v330 = vunpack.c.l.b16 %v20
  %v331 = vunpack.c.h.b16 %v20
  %v332 = vunpack.c.l.b16 %v21
  %v333 = vunpack.c.h.b16 %v21
  %v334 = vunpack.c.l.b16 %v22
  %v335 = vunpack.c.h.b16 %v22
  %v336 = vunpack.c.l.b16 %v23
  %v337 = vunpack.c.h.b16 %v23
  %v338 = vunpack.c.l.b16 %v24
  %v339 = vunpack.c.h.b16 %v24
  %v340 = vunpack.c.l.b16 %v25
  %v341 = vunpack.c.h.b16 %v25
  %v342 = vunpack.c.l.b16 %v26
  %v343 = vunpack.c.h.b16 %v26
  %v344 = vunpack.c.l.b16 %v27
  %v345 = vunpack.c.h.b16 %v27
  %v346 = vunpack.c.l.b16 %v28
  %v347 = vunpack.c.h.b16 %v28
  %v348 = vunpack.c.l.b16 %v29
  %v349 = vunpack.c.h.b16 %v29
  %v350 = vunpack.c.l.b16 %v30
  %v351 = vunpack.c.h.b16 %v30
  %v352 = vunpack.c.l.b16 %v31
  %v353 = vunpack.c.h.b16 %v31
  %v354 = vunpack.c.l.b16 %v32
  %v355 = vunpack.c.h.b16 %v32
  %v356 = vunpack.c.l.b16 %v33
  %v357 = vunpack.c.h.b16 %v33
  %v358 = vunpack.c.l.b16 %v34
  %v359 = vunpack.c.h.b16 %v34
  %v360 = vunpack.c.l.b16 %v35
  %v361 = vunpack.c.h.b16 %v35
  %v362 = vunpack.c.l.b16 %v36
  %v363 = vunpack.c.h.b16 %v36
  %v364 = vunpack.c.l.b16 %v37
  %v365 = vunpack.c.h.b16 %v37
  %v366 = vpack.c.b16 %v334, %v318
  %v367 = vpack.c.b16 %v335, %v319
  %v368 = vpack.c.b16 %v336, %v320
  %v369 = vpack.c.b16 %v337, %v321
  %v370 = vpack.c.b16 %v338, %v322
  %v371 = vpack.c.b16 %v339, %v323
  %v372 = vpack.c.b16 %v340, %v324
  %v373 = vpack.c.b16 %v341, %v325
  %v374 = vpack.c.b16 %v342, %v326
  %v375 = vpack.c.b16 %v343, %v327
  %v376 = vpack.c.b16 %v344, %v328
  %v377 = vpack.c.b16 %v345, %v329
  %v378 = vpack.c.b16 %v346, %v330
  %v379 = vpack.c.b16 %v347, %v331
  %v380 = vpack.c.b16 %v348, %v332
  %v381 = vpack.c.b16 %v349, %v333
  %v382 = vpack.c.b16 %v350, %v350
  %v383 = vpack.c.b16 %v351, %v351
  %v384 = vpack.c.b16 %v352, %v352
  %v385 = vpack.c.b16 %v353, %v353
  %v386 = vpack.c.b16 %v354, %v354
  %v387 = vpack.c.b16 %v355, %v355
  %v388 = vpack.c.b16 %v356, %v356
  %v389 = vpack.c.b16 %v357, %v357
  %v390 = vpack.c.b16 %v358, %v358
  %v391 = vpack.c.b16 %v359, %v359
  %v392 = vpack.c.b16 %v360, %v360
  %v393 = vpack.c.b16 %v361, %v361
  %v394 = vpack.c.b16 %v362, %v362
  %v395 = vpack.c.b16 %v363, %v363
  %v396 = vpack.c.b16 %v364, %v364
  %v397 = vpack.c.b16 %v365, %v365
  %v686 = vunpack.c.l.b16 %v38
  %v687 = vunpack.c.l.b16 %v39
  %v688 = vunpack.c.l.b16 %v40
  %v689 = vunpack.c.l.b16 %v41
  %v690 = vunpack.c.l.b16 %v42
  %v691 = vunpack.c.l.b16 %v43
  %v692 = vunpack.c.l.b16 %v44
  %v693 = vunpack.c.l.b16 %v45
  %v694 = vunpack.c.l.b16 %v46
  %v695 = vunpack.c.l.b16 %v47
  %v696 = vunpack.c.l.b16 %v48
  %v697 = vunpack.c.l.b16 %v49
  %v698 = vunpack.c.l.b16 %v50
  %v699 = vunpack.c.l.b16 %v51
  %v700 = vunpack.c.l.b16 %v52
  %v701 = vunpack.c.l.b16 %v53
  %v702 = vunpack.c.l.b16 %v54
  %v703 = vunpack.c.l.b16 %v55
  %v704 = vunpack.c.l.b16 %v56
  %v705 = vunpack.c.l.b16 %v57
  %v706 = vunpack.c.l.b16 %v58
  %v707 = vunpack.c.l.b16 %v59
  %v708 = vunpack.c.l.b16 %v60
  %v709 = vunpack.c.l.b16 %v61
  %v710 = vunpack.c.l.b16 %v62
  %v711 = vunpack.c.l.b16 %v63
  %v712 = vunpack.c.l.b16 %v64
  %v713 = vunpack.c.l.b16 %v65
  %v714 = vunpack.c.l.b16 %v66
  %v715 = vunpack.c.l.b16 %v67
  %v716 = vunpack.c.l.b16 %v68
  %v717 = vunpack.c.l.b16 %v69
  %v718 = vunpack.c.l.b16 %v70
  %v719 = vunpack.c.l.b16 %v71
  %v720 = vunpack.c.l.b16 %v72
  %v721 = vunpack.c.l.b16 %v73
  %v722 = vunpack.c.l.b16 %v74
  %v723 = vunpack.c.l.b16 %v75
  %v724 = vunpack.c.l.b16 %v76
  %v725 = vunpack.c.l.b16 %v77
  %v726 = vunpack.c.l.b16 %v78
  %v727 = vunpack.c.l.b16 %v79
  %v728 = vunpack.c.l.b16 %v80
  %v729 = vunpack.c.l.b16 %v81
  %v730 = vunpack.c.l.b16 %v82
  %v731 = vunpack.c.l.b16 %v83
  %v732 = vunpack.c.l.b16 %v84
  %v733 = vunpack.c.l.b16 %v85
  %v734 = vunpack.c.l.b16 %v86
  %v735 = vunpack.c.l.b16 %v87
  %v736 = vunpack.c.l.b16 %v88
  %v737 = vunpack.c.l.b16 %v89
  %v738 = vunpack.c.l.b16 %v90
  %v739 = vunpack.c.l.b16 %v91
  %v740 = vunpack.c.l.b16 %v92
  %v741 = vunpack.c.l.b16 %v93
  %v742 = vunpack.c.l.b16 %v94
  %v743 = vunpack.c.l.b16 %v95
  %v744 = vunpack.c.l.b16 %v96
  %v745 = vunpack.c.l.b16 %v97
  %v746 = vunpack.c.l.b16 %v98
  %v747 = vunpack.c.l.b16 %v99
  %v748 = vunpack.c.l.b16 %v100
  %v749 = vunpack.c.l.b16 %v101
  %v750 = vunpack.c.l.b16 %v102
  %v751 = vunpack.c.l.b16 %v103
  %v752 = vunpack.c.l.b16 %v104
  %v753 = vunpack.c.l.b16 %v105
  %v754 = vunpack.c.l.b16 %v106
  %v755 = vunpack.c.l.b16 %v107
  %v756 = vunpack.c.l.b16 %v108
  %v757 = vunpack.c.l.b16 %v109
  %v758 = vunpack.c.l.b16 %v110
  %v759 = vunpack.c.l.b16 %v111
  %v760 = vunpack.c.l.b16 %v112
  %v761 = vunpack.c.l.b16 %v113
  %v762 = vunpack.c.l.b16 %v114
  %v763 = vunpack.c.l.b16 %v115
  %v764 = vunpack.c.l.b16 %v116
  %v765 = vunpack.c.l.b16 %v117
  %v766 = vunpack.c.l.b16 %v118
  %v767 = vunpack.c.l.b16 %v119
  %v768 = vunpack.c.l.b16 %v120
  %v769 = vunpack.c.l.b16 %v121
  %v770 = vunpack.c.l.b16 %v122
  %v771 = vunpack.c.l.b16 %v123
  %v772 = vunpack.c.l.b16 %v124
  %v773 = vunpack.c.l.b16 %v125
  %v774 = vunpack.c.l.b16 %v126
  %v775 = vunpack.c.l.b16 %v127
  %v776 = vunpack.c.l.b16 %v128
  %v777 = vunpack.c.l.b16 %v129
  %v778 = vunpack.c.l.b16 %v130
  %v779 = vunpack.c.l.b16 %v131
  %v780 = vunpack.c.l.b16 %v132
  %v781 = vunpack.c.l.b16 %v133
  %v782 = vunpack.c.l.b16 %v134
  %v783 = vunpack.c.l.b16 %v135
  %v784 = vunpack.c.l.b16 %v136
  %v785 = vunpack.c.l.b16 %v137
  %v786 = vunpack.c.l.b16 %v138
  %v787 = vunpack.c.l.b16 %v139
  %v788 = vunpack.c.l.b16 %v140
  %v789 = vunpack.c.l.b16 %v141
  %v790 = vunpack.c.l.b16 %v142
  %v791 = vunpack.c.l.b16 %v143
  %v792 = vunpack.c.l.b16 %v144
  %v793 = vunpack.c.l.b16 %v145
  %v794 = vunpack.c.l.b16 %v146
  %v795 = vunpack.c.l.b16 %v147
  %v796 = vunpack.c.l.b16 %v148
  %v797 = vunpack.c.l.b16 %v149
  %v798 = vunpack.c.l.b16 %v150
  %v799 = vunpack.c.l.b16 %v151
  %v800 = vunpack.c.l.b16 %v152
  %v801 = vunpack.c.l.b16 %v153
  %v802 = vunpack.c.l.b16 %v154
  %v803 = vunpack.c.l.b16 %v155
  %v804 = vunpack.c.l.b16 %v156
  %v805 = vunpack.c.l.b16 %v157
  %v806 = vunpack.c.l.b16 %v158
  %v807 = vunpack.c.l.b16 %v159
  %v808 = vunpack.c.l.b16 %v160
  %v809 = vunpack.c.l.b16 %v161
  %v810 = vunpack.c.l.b16 %v162
  %v811 = vunpack.c.l.b16 %v163
  %v812 = vunpack.c.l.b16 %v164
  %v813 = vunpack.c.l.b16 %v165
  %v814 = vunpack.c.l.b16 %v166
  %v815 = vunpack.c.l.b16 %v167
  %v816 = vunpack.c.l.b16 %v168
  %v817 = vunpack.c.l.b16 %v169
  %v818 = vunpack.c.l.b16 %v170
  %v819 = vunpack.c.l.b16 %v171
  %v820 = vunpack.c.l.b16 %v172
  %v821 = vunpack.c.l.b16 %v173
  %v822 = vunpack.c.l.b16 %v174
  %v823 = vunpack.c.l.b16 %v175
  %v824 = vunpack.c.l.b16 %v176
  %v825 = vunpack.c.l.b16 %v177
  %v826 = vunpack.c.l.b16 %v178
  %v827 = vunpack.c.l.b16 %v179
  %v828 = vunpack.c.l.b16 %v180
  %v829 = vunpack.c.l.b16 %v181
  %v830 = vunpack.c.l.b16 %v182
  %v831 = vunpack.c.l.b16 %v183
  %v832 = vunpack.c.l.b16 %v184
  %v833 = vunpack.c.l.b16 %v185
  %v834 = vunpack.c.l.b16 %v186
  %v835 = vunpack.c.l.b16 %v187
  %v836 = vunpack.c.l.b16 %v188
  %v837 = vunpack.c.l.b16 %v189
  %v838 = vunpack.c.l.b16 %v190
  %v839 = vunpack.c.l.b16 %v191
  %v840 = vunpack.c.l.b16 %v192
  %v841 = vunpack.c.l.b16 %v193
  %v842 = vunpack.c.l.b16 %v194
  %v843 = vunpack.c.l.b16 %v195
  %v844 = vunpack.c.l.b16 %v196
  %v845 = vunpack.c.l.b16 %v197
  %v846 = vunpack.c.l.b16 %v198
  %v847 = vunpack.c.l.b16 %v199
  %v848 = vunpack.c.l.b16 %v200
  %v849 = vunpack.c.l.b16 %v201
  %v850 = vunpack.c.l.b16 %v202
  %v851 = vunpack.c.l.b16 %v203
  %v852 = vunpack.c.l.b16 %v204
  %v853 = vunpack.c.l.b16 %v205
  %v854 = vunpack.c.l.b16 %v206
  %v855 = vunpack.c.l.b16 %v207
  %v856 = vunpack.c.l.b16 %v208
  %v857 = vunpack.c.l.b16 %v209
  %v858 = vunpack.c.l.b16 %v210
  %v859 = vunpack.c.l.b16 %v211
  %v860 = vunpack.c.l.b16 %v212
  %v861 = vunpack.c.l.b16 %v213
  %v862 = vunpack.c.l.b16 %v214
  %v863 = vunpack.c.l.b16 %v215
  %v864 = vunpack.c.l.b16 %v216
  %v865 = vunpack.c.l.b16 %v217
  %v866 = vunpack.c.l.b16 %v218
  %v867 = vunpack.c.l.b16 %v219
  %v868 = vunpack.c.l.b16 %v220
  %v869 = vunpack.c.l.b16 %v221
  %v870 = vunpack.c.l.b16 %v222
  %v871 = vunpack.c.l.b16 %v223
  %v872 = vunpack.c.l.b16 %v224
  %v873 = vunpack.c.l.b16 %v225
  %v874 = vunpack.c.l.b16 %v226
  %v875 = vunpack.c.l.b16 %v227
  %v876 = vunpack.c.l.b16 %v228
  %v877 = vunpack.c.l.b16 %v229
  %v878 = vunpack.c.l.b16 %v230
  %v879 = vunpack.c.l.b16 %v231
  %v880 = vunpack.c.l.b16 %v232
  %v881 = vunpack.c.l.b16 %v233
  %v882 = vunpack.c.l.b16 %v234
  %v883 = vunpack.c.l.b16 %v235
  %v884 = vunpack.c.l.b16 %v236
  %v885 = vunpack.c.l.b16 %v237
  %v886 = vunpack.c.l.b16 %v238
  %v887 = vunpack.c.l.b16 %v239
  %v888 = vunpack.c.l.b16 %v240
  %v889 = vunpack.c.l.b16 %v241
  %v890 = vunpack.c.l.b16 %v242
  %v891 = vunpack.c.l.b16 %v243
  %v892 = vunpack.c.l.b16 %v244
  %v893 = vunpack.c.l.b16 %v245
  %v894 = vunpack.c.l.b16 %v246
  %v895 = vunpack.c.l.b16 %v247
  %v896 = vunpack.c.l.b16 %v248
  %v897 = vunpack.c.l.b16 %v249
  %v898 = vunpack.c.l.b16 %v250
  %v899 = vunpack.c.l.b16 %v251
  %v900 = vunpack.c.l.b16 %v252
  %v901 = vunpack.c.l.b16 %v253
  %v902 = vunpack.c.l.b16 %v254
  %v903 = vunpack.c.l.b16 %v255
  %v904 = vunpack.c.l.b16 %v256
  %v905 = vunpack.c.l.b16 %v257
  %v906 = vunpack.c.l.b16 %v258
  %v907 = vunpack.c.l.b16 %v259
  %v908 = vunpack.c.l.b16 %v260
  %v909 = vunpack.c.l.b16 %v261
  %v910 = vunpack.c.l.b16 %v262
  %v911 = vunpack.c.l.b16 %v263
  %v912 = vunpack.c.l.b16 %v264
  %v913 = vunpack.c.l.b16 %v265
  %v914 = vunpack.c.l.b16 %v266
  %v915 = vunpack.c.l.b16 %v267
  %v916 = vunpack.c.l.b16 %v268
  %v917 = vunpack.c.l.b16 %v269
  %v918 = vunpack.c.l.b16 %v270
  %v919 = vunpack.c.l.b16 %v271
  %v920 = vunpack.c.l.b16 %v272
  %v921 = vunpack.c.l.b16 %v273
  %v922 = vunpack.c.l.b16 %v274
  %v923 = vunpack.c.l.b16 %v275
  %v924 = vunpack.c.l.b16 %v276
  %v925 = vunpack.c.l.b16 %v277
  %v926 = vunpack.c.l.b16 %v278
  %v927 = vunpack.c.l.b16 %v279
  %v928 = vunpack.c.l.b16 %v280
  %v929 = vunpack.c.l.b16 %v281
  %v930 = vunpack.c.l.b16 %v282
  %v931 = vunpack.c.l.b16 %v283
  %v932 = vunpack.c.l.b16 %v284
  %v933 = vunpack.c.l.b16 %v285
  %v934 = vunpack.c.l.b16 %v286
  %v935 = vunpack.c.l.b16 %v287
  %v936 = vunpack.c.l.b16 %v288
  %v937 = vunpack.c.l.b16 %v289
  %v938 = vunpack.c.l.b16 %v290
  %v939 = vunpack.c.l.b16 %v291
  %v940 = vunpack.c.l.b16 %v292
  %v941 = vunpack.c.l.b16 %v293
  %v942 = vpack.c.b16 %v687, %v686
  %v943 = vpack.c.b16 %v689, %v688
  %v944 = vpack.c.b16 %v691, %v690
  %v945 = vpack.c.b16 %v693, %v692
  %v946 = vpack.c.b16 %v695, %v694
  %v947 = vpack.c.b16 %v697, %v696
  %v948 = vpack.c.b16 %v699, %v698
  %v949 = vpack.c.b16 %v701, %v700
  %v950 = vpack.c.b16 %v703, %v702
  %v951 = vpack.c.b16 %v705, %v704
  %v952 = vpack.c.b16 %v707, %v706
  %v953 = vpack.c.b16 %v709, %v708
  %v954 = vpack.c.b16 %v711, %v710
  %v955 = vpack.c.b16 %v713, %v712
  %v956 = vpack.c.b16 %v715, %v714
  %v957 = vpack.c.b16 %v717, %v716
  %v958 = vpack.c.b16 %v719, %v718
  %v959 = vpack.c.b16 %v721, %v720
  %v960 = vpack.c.b16 %v723, %v722
  %v961 = vpack.c.b16 %v725, %v724
  %v962 = vpack.c.b16 %v727, %v726
  %v963 = vpack.c.b16 %v729, %v728
  %v964 = vpack.c.b16 %v731, %v730
  %v965 = vpack.c.b16 %v733, %v732
  %v966 = vpack.c.b16 %v735, %v734
  %v967 = vpack.c.b16 %v737, %v736
  %v968 = vpack.c.b16 %v739, %v738
  %v969 = vpack.c.b16 %v741, %v740
  %v970 = vpack.c.b16 %v743, %v742
  %v971 = vpack.c.b16 %v745, %v744
  %v972 = vpack.c.b16 %v747, %v746
  %v973 = vpack.c.b16 %v749, %v748
  %v974 = vpack.c.b16 %v751, %v750
  %v975 = vpack.c.b16 %v753, %v752
  %v976 = vpack.c.b16 %v755, %v754
  %v977 = vpack.c.b16 %v757, %v756
  %v978 = vpack.c.b16 %v759, %v758
  %v979 = vpack.c.b16 %v761, %v760
  %v980 = vpack.c.b16 %v763, %v762
  %v981 = vpack.c.b16 %v765, %v764
  %v982 = vpack.c.b16 %v767, %v766
  %v983 = vpack.c.b16 %v769, %v768
  %v984 = vpack.c.b16 %v771, %v770
  %v985 = vpack.c.b16 %v773, %v772
  %v986 = vpack.c.b16 %v775, %v774
  %v987 = vpack.c.b16 %v777, %v776
  %v988 = vpack.c.b16 %v779, %v778
  %v989 = vpack.c.b16 %v781, %v780
  %v990 = vpack.c.b16 %v783, %v782
  %v991 = vpack.c.b16 %v785, %v784
  %v992 = vpack.c.b16 %v787, %v786
  %v993 = vpack.c.b16 %v789, %v788
  %v994 = vpack.c.b16 %v791, %v790
  %v995 = vpack.c.b16 %v793, %v792
  %v996 = vpack.c.b16 %v795, %v794
  %v997 = vpack.c.b16 %v797, %v796
  %v998 = vpack.c.b16 %v799, %v798
  %v999 = vpack.c.b16 %v801, %v800
  %v1000 = vpack.c.b16 %v803, %v802
  %v1001 = vpack.c.b16 %v805, %v804
  %v1002 = vpack.c.b16 %v807, %v806
  %v1003 = vpack.c.b16 %v809, %v808
  %v1004 = vpack.c.b16 %v811, %v810
  %v1005 = vpack.c.b16 %v813, %v812
  %v1006 = vpack.c.b16 %v815, %v814
  %v1007 = vpack.c.b16 %v817, %v816
  %v1008 = vpack.c.b16 %v819, %v818
  %v1009 = vpack.c.b16 %v821, %v820
  %v1010 = vpack.c.b16 %v823, %v822
  %v1011 = vpack.c.b16 %v825, %v824
  %v1012 = vpack.c.b16 %v827, %v826
  %v1013 = vpack.c.b16 %v829, %v828
  %v1014 = vpack.c.b16 %v831, %v830
  %v1015 = vpack.c.b16 %v833, %v832
  %v1016 = vpack.c.b16 %v835, %v834
  %v1017 = vpack.c.b16 %v837, %v836
  %v1018 = vpack.c.b16 %v839, %v838
  %v1019 = vpack.c.b16 %v841, %v840
  %v1020 = vpack.c.b16 %v843, %v842
  %v1021 = vpack.c.b16 %v845, %v844
  %v1022 = vpack.c.b16 %v847, %v846
  %v1023 = vpack.c.b16 %v849, %v848
  %v1024 = vpack.c.b16 %v851, %v850
  %v1025 = vpack.c.b16 %v853, %v852
  %v1026 = vpack.c.b16 %v855, %v854
  %v1027 = vpack.c.b16 %v857, %v856
  %v1028 = vpack.c.b16 %v859, %v858
  %v1029 = vpack.c.b16 %v861, %v860
  %v1030 = vpack.c.b16 %v863, %v862
  %v1031 = vpack.c.b16 %v865, %v864
  %v1032 = vpack.c.b16 %v867, %v866
  %v1033 = vpack.c.b16 %v869, %v868
  %v1034 = vpack.c.b16 %v871, %v870
  %v1035 = vpack.c.b16 %v873, %v872
  %v1036 = vpack.c.b16 %v875, %v874
  %v1037 = vpack.c.b16 %v877, %v876
  %v1038 = vpack.c.b16 %v879, %v878
  %v1039 = vpack.c.b16 %v881, %v880
  %v1040 = vpack.c.b16 %v883, %v882
  %v1041 = vpack.c.b16 %v885, %v884
  %v1042 = vpack.c.b16 %v887, %v886
  %v1043 = vpack.c.b16 %v889, %v888
  %v1044 = vpack.c.b16 %v891, %v890
  %v1045 = vpack.c.b16 %v893, %v892
  %v1046 = vpack.c.b16 %v895, %v894
  %v1047 = vpack.c.b16 %v897, %v896
  %v1048 = vpack.c.b16 %v899, %v898
  %v1049 = vpack.c.b16 %v901, %v900
  %v1050 = vpack.c.b16 %v903, %v902
  %v1051 = vpack.c.b16 %v905, %v904
  %v1052 = vpack.c.b16 %v907, %v906
  %v1053 = vpack.c.b16 %v909, %v908
  %v1054 = vpack.c.b16 %v911, %v910
  %v1055 = vpack.c.b16 %v913, %v912
  %v1056 = vpack.c.b16 %v915, %v914
  %v1057 = vpack.c.b16 %v917, %v916
  %v1058 = vpack.c.b16 %v919, %v918
  %v1059 = vpack.c.b16 %v921, %v920
  %v1060 = vpack.c.b16 %v923, %v922
  %v1061 = vpack.c.b16 %v925, %v924
  %v1062 = vpack.c.b16 %v927, %v926
  %v1063 = vpack.c.b16 %v929, %v928
  %v1064 = vpack.c.b16 %v931, %v930
  %v1065 = vpack.c.b16 %v933, %v932
  %v1066 = vpack.c.b16 %v935, %v934
  %v1067 = vpack.c.b16 %v937, %v936
  %v1068 = vpack.c.b16 %v939, %v938
  %v1069 = vpack.c.b16 %v941, %v940
  %1198 = vmatpush.bf16.msra.mxu0 %v949
  %1199 = vmatpush.bf16.msra.mxu0 %v948
  %1200 = vmatpush.bf16.msra.mxu0 %v947
  %1201 = vmatpush.bf16.msra.mxu0 %v946
  %1202 = vmatpush.bf16.msra.mxu0 %v945
  %1203 = vmatpush.bf16.msra.mxu0 %v944
  %1204 = vmatpush.bf16.msra.mxu0 %v943
  %1205 = vmatpush.bf16.msra.mxu0 %v942
  %1206 = vmatmul.bf16.gmra.mxu0 %v366
  %v1207 = vpop.f32.mrf.mxu0
  %v1208 = vadd.f32 0.0, %v1207
  %v1209 = vpop.f32.mrf.mxu0
  %v1210 = vadd.f32 0.0, %v1209
  %1211 = vmatmul.bf16.gmra.mxu0 %v382
  %v1212 = vpop.f32.mrf.mxu0
  %v1213 = vadd.f32 0.0, %v1212
  %v1214 = vpop.f32.mrf.mxu0
  %1215 = vdwg.mxu0
  %1216 = vmatpush.bf16.msra.mxu0 %v957
  %1217 = vmatpush.bf16.msra.mxu0 %v956
  %1218 = vmatpush.bf16.msra.mxu0 %v955
  %1219 = vmatpush.bf16.msra.mxu0 %v954
  %1220 = vmatpush.bf16.msra.mxu0 %v953
  %1221 = vmatpush.bf16.msra.mxu0 %v952
  %1222 = vmatpush.bf16.msra.mxu0 %v951
  %1223 = vmatpush.bf16.msra.mxu0 %v950
  %1224 = vmatmul.bf16.gmra.mxu0 %v367
  %v1225 = vpop.f32.mrf.mxu0
  %v1226 = vadd.f32 %v1208, %v1225
  %v1227 = vpop.f32.mrf.mxu0
  %v1228 = vadd.f32 %v1210, %v1227
  %1229 = vmatmul.bf16.gmra.mxu0 %v383
  %v1230 = vpop.f32.mrf.mxu0
  %v1231 = vadd.f32 %v1213, %v1230
  %v1232 = vpop.f32.mrf.mxu0
  %1233 = vdwg.mxu0
  %1234 = vmatpush.bf16.msra.mxu0 %v965
  %1235 = vmatpush.bf16.msra.mxu0 %v964
  %1236 = vmatpush.bf16.msra.mxu0 %v963
  %1237 = vmatpush.bf16.msra.mxu0 %v962
  %1238 = vmatpush.bf16.msra.mxu0 %v961
  %1239 = vmatpush.bf16.msra.mxu0 %v960
  %1240 = vmatpush.bf16.msra.mxu0 %v959
  %1241 = vmatpush.bf16.msra.mxu0 %v958
  %1242 = vmatmul.bf16.gmra.mxu0 %v368
  %v1243 = vpop.f32.mrf.mxu0
  %v1244 = vadd.f32 %v1226, %v1243
  %v1245 = vpop.f32.mrf.mxu0
  %v1246 = vadd.f32 %v1228, %v1245
  %1247 = vmatmul.bf16.gmra.mxu0 %v384
  %v1248 = vpop.f32.mrf.mxu0
  %v1249 = vadd.f32 %v1231, %v1248
  %v1250 = vpop.f32.mrf.mxu0
  %1251 = vdwg.mxu0
  %1252 = vmatpush.bf16.msra.mxu0 %v973
  %1253 = vmatpush.bf16.msra.mxu0 %v972
  %1254 = vmatpush.bf16.msra.mxu0 %v971
  %1255 = vmatpush.bf16.msra.mxu0 %v970
  %1256 = vmatpush.bf16.msra.mxu0 %v969
  %1257 = vmatpush.bf16.msra.mxu0 %v968
  %1258 = vmatpush.bf16.msra.mxu0 %v967
  %1259 = vmatpush.bf16.msra.mxu0 %v966
  %1260 = vmatmul.bf16.gmra.mxu0 %v369
  %v1261 = vpop.f32.mrf.mxu0
  %v1262 = vadd.f32 %v1244, %v1261
  %v1263 = vpop.f32.mrf.mxu0
  %v1264 = vadd.f32 %v1246, %v1263
  %1265 = vmatmul.bf16.gmra.mxu0 %v385
  %v1266 = vpop.f32.mrf.mxu0
  %v1267 = vadd.f32 %v1249, %v1266
  %v1268 = vpop.f32.mrf.mxu0
  %1269 = vdwg.mxu0
  %1270 = vmatpush.bf16.msra.mxu0 %v981
  %1271 = vmatpush.bf16.msra.mxu0 %v980
  %1272 = vmatpush.bf16.msra.mxu0 %v979
  %1273 = vmatpush.bf16.msra.mxu0 %v978
  %1274 = vmatpush.bf16.msra.mxu0 %v977
  %1275 = vmatpush.bf16.msra.mxu0 %v976
  %1276 = vmatpush.bf16.msra.mxu0 %v975
  %1277 = vmatpush.bf16.msra.mxu0 %v974
  %1278 = vmatmul.bf16.gmra.mxu0 %v370
  %v1279 = vpop.f32.mrf.mxu0
  %v1280 = vadd.f32 %v1262, %v1279
  %v1281 = vpop.f32.mrf.mxu0
  %v1282 = vadd.f32 %v1264, %v1281
  %1283 = vmatmul.bf16.gmra.mxu0 %v386
  %v1284 = vpop.f32.mrf.mxu0
  %v1285 = vadd.f32 %v1267, %v1284
  %v1286 = vpop.f32.mrf.mxu0
  %1287 = vdwg.mxu0
  %1288 = vmatpush.bf16.msra.mxu0 %v989
  %1289 = vmatpush.bf16.msra.mxu0 %v988
  %1290 = vmatpush.bf16.msra.mxu0 %v987
  %1291 = vmatpush.bf16.msra.mxu0 %v986
  %1292 = vmatpush.bf16.msra.mxu0 %v985
  %1293 = vmatpush.bf16.msra.mxu0 %v984
  %1294 = vmatpush.bf16.msra.mxu0 %v983
  %1295 = vmatpush.bf16.msra.mxu0 %v982
  %1296 = vmatmul.bf16.gmra.mxu0 %v371
  %v1297 = vpop.f32.mrf.mxu0
  %v1298 = vadd.f32 %v1280, %v1297
  %v1299 = vpop.f32.mrf.mxu0
  %v1300 = vadd.f32 %v1282, %v1299
  %1301 = vmatmul.bf16.gmra.mxu0 %v387
  %v1302 = vpop.f32.mrf.mxu0
  %v1303 = vadd.f32 %v1285, %v1302
  %v1304 = vpop.f32.mrf.mxu0
  %1305 = vdwg.mxu0
  %1306 = vmatpush.bf16.msra.mxu0 %v997
  %1307 = vmatpush.bf16.msra.mxu0 %v996
  %1308 = vmatpush.bf16.msra.mxu0 %v995
  %1309 = vmatpush.bf16.msra.mxu0 %v994
  %1310 = vmatpush.bf16.msra.mxu0 %v993
  %1311 = vmatpush.bf16.msra.mxu0 %v992
  %1312 = vmatpush.bf16.msra.mxu0 %v991
  %1313 = vmatpush.bf16.msra.mxu0 %v990
  %1314 = vmatmul.bf16.gmra.mxu0 %v372
  %v1315 = vpop.f32.mrf.mxu0
  %v1316 = vadd.f32 %v1298, %v1315
  %v1317 = vpop.f32.mrf.mxu0
  %v1318 = vadd.f32 %v1300, %v1317
  %1319 = vmatmul.bf16.gmra.mxu0 %v388
  %v1320 = vpop.f32.mrf.mxu0
  %v1321 = vadd.f32 %v1303, %v1320
  %v1322 = vpop.f32.mrf.mxu0
  %1323 = vdwg.mxu0
  %1324 = vmatpush.bf16.msra.mxu0 %v1005
  %1325 = vmatpush.bf16.msra.mxu0 %v1004
  %1326 = vmatpush.bf16.msra.mxu0 %v1003
  %1327 = vmatpush.bf16.msra.mxu0 %v1002
  %1328 = vmatpush.bf16.msra.mxu0 %v1001
  %1329 = vmatpush.bf16.msra.mxu0 %v1000
  %1330 = vmatpush.bf16.msra.mxu0 %v999
  %1331 = vmatpush.bf16.msra.mxu0 %v998
  %1332 = vmatmul.bf16.gmra.mxu0 %v373
  %v1333 = vpop.f32.mrf.mxu0
  %v1334 = vadd.f32 %v1316, %v1333
  %v1335 = vpop.f32.mrf.mxu0
  %v1336 = vadd.f32 %v1318, %v1335
  %1337 = vmatmul.bf16.gmra.mxu0 %v389
  %v1338 = vpop.f32.mrf.mxu0
  %v1339 = vadd.f32 %v1321, %v1338
  %v1340 = vpop.f32.mrf.mxu0
  %1341 = vdwg.mxu0
  %1342 = vmatpush.bf16.msra.mxu0 %v1013
  %1343 = vmatpush.bf16.msra.mxu0 %v1012
  %1344 = vmatpush.bf16.msra.mxu0 %v1011
  %1345 = vmatpush.bf16.msra.mxu0 %v1010
  %1346 = vmatpush.bf16.msra.mxu0 %v1009
  %1347 = vmatpush.bf16.msra.mxu0 %v1008
  %1348 = vmatpush.bf16.msra.mxu0 %v1007
  %1349 = vmatpush.bf16.msra.mxu0 %v1006
  %1350 = vmatmul.bf16.gmra.mxu0 %v374
  %v1351 = vpop.f32.mrf.mxu0
  %v1352 = vadd.f32 %v1334, %v1351
  %v1353 = vpop.f32.mrf.mxu0
  %v1354 = vadd.f32 %v1336, %v1353
  %1355 = vmatmul.bf16.gmra.mxu0 %v390
  %v1356 = vpop.f32.mrf.mxu0
  %v1357 = vadd.f32 %v1339, %v1356
  %v1358 = vpop.f32.mrf.mxu0
  %1359 = vdwg.mxu0
  %1360 = vmatpush.bf16.msra.mxu0 %v1021
  %1361 = vmatpush.bf16.msra.mxu0 %v1020
  %1362 = vmatpush.bf16.msra.mxu0 %v1019
  %1363 = vmatpush.bf16.msra.mxu0 %v1018
  %1364 = vmatpush.bf16.msra.mxu0 %v1017
  %1365 = vmatpush.bf16.msra.mxu0 %v1016
  %1366 = vmatpush.bf16.msra.mxu0 %v1015
  %1367 = vmatpush.bf16.msra.mxu0 %v1014
  %1368 = vmatmul.bf16.gmra.mxu0 %v375
  %v1369 = vpop.f32.mrf.mxu0
  %v1370 = vadd.f32 %v1352, %v1369
  %v1371 = vpop.f32.mrf.mxu0
  %v1372 = vadd.f32 %v1354, %v1371
  %1373 = vmatmul.bf16.gmra.mxu0 %v391
  %v1374 = vpop.f32.mrf.mxu0
  %v1375 = vadd.f32 %v1357, %v1374
  %v1376 = vpop.f32.mrf.mxu0
  %1377 = vdwg.mxu0
  %1378 = vmatpush.bf16.msra.mxu0 %v1029
  %1379 = vmatpush.bf16.msra.mxu0 %v1028
  %1380 = vmatpush.bf16.msra.mxu0 %v1027
  %1381 = vmatpush.bf16.msra.mxu0 %v1026
  %1382 = vmatpush.bf16.msra.mxu0 %v1025
  %1383 = vmatpush.bf16.msra.mxu0 %v1024
  %1384 = vmatpush.bf16.msra.mxu0 %v1023
  %1385 = vmatpush.bf16.msra.mxu0 %v1022
  %1386 = vmatmul.bf16.gmra.mxu0 %v376
  %v1387 = vpop.f32.mrf.mxu0
  %v1388 = vadd.f32 %v1370, %v1387
  %v1389 = vpop.f32.mrf.mxu0
  %v1390 = vadd.f32 %v1372, %v1389
  %1391 = vmatmul.bf16.gmra.mxu0 %v392
  %v1392 = vpop.f32.mrf.mxu0
  %v1393 = vadd.f32 %v1375, %v1392
  %v1394 = vpop.f32.mrf.mxu0
  %1395 = vdwg.mxu0
  %1396 = vmatpush.bf16.msra.mxu0 %v1037
  %1397 = vmatpush.bf16.msra.mxu0 %v1036
  %1398 = vmatpush.bf16.msra.mxu0 %v1035
  %1399 = vmatpush.bf16.msra.mxu0 %v1034
  %1400 = vmatpush.bf16.msra.mxu0 %v1033
  %1401 = vmatpush.bf16.msra.mxu0 %v1032
  %1402 = vmatpush.bf16.msra.mxu0 %v1031
  %1403 = vmatpush.bf16.msra.mxu0 %v1030
  %1404 = vmatmul.bf16.gmra.mxu0 %v377
  %v1405 = vpop.f32.mrf.mxu0
  %v1406 = vadd.f32 %v1388, %v1405
  %v1407 = vpop.f32.mrf.mxu0
  %v1408 = vadd.f32 %v1390, %v1407
  %1409 = vmatmul.bf16.gmra.mxu0 %v393
  %v1410 = vpop.f32.mrf.mxu0
  %v1411 = vadd.f32 %v1393, %v1410
  %v1412 = vpop.f32.mrf.mxu0
  %1413 = vdwg.mxu0
  %1414 = vmatpush.bf16.msra.mxu0 %v1045
  %1415 = vmatpush.bf16.msra.mxu0 %v1044
  %1416 = vmatpush.bf16.msra.mxu0 %v1043
  %1417 = vmatpush.bf16.msra.mxu0 %v1042
  %1418 = vmatpush.bf16.msra.mxu0 %v1041
  %1419 = vmatpush.bf16.msra.mxu0 %v1040
  %1420 = vmatpush.bf16.msra.mxu0 %v1039
  %1421 = vmatpush.bf16.msra.mxu0 %v1038
  %1422 = vmatmul.bf16.gmra.mxu0 %v378
  %v1423 = vpop.f32.mrf.mxu0
  %v1424 = vadd.f32 %v1406, %v1423
  %v1425 = vpop.f32.mrf.mxu0
  %v1426 = vadd.f32 %v1408, %v1425
  %1427 = vmatmul.bf16.gmra.mxu0 %v394
  %v1428 = vpop.f32.mrf.mxu0
  %v1429 = vadd.f32 %v1411, %v1428
  %v1430 = vpop.f32.mrf.mxu0
  %1431 = vdwg.mxu0
  %1432 = vmatpush.bf16.msra.mxu0 %v1053
  %1433 = vmatpush.bf16.msra.mxu0 %v1052
  %1434 = vmatpush.bf16.msra.mxu0 %v1051
  %1435 = vmatpush.bf16.msra.mxu0 %v1050
  %1436 = vmatpush.bf16.msra.mxu0 %v1049
  %1437 = vmatpush.bf16.msra.mxu0 %v1048
  %1438 = vmatpush.bf16.msra.mxu0 %v1047
  %1439 = vmatpush.bf16.msra.mxu0 %v1046
  %1440 = vmatmul.bf16.gmra.mxu0 %v379
  %v1441 = vpop.f32.mrf.mxu0
  %v1442 = vadd.f32 %v1424, %v1441
  %v1443 = vpop.f32.mrf.mxu0
  %v1444 = vadd.f32 %v1426, %v1443
  %1445 = vmatmul.bf16.gmra.mxu0 %v395
  %v1446 = vpop.f32.mrf.mxu0
  %v1447 = vadd.f32 %v1429, %v1446
  %v1448 = vpop.f32.mrf.mxu0
  %1449 = vdwg.mxu0
  %1450 = vmatpush.bf16.msra.mxu0 %v1061
  %1451 = vmatpush.bf16.msra.mxu0 %v1060
  %1452 = vmatpush.bf16.msra.mxu0 %v1059
  %1453 = vmatpush.bf16.msra.mxu0 %v1058
  %1454 = vmatpush.bf16.msra.mxu0 %v1057
  %1455 = vmatpush.bf16.msra.mxu0 %v1056
  %1456 = vmatpush.bf16.msra.mxu0 %v1055
  %1457 = vmatpush.bf16.msra.mxu0 %v1054
  %1458 = vmatmul.bf16.gmra.mxu0 %v380
  %v1459 = vpop.f32.mrf.mxu0
  %v1460 = vadd.f32 %v1442, %v1459
  %v1461 = vpop.f32.mrf.mxu0
  %v1462 = vadd.f32 %v1444, %v1461
  %1463 = vmatmul.bf16.gmra.mxu0 %v396
  %v1464 = vpop.f32.mrf.mxu0
  %v1465 = vadd.f32 %v1447, %v1464
  %v1466 = vpop.f32.mrf.mxu0
  %1467 = vdwg.mxu0
  %1468 = vmatpush.bf16.msra.mxu0 %v1069
  %1469 = vmatpush.bf16.msra.mxu0 %v1068
  %1470 = vmatpush.bf16.msra.mxu0 %v1067
  %1471 = vmatpush.bf16.msra.mxu0 %v1066
  %1472 = vmatpush.bf16.msra.mxu0 %v1065
  %1473 = vmatpush.bf16.msra.mxu0 %v1064
  %1474 = vmatpush.bf16.msra.mxu0 %v1063
  %1475 = vmatpush.bf16.msra.mxu0 %v1062
  %1476 = vmatmul.bf16.gmra.mxu0 %v381
  %v1477 = vpop.f32.mrf.mxu0
  %v1478 = vadd.f32 %v1460, %v1477
  %v1479 = vpop.f32.mrf.mxu0
  %v1480 = vadd.f32 %v1462, %v1479
  %1481 = vmatmul.bf16.gmra.mxu0 %v397
  %v1482 = vpop.f32.mrf.mxu0
  %v1483 = vadd.f32 %v1465, %v1482
  %v1484 = vpop.f32.mrf.mxu0
  %1485 = vdwg.mxu0
  %1486 = vst [vmem:[%s2] sm:$0xff] %v1478
  %1487 = vst [vmem:[%s2 + $0x8] sm:$0xff] %v1480
  %1488 = vst [vmem:[%s2 + $0x10] sm:$0xff] %v1483
  %v1489 = vadd.f32 %v1478, %v1480
  %v1490 = vadd.f32 %v1489, %v1483
  %v1491 = vrot.slane %v1490, 4
  %v1492 = vadd.f32 %v1490, %v1491
  %v1493 = vrot.slane %v1492, 2
  %v1494 = vadd.f32 %v1492, %v1493
  %v1495 = vrot.slane %v1494, 1
  %v1496 = vadd.f32 %v1494, %v1495
  %v1497 = vmul.f32 %v1478, %v1478
  %v1498 = vmul.f32 %v1480, %v1480
  %v1499 = vmul.f32 %v1483, %v1483
  %v1500 = vadd.f32 %v1497, %v1498
  %v1501 = vadd.f32 %v1500, %v1499
  %v1502 = vrot.slane %v1501, 4
  %v1503 = vadd.f32 %v1501, %v1502
  %v1504 = vrot.slane %v1503, 2
  %v1505 = vadd.f32 %v1503, %v1504
  %v1506 = vrot.slane %v1505, 1
  %v1507 = vadd.f32 %v1505, %v1506
  %1508 = vst [vmem:[%s3] sm:$0xff] %v1496
  %1509 = vst [vmem:[%s4] sm:$0xff] %v1507
  // Predicated region
  $region10: #{_lambda_.13} parent=0 // pred_check
    _
  $region11: #{_lambda_.13} parent=0 // pred_check_branch
    %1511 = sbr.rel (0) target = $region13
  $region12: #{_lambda_.13} parent=0 // pred_region
    _
  $region13: #{_lambda_.13} parent=0 // pred_fallthru
    _
  // Predicated region
  $region14: #{_lambda_.13} parent=0 // pred_check
    _
  $region15: #{_lambda_.13} parent=0 // pred_check_branch
    %1513 = sbr.rel (0) target = $region17
  $region16: #{_lambda_.13} parent=0 // pred_region
    _
  $region17: #{_lambda_.13} parent=0 // pred_fallthru
    _
  // Predicated region
  $region18: #{_lambda_.13} parent=0 // pred_check
    _
  $region19: #{_lambda_.13} parent=0 // pred_check_branch
    %1515 = sbr.rel (0) target = $region21
  $region20: #{_lambda_.13} parent=0 // pred_region
    _
  $region21: #{_lambda_.13} parent=0 // pred_fallthru
    _
  // Predicated region
  $region22: #{_lambda_.13} parent=0 // pred_check
    _
  $region23: #{_lambda_.13} parent=0 // pred_check_branch
    %1517 = sbr.rel (0) target = $region25
  $region24: #{_lambda_.13} parent=0 // pred_region
    _
  $region25: #{_lambda_.13} parent=0 // pred_fallthru
    _
  // Predicated region
  $region26: #{_lambda_.13} parent=0 // pred_check
    _
  $region27: #{_lambda_.13} parent=0 // pred_check_branch
    %1519 = sbr.rel (0) target = $region29
  $region28: #{_lambda_.13} parent=0 // pred_region
    _
  $region29: #{_lambda_.13} parent=0 // pred_fallthru
    _
  // Predicated region
  $region30: #{_lambda_.13} parent=0 // pred_check
    _
  $region31: #{_lambda_.13} parent=0 // pred_check_branch
    %1521 = sbr.rel (0) target = $region33
  $region32: #{_lambda_.13} parent=0 // pred_region
    _
  $region33: #{_lambda_.13} parent=0 // pred_fallthru
    _

// kernel: _lambda_.15
$region0: #{_lambda_.15}
  #allocation0 [shape = 'u32[]', space=smem, size = 0x4, offset = 0x4, fixed_abs, tag = 'smem constant byte address 0x4 - core index']
  #allocation1 [shape = 'u32[72,128]{1,0:T(1,128)}', space=vmem, size = 0x9000, scoped, tag = 'internal scratch']
  %s0 = inlined_call_operand.vmem [shape: bf16[8,2048], index: 0, kind: input, shape index: {}]
  %s1 = inlined_call_operand.vmem [shape: bf16[2048,128], index: 1, kind: input, shape index: {}]
  %s2 = inlined_call_operand.vmem [shape: f32[1,128], index: 2, kind: input, shape index: {}]
  %s3 = inlined_call_operand.vmem [shape: f32[8,128], index: 3, kind: output, shape index: {}]
  %s4 = sld [smem:[#allocation0]]
  $region22: #{_lambda_.15} parent=0
    _
  %s6 = ssub.s32 1, %s4
  %s7 = scalar_select 0, %s6, %s4
  // Predicated region
  $region2: #{_lambda_.15} parent=0 // pred_check
    _
  $region3: #{_lambda_.15} parent=0 // pred_check_branch
    %9 = sbr.rel (0) target = $region5
  $region4: #{_lambda_.15} parent=0 // pred_region
    _
  $region5: #{_lambda_.15} parent=0 // pred_fallthru
    _
  // Predicated region
  $region6: #{_lambda_.15} parent=0 // pred_check
    _
  $region7: #{_lambda_.15} parent=0 // pred_check_branch
    %11 = sbr.rel (0) target = $region9
  $region8: #{_lambda_.15} parent=0 // pred_region
    _
  $region9: #{_lambda_.15} parent=0 // pred_fallthru
    _
  // Predicated region
  $region10: #{_lambda_.15} parent=0 // pred_check
    _
  $region11: #{_lambda_.15} parent=0 // pred_check_branch
    %13 = sbr.rel (0) target = $region13
  $region12: #{_lambda_.15} parent=0 // pred_region
    _
  $region13: #{_lambda_.15} parent=0 // pred_fallthru
    _
  %v14 = vld [vmem:[%s0] sm:$0xff]
  %v15 = vld [vmem:[%s0 + $0x8] sm:$0xff]
  %v16 = vld [vmem:[%s0 + $0x10] sm:$0xff]
  %v17 = vld [vmem:[%s0 + $0x18] sm:$0xff]
  %v18 = vld [vmem:[%s0 + $0x20] sm:$0xff]
  %v19 = vld [vmem:[%s0 + $0x28] sm:$0xff]
  %v20 = vld [vmem:[%s0 + $0x30] sm:$0xff]
  %v21 = vld [vmem:[%s0 + $0x38] sm:$0xff]
  %v22 = vld [vmem:[%s1] sm:$0xf]
  %v23 = vld [vmem:[%s1 + $0x4] sm:$0xf]
  %v24 = vld [vmem:[%s1 + $0x8] sm:$0xf]
  %v25 = vld [vmem:[%s1 + $0xc] sm:$0xf]
  %v26 = vld [vmem:[%s1 + $0x10] sm:$0xf]
  %v27 = vld [vmem:[%s1 + $0x14] sm:$0xf]
  %v28 = vld [vmem:[%s1 + $0x18] sm:$0xf]
  %v29 = vld [vmem:[%s1 + $0x1c] sm:$0xf]
  %v30 = vld [vmem:[%s1 + $0x20] sm:$0xf]
  %v31 = vld [vmem:[%s1 + $0x24] sm:$0xf]
  %v32 = vld [vmem:[%s1 + $0x28] sm:$0xf]
  %v33 = vld [vmem:[%s1 + $0x2c] sm:$0xf]
  %v34 = vld [vmem:[%s1 + $0x30] sm:$0xf]
  %v35 = vld [vmem:[%s1 + $0x34] sm:$0xf]
  %v36 = vld [vmem:[%s1 + $0x38] sm:$0xf]
  %v37 = vld [vmem:[%s1 + $0x3c] sm:$0xf]
  %v38 = vld [vmem:[%s1 + $0x40] sm:$0xf]
  %v39 = vld [vmem:[%s1 + $0x44] sm:$0xf]
  %v40 = vld [vmem:[%s1 + $0x48] sm:$0xf]
  %v41 = vld [vmem:[%s1 + $0x4c] sm:$0xf]
  %v42 = vld [vmem:[%s1 + $0x50] sm:$0xf]
  %v43 = vld [vmem:[%s1 + $0x54] sm:$0xf]
  %v44 = vld [vmem:[%s1 + $0x58] sm:$0xf]
  %v45 = vld [vmem:[%s1 + $0x5c] sm:$0xf]
  %v46 = vld [vmem:[%s1 + $0x60] sm:$0xf]
  %v47 = vld [vmem:[%s1 + $0x64] sm:$0xf]
  %v48 = vld [vmem:[%s1 + $0x68] sm:$0xf]
  %v49 = vld [vmem:[%s1 + $0x6c] sm:$0xf]
  %v50 = vld [vmem:[%s1 + $0x70] sm:$0xf]
  %v51 = vld [vmem:[%s1 + $0x74] sm:$0xf]
  %v52 = vld [vmem:[%s1 + $0x78] sm:$0xf]
  %v53 = vld [vmem:[%s1 + $0x7c] sm:$0xf]
  %v54 = vld [vmem:[%s1 + $0x80] sm:$0xf]
  %v55 = vld [vmem:[%s1 + $0x84] sm:$0xf]
  %v56 = vld [vmem:[%s1 + $0x88] sm:$0xf]
  %v57 = vld [vmem:[%s1 + $0x8c] sm:$0xf]
  %v58 = vld [vmem:[%s1 + $0x90] sm:$0xf]
  %v59 = vld [vmem:[%s1 + $0x94] sm:$0xf]
  %v60 = vld [vmem:[%s1 + $0x98] sm:$0xf]
  %v61 = vld [vmem:[%s1 + $0x9c] sm:$0xf]
  %v62 = vld [vmem:[%s1 + $0xa0] sm:$0xf]
  %v63 = vld [vmem:[%s1 + $0xa4] sm:$0xf]
  %v64 = vld [vmem:[%s1 + $0xa8] sm:$0xf]
  %v65 = vld [vmem:[%s1 + $0xac] sm:$0xf]
  %v66 = vld [vmem:[%s1 + $0xb0] sm:$0xf]
  %v67 = vld [vmem:[%s1 + $0xb4] sm:$0xf]
  %v68 = vld [vmem:[%s1 + $0xb8] sm:$0xf]
  %v69 = vld [vmem:[%s1 + $0xbc] sm:$0xf]
  %v70 = vld [vmem:[%s1 + $0xc0] sm:$0xf]
  %v71 = vld [vmem:[%s1 + $0xc4] sm:$0xf]
  %v72 = vld [vmem:[%s1 + $0xc8] sm:$0xf]
  %v73 = vld [vmem:[%s1 + $0xcc] sm:$0xf]
  %v74 = vld [vmem:[%s1 + $0xd0] sm:$0xf]
  %v75 = vld [vmem:[%s1 + $0xd4] sm:$0xf]
  %v76 = vld [vmem:[%s1 + $0xd8] sm:$0xf]
  %v77 = vld [vmem:[%s1 + $0xdc] sm:$0xf]
  %v78 = vld [vmem:[%s1 + $0xe0] sm:$0xf]
  %v79 = vld [vmem:[%s1 + $0xe4] sm:$0xf]
  %v80 = vld [vmem:[%s1 + $0xe8] sm:$0xf]
  %v81 = vld [vmem:[%s1 + $0xec] sm:$0xf]
  %v82 = vld [vmem:[%s1 + $0xf0] sm:$0xf]
  %v83 = vld [vmem:[%s1 + $0xf4] sm:$0xf]
  %v84 = vld [vmem:[%s1 + $0xf8] sm:$0xf]
  %v85 = vld [vmem:[%s1 + $0xfc] sm:$0xf]
  %v86 = vld [vmem:[%s1 + $0x100] sm:$0xf]
  %v87 = vld [vmem:[%s1 + $0x104] sm:$0xf]
  %v88 = vld [vmem:[%s1 + $0x108] sm:$0xf]
  %v89 = vld [vmem:[%s1 + $0x10c] sm:$0xf]
  %v90 = vld [vmem:[%s1 + $0x110] sm:$0xf]
  %v91 = vld [vmem:[%s1 + $0x114] sm:$0xf]
  %v92 = vld [vmem:[%s1 + $0x118] sm:$0xf]
  %v93 = vld [vmem:[%s1 + $0x11c] sm:$0xf]
  %v94 = vld [vmem:[%s1 + $0x120] sm:$0xf]
  %v95 = vld [vmem:[%s1 + $0x124] sm:$0xf]
  %v96 = vld [vmem:[%s1 + $0x128] sm:$0xf]
  %v97 = vld [vmem:[%s1 + $0x12c] sm:$0xf]
  %v98 = vld [vmem:[%s1 + $0x130] sm:$0xf]
  %v99 = vld [vmem:[%s1 + $0x134] sm:$0xf]
  %v100 = vld [vmem:[%s1 + $0x138] sm:$0xf]
  %v101 = vld [vmem:[%s1 + $0x13c] sm:$0xf]
  %v102 = vld [vmem:[%s1 + $0x140] sm:$0xf]
  %v103 = vld [vmem:[%s1 + $0x144] sm:$0xf]
  %v104 = vld [vmem:[%s1 + $0x148] sm:$0xf]
  %v105 = vld [vmem:[%s1 + $0x14c] sm:$0xf]
  %v106 = vld [vmem:[%s1 + $0x150] sm:$0xf]
  %v107 = vld [vmem:[%s1 + $0x154] sm:$0xf]
  %v108 = vld [vmem:[%s1 + $0x158] sm:$0xf]
  %v109 = vld [vmem:[%s1 + $0x15c] sm:$0xf]
  %v110 = vld [vmem:[%s1 + $0x160] sm:$0xf]
  %v111 = vld [vmem:[%s1 + $0x164] sm:$0xf]
  %v112 = vld [vmem:[%s1 + $0x168] sm:$0xf]
  %v113 = vld [vmem:[%s1 + $0x16c] sm:$0xf]
  %v114 = vld [vmem:[%s1 + $0x170] sm:$0xf]
  %v115 = vld [vmem:[%s1 + $0x174] sm:$0xf]
  %v116 = vld [vmem:[%s1 + $0x178] sm:$0xf]
  %v117 = vld [vmem:[%s1 + $0x17c] sm:$0xf]
  %v118 = vld [vmem:[%s1 + $0x180] sm:$0xf]
  %v119 = vld [vmem:[%s1 + $0x184] sm:$0xf]
  %v120 = vld [vmem:[%s1 + $0x188] sm:$0xf]
  %v121 = vld [vmem:[%s1 + $0x18c] sm:$0xf]
  %v122 = vld [vmem:[%s1 + $0x190] sm:$0xf]
  %v123 = vld [vmem:[%s1 + $0x194] sm:$0xf]
  %v124 = vld [vmem:[%s1 + $0x198] sm:$0xf]
  %v125 = vld [vmem:[%s1 + $0x19c] sm:$0xf]
  %v126 = vld [vmem:[%s1 + $0x1a0] sm:$0xf]
  %v127 = vld [vmem:[%s1 + $0x1a4] sm:$0xf]
  %v128 = vld [vmem:[%s1 + $0x1a8] sm:$0xf]
  %v129 = vld [vmem:[%s1 + $0x1ac] sm:$0xf]
  %v130 = vld [vmem:[%s1 + $0x1b0] sm:$0xf]
  %v131 = vld [vmem:[%s1 + $0x1b4] sm:$0xf]
  %v132 = vld [vmem:[%s1 + $0x1b8] sm:$0xf]
  %v133 = vld [vmem:[%s1 + $0x1bc] sm:$0xf]
  %v134 = vld [vmem:[%s1 + $0x1c0] sm:$0xf]
  %v135 = vld [vmem:[%s1 + $0x1c4] sm:$0xf]
  %v136 = vld [vmem:[%s1 + $0x1c8] sm:$0xf]
  %v137 = vld [vmem:[%s1 + $0x1cc] sm:$0xf]
  %v138 = vld [vmem:[%s1 + $0x1d0] sm:$0xf]
  %v139 = vld [vmem:[%s1 + $0x1d4] sm:$0xf]
  %v140 = vld [vmem:[%s1 + $0x1d8] sm:$0xf]
  %v141 = vld [vmem:[%s1 + $0x1dc] sm:$0xf]
  %v142 = vld [vmem:[%s1 + $0x1e0] sm:$0xf]
  %v143 = vld [vmem:[%s1 + $0x1e4] sm:$0xf]
  %v144 = vld [vmem:[%s1 + $0x1e8] sm:$0xf]
  %v145 = vld [vmem:[%s1 + $0x1ec] sm:$0xf]
  %v146 = vld [vmem:[%s1 + $0x1f0] sm:$0xf]
  %v147 = vld [vmem:[%s1 + $0x1f4] sm:$0xf]
  %v148 = vld [vmem:[%s1 + $0x1f8] sm:$0xf]
  %v149 = vld [vmem:[%s1 + $0x1fc] sm:$0xf]
  %v150 = vld [vmem:[%s1 + $0x200] sm:$0xf]
  %v151 = vld [vmem:[%s1 + $0x204] sm:$0xf]
  %v152 = vld [vmem:[%s1 + $0x208] sm:$0xf]
  %v153 = vld [vmem:[%s1 + $0x20c] sm:$0xf]
  %v154 = vld [vmem:[%s1 + $0x210] sm:$0xf]
  %v155 = vld [vmem:[%s1 + $0x214] sm:$0xf]
  %v156 = vld [vmem:[%s1 + $0x218] sm:$0xf]
  %v157 = vld [vmem:[%s1 + $0x21c] sm:$0xf]
  %v158 = vld [vmem:[%s1 + $0x220] sm:$0xf]
  %v159 = vld [vmem:[%s1 + $0x224] sm:$0xf]
  %v160 = vld [vmem:[%s1 + $0x228] sm:$0xf]
  %v161 = vld [vmem:[%s1 + $0x22c] sm:$0xf]
  %v162 = vld [vmem:[%s1 + $0x230] sm:$0xf]
  %v163 = vld [vmem:[%s1 + $0x234] sm:$0xf]
  %v164 = vld [vmem:[%s1 + $0x238] sm:$0xf]
  %v165 = vld [vmem:[%s1 + $0x23c] sm:$0xf]
  %v166 = vld [vmem:[%s1 + $0x240] sm:$0xf]
  %v167 = vld [vmem:[%s1 + $0x244] sm:$0xf]
  %v168 = vld [vmem:[%s1 + $0x248] sm:$0xf]
  %v169 = vld [vmem:[%s1 + $0x24c] sm:$0xf]
  %v170 = vld [vmem:[%s1 + $0x250] sm:$0xf]
  %v171 = vld [vmem:[%s1 + $0x254] sm:$0xf]
  %v172 = vld [vmem:[%s1 + $0x258] sm:$0xf]
  %v173 = vld [vmem:[%s1 + $0x25c] sm:$0xf]
  %v174 = vld [vmem:[%s1 + $0x260] sm:$0xf]
  %v175 = vld [vmem:[%s1 + $0x264] sm:$0xf]
  %v176 = vld [vmem:[%s1 + $0x268] sm:$0xf]
  %v177 = vld [vmem:[%s1 + $0x26c] sm:$0xf]
  %v178 = vld [vmem:[%s1 + $0x270] sm:$0xf]
  %v179 = vld [vmem:[%s1 + $0x274] sm:$0xf]
  %v180 = vld [vmem:[%s1 + $0x278] sm:$0xf]
  %v181 = vld [vmem:[%s1 + $0x27c] sm:$0xf]
  %v182 = vld [vmem:[%s1 + $0x280] sm:$0xf]
  %v183 = vld [vmem:[%s1 + $0x284] sm:$0xf]
  %v184 = vld [vmem:[%s1 + $0x288] sm:$0xf]
  %v185 = vld [vmem:[%s1 + $0x28c] sm:$0xf]
  %v186 = vld [vmem:[%s1 + $0x290] sm:$0xf]
  %v187 = vld [vmem:[%s1 + $0x294] sm:$0xf]
  %v188 = vld [vmem:[%s1 + $0x298] sm:$0xf]
  %v189 = vld [vmem:[%s1 + $0x29c] sm:$0xf]
  %v190 = vld [vmem:[%s1 + $0x2a0] sm:$0xf]
  %v191 = vld [vmem:[%s1 + $0x2a4] sm:$0xf]
  %v192 = vld [vmem:[%s1 + $0x2a8] sm:$0xf]
  %v193 = vld [vmem:[%s1 + $0x2ac] sm:$0xf]
  %v194 = vld [vmem:[%s1 + $0x2b0] sm:$0xf]
  %v195 = vld [vmem:[%s1 + $0x2b4] sm:$0xf]
  %v196 = vld [vmem:[%s1 + $0x2b8] sm:$0xf]
  %v197 = vld [vmem:[%s1 + $0x2bc] sm:$0xf]
  %v198 = vld [vmem:[%s1 + $0x2c0] sm:$0xf]
  %v199 = vld [vmem:[%s1 + $0x2c4] sm:$0xf]
  %v200 = vld [vmem:[%s1 + $0x2c8] sm:$0xf]
  %v201 = vld [vmem:[%s1 + $0x2cc] sm:$0xf]
  %v202 = vld [vmem:[%s1 + $0x2d0] sm:$0xf]
  %v203 = vld [vmem:[%s1 + $0x2d4] sm:$0xf]
  %v204 = vld [vmem:[%s1 + $0x2d8] sm:$0xf]
  %v205 = vld [vmem:[%s1 + $0x2dc] sm:$0xf]
  %v206 = vld [vmem:[%s1 + $0x2e0] sm:$0xf]
  %v207 = vld [vmem:[%s1 + $0x2e4] sm:$0xf]
  %v208 = vld [vmem:[%s1 + $0x2e8] sm:$0xf]
  %v209 = vld [vmem:[%s1 + $0x2ec] sm:$0xf]
  %v210 = vld [vmem:[%s1 + $0x2f0] sm:$0xf]
  %v211 = vld [vmem:[%s1 + $0x2f4] sm:$0xf]
  %v212 = vld [vmem:[%s1 + $0x2f8] sm:$0xf]
  %v213 = vld [vmem:[%s1 + $0x2fc] sm:$0xf]
  %v214 = vld [vmem:[%s1 + $0x300] sm:$0xf]
  %v215 = vld [vmem:[%s1 + $0x304] sm:$0xf]
  %v216 = vld [vmem:[%s1 + $0x308] sm:$0xf]
  %v217 = vld [vmem:[%s1 + $0x30c] sm:$0xf]
  %v218 = vld [vmem:[%s1 + $0x310] sm:$0xf]
  %v219 = vld [vmem:[%s1 + $0x314] sm:$0xf]
  %v220 = vld [vmem:[%s1 + $0x318] sm:$0xf]
  %v221 = vld [vmem:[%s1 + $0x31c] sm:$0xf]
  %v222 = vld [vmem:[%s1 + $0x320] sm:$0xf]
  %v223 = vld [vmem:[%s1 + $0x324] sm:$0xf]
  %v224 = vld [vmem:[%s1 + $0x328] sm:$0xf]
  %v225 = vld [vmem:[%s1 + $0x32c] sm:$0xf]
  %v226 = vld [vmem:[%s1 + $0x330] sm:$0xf]
  %v227 = vld [vmem:[%s1 + $0x334] sm:$0xf]
  %v228 = vld [vmem:[%s1 + $0x338] sm:$0xf]
  %v229 = vld [vmem:[%s1 + $0x33c] sm:$0xf]
  %v230 = vld [vmem:[%s1 + $0x340] sm:$0xf]
  %v231 = vld [vmem:[%s1 + $0x344] sm:$0xf]
  %v232 = vld [vmem:[%s1 + $0x348] sm:$0xf]
  %v233 = vld [vmem:[%s1 + $0x34c] sm:$0xf]
  %v234 = vld [vmem:[%s1 + $0x350] sm:$0xf]
  %v235 = vld [vmem:[%s1 + $0x354] sm:$0xf]
  %v236 = vld [vmem:[%s1 + $0x358] sm:$0xf]
  %v237 = vld [vmem:[%s1 + $0x35c] sm:$0xf]
  %v238 = vld [vmem:[%s1 + $0x360] sm:$0xf]
  %v239 = vld [vmem:[%s1 + $0x364] sm:$0xf]
  %v240 = vld [vmem:[%s1 + $0x368] sm:$0xf]
  %v241 = vld [vmem:[%s1 + $0x36c] sm:$0xf]
  %v242 = vld [vmem:[%s1 + $0x370] sm:$0xf]
  %v243 = vld [vmem:[%s1 + $0x374] sm:$0xf]
  %v244 = vld [vmem:[%s1 + $0x378] sm:$0xf]
  %v245 = vld [vmem:[%s1 + $0x37c] sm:$0xf]
  %v246 = vld [vmem:[%s1 + $0x380] sm:$0xf]
  %v247 = vld [vmem:[%s1 + $0x384] sm:$0xf]
  %v248 = vld [vmem:[%s1 + $0x388] sm:$0xf]
  %v249 = vld [vmem:[%s1 + $0x38c] sm:$0xf]
  %v250 = vld [vmem:[%s1 + $0x390] sm:$0xf]
  %v251 = vld [vmem:[%s1 + $0x394] sm:$0xf]
  %v252 = vld [vmem:[%s1 + $0x398] sm:$0xf]
  %v253 = vld [vmem:[%s1 + $0x39c] sm:$0xf]
  %v254 = vld [vmem:[%s1 + $0x3a0] sm:$0xf]
  %v255 = vld [vmem:[%s1 + $0x3a4] sm:$0xf]
  %v256 = vld [vmem:[%s1 + $0x3a8] sm:$0xf]
  %v257 = vld [vmem:[%s1 + $0x3ac] sm:$0xf]
  %v258 = vld [vmem:[%s1 + $0x3b0] sm:$0xf]
  %v259 = vld [vmem:[%s1 + $0x3b4] sm:$0xf]
  %v260 = vld [vmem:[%s1 + $0x3b8] sm:$0xf]
  %v261 = vld [vmem:[%s1 + $0x3bc] sm:$0xf]
  %v262 = vld [vmem:[%s1 + $0x3c0] sm:$0xf]
  %v263 = vld [vmem:[%s1 + $0x3c4] sm:$0xf]
  %v264 = vld [vmem:[%s1 + $0x3c8] sm:$0xf]
  %v265 = vld [vmem:[%s1 + $0x3cc] sm:$0xf]
  %v266 = vld [vmem:[%s1 + $0x3d0] sm:$0xf]
  %v267 = vld [vmem:[%s1 + $0x3d4] sm:$0xf]
  %v268 = vld [vmem:[%s1 + $0x3d8] sm:$0xf]
  %v269 = vld [vmem:[%s1 + $0x3dc] sm:$0xf]
  %v270 = vld [vmem:[%s1 + $0x3e0] sm:$0xf]
  %v271 = vld [vmem:[%s1 + $0x3e4] sm:$0xf]
  %v272 = vld [vmem:[%s1 + $0x3e8] sm:$0xf]
  %v273 = vld [vmem:[%s1 + $0x3ec] sm:$0xf]
  %v274 = vld [vmem:[%s1 + $0x3f0] sm:$0xf]
  %v275 = vld [vmem:[%s1 + $0x3f4] sm:$0xf]
  %v276 = vld [vmem:[%s1 + $0x3f8] sm:$0xf]
  %v277 = vld [vmem:[%s1 + $0x3fc] sm:$0xf]
  %v278 = vld [vmem:[%s2] sm:$0x1]
  %v280 = vperm.slane %v278, 0
  %v290 = vunpack.c.l.b16 %v14
  %v291 = vunpack.c.h.b16 %v14
  %v292 = vunpack.c.l.b16 %v15
  %v293 = vunpack.c.h.b16 %v15
  %v294 = vunpack.c.l.b16 %v16
  %v295 = vunpack.c.h.b16 %v16
  %v296 = vunpack.c.l.b16 %v17
  %v297 = vunpack.c.h.b16 %v17
  %v298 = vunpack.c.l.b16 %v18
  %v299 = vunpack.c.h.b16 %v18
  %v300 = vunpack.c.l.b16 %v19
  %v301 = vunpack.c.h.b16 %v19
  %v302 = vunpack.c.l.b16 %v20
  %v303 = vunpack.c.h.b16 %v20
  %v304 = vunpack.c.l.b16 %v21
  %v305 = vunpack.c.h.b16 %v21
  %v306 = vpack.c.b16 %v290, %v290
  %v307 = vpack.c.b16 %v291, %v291
  %v308 = vpack.c.b16 %v292, %v292
  %v309 = vpack.c.b16 %v293, %v293
  %v310 = vpack.c.b16 %v294, %v294
  %v311 = vpack.c.b16 %v295, %v295
  %v312 = vpack.c.b16 %v296, %v296
  %v313 = vpack.c.b16 %v297, %v297
  %v314 = vpack.c.b16 %v298, %v298
  %v315 = vpack.c.b16 %v299, %v299
  %v316 = vpack.c.b16 %v300, %v300
  %v317 = vpack.c.b16 %v301, %v301
  %v318 = vpack.c.b16 %v302, %v302
  %v319 = vpack.c.b16 %v303, %v303
  %v320 = vpack.c.b16 %v304, %v304
  %v321 = vpack.c.b16 %v305, %v305
  %v594 = vunpack.c.l.b16 %v22
  %v595 = vunpack.c.l.b16 %v23
  %v596 = vunpack.c.l.b16 %v24
  %v597 = vunpack.c.l.b16 %v25
  %v598 = vunpack.c.l.b16 %v26
  %v599 = vunpack.c.l.b16 %v27
  %v600 = vunpack.c.l.b16 %v28
  %v601 = vunpack.c.l.b16 %v29
  %v602 = vunpack.c.l.b16 %v30
  %v603 = vunpack.c.l.b16 %v31
  %v604 = vunpack.c.l.b16 %v32
  %v605 = vunpack.c.l.b16 %v33
  %v606 = vunpack.c.l.b16 %v34
  %v607 = vunpack.c.l.b16 %v35
  %v608 = vunpack.c.l.b16 %v36
  %v609 = vunpack.c.l.b16 %v37
  %v610 = vunpack.c.l.b16 %v38
  %v611 = vunpack.c.l.b16 %v39
  %v612 = vunpack.c.l.b16 %v40
  %v613 = vunpack.c.l.b16 %v41
  %v614 = vunpack.c.l.b16 %v42
  %v615 = vunpack.c.l.b16 %v43
  %v616 = vunpack.c.l.b16 %v44
  %v617 = vunpack.c.l.b16 %v45
  %v618 = vunpack.c.l.b16 %v46
  %v619 = vunpack.c.l.b16 %v47
  %v620 = vunpack.c.l.b16 %v48
  %v621 = vunpack.c.l.b16 %v49
  %v622 = vunpack.c.l.b16 %v50
  %v623 = vunpack.c.l.b16 %v51
  %v624 = vunpack.c.l.b16 %v52
  %v625 = vunpack.c.l.b16 %v53
  %v626 = vunpack.c.l.b16 %v54
  %v627 = vunpack.c.l.b16 %v55
  %v628 = vunpack.c.l.b16 %v56
  %v629 = vunpack.c.l.b16 %v57
  %v630 = vunpack.c.l.b16 %v58
  %v631 = vunpack.c.l.b16 %v59
  %v632 = vunpack.c.l.b16 %v60
  %v633 = vunpack.c.l.b16 %v61
  %v634 = vunpack.c.l.b16 %v62
  %v635 = vunpack.c.l.b16 %v63
  %v636 = vunpack.c.l.b16 %v64
  %v637 = vunpack.c.l.b16 %v65
  %v638 = vunpack.c.l.b16 %v66
  %v639 = vunpack.c.l.b16 %v67
  %v640 = vunpack.c.l.b16 %v68
  %v641 = vunpack.c.l.b16 %v69
  %v642 = vunpack.c.l.b16 %v70
  %v643 = vunpack.c.l.b16 %v71
  %v644 = vunpack.c.l.b16 %v72
  %v645 = vunpack.c.l.b16 %v73
  %v646 = vunpack.c.l.b16 %v74
  %v647 = vunpack.c.l.b16 %v75
  %v648 = vunpack.c.l.b16 %v76
  %v649 = vunpack.c.l.b16 %v77
  %v650 = vunpack.c.l.b16 %v78
  %v651 = vunpack.c.l.b16 %v79
  %v652 = vunpack.c.l.b16 %v80
  %v653 = vunpack.c.l.b16 %v81
  %v654 = vunpack.c.l.b16 %v82
  %v655 = vunpack.c.l.b16 %v83
  %v656 = vunpack.c.l.b16 %v84
  %v657 = vunpack.c.l.b16 %v85
  %v658 = vunpack.c.l.b16 %v86
  %v659 = vunpack.c.l.b16 %v87
  %v660 = vunpack.c.l.b16 %v88
  %v661 = vunpack.c.l.b16 %v89
  %v662 = vunpack.c.l.b16 %v90
  %v663 = vunpack.c.l.b16 %v91
  %v664 = vunpack.c.l.b16 %v92
  %v665 = vunpack.c.l.b16 %v93
  %v666 = vunpack.c.l.b16 %v94
  %v667 = vunpack.c.l.b16 %v95
  %v668 = vunpack.c.l.b16 %v96
  %v669 = vunpack.c.l.b16 %v97
  %v670 = vunpack.c.l.b16 %v98
  %v671 = vunpack.c.l.b16 %v99
  %v672 = vunpack.c.l.b16 %v100
  %v673 = vunpack.c.l.b16 %v101
  %v674 = vunpack.c.l.b16 %v102
  %v675 = vunpack.c.l.b16 %v103
  %v676 = vunpack.c.l.b16 %v104
  %v677 = vunpack.c.l.b16 %v105
  %v678 = vunpack.c.l.b16 %v106
  %v679 = vunpack.c.l.b16 %v107
  %v680 = vunpack.c.l.b16 %v108
  %v681 = vunpack.c.l.b16 %v109
  %v682 = vunpack.c.l.b16 %v110
  %v683 = vunpack.c.l.b16 %v111
  %v684 = vunpack.c.l.b16 %v112
  %v685 = vunpack.c.l.b16 %v113
  %v686 = vunpack.c.l.b16 %v114
  %v687 = vunpack.c.l.b16 %v115
  %v688 = vunpack.c.l.b16 %v116
  %v689 = vunpack.c.l.b16 %v117
  %v690 = vunpack.c.l.b16 %v118
  %v691 = vunpack.c.l.b16 %v119
  %v692 = vunpack.c.l.b16 %v120
  %v693 = vunpack.c.l.b16 %v121
  %v694 = vunpack.c.l.b16 %v122
  %v695 = vunpack.c.l.b16 %v123
  %v696 = vunpack.c.l.b16 %v124
  %v697 = vunpack.c.l.b16 %v125
  %v698 = vunpack.c.l.b16 %v126
  %v699 = vunpack.c.l.b16 %v127
  %v700 = vunpack.c.l.b16 %v128
  %v701 = vunpack.c.l.b16 %v129
  %v702 = vunpack.c.l.b16 %v130
  %v703 = vunpack.c.l.b16 %v131
  %v704 = vunpack.c.l.b16 %v132
  %v705 = vunpack.c.l.b16 %v133
  %v706 = vunpack.c.l.b16 %v134
  %v707 = vunpack.c.l.b16 %v135
  %v708 = vunpack.c.l.b16 %v136
  %v709 = vunpack.c.l.b16 %v137
  %v710 = vunpack.c.l.b16 %v138
  %v711 = vunpack.c.l.b16 %v139
  %v712 = vunpack.c.l.b16 %v140
  %v713 = vunpack.c.l.b16 %v141
  %v714 = vunpack.c.l.b16 %v142
  %v715 = vunpack.c.l.b16 %v143
  %v716 = vunpack.c.l.b16 %v144
  %v717 = vunpack.c.l.b16 %v145
  %v718 = vunpack.c.l.b16 %v146
  %v719 = vunpack.c.l.b16 %v147
  %v720 = vunpack.c.l.b16 %v148
  %v721 = vunpack.c.l.b16 %v149
  %v722 = vunpack.c.l.b16 %v150
  %v723 = vunpack.c.l.b16 %v151
  %v724 = vunpack.c.l.b16 %v152
  %v725 = vunpack.c.l.b16 %v153
  %v726 = vunpack.c.l.b16 %v154
  %v727 = vunpack.c.l.b16 %v155
  %v728 = vunpack.c.l.b16 %v156
  %v729 = vunpack.c.l.b16 %v157
  %v730 = vunpack.c.l.b16 %v158
  %v731 = vunpack.c.l.b16 %v159
  %v732 = vunpack.c.l.b16 %v160
  %v733 = vunpack.c.l.b16 %v161
  %v734 = vunpack.c.l.b16 %v162
  %v735 = vunpack.c.l.b16 %v163
  %v736 = vunpack.c.l.b16 %v164
  %v737 = vunpack.c.l.b16 %v165
  %v738 = vunpack.c.l.b16 %v166
  %v739 = vunpack.c.l.b16 %v167
  %v740 = vunpack.c.l.b16 %v168
  %v741 = vunpack.c.l.b16 %v169
  %v742 = vunpack.c.l.b16 %v170
  %v743 = vunpack.c.l.b16 %v171
  %v744 = vunpack.c.l.b16 %v172
  %v745 = vunpack.c.l.b16 %v173
  %v746 = vunpack.c.l.b16 %v174
  %v747 = vunpack.c.l.b16 %v175
  %v748 = vunpack.c.l.b16 %v176
  %v749 = vunpack.c.l.b16 %v177
  %v750 = vunpack.c.l.b16 %v178
  %v751 = vunpack.c.l.b16 %v179
  %v752 = vunpack.c.l.b16 %v180
  %v753 = vunpack.c.l.b16 %v181
  %v754 = vunpack.c.l.b16 %v182
  %v755 = vunpack.c.l.b16 %v183
  %v756 = vunpack.c.l.b16 %v184
  %v757 = vunpack.c.l.b16 %v185
  %v758 = vunpack.c.l.b16 %v186
  %v759 = vunpack.c.l.b16 %v187
  %v760 = vunpack.c.l.b16 %v188
  %v761 = vunpack.c.l.b16 %v189
  %v762 = vunpack.c.l.b16 %v190
  %v763 = vunpack.c.l.b16 %v191
  %v764 = vunpack.c.l.b16 %v192
  %v765 = vunpack.c.l.b16 %v193
  %v766 = vunpack.c.l.b16 %v194
  %v767 = vunpack.c.l.b16 %v195
  %v768 = vunpack.c.l.b16 %v196
  %v769 = vunpack.c.l.b16 %v197
  %v770 = vunpack.c.l.b16 %v198
  %v771 = vunpack.c.l.b16 %v199
  %v772 = vunpack.c.l.b16 %v200
  %v773 = vunpack.c.l.b16 %v201
  %v774 = vunpack.c.l.b16 %v202
  %v775 = vunpack.c.l.b16 %v203
  %v776 = vunpack.c.l.b16 %v204
  %v777 = vunpack.c.l.b16 %v205
  %v778 = vunpack.c.l.b16 %v206
  %v779 = vunpack.c.l.b16 %v207
  %v780 = vunpack.c.l.b16 %v208
  %v781 = vunpack.c.l.b16 %v209
  %v782 = vunpack.c.l.b16 %v210
  %v783 = vunpack.c.l.b16 %v211
  %v784 = vunpack.c.l.b16 %v212
  %v785 = vunpack.c.l.b16 %v213
  %v786 = vunpack.c.l.b16 %v214
  %v787 = vunpack.c.l.b16 %v215
  %v788 = vunpack.c.l.b16 %v216
  %v789 = vunpack.c.l.b16 %v217
  %v790 = vunpack.c.l.b16 %v218
  %v791 = vunpack.c.l.b16 %v219
  %v792 = vunpack.c.l.b16 %v220
  %v793 = vunpack.c.l.b16 %v221
  %v794 = vunpack.c.l.b16 %v222
  %v795 = vunpack.c.l.b16 %v223
  %v796 = vunpack.c.l.b16 %v224
  %v797 = vunpack.c.l.b16 %v225
  %v798 = vunpack.c.l.b16 %v226
  %v799 = vunpack.c.l.b16 %v227
  %v800 = vunpack.c.l.b16 %v228
  %v801 = vunpack.c.l.b16 %v229
  %v802 = vunpack.c.l.b16 %v230
  %v803 = vunpack.c.l.b16 %v231
  %v804 = vunpack.c.l.b16 %v232
  %v805 = vunpack.c.l.b16 %v233
  %v806 = vunpack.c.l.b16 %v234
  %v807 = vunpack.c.l.b16 %v235
  %v808 = vunpack.c.l.b16 %v236
  %v809 = vunpack.c.l.b16 %v237
  %v810 = vunpack.c.l.b16 %v238
  %v811 = vunpack.c.l.b16 %v239
  %v812 = vunpack.c.l.b16 %v240
  %v813 = vunpack.c.l.b16 %v241
  %v814 = vunpack.c.l.b16 %v242
  %v815 = vunpack.c.l.b16 %v243
  %v816 = vunpack.c.l.b16 %v244
  %v817 = vunpack.c.l.b16 %v245
  %v818 = vunpack.c.l.b16 %v246
  %v819 = vunpack.c.l.b16 %v247
  %v820 = vunpack.c.l.b16 %v248
  %v821 = vunpack.c.l.b16 %v249
  %v822 = vunpack.c.l.b16 %v250
  %v823 = vunpack.c.l.b16 %v251
  %v824 = vunpack.c.l.b16 %v252
  %v825 = vunpack.c.l.b16 %v253
  %v826 = vunpack.c.l.b16 %v254
  %v827 = vunpack.c.l.b16 %v255
  %v828 = vunpack.c.l.b16 %v256
  %v829 = vunpack.c.l.b16 %v257
  %v830 = vunpack.c.l.b16 %v258
  %v831 = vunpack.c.l.b16 %v259
  %v832 = vunpack.c.l.b16 %v260
  %v833 = vunpack.c.l.b16 %v261
  %v834 = vunpack.c.l.b16 %v262
  %v835 = vunpack.c.l.b16 %v263
  %v836 = vunpack.c.l.b16 %v264
  %v837 = vunpack.c.l.b16 %v265
  %v838 = vunpack.c.l.b16 %v266
  %v839 = vunpack.c.l.b16 %v267
  %v840 = vunpack.c.l.b16 %v268
  %v841 = vunpack.c.l.b16 %v269
  %v842 = vunpack.c.l.b16 %v270
  %v843 = vunpack.c.l.b16 %v271
  %v844 = vunpack.c.l.b16 %v272
  %v845 = vunpack.c.l.b16 %v273
  %v846 = vunpack.c.l.b16 %v274
  %v847 = vunpack.c.l.b16 %v275
  %v848 = vunpack.c.l.b16 %v276
  %v849 = vunpack.c.l.b16 %v277
  %v850 = vpack.c.b16 %v595, %v594
  %v851 = vpack.c.b16 %v597, %v596
  %v852 = vpack.c.b16 %v599, %v598
  %v853 = vpack.c.b16 %v601, %v600
  %v854 = vpack.c.b16 %v603, %v602
  %v855 = vpack.c.b16 %v605, %v604
  %v856 = vpack.c.b16 %v607, %v606
  %v857 = vpack.c.b16 %v609, %v608
  %v858 = vpack.c.b16 %v611, %v610
  %v859 = vpack.c.b16 %v613, %v612
  %v860 = vpack.c.b16 %v615, %v614
  %v861 = vpack.c.b16 %v617, %v616
  %v862 = vpack.c.b16 %v619, %v618
  %v863 = vpack.c.b16 %v621, %v620
  %v864 = vpack.c.b16 %v623, %v622
  %v865 = vpack.c.b16 %v625, %v624
  %v866 = vpack.c.b16 %v627, %v626
  %v867 = vpack.c.b16 %v629, %v628
  %v868 = vpack.c.b16 %v631, %v630
  %v869 = vpack.c.b16 %v633, %v632
  %v870 = vpack.c.b16 %v635, %v634
  %v871 = vpack.c.b16 %v637, %v636
  %v872 = vpack.c.b16 %v639, %v638
  %v873 = vpack.c.b16 %v641, %v640
  %v874 = vpack.c.b16 %v643, %v642
  %v875 = vpack.c.b16 %v645, %v644
  %v876 = vpack.c.b16 %v647, %v646
  %v877 = vpack.c.b16 %v649, %v648
  %v878 = vpack.c.b16 %v651, %v650
  %v879 = vpack.c.b16 %v653, %v652
  %v880 = vpack.c.b16 %v655, %v654
  %v881 = vpack.c.b16 %v657, %v656
  %v882 = vpack.c.b16 %v659, %v658
  %v883 = vpack.c.b16 %v661, %v660
  %v884 = vpack.c.b16 %v663, %v662
  %v885 = vpack.c.b16 %v665, %v664
  %v886 = vpack.c.b16 %v667, %v666
  %v887 = vpack.c.b16 %v669, %v668
  %v888 = vpack.c.b16 %v671, %v670
  %v889 = vpack.c.b16 %v673, %v672
  %v890 = vpack.c.b16 %v675, %v674
  %v891 = vpack.c.b16 %v677, %v676
  %v892 = vpack.c.b16 %v679, %v678
  %v893 = vpack.c.b16 %v681, %v680
  %v894 = vpack.c.b16 %v683, %v682
  %v895 = vpack.c.b16 %v685, %v684
  %v896 = vpack.c.b16 %v687, %v686
  %v897 = vpack.c.b16 %v689, %v688
  %v898 = vpack.c.b16 %v691, %v690
  %v899 = vpack.c.b16 %v693, %v692
  %v900 = vpack.c.b16 %v695, %v694
  %v901 = vpack.c.b16 %v697, %v696
  %v902 = vpack.c.b16 %v699, %v698
  %v903 = vpack.c.b16 %v701, %v700
  %v904 = vpack.c.b16 %v703, %v702
  %v905 = vpack.c.b16 %v705, %v704
  %v906 = vpack.c.b16 %v707, %v706
  %v907 = vpack.c.b16 %v709, %v708
  %v908 = vpack.c.b16 %v711, %v710
  %v909 = vpack.c.b16 %v713, %v712
  %v910 = vpack.c.b16 %v715, %v714
  %v911 = vpack.c.b16 %v717, %v716
  %v912 = vpack.c.b16 %v719, %v718
  %v913 = vpack.c.b16 %v721, %v720
  %v914 = vpack.c.b16 %v723, %v722
  %v915 = vpack.c.b16 %v725, %v724
  %v916 = vpack.c.b16 %v727, %v726
  %v917 = vpack.c.b16 %v729, %v728
  %v918 = vpack.c.b16 %v731, %v730
  %v919 = vpack.c.b16 %v733, %v732
  %v920 = vpack.c.b16 %v735, %v734
  %v921 = vpack.c.b16 %v737, %v736
  %v922 = vpack.c.b16 %v739, %v738
  %v923 = vpack.c.b16 %v741, %v740
  %v924 = vpack.c.b16 %v743, %v742
  %v925 = vpack.c.b16 %v745, %v744
  %v926 = vpack.c.b16 %v747, %v746
  %v927 = vpack.c.b16 %v749, %v748
  %v928 = vpack.c.b16 %v751, %v750
  %v929 = vpack.c.b16 %v753, %v752
  %v930 = vpack.c.b16 %v755, %v754
  %v931 = vpack.c.b16 %v757, %v756
  %v932 = vpack.c.b16 %v759, %v758
  %v933 = vpack.c.b16 %v761, %v760
  %v934 = vpack.c.b16 %v763, %v762
  %v935 = vpack.c.b16 %v765, %v764
  %v936 = vpack.c.b16 %v767, %v766
  %v937 = vpack.c.b16 %v769, %v768
  %v938 = vpack.c.b16 %v771, %v770
  %v939 = vpack.c.b16 %v773, %v772
  %v940 = vpack.c.b16 %v775, %v774
  %v941 = vpack.c.b16 %v777, %v776
  %v942 = vpack.c.b16 %v779, %v778
  %v943 = vpack.c.b16 %v781, %v780
  %v944 = vpack.c.b16 %v783, %v782
  %v945 = vpack.c.b16 %v785, %v784
  %v946 = vpack.c.b16 %v787, %v786
  %v947 = vpack.c.b16 %v789, %v788
  %v948 = vpack.c.b16 %v791, %v790
  %v949 = vpack.c.b16 %v793, %v792
  %v950 = vpack.c.b16 %v795, %v794
  %v951 = vpack.c.b16 %v797, %v796
  %v952 = vpack.c.b16 %v799, %v798
  %v953 = vpack.c.b16 %v801, %v800
  %v954 = vpack.c.b16 %v803, %v802
  %v955 = vpack.c.b16 %v805, %v804
  %v956 = vpack.c.b16 %v807, %v806
  %v957 = vpack.c.b16 %v809, %v808
  %v958 = vpack.c.b16 %v811, %v810
  %v959 = vpack.c.b16 %v813, %v812
  %v960 = vpack.c.b16 %v815, %v814
  %v961 = vpack.c.b16 %v817, %v816
  %v962 = vpack.c.b16 %v819, %v818
  %v963 = vpack.c.b16 %v821, %v820
  %v964 = vpack.c.b16 %v823, %v822
  %v965 = vpack.c.b16 %v825, %v824
  %v966 = vpack.c.b16 %v827, %v826
  %v967 = vpack.c.b16 %v829, %v828
  %v968 = vpack.c.b16 %v831, %v830
  %v969 = vpack.c.b16 %v833, %v832
  %v970 = vpack.c.b16 %v835, %v834
  %v971 = vpack.c.b16 %v837, %v836
  %v972 = vpack.c.b16 %v839, %v838
  %v973 = vpack.c.b16 %v841, %v840
  %v974 = vpack.c.b16 %v843, %v842
  %v975 = vpack.c.b16 %v845, %v844
  %v976 = vpack.c.b16 %v847, %v846
  %v977 = vpack.c.b16 %v849, %v848
  %1106 = vmatpush.bf16.msra.mxu0 %v857
  %1107 = vmatpush.bf16.msra.mxu0 %v856
  %1108 = vmatpush.bf16.msra.mxu0 %v855
  %1109 = vmatpush.bf16.msra.mxu0 %v854
  %1110 = vmatpush.bf16.msra.mxu0 %v853
  %1111 = vmatpush.bf16.msra.mxu0 %v852
  %1112 = vmatpush.bf16.msra.mxu0 %v851
  %1113 = vmatpush.bf16.msra.mxu0 %v850
  %1114 = vmatmul.bf16.gmra.mxu0 %v306
  %v1115 = vpop.f32.mrf.mxu0
  %v1116 = vadd.f32 %v280, %v1115
  %v1117 = vpop.f32.mrf.mxu0
  %1118 = vdwg.mxu0
  %1119 = vmatpush.bf16.msra.mxu0 %v865
  %1120 = vmatpush.bf16.msra.mxu0 %v864
  %1121 = vmatpush.bf16.msra.mxu0 %v863
  %1122 = vmatpush.bf16.msra.mxu0 %v862
  %1123 = vmatpush.bf16.msra.mxu0 %v861
  %1124 = vmatpush.bf16.msra.mxu0 %v860
  %1125 = vmatpush.bf16.msra.mxu0 %v859
  %1126 = vmatpush.bf16.msra.mxu0 %v858
  %1127 = vmatmul.bf16.gmra.mxu0 %v307
  %v1128 = vpop.f32.mrf.mxu0
  %v1129 = vadd.f32 %v1116, %v1128
  %v1130 = vpop.f32.mrf.mxu0
  %1131 = vdwg.mxu0
  %1132 = vmatpush.bf16.msra.mxu0 %v873
  %1133 = vmatpush.bf16.msra.mxu0 %v872
  %1134 = vmatpush.bf16.msra.mxu0 %v871
  %1135 = vmatpush.bf16.msra.mxu0 %v870
  %1136 = vmatpush.bf16.msra.mxu0 %v869
  %1137 = vmatpush.bf16.msra.mxu0 %v868
  %1138 = vmatpush.bf16.msra.mxu0 %v867
  %1139 = vmatpush.bf16.msra.mxu0 %v866
  %1140 = vmatmul.bf16.gmra.mxu0 %v308
  %v1141 = vpop.f32.mrf.mxu0
  %v1142 = vadd.f32 %v1129, %v1141
  %v1143 = vpop.f32.mrf.mxu0
  %1144 = vdwg.mxu0
  %1145 = vmatpush.bf16.msra.mxu0 %v881
  %1146 = vmatpush.bf16.msra.mxu0 %v880
  %1147 = vmatpush.bf16.msra.mxu0 %v879
  %1148 = vmatpush.bf16.msra.mxu0 %v878
  %1149 = vmatpush.bf16.msra.mxu0 %v877
  %1150 = vmatpush.bf16.msra.mxu0 %v876
  %1151 = vmatpush.bf16.msra.mxu0 %v875
  %1152 = vmatpush.bf16.msra.mxu0 %v874
  %1153 = vmatmul.bf16.gmra.mxu0 %v309
  %v1154 = vpop.f32.mrf.mxu0
  %v1155 = vadd.f32 %v1142, %v1154
  %v1156 = vpop.f32.mrf.mxu0
  %1157 = vdwg.mxu0
  %1158 = vmatpush.bf16.msra.mxu0 %v889
  %1159 = vmatpush.bf16.msra.mxu0 %v888
  %1160 = vmatpush.bf16.msra.mxu0 %v887
  %1161 = vmatpush.bf16.msra.mxu0 %v886
  %1162 = vmatpush.bf16.msra.mxu0 %v885
  %1163 = vmatpush.bf16.msra.mxu0 %v884
  %1164 = vmatpush.bf16.msra.mxu0 %v883
  %1165 = vmatpush.bf16.msra.mxu0 %v882
  %1166 = vmatmul.bf16.gmra.mxu0 %v310
  %v1167 = vpop.f32.mrf.mxu0
  %v1168 = vadd.f32 %v1155, %v1167
  %v1169 = vpop.f32.mrf.mxu0
  %1170 = vdwg.mxu0
  %1171 = vmatpush.bf16.msra.mxu0 %v897
  %1172 = vmatpush.bf16.msra.mxu0 %v896
  %1173 = vmatpush.bf16.msra.mxu0 %v895
  %1174 = vmatpush.bf16.msra.mxu0 %v894
  %1175 = vmatpush.bf16.msra.mxu0 %v893
  %1176 = vmatpush.bf16.msra.mxu0 %v892
  %1177 = vmatpush.bf16.msra.mxu0 %v891
  %1178 = vmatpush.bf16.msra.mxu0 %v890
  %1179 = vmatmul.bf16.gmra.mxu0 %v311
  %v1180 = vpop.f32.mrf.mxu0
  %v1181 = vadd.f32 %v1168, %v1180
  %v1182 = vpop.f32.mrf.mxu0
  %1183 = vdwg.mxu0
  %1184 = vmatpush.bf16.msra.mxu0 %v905
  %1185 = vmatpush.bf16.msra.mxu0 %v904
  %1186 = vmatpush.bf16.msra.mxu0 %v903
  %1187 = vmatpush.bf16.msra.mxu0 %v902
  %1188 = vmatpush.bf16.msra.mxu0 %v901
  %1189 = vmatpush.bf16.msra.mxu0 %v900
  %1190 = vmatpush.bf16.msra.mxu0 %v899
  %1191 = vmatpush.bf16.msra.mxu0 %v898
  %1192 = vmatmul.bf16.gmra.mxu0 %v312
  %v1193 = vpop.f32.mrf.mxu0
  %v1194 = vadd.f32 %v1181, %v1193
  %v1195 = vpop.f32.mrf.mxu0
  %1196 = vdwg.mxu0
  %1197 = vmatpush.bf16.msra.mxu0 %v913
  %1198 = vmatpush.bf16.msra.mxu0 %v912
  %1199 = vmatpush.bf16.msra.mxu0 %v911
  %1200 = vmatpush.bf16.msra.mxu0 %v910
  %1201 = vmatpush.bf16.msra.mxu0 %v909
  %1202 = vmatpush.bf16.msra.mxu0 %v908
  %1203 = vmatpush.bf16.msra.mxu0 %v907
  %1204 = vmatpush.bf16.msra.mxu0 %v906
  %1205 = vmatmul.bf16.gmra.mxu0 %v313
  %v1206 = vpop.f32.mrf.mxu0
  %v1207 = vadd.f32 %v1194, %v1206
  %v1208 = vpop.f32.mrf.mxu0
  %1209 = vdwg.mxu0
  %1210 = vmatpush.bf16.msra.mxu0 %v921
  %1211 = vmatpush.bf16.msra.mxu0 %v920
  %1212 = vmatpush.bf16.msra.mxu0 %v919
  %1213 = vmatpush.bf16.msra.mxu0 %v918
  %1214 = vmatpush.bf16.msra.mxu0 %v917
  %1215 = vmatpush.bf16.msra.mxu0 %v916
  %1216 = vmatpush.bf16.msra.mxu0 %v915
  %1217 = vmatpush.bf16.msra.mxu0 %v914
  %1218 = vmatmul.bf16.gmra.mxu0 %v314
  %v1219 = vpop.f32.mrf.mxu0
  %v1220 = vadd.f32 %v1207, %v1219
  %v1221 = vpop.f32.mrf.mxu0
  %1222 = vdwg.mxu0
  %1223 = vmatpush.bf16.msra.mxu0 %v929
  %1224 = vmatpush.bf16.msra.mxu0 %v928
  %1225 = vmatpush.bf16.msra.mxu0 %v927
  %1226 = vmatpush.bf16.msra.mxu0 %v926
  %1227 = vmatpush.bf16.msra.mxu0 %v925
  %1228 = vmatpush.bf16.msra.mxu0 %v924
  %1229 = vmatpush.bf16.msra.mxu0 %v923
  %1230 = vmatpush.bf16.msra.mxu0 %v922
  %1231 = vmatmul.bf16.gmra.mxu0 %v315
  %v1232 = vpop.f32.mrf.mxu0
  %v1233 = vadd.f32 %v1220, %v1232
  %v1234 = vpop.f32.mrf.mxu0
  %1235 = vdwg.mxu0
  %1236 = vmatpush.bf16.msra.mxu0 %v937
  %1237 = vmatpush.bf16.msra.mxu0 %v936
  %1238 = vmatpush.bf16.msra.mxu0 %v935
  %1239 = vmatpush.bf16.msra.mxu0 %v934
  %1240 = vmatpush.bf16.msra.mxu0 %v933
  %1241 = vmatpush.bf16.msra.mxu0 %v932
  %1242 = vmatpush.bf16.msra.mxu0 %v931
  %1243 = vmatpush.bf16.msra.mxu0 %v930
  %1244 = vmatmul.bf16.gmra.mxu0 %v316
  %v1245 = vpop.f32.mrf.mxu0
  %v1246 = vadd.f32 %v1233, %v1245
  %v1247 = vpop.f32.mrf.mxu0
  %1248 = vdwg.mxu0
  %1249 = vmatpush.bf16.msra.mxu0 %v945
  %1250 = vmatpush.bf16.msra.mxu0 %v944
  %1251 = vmatpush.bf16.msra.mxu0 %v943
  %1252 = vmatpush.bf16.msra.mxu0 %v942
  %1253 = vmatpush.bf16.msra.mxu0 %v941
  %1254 = vmatpush.bf16.msra.mxu0 %v940
  %1255 = vmatpush.bf16.msra.mxu0 %v939
  %1256 = vmatpush.bf16.msra.mxu0 %v938
  %1257 = vmatmul.bf16.gmra.mxu0 %v317
  %v1258 = vpop.f32.mrf.mxu0
  %v1259 = vadd.f32 %v1246, %v1258
  %v1260 = vpop.f32.mrf.mxu0
  %1261 = vdwg.mxu0
  %1262 = vmatpush.bf16.msra.mxu0 %v953
  %1263 = vmatpush.bf16.msra.mxu0 %v952
  %1264 = vmatpush.bf16.msra.mxu0 %v951
  %1265 = vmatpush.bf16.msra.mxu0 %v950
  %1266 = vmatpush.bf16.msra.mxu0 %v949
  %1267 = vmatpush.bf16.msra.mxu0 %v948
  %1268 = vmatpush.bf16.msra.mxu0 %v947
  %1269 = vmatpush.bf16.msra.mxu0 %v946
  %1270 = vmatmul.bf16.gmra.mxu0 %v318
  %v1271 = vpop.f32.mrf.mxu0
  %v1272 = vadd.f32 %v1259, %v1271
  %v1273 = vpop.f32.mrf.mxu0
  %1274 = vdwg.mxu0
  %1275 = vmatpush.bf16.msra.mxu0 %v961
  %1276 = vmatpush.bf16.msra.mxu0 %v960
  %1277 = vmatpush.bf16.msra.mxu0 %v959
  %1278 = vmatpush.bf16.msra.mxu0 %v958
  %1279 = vmatpush.bf16.msra.mxu0 %v957
  %1280 = vmatpush.bf16.msra.mxu0 %v956
  %1281 = vmatpush.bf16.msra.mxu0 %v955
  %1282 = vmatpush.bf16.msra.mxu0 %v954
  %1283 = vmatmul.bf16.gmra.mxu0 %v319
  %v1284 = vpop.f32.mrf.mxu0
  %v1285 = vadd.f32 %v1272, %v1284
  %v1286 = vpop.f32.mrf.mxu0
  %1287 = vdwg.mxu0
  %1288 = vmatpush.bf16.msra.mxu0 %v969
  %1289 = vmatpush.bf16.msra.mxu0 %v968
  %1290 = vmatpush.bf16.msra.mxu0 %v967
  %1291 = vmatpush.bf16.msra.mxu0 %v966
  %1292 = vmatpush.bf16.msra.mxu0 %v965
  %1293 = vmatpush.bf16.msra.mxu0 %v964
  %1294 = vmatpush.bf16.msra.mxu0 %v963
  %1295 = vmatpush.bf16.msra.mxu0 %v962
  %1296 = vmatmul.bf16.gmra.mxu0 %v320
  %v1297 = vpop.f32.mrf.mxu0
  %v1298 = vadd.f32 %v1285, %v1297
  %v1299 = vpop.f32.mrf.mxu0
  %1300 = vdwg.mxu0
  %1301 = vmatpush.bf16.msra.mxu0 %v977
  %1302 = vmatpush.bf16.msra.mxu0 %v976
  %1303 = vmatpush.bf16.msra.mxu0 %v975
  %1304 = vmatpush.bf16.msra.mxu0 %v974
  %1305 = vmatpush.bf16.msra.mxu0 %v973
  %1306 = vmatpush.bf16.msra.mxu0 %v972
  %1307 = vmatpush.bf16.msra.mxu0 %v971
  %1308 = vmatpush.bf16.msra.mxu0 %v970
  %1309 = vmatmul.bf16.gmra.mxu0 %v321
  %v1310 = vpop.f32.mrf.mxu0
  %v1311 = vadd.f32 %v1298, %v1310
  %v1312 = vpop.f32.mrf.mxu0
  %1313 = vdwg.mxu0
  %1314 = vst [vmem:[%s3] sm:$0xff] %v1311
  // Predicated region
  $region14: #{_lambda_.15} parent=0 // pred_check
    _
  $region15: #{_lambda_.15} parent=0 // pred_check_branch
    %1316 = sbr.rel (0) target = $region17
  $region16: #{_lambda_.15} parent=0 // pred_region
    _
  $region17: #{_lambda_.15} parent=0 // pred_fallthru
    _
  // Predicated region
  $region18: #{_lambda_.15} parent=0 // pred_check
    _
  $region19: #{_lambda_.15} parent=0 // pred_check_branch
    %1318 = sbr.rel (0) target = $region21
  $region20: #{_lambda_.15} parent=0 // pred_region
    _
  $region21: #{_lambda_.15} parent=0 // pred_fallthru
    _

</llo_original>
